<compile_context>
chip_gen: v7x
topology: tpu7x:2x2x1
jax: 0.10.0
libtpu: 0.0.40
codegen_flags: <defaults>
</compile_context>

<pallas_src>
import functools

import jax
import jax.numpy as jnp
import numpy as np
from jax.experimental import pallas as pl
from jax.experimental.pallas import tpu as pltpu

PARAMS = dict(
    conv_channels1=32,
    conv_channels2=64,
    conv_channels3=64,   # forced by 576 = C3 * 3 * 3
    conv_kernel_size=3,
    maxpool_size=2,
    linear_features1=128,
)

_BF16 = jnp.bfloat16
_F32 = jnp.float32

# Lane-padded "column-parity half" widths (multiples of 128 so every pooling
# slice is vreg-aligned).  Padding columns/rows in the Toeplitz weights are 0.
_H1 = 512    # conv1: 13 pooled cols * 32 ch = 416 -> 512
_H2 = 384    # conv2:  5 pooled cols * 64 ch = 320 -> 384


# ----------------------------- fused forward kernel -----------------------------
# One grid step == one batch tile of B images.  Layout convention everywhere:
#   rows  = (spatial row, image)  with the image index minor (B is a mult. of 8)
#   lanes = (column parity [for pooled layers], column, channel), channel minor.

def _net_kernel(x_ref, t1_ref, b1_ref, t2_ref, b2_ref, t3_ref, b3_ref,
                w4_ref, b4_ref, w5_ref, b5_ref, o_ref, *, bt):
    B = bt
    x = x_ref[...]                                            # [28B, 28] bf16

    # ---- conv1 (3x3, 1->32): 3 row-Toeplitz matmuls accumulated over dh ------
    acc = jnp.dot(x[0:26 * B], t1_ref[0], preferred_element_type=_F32)
    acc = acc + jnp.dot(x[B:27 * B], t1_ref[1], preferred_element_type=_F32)
    acc = acc + jnp.dot(x[2 * B:28 * B], t1_ref[2], preferred_element_type=_F32)
    # acc: [26B, 2*_H1]; lanes = (j%2, j//2, c_out)

    # ---- 2x2 maxpool + bias + ReLU  (pool(relu(y+b)) == relu(pool(y)+b)) -----
    b1 = b1_ref[...]                                          # [1, _H1] f32
    rows = []
    for p in range(13):
        r0 = acc[(2 * p) * B:(2 * p + 1) * B]
        r1 = acc[(2 * p + 1) * B:(2 * p + 2) * B]
        m = jnp.maximum(jnp.maximum(r0[:, :_H1], r0[:, _H1:]),
                        jnp.maximum(r1[:, :_H1], r1[:, _H1:]))
        rows.append(jnp.maximum(m + b1, 0.0).astype(_BF16))   # cast once
    pool1 = jnp.concatenate(rows, axis=0)                     # [13B, _H1] bf16

    # ---- conv2 (3x3, 32->64) on the 13x13 pooled map (only 10x10 needed) -----
    acc = jnp.dot(pool1[0:10 * B], t2_ref[0], preferred_element_type=_F32)
    acc = acc + jnp.dot(pool1[B:11 * B], t2_ref[1], preferred_element_type=_F32)
    acc = acc + jnp.dot(pool1[2 * B:12 * B], t2_ref[2], preferred_element_type=_F32)
    # acc: [10B, 2*_H2]

    b2 = b2_ref[...]                                          # [1, _H2]
    rows = []
    for p in range(5):
        r0 = acc[(2 * p) * B:(2 * p + 1) * B]
        r1 = acc[(2 * p + 1) * B:(2 * p + 2) * B]
        m = jnp.maximum(jnp.maximum(r0[:, :_H2], r0[:, _H2:]),
                        jnp.maximum(r1[:, :_H2], r1[:, _H2:]))
        rows.append(jnp.maximum(m + b2, 0.0).astype(_BF16))
    pool2 = jnp.concatenate(rows, axis=0)                     # [5B, _H2] bf16

    # ---- conv3 (3x3, 64->64) + ReLU (no pool) ---------------------------------
    acc = jnp.dot(pool2[0:3 * B], t3_ref[0], preferred_element_type=_F32)
    acc = acc + jnp.dot(pool2[B:4 * B], t3_ref[1], preferred_element_type=_F32)
    acc = acc + jnp.dot(pool2[2 * B:5 * B], t3_ref[2], preferred_element_type=_F32)
    a3 = jnp.maximum(acc + b3_ref[...], 0.0).astype(_BF16)    # [3B, 192], lanes (w, c)

    # ---- flatten + dense1 + ReLU (flatten folded into 3 row-block matmuls) ----
    z = jnp.dot(a3[0:B], w4_ref[0:192, :], preferred_element_type=_F32)
    z = z + jnp.dot(a3[B:2 * B], w4_ref[192:384, :], preferred_element_type=_F32)
    z = z + jnp.dot(a3[2 * B:3 * B], w4_ref[384:576, :], preferred_element_type=_F32)
    z = jnp.maximum(z + b4_ref[...], 0.0).astype(_BF16)       # [B, 128]

    # ---- dense2 + softmax ------------------------------------------------------
    logits = jnp.dot(z, w5_ref[...], preferred_element_type=_F32) + b5_ref[...]
    mx = jnp.max(logits, axis=-1, keepdims=True)
    ex = jnp.exp(logits - mx)
    inv = pl.reciprocal(jnp.sum(ex, axis=-1, keepdims=True), approx=True)
    o_ref[...] = ex * inv                                      # [B, 10] f32


# --------------------------------- wrapper ---------------------------------

def net_forward(kparams, x_nchw, *, batch_tile=64):
    """Forward pass of Net.  x_nchw: [N, 1, 28, 28] f32 -> [N, 10] softmax."""
    n = x_nchw.shape[0]
    bt = batch_tile
    assert bt % 8 == 0 and n % bt == 0, "batch_tile must be a multiple of 8 dividing N"
    nt = n // bt

    # Host-side layout only (no data inflation): rows ordered (tile, h, image) so
    # each grid step DMAs one contiguous, lane-dense [28*bt, 28] bf16 slab.
    xr = x_nchw.reshape(nt, bt, 28, 28)
    xr = jnp.transpose(xr, (0, 2, 1, 3)).reshape(nt * 28 * bt, 28).astype(_BF16)

    wnames = ("t1", "b1", "t2", "b2", "t3", "b3", "w4", "b4", "w5", "b5")
    in_specs = [pl.BlockSpec((28 * bt, 28), lambda i: (i, 0))]
    operands = [xr]
    for name in wnames:   # weights/biases: resident blocks, constant index maps
        arr = kparams[name]
        in_specs.append(pl.BlockSpec(arr.shape, lambda i, _nd=arr.ndim: (0,) * _nd))
        operands.append(arr)

    return pl.pallas_call(
        functools.partial(_net_kernel, bt=bt),
        out_shape=jax.ShapeDtypeStruct((n, 10), jnp.float32),
        grid=(nt,),
        in_specs=in_specs,
        out_specs=pl.BlockSpec((bt, 10), lambda i: (i, 0)),
        compiler_params=pltpu.CompilerParams(
            dimension_semantics=("parallel",),
            vmem_limit_bytes=48 * 1024 * 1024),
    )(*operands)


# ------------------------------ parameters ------------------------------

def init_params(key):
    """Torch-layout parameters (conv: [O,I,3,3]; dense stored as weight.T)."""
    ks = jax.random.split(key, 10)
    p = PARAMS

    def u(k, shape, fan_in):
        bound = 1.0 / jnp.sqrt(fan_in)
        return jax.random.uniform(k, shape, jnp.float32, -bound, bound)

    return {
        "conv1_w": u(ks[0], (p["conv_channels1"], 1, 3, 3), 1 * 9),
        "conv1_b": u(ks[1], (p["conv_channels1"],), 1 * 9),
        "conv2_w": u(ks[2], (p["conv_channels2"], p["conv_channels1"], 3, 3),
                     p["conv_channels1"] * 9),
        "conv2_b": u(ks[3], (p["conv_channels2"],), p["conv_channels1"] * 9),
        "conv3_w": u(ks[4], (p["conv_channels3"], p["conv_channels2"], 3, 3),
                     p["conv_channels2"] * 9),
        "conv3_b": u(ks[5], (p["conv_channels3"],), p["conv_channels2"] * 9),
        # dense weights stored as [in, out] (== torch weight.T); dense1 rows in
        # torch flatten order (c, h, w)
        "dense1_w": u(ks[6], (576, p["linear_features1"]), 576),
        "dense1_b": u(ks[7], (p["linear_features1"],), 576),
        "dense2_w": u(ks[8], (p["linear_features1"], 10), p["linear_features1"]),
        "dense2_b": u(ks[9], (10,), p["linear_features1"]),
    }


def prepare_kernel_params(params):
    """One-time host-side conversion to bf16 row-Toeplitz matmul layouts.

    T_l[dh][(in_col, c_in), (out_parity, out_col//2, c_out)] = w_l[c_out, c_in, dh, dw]
    with dw = in_col - out_col in [0, 3); everything else (incl. lane padding) is 0.
    """
    w1 = np.asarray(params["conv1_w"], np.float32)   # [32, 1, 3, 3]
    w2 = np.asarray(params["conv2_w"], np.float32)   # [64, 32, 3, 3]
    w3 = np.asarray(params["conv3_w"], np.float32)   # [64, 64, 3, 3]

    t1 = np.zeros((3, 28, 2 * _H1), np.float32)
    for dh in range(3):
        for j in range(26):                       # conv1 output column
            col = (j % 2) * _H1 + (j // 2) * 32
            for dw in range(3):
                t1[dh, j + dw, col:col + 32] = w1[:, 0, dh, dw]

    t2 = np.zeros((3, _H1, 2 * _H2), np.float32)
    for dh in range(3):
        for j in range(10):                       # conv2 output column (10 needed)
            col = (j % 2) * _H2 + (j // 2) * 64
            for dw in range(3):
                row = (j + dw) * 32
                t2[dh, row:row + 32, col:col + 64] = w2[:, :, dh, dw].T

    t3 = np.zeros((3, _H2, 192), np.float32)
    for dh in range(3):
        for j in range(3):                        # conv3 output column
            for dw in range(3):
                row = (j + dw) * 64
                t3[dh, row:row + 64, j * 64:(j + 1) * 64] = w3[:, :, dh, dw].T

    b1t = np.zeros((1, _H1), np.float32)
    b1t[0, :13 * 32] = np.tile(np.asarray(params["conv1_b"], np.float32), 13)
    b2t = np.zeros((1, _H2), np.float32)
    b2t[0, :5 * 64] = np.tile(np.asarray(params["conv2_b"], np.float32), 5)
    b3t = np.tile(np.asarray(params["conv3_b"], np.float32), 3).reshape(1, 192)

    # dense1 rows: torch (c, h, w) order -> kernel (h, w, c) order, so the
    # flatten is just three contiguous row-blocks of a3.
    w4 = np.asarray(params["dense1_w"], np.float32).reshape(64, 3, 3, 128)
    w4 = np.transpose(w4, (1, 2, 0, 3)).reshape(576, 128)

    return dict(
        t1=jnp.asarray(t1, _BF16), b1=jnp.asarray(b1t, _F32),
        t2=jnp.asarray(t2, _BF16), b2=jnp.asarray(b2t, _F32),
        t3=jnp.asarray(t3, _BF16), b3=jnp.asarray(b3t, _F32),
        w4=jnp.asarray(w4, _BF16),
        b4=jnp.asarray(np.asarray(params["dense1_b"]).reshape(1, -1), _F32),
        w5=jnp.asarray(np.asarray(params["dense2_w"]), _BF16),
        b5=jnp.asarray(np.asarray(params["dense2_b"]).reshape(1, -1), _F32),
    )


# -------------------------- pure-JAX reference (f32) --------------------------

def net_forward_reference(params, x_nchw):
    def conv(x, w, b):
        y = jax.lax.conv_general_dilated(
            x, w, (1, 1), "VALID", dimension_numbers=("NCHW", "OIHW", "NCHW"))
        return jax.nn.relu(y + b.reshape(1, -1, 1, 1))

    def pool(x):
        return jax.lax.reduce_window(x, -jnp.inf, jax.lax.max,
                                     (1, 1, 2, 2), (1, 1, 2, 2), "VALID")

    x = pool(conv(x_nchw, params["conv1_w"], params["conv1_b"]))
    x = pool(conv(x, params["conv2_w"], params["conv2_b"]))
    x = conv(x, params["conv3_w"], params["conv3_b"])
    x = x.reshape(x.shape[0], -1)                      # NCHW flatten (c, h, w)
    x = jax.nn.relu(x @ params["dense1_w"] + params["dense1_b"])
    return jax.nn.softmax(x @ params["dense2_w"] + params["dense2_b"], axis=-1)


if __name__ == "__main__":
    key = jax.random.PRNGKey(0)
    k_param, k_data = jax.random.split(key)
    params = init_params(k_param)

    # MNIST-shaped input (forced by the hard-coded 576 flatten size).
    # N=16 with batch_tile=8 -> grid of 2 parallel steps (both v7x cores busy).
    n, bt = 16, 8
    x = jax.random.uniform(k_data, (n, 1, 28, 28), dtype=jnp.float32)

    kparams = prepare_kernel_params(params)
    fwd = jax.jit(functools.partial(net_forward, batch_tile=bt))
    out = jax.block_until_ready(fwd(kparams, x))
    ref = jax.block_until_ready(jax.jit(net_forward_reference)(params, x))

    assert out.shape == (n, 10)
    assert bool(jnp.all(jnp.isfinite(out)))
    # softmax rows sum to ~1 (approx-reciprocal normalization)
    assert bool(jnp.allclose(jnp.sum(out, axis=1), 1.0, atol=2e-2))
    # matches the f32 XLA reference within bf16-matmul tolerance
    assert bool(jnp.allclose(out, ref, atol=3e-2)), (out, ref)
    print("KERNEL_OK")
</pallas_src>

<mosaic_0001>
module attributes {stable_mosaic.version = 11 : i64} {
  func.func @_net_kernel(%arg0: i32, %arg1: memref<224x28xbf16, #tpu.memory_space<vmem>>, %arg2: memref<3x28x1024xbf16, #tpu.memory_space<vmem>>, %arg3: memref<1x512xf32, #tpu.memory_space<vmem>>, %arg4: memref<3x512x768xbf16, #tpu.memory_space<vmem>>, %arg5: memref<1x384xf32, #tpu.memory_space<vmem>>, %arg6: memref<3x384x192xbf16, #tpu.memory_space<vmem>>, %arg7: memref<1x192xf32, #tpu.memory_space<vmem>>, %arg8: memref<576x128xbf16, #tpu.memory_space<vmem>>, %arg9: memref<1x128xf32, #tpu.memory_space<vmem>>, %arg10: memref<128x10xbf16, #tpu.memory_space<vmem>>, %arg11: memref<1x10xf32, #tpu.memory_space<vmem>>, %arg12: memref<8x10xf32, #tpu.memory_space<vmem>>) attributes {dimension_semantics = [#tpu.dimension_semantics<parallel>], iteration_bounds = array<i64: 2>, scalar_prefetch = 0 : i64, scratch_operands = 0 : i64, tpu.core_type = #tpu.core_type<tc>, window_params = [{transform_indices = @transform_0, window_bounds = array<i64: 224, 28>}, {pipeline_mode = #tpu.pipeline_mode<synchronous>, transform_indices = @transform_1, window_bounds = array<i64: 3, 28, 1024>}, {pipeline_mode = #tpu.pipeline_mode<synchronous>, transform_indices = @transform_2, window_bounds = array<i64: 1, 512>}, {pipeline_mode = #tpu.pipeline_mode<synchronous>, transform_indices = @transform_3, window_bounds = array<i64: 3, 512, 768>}, {pipeline_mode = #tpu.pipeline_mode<synchronous>, transform_indices = @transform_4, window_bounds = array<i64: 1, 384>}, {pipeline_mode = #tpu.pipeline_mode<synchronous>, transform_indices = @transform_5, window_bounds = array<i64: 3, 384, 192>}, {pipeline_mode = #tpu.pipeline_mode<synchronous>, transform_indices = @transform_6, window_bounds = array<i64: 1, 192>}, {pipeline_mode = #tpu.pipeline_mode<synchronous>, transform_indices = @transform_7, window_bounds = array<i64: 576, 128>}, {pipeline_mode = #tpu.pipeline_mode<synchronous>, transform_indices = @transform_8, window_bounds = array<i64: 1, 128>}, {pipeline_mode = #tpu.pipeline_mode<synchronous>, transform_indices = @transform_9, window_bounds = array<i64: 128, 10>}, {pipeline_mode = #tpu.pipeline_mode<synchronous>, transform_indices = @transform_10, window_bounds = array<i64: 1, 10>}, {transform_indices = @transform_11, window_bounds = array<i64: 8, 10>}]} {
    %c0 = arith.constant 0 : index
    %c0_0 = arith.constant 0 : index
    %0 = vector.load %arg1[%c0, %c0_0] : memref<224x28xbf16, #tpu.memory_space<vmem>>, vector<224x28xbf16>
    %1 = vector.extract_strided_slice %0 {offsets = [0, 0], sizes = [208, 28], strides = [1, 1]} : vector<224x28xbf16> to vector<208x28xbf16>
    %c0_1 = arith.constant 0 : index
    %c0_2 = arith.constant 0 : index
    %c0_3 = arith.constant 0 : index
    %2 = vector.load %arg2[%c0_1, %c0_2, %c0_3] : memref<3x28x1024xbf16, #tpu.memory_space<vmem>>, vector<1x28x1024xbf16>
    %3 = vector.shape_cast %2 : vector<1x28x1024xbf16> to vector<28x1024xbf16>
    %cst = arith.constant dense<0.000000e+00> : vector<208x1024xf32>
    %4 = tpu.matmul %1, %3, %cst {dimension_numbers = #tpu.dot_dimension_numbers<[1], [0], [0], [1], [0, 0, 1, 1], [], []>} : vector<208x28xbf16>, vector<28x1024xbf16>, vector<208x1024xf32> -> vector<208x1024xf32>
    %5 = vector.extract_strided_slice %0 {offsets = [8, 0], sizes = [208, 28], strides = [1, 1]} : vector<224x28xbf16> to vector<208x28xbf16>
    %c1 = arith.constant 1 : index
    %c0_4 = arith.constant 0 : index
    %c0_5 = arith.constant 0 : index
    %6 = vector.load %arg2[%c1, %c0_4, %c0_5] : memref<3x28x1024xbf16, #tpu.memory_space<vmem>>, vector<1x28x1024xbf16>
    %7 = vector.shape_cast %6 : vector<1x28x1024xbf16> to vector<28x1024xbf16>
    %cst_6 = arith.constant dense<0.000000e+00> : vector<208x1024xf32>
    %8 = tpu.matmul %5, %7, %cst_6 {dimension_numbers = #tpu.dot_dimension_numbers<[1], [0], [0], [1], [0, 0, 1, 1], [], []>} : vector<208x28xbf16>, vector<28x1024xbf16>, vector<208x1024xf32> -> vector<208x1024xf32>
    %9 = arith.addf %4, %8 : vector<208x1024xf32>
    %10 = vector.extract_strided_slice %0 {offsets = [16, 0], sizes = [208, 28], strides = [1, 1]} : vector<224x28xbf16> to vector<208x28xbf16>
    %c2 = arith.constant 2 : index
    %c0_7 = arith.constant 0 : index
    %c0_8 = arith.constant 0 : index
    %11 = vector.load %arg2[%c2, %c0_7, %c0_8] : memref<3x28x1024xbf16, #tpu.memory_space<vmem>>, vector<1x28x1024xbf16>
    %12 = vector.shape_cast %11 : vector<1x28x1024xbf16> to vector<28x1024xbf16>
    %cst_9 = arith.constant dense<0.000000e+00> : vector<208x1024xf32>
    %13 = tpu.matmul %10, %12, %cst_9 {dimension_numbers = #tpu.dot_dimension_numbers<[1], [0], [0], [1], [0, 0, 1, 1], [], []>} : vector<208x28xbf16>, vector<28x1024xbf16>, vector<208x1024xf32> -> vector<208x1024xf32>
    %14 = arith.addf %9, %13 : vector<208x1024xf32>
    %c0_10 = arith.constant 0 : index
    %c0_11 = arith.constant 0 : index
    %15 = vector.load %arg3[%c0_10, %c0_11] : memref<1x512xf32, #tpu.memory_space<vmem>>, vector<1x512xf32>
    %16 = vector.extract_strided_slice %14 {offsets = [0, 0], sizes = [8, 1024], strides = [1, 1]} : vector<208x1024xf32> to vector<8x1024xf32>
    %17 = vector.extract_strided_slice %14 {offsets = [8, 0], sizes = [8, 1024], strides = [1, 1]} : vector<208x1024xf32> to vector<8x1024xf32>
    %18 = vector.extract_strided_slice %16 {offsets = [0, 0], sizes = [8, 512], strides = [1, 1]} : vector<8x1024xf32> to vector<8x512xf32>
    %19 = vector.extract_strided_slice %16 {offsets = [0, 512], sizes = [8, 512], strides = [1, 1]} : vector<8x1024xf32> to vector<8x512xf32>
    %20 = arith.maximumf %18, %19 : vector<8x512xf32>
    %21 = vector.extract_strided_slice %17 {offsets = [0, 0], sizes = [8, 512], strides = [1, 1]} : vector<8x1024xf32> to vector<8x512xf32>
    %22 = vector.extract_strided_slice %17 {offsets = [0, 512], sizes = [8, 512], strides = [1, 1]} : vector<8x1024xf32> to vector<8x512xf32>
    %23 = arith.maximumf %21, %22 : vector<8x512xf32>
    %24 = arith.maximumf %20, %23 : vector<8x512xf32>
    %25 = vector.broadcast %15 : vector<1x512xf32> to vector<8x512xf32>
    %26 = arith.addf %24, %25 : vector<8x512xf32>
    %cst_12 = arith.constant 0.000000e+00 : f32
    %27 = vector.broadcast %cst_12 : f32 to vector<8x512xf32>
    %28 = arith.maximumf %26, %27 : vector<8x512xf32>
    %29 = arith.truncf %28 : vector<8x512xf32> to vector<8x512xbf16>
    %30 = vector.extract_strided_slice %14 {offsets = [16, 0], sizes = [8, 1024], strides = [1, 1]} : vector<208x1024xf32> to vector<8x1024xf32>
    %31 = vector.extract_strided_slice %14 {offsets = [24, 0], sizes = [8, 1024], strides = [1, 1]} : vector<208x1024xf32> to vector<8x1024xf32>
    %32 = vector.extract_strided_slice %30 {offsets = [0, 0], sizes = [8, 512], strides = [1, 1]} : vector<8x1024xf32> to vector<8x512xf32>
    %33 = vector.extract_strided_slice %30 {offsets = [0, 512], sizes = [8, 512], strides = [1, 1]} : vector<8x1024xf32> to vector<8x512xf32>
    %34 = arith.maximumf %32, %33 : vector<8x512xf32>
    %35 = vector.extract_strided_slice %31 {offsets = [0, 0], sizes = [8, 512], strides = [1, 1]} : vector<8x1024xf32> to vector<8x512xf32>
    %36 = vector.extract_strided_slice %31 {offsets = [0, 512], sizes = [8, 512], strides = [1, 1]} : vector<8x1024xf32> to vector<8x512xf32>
    %37 = arith.maximumf %35, %36 : vector<8x512xf32>
    %38 = arith.maximumf %34, %37 : vector<8x512xf32>
    %39 = vector.broadcast %15 : vector<1x512xf32> to vector<8x512xf32>
    %40 = arith.addf %38, %39 : vector<8x512xf32>
    %cst_13 = arith.constant 0.000000e+00 : f32
    %41 = vector.broadcast %cst_13 : f32 to vector<8x512xf32>
    %42 = arith.maximumf %40, %41 : vector<8x512xf32>
    %43 = arith.truncf %42 : vector<8x512xf32> to vector<8x512xbf16>
    %44 = vector.extract_strided_slice %14 {offsets = [32, 0], sizes = [8, 1024], strides = [1, 1]} : vector<208x1024xf32> to vector<8x1024xf32>
    %45 = vector.extract_strided_slice %14 {offsets = [40, 0], sizes = [8, 1024], strides = [1, 1]} : vector<208x1024xf32> to vector<8x1024xf32>
    %46 = vector.extract_strided_slice %44 {offsets = [0, 0], sizes = [8, 512], strides = [1, 1]} : vector<8x1024xf32> to vector<8x512xf32>
    %47 = vector.extract_strided_slice %44 {offsets = [0, 512], sizes = [8, 512], strides = [1, 1]} : vector<8x1024xf32> to vector<8x512xf32>
    %48 = arith.maximumf %46, %47 : vector<8x512xf32>
    %49 = vector.extract_strided_slice %45 {offsets = [0, 0], sizes = [8, 512], strides = [1, 1]} : vector<8x1024xf32> to vector<8x512xf32>
    %50 = vector.extract_strided_slice %45 {offsets = [0, 512], sizes = [8, 512], strides = [1, 1]} : vector<8x1024xf32> to vector<8x512xf32>
    %51 = arith.maximumf %49, %50 : vector<8x512xf32>
    %52 = arith.maximumf %48, %51 : vector<8x512xf32>
    %53 = vector.broadcast %15 : vector<1x512xf32> to vector<8x512xf32>
    %54 = arith.addf %52, %53 : vector<8x512xf32>
    %cst_14 = arith.constant 0.000000e+00 : f32
    %55 = vector.broadcast %cst_14 : f32 to vector<8x512xf32>
    %56 = arith.maximumf %54, %55 : vector<8x512xf32>
    %57 = arith.truncf %56 : vector<8x512xf32> to vector<8x512xbf16>
    %58 = vector.extract_strided_slice %14 {offsets = [48, 0], sizes = [8, 1024], strides = [1, 1]} : vector<208x1024xf32> to vector<8x1024xf32>
    %59 = vector.extract_strided_slice %14 {offsets = [56, 0], sizes = [8, 1024], strides = [1, 1]} : vector<208x1024xf32> to vector<8x1024xf32>
    %60 = vector.extract_strided_slice %58 {offsets = [0, 0], sizes = [8, 512], strides = [1, 1]} : vector<8x1024xf32> to vector<8x512xf32>
    %61 = vector.extract_strided_slice %58 {offsets = [0, 512], sizes = [8, 512], strides = [1, 1]} : vector<8x1024xf32> to vector<8x512xf32>
    %62 = arith.maximumf %60, %61 : vector<8x512xf32>
    %63 = vector.extract_strided_slice %59 {offsets = [0, 0], sizes = [8, 512], strides = [1, 1]} : vector<8x1024xf32> to vector<8x512xf32>
    %64 = vector.extract_strided_slice %59 {offsets = [0, 512], sizes = [8, 512], strides = [1, 1]} : vector<8x1024xf32> to vector<8x512xf32>
    %65 = arith.maximumf %63, %64 : vector<8x512xf32>
    %66 = arith.maximumf %62, %65 : vector<8x512xf32>
    %67 = vector.broadcast %15 : vector<1x512xf32> to vector<8x512xf32>
    %68 = arith.addf %66, %67 : vector<8x512xf32>
    %cst_15 = arith.constant 0.000000e+00 : f32
    %69 = vector.broadcast %cst_15 : f32 to vector<8x512xf32>
    %70 = arith.maximumf %68, %69 : vector<8x512xf32>
    %71 = arith.truncf %70 : vector<8x512xf32> to vector<8x512xbf16>
    %72 = vector.extract_strided_slice %14 {offsets = [64, 0], sizes = [8, 1024], strides = [1, 1]} : vector<208x1024xf32> to vector<8x1024xf32>
    %73 = vector.extract_strided_slice %14 {offsets = [72, 0], sizes = [8, 1024], strides = [1, 1]} : vector<208x1024xf32> to vector<8x1024xf32>
    %74 = vector.extract_strided_slice %72 {offsets = [0, 0], sizes = [8, 512], strides = [1, 1]} : vector<8x1024xf32> to vector<8x512xf32>
    %75 = vector.extract_strided_slice %72 {offsets = [0, 512], sizes = [8, 512], strides = [1, 1]} : vector<8x1024xf32> to vector<8x512xf32>
    %76 = arith.maximumf %74, %75 : vector<8x512xf32>
    %77 = vector.extract_strided_slice %73 {offsets = [0, 0], sizes = [8, 512], strides = [1, 1]} : vector<8x1024xf32> to vector<8x512xf32>
    %78 = vector.extract_strided_slice %73 {offsets = [0, 512], sizes = [8, 512], strides = [1, 1]} : vector<8x1024xf32> to vector<8x512xf32>
    %79 = arith.maximumf %77, %78 : vector<8x512xf32>
    %80 = arith.maximumf %76, %79 : vector<8x512xf32>
    %81 = vector.broadcast %15 : vector<1x512xf32> to vector<8x512xf32>
    %82 = arith.addf %80, %81 : vector<8x512xf32>
    %cst_16 = arith.constant 0.000000e+00 : f32
    %83 = vector.broadcast %cst_16 : f32 to vector<8x512xf32>
    %84 = arith.maximumf %82, %83 : vector<8x512xf32>
    %85 = arith.truncf %84 : vector<8x512xf32> to vector<8x512xbf16>
    %86 = vector.extract_strided_slice %14 {offsets = [80, 0], sizes = [8, 1024], strides = [1, 1]} : vector<208x1024xf32> to vector<8x1024xf32>
    %87 = vector.extract_strided_slice %14 {offsets = [88, 0], sizes = [8, 1024], strides = [1, 1]} : vector<208x1024xf32> to vector<8x1024xf32>
    %88 = vector.extract_strided_slice %86 {offsets = [0, 0], sizes = [8, 512], strides = [1, 1]} : vector<8x1024xf32> to vector<8x512xf32>
    %89 = vector.extract_strided_slice %86 {offsets = [0, 512], sizes = [8, 512], strides = [1, 1]} : vector<8x1024xf32> to vector<8x512xf32>
    %90 = arith.maximumf %88, %89 : vector<8x512xf32>
    %91 = vector.extract_strided_slice %87 {offsets = [0, 0], sizes = [8, 512], strides = [1, 1]} : vector<8x1024xf32> to vector<8x512xf32>
    %92 = vector.extract_strided_slice %87 {offsets = [0, 512], sizes = [8, 512], strides = [1, 1]} : vector<8x1024xf32> to vector<8x512xf32>
    %93 = arith.maximumf %91, %92 : vector<8x512xf32>
    %94 = arith.maximumf %90, %93 : vector<8x512xf32>
    %95 = vector.broadcast %15 : vector<1x512xf32> to vector<8x512xf32>
    %96 = arith.addf %94, %95 : vector<8x512xf32>
    %cst_17 = arith.constant 0.000000e+00 : f32
    %97 = vector.broadcast %cst_17 : f32 to vector<8x512xf32>
    %98 = arith.maximumf %96, %97 : vector<8x512xf32>
    %99 = arith.truncf %98 : vector<8x512xf32> to vector<8x512xbf16>
    %100 = vector.extract_strided_slice %14 {offsets = [96, 0], sizes = [8, 1024], strides = [1, 1]} : vector<208x1024xf32> to vector<8x1024xf32>
    %101 = vector.extract_strided_slice %14 {offsets = [104, 0], sizes = [8, 1024], strides = [1, 1]} : vector<208x1024xf32> to vector<8x1024xf32>
    %102 = vector.extract_strided_slice %100 {offsets = [0, 0], sizes = [8, 512], strides = [1, 1]} : vector<8x1024xf32> to vector<8x512xf32>
    %103 = vector.extract_strided_slice %100 {offsets = [0, 512], sizes = [8, 512], strides = [1, 1]} : vector<8x1024xf32> to vector<8x512xf32>
    %104 = arith.maximumf %102, %103 : vector<8x512xf32>
    %105 = vector.extract_strided_slice %101 {offsets = [0, 0], sizes = [8, 512], strides = [1, 1]} : vector<8x1024xf32> to vector<8x512xf32>
    %106 = vector.extract_strided_slice %101 {offsets = [0, 512], sizes = [8, 512], strides = [1, 1]} : vector<8x1024xf32> to vector<8x512xf32>
    %107 = arith.maximumf %105, %106 : vector<8x512xf32>
    %108 = arith.maximumf %104, %107 : vector<8x512xf32>
    %109 = vector.broadcast %15 : vector<1x512xf32> to vector<8x512xf32>
    %110 = arith.addf %108, %109 : vector<8x512xf32>
    %cst_18 = arith.constant 0.000000e+00 : f32
    %111 = vector.broadcast %cst_18 : f32 to vector<8x512xf32>
    %112 = arith.maximumf %110, %111 : vector<8x512xf32>
    %113 = arith.truncf %112 : vector<8x512xf32> to vector<8x512xbf16>
    %114 = vector.extract_strided_slice %14 {offsets = [112, 0], sizes = [8, 1024], strides = [1, 1]} : vector<208x1024xf32> to vector<8x1024xf32>
    %115 = vector.extract_strided_slice %14 {offsets = [120, 0], sizes = [8, 1024], strides = [1, 1]} : vector<208x1024xf32> to vector<8x1024xf32>
    %116 = vector.extract_strided_slice %114 {offsets = [0, 0], sizes = [8, 512], strides = [1, 1]} : vector<8x1024xf32> to vector<8x512xf32>
    %117 = vector.extract_strided_slice %114 {offsets = [0, 512], sizes = [8, 512], strides = [1, 1]} : vector<8x1024xf32> to vector<8x512xf32>
    %118 = arith.maximumf %116, %117 : vector<8x512xf32>
    %119 = vector.extract_strided_slice %115 {offsets = [0, 0], sizes = [8, 512], strides = [1, 1]} : vector<8x1024xf32> to vector<8x512xf32>
    %120 = vector.extract_strided_slice %115 {offsets = [0, 512], sizes = [8, 512], strides = [1, 1]} : vector<8x1024xf32> to vector<8x512xf32>
    %121 = arith.maximumf %119, %120 : vector<8x512xf32>
    %122 = arith.maximumf %118, %121 : vector<8x512xf32>
    %123 = vector.broadcast %15 : vector<1x512xf32> to vector<8x512xf32>
    %124 = arith.addf %122, %123 : vector<8x512xf32>
    %cst_19 = arith.constant 0.000000e+00 : f32
    %125 = vector.broadcast %cst_19 : f32 to vector<8x512xf32>
    %126 = arith.maximumf %124, %125 : vector<8x512xf32>
    %127 = arith.truncf %126 : vector<8x512xf32> to vector<8x512xbf16>
    %128 = vector.extract_strided_slice %14 {offsets = [128, 0], sizes = [8, 1024], strides = [1, 1]} : vector<208x1024xf32> to vector<8x1024xf32>
    %129 = vector.extract_strided_slice %14 {offsets = [136, 0], sizes = [8, 1024], strides = [1, 1]} : vector<208x1024xf32> to vector<8x1024xf32>
    %130 = vector.extract_strided_slice %128 {offsets = [0, 0], sizes = [8, 512], strides = [1, 1]} : vector<8x1024xf32> to vector<8x512xf32>
    %131 = vector.extract_strided_slice %128 {offsets = [0, 512], sizes = [8, 512], strides = [1, 1]} : vector<8x1024xf32> to vector<8x512xf32>
    %132 = arith.maximumf %130, %131 : vector<8x512xf32>
    %133 = vector.extract_strided_slice %129 {offsets = [0, 0], sizes = [8, 512], strides = [1, 1]} : vector<8x1024xf32> to vector<8x512xf32>
    %134 = vector.extract_strided_slice %129 {offsets = [0, 512], sizes = [8, 512], strides = [1, 1]} : vector<8x1024xf32> to vector<8x512xf32>
    %135 = arith.maximumf %133, %134 : vector<8x512xf32>
    %136 = arith.maximumf %132, %135 : vector<8x512xf32>
    %137 = vector.broadcast %15 : vector<1x512xf32> to vector<8x512xf32>
    %138 = arith.addf %136, %137 : vector<8x512xf32>
    %cst_20 = arith.constant 0.000000e+00 : f32
    %139 = vector.broadcast %cst_20 : f32 to vector<8x512xf32>
    %140 = arith.maximumf %138, %139 : vector<8x512xf32>
    %141 = arith.truncf %140 : vector<8x512xf32> to vector<8x512xbf16>
    %142 = vector.extract_strided_slice %14 {offsets = [144, 0], sizes = [8, 1024], strides = [1, 1]} : vector<208x1024xf32> to vector<8x1024xf32>
    %143 = vector.extract_strided_slice %14 {offsets = [152, 0], sizes = [8, 1024], strides = [1, 1]} : vector<208x1024xf32> to vector<8x1024xf32>
    %144 = vector.extract_strided_slice %142 {offsets = [0, 0], sizes = [8, 512], strides = [1, 1]} : vector<8x1024xf32> to vector<8x512xf32>
    %145 = vector.extract_strided_slice %142 {offsets = [0, 512], sizes = [8, 512], strides = [1, 1]} : vector<8x1024xf32> to vector<8x512xf32>
    %146 = arith.maximumf %144, %145 : vector<8x512xf32>
    %147 = vector.extract_strided_slice %143 {offsets = [0, 0], sizes = [8, 512], strides = [1, 1]} : vector<8x1024xf32> to vector<8x512xf32>
    %148 = vector.extract_strided_slice %143 {offsets = [0, 512], sizes = [8, 512], strides = [1, 1]} : vector<8x1024xf32> to vector<8x512xf32>
    %149 = arith.maximumf %147, %148 : vector<8x512xf32>
    %150 = arith.maximumf %146, %149 : vector<8x512xf32>
    %151 = vector.broadcast %15 : vector<1x512xf32> to vector<8x512xf32>
    %152 = arith.addf %150, %151 : vector<8x512xf32>
    %cst_21 = arith.constant 0.000000e+00 : f32
    %153 = vector.broadcast %cst_21 : f32 to vector<8x512xf32>
    %154 = arith.maximumf %152, %153 : vector<8x512xf32>
    %155 = arith.truncf %154 : vector<8x512xf32> to vector<8x512xbf16>
    %156 = vector.extract_strided_slice %14 {offsets = [160, 0], sizes = [8, 1024], strides = [1, 1]} : vector<208x1024xf32> to vector<8x1024xf32>
    %157 = vector.extract_strided_slice %14 {offsets = [168, 0], sizes = [8, 1024], strides = [1, 1]} : vector<208x1024xf32> to vector<8x1024xf32>
    %158 = vector.extract_strided_slice %156 {offsets = [0, 0], sizes = [8, 512], strides = [1, 1]} : vector<8x1024xf32> to vector<8x512xf32>
    %159 = vector.extract_strided_slice %156 {offsets = [0, 512], sizes = [8, 512], strides = [1, 1]} : vector<8x1024xf32> to vector<8x512xf32>
    %160 = arith.maximumf %158, %159 : vector<8x512xf32>
    %161 = vector.extract_strided_slice %157 {offsets = [0, 0], sizes = [8, 512], strides = [1, 1]} : vector<8x1024xf32> to vector<8x512xf32>
    %162 = vector.extract_strided_slice %157 {offsets = [0, 512], sizes = [8, 512], strides = [1, 1]} : vector<8x1024xf32> to vector<8x512xf32>
    %163 = arith.maximumf %161, %162 : vector<8x512xf32>
    %164 = arith.maximumf %160, %163 : vector<8x512xf32>
    %165 = vector.broadcast %15 : vector<1x512xf32> to vector<8x512xf32>
    %166 = arith.addf %164, %165 : vector<8x512xf32>
    %cst_22 = arith.constant 0.000000e+00 : f32
    %167 = vector.broadcast %cst_22 : f32 to vector<8x512xf32>
    %168 = arith.maximumf %166, %167 : vector<8x512xf32>
    %169 = arith.truncf %168 : vector<8x512xf32> to vector<8x512xbf16>
    %170 = vector.extract_strided_slice %14 {offsets = [176, 0], sizes = [8, 1024], strides = [1, 1]} : vector<208x1024xf32> to vector<8x1024xf32>
    %171 = vector.extract_strided_slice %14 {offsets = [184, 0], sizes = [8, 1024], strides = [1, 1]} : vector<208x1024xf32> to vector<8x1024xf32>
    %172 = vector.extract_strided_slice %170 {offsets = [0, 0], sizes = [8, 512], strides = [1, 1]} : vector<8x1024xf32> to vector<8x512xf32>
    %173 = vector.extract_strided_slice %170 {offsets = [0, 512], sizes = [8, 512], strides = [1, 1]} : vector<8x1024xf32> to vector<8x512xf32>
    %174 = arith.maximumf %172, %173 : vector<8x512xf32>
    %175 = vector.extract_strided_slice %171 {offsets = [0, 0], sizes = [8, 512], strides = [1, 1]} : vector<8x1024xf32> to vector<8x512xf32>
    %176 = vector.extract_strided_slice %171 {offsets = [0, 512], sizes = [8, 512], strides = [1, 1]} : vector<8x1024xf32> to vector<8x512xf32>
    %177 = arith.maximumf %175, %176 : vector<8x512xf32>
    %178 = arith.maximumf %174, %177 : vector<8x512xf32>
    %179 = vector.broadcast %15 : vector<1x512xf32> to vector<8x512xf32>
    %180 = arith.addf %178, %179 : vector<8x512xf32>
    %cst_23 = arith.constant 0.000000e+00 : f32
    %181 = vector.broadcast %cst_23 : f32 to vector<8x512xf32>
    %182 = arith.maximumf %180, %181 : vector<8x512xf32>
    %183 = arith.truncf %182 : vector<8x512xf32> to vector<8x512xbf16>
    %184 = vector.extract_strided_slice %14 {offsets = [192, 0], sizes = [8, 1024], strides = [1, 1]} : vector<208x1024xf32> to vector<8x1024xf32>
    %185 = vector.extract_strided_slice %14 {offsets = [200, 0], sizes = [8, 1024], strides = [1, 1]} : vector<208x1024xf32> to vector<8x1024xf32>
    %186 = vector.extract_strided_slice %184 {offsets = [0, 0], sizes = [8, 512], strides = [1, 1]} : vector<8x1024xf32> to vector<8x512xf32>
    %187 = vector.extract_strided_slice %184 {offsets = [0, 512], sizes = [8, 512], strides = [1, 1]} : vector<8x1024xf32> to vector<8x512xf32>
    %188 = arith.maximumf %186, %187 : vector<8x512xf32>
    %189 = vector.extract_strided_slice %185 {offsets = [0, 0], sizes = [8, 512], strides = [1, 1]} : vector<8x1024xf32> to vector<8x512xf32>
    %190 = vector.extract_strided_slice %185 {offsets = [0, 512], sizes = [8, 512], strides = [1, 1]} : vector<8x1024xf32> to vector<8x512xf32>
    %191 = arith.maximumf %189, %190 : vector<8x512xf32>
    %192 = arith.maximumf %188, %191 : vector<8x512xf32>
    %193 = vector.broadcast %15 : vector<1x512xf32> to vector<8x512xf32>
    %194 = arith.addf %192, %193 : vector<8x512xf32>
    %cst_24 = arith.constant 0.000000e+00 : f32
    %195 = vector.broadcast %cst_24 : f32 to vector<8x512xf32>
    %196 = arith.maximumf %194, %195 : vector<8x512xf32>
    %197 = arith.truncf %196 : vector<8x512xf32> to vector<8x512xbf16>
    %198 = tpu.concatenate %29, %43, %57, %71, %85, %99, %113, %127, %141, %155, %169, %183, %197 in 0 : vector<8x512xbf16>, vector<8x512xbf16>, vector<8x512xbf16>, vector<8x512xbf16>, vector<8x512xbf16>, vector<8x512xbf16>, vector<8x512xbf16>, vector<8x512xbf16>, vector<8x512xbf16>, vector<8x512xbf16>, vector<8x512xbf16>, vector<8x512xbf16>, vector<8x512xbf16> -> vector<104x512xbf16>
    %199 = vector.extract_strided_slice %198 {offsets = [0, 0], sizes = [80, 512], strides = [1, 1]} : vector<104x512xbf16> to vector<80x512xbf16>
    %c0_25 = arith.constant 0 : index
    %c0_26 = arith.constant 0 : index
    %c0_27 = arith.constant 0 : index
    %200 = vector.load %arg4[%c0_25, %c0_26, %c0_27] : memref<3x512x768xbf16, #tpu.memory_space<vmem>>, vector<1x512x768xbf16>
    %201 = vector.shape_cast %200 : vector<1x512x768xbf16> to vector<512x768xbf16>
    %cst_28 = arith.constant dense<0.000000e+00> : vector<80x768xf32>
    %202 = tpu.matmul %199, %201, %cst_28 {dimension_numbers = #tpu.dot_dimension_numbers<[1], [0], [0], [1], [0, 0, 1, 1], [], []>} : vector<80x512xbf16>, vector<512x768xbf16>, vector<80x768xf32> -> vector<80x768xf32>
    %203 = vector.extract_strided_slice %198 {offsets = [8, 0], sizes = [80, 512], strides = [1, 1]} : vector<104x512xbf16> to vector<80x512xbf16>
    %c1_29 = arith.constant 1 : index
    %c0_30 = arith.constant 0 : index
    %c0_31 = arith.constant 0 : index
    %204 = vector.load %arg4[%c1_29, %c0_30, %c0_31] : memref<3x512x768xbf16, #tpu.memory_space<vmem>>, vector<1x512x768xbf16>
    %205 = vector.shape_cast %204 : vector<1x512x768xbf16> to vector<512x768xbf16>
    %cst_32 = arith.constant dense<0.000000e+00> : vector<80x768xf32>
    %206 = tpu.matmul %203, %205, %cst_32 {dimension_numbers = #tpu.dot_dimension_numbers<[1], [0], [0], [1], [0, 0, 1, 1], [], []>} : vector<80x512xbf16>, vector<512x768xbf16>, vector<80x768xf32> -> vector<80x768xf32>
    %207 = arith.addf %202, %206 : vector<80x768xf32>
    %208 = vector.extract_strided_slice %198 {offsets = [16, 0], sizes = [80, 512], strides = [1, 1]} : vector<104x512xbf16> to vector<80x512xbf16>
    %c2_33 = arith.constant 2 : index
    %c0_34 = arith.constant 0 : index
    %c0_35 = arith.constant 0 : index
    %209 = vector.load %arg4[%c2_33, %c0_34, %c0_35] : memref<3x512x768xbf16, #tpu.memory_space<vmem>>, vector<1x512x768xbf16>
    %210 = vector.shape_cast %209 : vector<1x512x768xbf16> to vector<512x768xbf16>
    %cst_36 = arith.constant dense<0.000000e+00> : vector<80x768xf32>
    %211 = tpu.matmul %208, %210, %cst_36 {dimension_numbers = #tpu.dot_dimension_numbers<[1], [0], [0], [1], [0, 0, 1, 1], [], []>} : vector<80x512xbf16>, vector<512x768xbf16>, vector<80x768xf32> -> vector<80x768xf32>
    %212 = arith.addf %207, %211 : vector<80x768xf32>
    %c0_37 = arith.constant 0 : index
    %c0_38 = arith.constant 0 : index
    %213 = vector.load %arg5[%c0_37, %c0_38] : memref<1x384xf32, #tpu.memory_space<vmem>>, vector<1x384xf32>
    %214 = vector.extract_strided_slice %212 {offsets = [0, 0], sizes = [8, 768], strides = [1, 1]} : vector<80x768xf32> to vector<8x768xf32>
    %215 = vector.extract_strided_slice %212 {offsets = [8, 0], sizes = [8, 768], strides = [1, 1]} : vector<80x768xf32> to vector<8x768xf32>
    %216 = vector.extract_strided_slice %214 {offsets = [0, 0], sizes = [8, 384], strides = [1, 1]} : vector<8x768xf32> to vector<8x384xf32>
    %217 = vector.extract_strided_slice %214 {offsets = [0, 384], sizes = [8, 384], strides = [1, 1]} : vector<8x768xf32> to vector<8x384xf32>
    %218 = arith.maximumf %216, %217 : vector<8x384xf32>
    %219 = vector.extract_strided_slice %215 {offsets = [0, 0], sizes = [8, 384], strides = [1, 1]} : vector<8x768xf32> to vector<8x384xf32>
    %220 = vector.extract_strided_slice %215 {offsets = [0, 384], sizes = [8, 384], strides = [1, 1]} : vector<8x768xf32> to vector<8x384xf32>
    %221 = arith.maximumf %219, %220 : vector<8x384xf32>
    %222 = arith.maximumf %218, %221 : vector<8x384xf32>
    %223 = vector.broadcast %213 : vector<1x384xf32> to vector<8x384xf32>
    %224 = arith.addf %222, %223 : vector<8x384xf32>
    %cst_39 = arith.constant 0.000000e+00 : f32
    %225 = vector.broadcast %cst_39 : f32 to vector<8x384xf32>
    %226 = arith.maximumf %224, %225 : vector<8x384xf32>
    %227 = arith.truncf %226 : vector<8x384xf32> to vector<8x384xbf16>
    %228 = vector.extract_strided_slice %212 {offsets = [16, 0], sizes = [8, 768], strides = [1, 1]} : vector<80x768xf32> to vector<8x768xf32>
    %229 = vector.extract_strided_slice %212 {offsets = [24, 0], sizes = [8, 768], strides = [1, 1]} : vector<80x768xf32> to vector<8x768xf32>
    %230 = vector.extract_strided_slice %228 {offsets = [0, 0], sizes = [8, 384], strides = [1, 1]} : vector<8x768xf32> to vector<8x384xf32>
    %231 = vector.extract_strided_slice %228 {offsets = [0, 384], sizes = [8, 384], strides = [1, 1]} : vector<8x768xf32> to vector<8x384xf32>
    %232 = arith.maximumf %230, %231 : vector<8x384xf32>
    %233 = vector.extract_strided_slice %229 {offsets = [0, 0], sizes = [8, 384], strides = [1, 1]} : vector<8x768xf32> to vector<8x384xf32>
    %234 = vector.extract_strided_slice %229 {offsets = [0, 384], sizes = [8, 384], strides = [1, 1]} : vector<8x768xf32> to vector<8x384xf32>
    %235 = arith.maximumf %233, %234 : vector<8x384xf32>
    %236 = arith.maximumf %232, %235 : vector<8x384xf32>
    %237 = vector.broadcast %213 : vector<1x384xf32> to vector<8x384xf32>
    %238 = arith.addf %236, %237 : vector<8x384xf32>
    %cst_40 = arith.constant 0.000000e+00 : f32
    %239 = vector.broadcast %cst_40 : f32 to vector<8x384xf32>
    %240 = arith.maximumf %238, %239 : vector<8x384xf32>
    %241 = arith.truncf %240 : vector<8x384xf32> to vector<8x384xbf16>
    %242 = vector.extract_strided_slice %212 {offsets = [32, 0], sizes = [8, 768], strides = [1, 1]} : vector<80x768xf32> to vector<8x768xf32>
    %243 = vector.extract_strided_slice %212 {offsets = [40, 0], sizes = [8, 768], strides = [1, 1]} : vector<80x768xf32> to vector<8x768xf32>
    %244 = vector.extract_strided_slice %242 {offsets = [0, 0], sizes = [8, 384], strides = [1, 1]} : vector<8x768xf32> to vector<8x384xf32>
    %245 = vector.extract_strided_slice %242 {offsets = [0, 384], sizes = [8, 384], strides = [1, 1]} : vector<8x768xf32> to vector<8x384xf32>
    %246 = arith.maximumf %244, %245 : vector<8x384xf32>
    %247 = vector.extract_strided_slice %243 {offsets = [0, 0], sizes = [8, 384], strides = [1, 1]} : vector<8x768xf32> to vector<8x384xf32>
    %248 = vector.extract_strided_slice %243 {offsets = [0, 384], sizes = [8, 384], strides = [1, 1]} : vector<8x768xf32> to vector<8x384xf32>
    %249 = arith.maximumf %247, %248 : vector<8x384xf32>
    %250 = arith.maximumf %246, %249 : vector<8x384xf32>
    %251 = vector.broadcast %213 : vector<1x384xf32> to vector<8x384xf32>
    %252 = arith.addf %250, %251 : vector<8x384xf32>
    %cst_41 = arith.constant 0.000000e+00 : f32
    %253 = vector.broadcast %cst_41 : f32 to vector<8x384xf32>
    %254 = arith.maximumf %252, %253 : vector<8x384xf32>
    %255 = arith.truncf %254 : vector<8x384xf32> to vector<8x384xbf16>
    %256 = vector.extract_strided_slice %212 {offsets = [48, 0], sizes = [8, 768], strides = [1, 1]} : vector<80x768xf32> to vector<8x768xf32>
    %257 = vector.extract_strided_slice %212 {offsets = [56, 0], sizes = [8, 768], strides = [1, 1]} : vector<80x768xf32> to vector<8x768xf32>
    %258 = vector.extract_strided_slice %256 {offsets = [0, 0], sizes = [8, 384], strides = [1, 1]} : vector<8x768xf32> to vector<8x384xf32>
    %259 = vector.extract_strided_slice %256 {offsets = [0, 384], sizes = [8, 384], strides = [1, 1]} : vector<8x768xf32> to vector<8x384xf32>
    %260 = arith.maximumf %258, %259 : vector<8x384xf32>
    %261 = vector.extract_strided_slice %257 {offsets = [0, 0], sizes = [8, 384], strides = [1, 1]} : vector<8x768xf32> to vector<8x384xf32>
    %262 = vector.extract_strided_slice %257 {offsets = [0, 384], sizes = [8, 384], strides = [1, 1]} : vector<8x768xf32> to vector<8x384xf32>
    %263 = arith.maximumf %261, %262 : vector<8x384xf32>
    %264 = arith.maximumf %260, %263 : vector<8x384xf32>
    %265 = vector.broadcast %213 : vector<1x384xf32> to vector<8x384xf32>
    %266 = arith.addf %264, %265 : vector<8x384xf32>
    %cst_42 = arith.constant 0.000000e+00 : f32
    %267 = vector.broadcast %cst_42 : f32 to vector<8x384xf32>
    %268 = arith.maximumf %266, %267 : vector<8x384xf32>
    %269 = arith.truncf %268 : vector<8x384xf32> to vector<8x384xbf16>
    %270 = vector.extract_strided_slice %212 {offsets = [64, 0], sizes = [8, 768], strides = [1, 1]} : vector<80x768xf32> to vector<8x768xf32>
    %271 = vector.extract_strided_slice %212 {offsets = [72, 0], sizes = [8, 768], strides = [1, 1]} : vector<80x768xf32> to vector<8x768xf32>
    %272 = vector.extract_strided_slice %270 {offsets = [0, 0], sizes = [8, 384], strides = [1, 1]} : vector<8x768xf32> to vector<8x384xf32>
    %273 = vector.extract_strided_slice %270 {offsets = [0, 384], sizes = [8, 384], strides = [1, 1]} : vector<8x768xf32> to vector<8x384xf32>
    %274 = arith.maximumf %272, %273 : vector<8x384xf32>
    %275 = vector.extract_strided_slice %271 {offsets = [0, 0], sizes = [8, 384], strides = [1, 1]} : vector<8x768xf32> to vector<8x384xf32>
    %276 = vector.extract_strided_slice %271 {offsets = [0, 384], sizes = [8, 384], strides = [1, 1]} : vector<8x768xf32> to vector<8x384xf32>
    %277 = arith.maximumf %275, %276 : vector<8x384xf32>
    %278 = arith.maximumf %274, %277 : vector<8x384xf32>
    %279 = vector.broadcast %213 : vector<1x384xf32> to vector<8x384xf32>
    %280 = arith.addf %278, %279 : vector<8x384xf32>
    %cst_43 = arith.constant 0.000000e+00 : f32
    %281 = vector.broadcast %cst_43 : f32 to vector<8x384xf32>
    %282 = arith.maximumf %280, %281 : vector<8x384xf32>
    %283 = arith.truncf %282 : vector<8x384xf32> to vector<8x384xbf16>
    %284 = tpu.concatenate %227, %241, %255, %269, %283 in 0 : vector<8x384xbf16>, vector<8x384xbf16>, vector<8x384xbf16>, vector<8x384xbf16>, vector<8x384xbf16> -> vector<40x384xbf16>
    %285 = vector.extract_strided_slice %284 {offsets = [0, 0], sizes = [24, 384], strides = [1, 1]} : vector<40x384xbf16> to vector<24x384xbf16>
    %c0_44 = arith.constant 0 : index
    %c0_45 = arith.constant 0 : index
    %c0_46 = arith.constant 0 : index
    %286 = vector.load %arg6[%c0_44, %c0_45, %c0_46] : memref<3x384x192xbf16, #tpu.memory_space<vmem>>, vector<1x384x192xbf16>
    %287 = vector.shape_cast %286 : vector<1x384x192xbf16> to vector<384x192xbf16>
    %cst_47 = arith.constant dense<0.000000e+00> : vector<24x192xf32>
    %288 = tpu.matmul %285, %287, %cst_47 {dimension_numbers = #tpu.dot_dimension_numbers<[1], [0], [0], [1], [0, 0, 1, 1], [], []>} : vector<24x384xbf16>, vector<384x192xbf16>, vector<24x192xf32> -> vector<24x192xf32>
    %289 = vector.extract_strided_slice %284 {offsets = [8, 0], sizes = [24, 384], strides = [1, 1]} : vector<40x384xbf16> to vector<24x384xbf16>
    %c1_48 = arith.constant 1 : index
    %c0_49 = arith.constant 0 : index
    %c0_50 = arith.constant 0 : index
    %290 = vector.load %arg6[%c1_48, %c0_49, %c0_50] : memref<3x384x192xbf16, #tpu.memory_space<vmem>>, vector<1x384x192xbf16>
    %291 = vector.shape_cast %290 : vector<1x384x192xbf16> to vector<384x192xbf16>
    %cst_51 = arith.constant dense<0.000000e+00> : vector<24x192xf32>
    %292 = tpu.matmul %289, %291, %cst_51 {dimension_numbers = #tpu.dot_dimension_numbers<[1], [0], [0], [1], [0, 0, 1, 1], [], []>} : vector<24x384xbf16>, vector<384x192xbf16>, vector<24x192xf32> -> vector<24x192xf32>
    %293 = arith.addf %288, %292 : vector<24x192xf32>
    %294 = vector.extract_strided_slice %284 {offsets = [16, 0], sizes = [24, 384], strides = [1, 1]} : vector<40x384xbf16> to vector<24x384xbf16>
    %c2_52 = arith.constant 2 : index
    %c0_53 = arith.constant 0 : index
    %c0_54 = arith.constant 0 : index
    %295 = vector.load %arg6[%c2_52, %c0_53, %c0_54] : memref<3x384x192xbf16, #tpu.memory_space<vmem>>, vector<1x384x192xbf16>
    %296 = vector.shape_cast %295 : vector<1x384x192xbf16> to vector<384x192xbf16>
    %cst_55 = arith.constant dense<0.000000e+00> : vector<24x192xf32>
    %297 = tpu.matmul %294, %296, %cst_55 {dimension_numbers = #tpu.dot_dimension_numbers<[1], [0], [0], [1], [0, 0, 1, 1], [], []>} : vector<24x384xbf16>, vector<384x192xbf16>, vector<24x192xf32> -> vector<24x192xf32>
    %298 = arith.addf %293, %297 : vector<24x192xf32>
    %c0_56 = arith.constant 0 : index
    %c0_57 = arith.constant 0 : index
    %299 = vector.load %arg7[%c0_56, %c0_57] : memref<1x192xf32, #tpu.memory_space<vmem>>, vector<1x192xf32>
    %300 = vector.broadcast %299 : vector<1x192xf32> to vector<24x192xf32>
    %301 = arith.addf %298, %300 : vector<24x192xf32>
    %cst_58 = arith.constant 0.000000e+00 : f32
    %302 = vector.broadcast %cst_58 : f32 to vector<24x192xf32>
    %303 = arith.maximumf %301, %302 : vector<24x192xf32>
    %304 = arith.truncf %303 : vector<24x192xf32> to vector<24x192xbf16>
    %305 = vector.extract_strided_slice %304 {offsets = [0, 0], sizes = [8, 192], strides = [1, 1]} : vector<24x192xbf16> to vector<8x192xbf16>
    %c0_59 = arith.constant 0 : index
    %c0_60 = arith.constant 0 : index
    %306 = vector.load %arg8[%c0_59, %c0_60] : memref<576x128xbf16, #tpu.memory_space<vmem>>, vector<192x128xbf16>
    %cst_61 = arith.constant dense<0.000000e+00> : vector<8x128xf32>
    %307 = tpu.matmul %305, %306, %cst_61 {dimension_numbers = #tpu.dot_dimension_numbers<[1], [0], [0], [1], [0, 0, 1, 1], [], []>} : vector<8x192xbf16>, vector<192x128xbf16>, vector<8x128xf32> -> vector<8x128xf32>
    %308 = vector.extract_strided_slice %304 {offsets = [8, 0], sizes = [8, 192], strides = [1, 1]} : vector<24x192xbf16> to vector<8x192xbf16>
    %c192 = arith.constant 192 : index
    %c0_62 = arith.constant 0 : index
    %309 = vector.load %arg8[%c192, %c0_62] : memref<576x128xbf16, #tpu.memory_space<vmem>>, vector<192x128xbf16>
    %cst_63 = arith.constant dense<0.000000e+00> : vector<8x128xf32>
    %310 = tpu.matmul %308, %309, %cst_63 {dimension_numbers = #tpu.dot_dimension_numbers<[1], [0], [0], [1], [0, 0, 1, 1], [], []>} : vector<8x192xbf16>, vector<192x128xbf16>, vector<8x128xf32> -> vector<8x128xf32>
    %311 = arith.addf %307, %310 : vector<8x128xf32>
    %312 = vector.extract_strided_slice %304 {offsets = [16, 0], sizes = [8, 192], strides = [1, 1]} : vector<24x192xbf16> to vector<8x192xbf16>
    %c384 = arith.constant 384 : index
    %c0_64 = arith.constant 0 : index
    %313 = vector.load %arg8[%c384, %c0_64] : memref<576x128xbf16, #tpu.memory_space<vmem>>, vector<192x128xbf16>
    %cst_65 = arith.constant dense<0.000000e+00> : vector<8x128xf32>
    %314 = tpu.matmul %312, %313, %cst_65 {dimension_numbers = #tpu.dot_dimension_numbers<[1], [0], [0], [1], [0, 0, 1, 1], [], []>} : vector<8x192xbf16>, vector<192x128xbf16>, vector<8x128xf32> -> vector<8x128xf32>
    %315 = arith.addf %311, %314 : vector<8x128xf32>
    %c0_66 = arith.constant 0 : index
    %c0_67 = arith.constant 0 : index
    %316 = vector.load %arg9[%c0_66, %c0_67] : memref<1x128xf32, #tpu.memory_space<vmem>>, vector<1x128xf32>
    %317 = vector.broadcast %316 : vector<1x128xf32> to vector<8x128xf32>
    %318 = arith.addf %315, %317 : vector<8x128xf32>
    %cst_68 = arith.constant 0.000000e+00 : f32
    %319 = vector.broadcast %cst_68 : f32 to vector<8x128xf32>
    %320 = arith.maximumf %318, %319 : vector<8x128xf32>
    %321 = arith.truncf %320 : vector<8x128xf32> to vector<8x128xbf16>
    %c0_69 = arith.constant 0 : index
    %c0_70 = arith.constant 0 : index
    %322 = vector.load %arg10[%c0_69, %c0_70] : memref<128x10xbf16, #tpu.memory_space<vmem>>, vector<128x10xbf16>
    %cst_71 = arith.constant dense<0.000000e+00> : vector<8x10xf32>
    %323 = tpu.matmul %321, %322, %cst_71 {dimension_numbers = #tpu.dot_dimension_numbers<[1], [0], [0], [1], [0, 0, 1, 1], [], []>} : vector<8x128xbf16>, vector<128x10xbf16>, vector<8x10xf32> -> vector<8x10xf32>
    %c0_72 = arith.constant 0 : index
    %c0_73 = arith.constant 0 : index
    %324 = vector.load %arg11[%c0_72, %c0_73] : memref<1x10xf32, #tpu.memory_space<vmem>>, vector<1x10xf32>
    %325 = vector.broadcast %324 : vector<1x10xf32> to vector<8x10xf32>
    %326 = arith.addf %323, %325 : vector<8x10xf32>
    %cst_74 = arith.constant dense<0xFF800000> : vector<8xf32>
    %327 = vector.multi_reduction <maximumf>, %326, %cst_74 [1] : vector<8x10xf32> to vector<8xf32>
    %328 = vector.shape_cast %327 : vector<8xf32> to vector<8x1xf32>
    %329 = vector.broadcast %328 : vector<8x1xf32> to vector<8x10xf32>
    %330 = arith.subf %326, %329 : vector<8x10xf32>
    %331 = math.exp %330 : vector<8x10xf32>
    %cst_75 = arith.constant dense<0.000000e+00> : vector<8xf32>
    %332 = vector.multi_reduction <add>, %331, %cst_75 [1] : vector<8x10xf32> to vector<8xf32>
    %333 = vector.shape_cast %332 : vector<8xf32> to vector<8x1xf32>
    %334 = tpu.reciprocal %333 {approx = true} : vector<8x1xf32> -> vector<8x1xf32>
    %335 = vector.broadcast %334 : vector<8x1xf32> to vector<8x10xf32>
    %336 = arith.mulf %331, %335 : vector<8x10xf32>
    %c0_76 = arith.constant 0 : index
    %c0_77 = arith.constant 0 : index
    %337 = vector.load %arg12[%c0_76, %c0_77] : memref<8x10xf32, #tpu.memory_space<vmem>>, vector<8x10xf32>
    tpu.vector_store %arg12[%c0_76, %c0_77], %336 {strides = array<i32>} : memref<8x10xf32, #tpu.memory_space<vmem>>, vector<8x10xf32>,
    return
  }
  func.func @transform_0(%arg0: i32) -> (i32, i32) {
    %c0_i32 = arith.constant 0 : i32
    %c0_i32_0 = arith.constant 0 : i32
    return %arg0, %c0_i32 : i32, i32
  }
  func.func @transform_1(%arg0: i32) -> (i32, i32, i32) {
    %c0_i32 = arith.constant 0 : i32
    %c0_i32_0 = arith.constant 0 : i32
    %c0_i32_1 = arith.constant 0 : i32
    %c0_i32_2 = arith.constant 0 : i32
    return %c0_i32, %c0_i32_0, %c0_i32_1 : i32, i32, i32
  }
  func.func @transform_2(%arg0: i32) -> (i32, i32) {
    %c0_i32 = arith.constant 0 : i32
    %c0_i32_0 = arith.constant 0 : i32
    %c0_i32_1 = arith.constant 0 : i32
    return %c0_i32, %c0_i32_0 : i32, i32
  }
  func.func @transform_3(%arg0: i32) -> (i32, i32, i32) {
    %c0_i32 = arith.constant 0 : i32
    %c0_i32_0 = arith.constant 0 : i32
    %c0_i32_1 = arith.constant 0 : i32
    %c0_i32_2 = arith.constant 0 : i32
    return %c0_i32, %c0_i32_0, %c0_i32_1 : i32, i32, i32
  }
  func.func @transform_4(%arg0: i32) -> (i32, i32) {
    %c0_i32 = arith.constant 0 : i32
    %c0_i32_0 = arith.constant 0 : i32
    %c0_i32_1 = arith.constant 0 : i32
    return %c0_i32, %c0_i32_0 : i32, i32
  }
  func.func @transform_5(%arg0: i32) -> (i32, i32, i32) {
    %c0_i32 = arith.constant 0 : i32
    %c0_i32_0 = arith.constant 0 : i32
    %c0_i32_1 = arith.constant 0 : i32
    %c0_i32_2 = arith.constant 0 : i32
    return %c0_i32, %c0_i32_0, %c0_i32_1 : i32, i32, i32
  }
  func.func @transform_6(%arg0: i32) -> (i32, i32) {
    %c0_i32 = arith.constant 0 : i32
    %c0_i32_0 = arith.constant 0 : i32
    %c0_i32_1 = arith.constant 0 : i32
    return %c0_i32, %c0_i32_0 : i32, i32
  }
  func.func @transform_7(%arg0: i32) -> (i32, i32) {
    %c0_i32 = arith.constant 0 : i32
    %c0_i32_0 = arith.constant 0 : i32
    %c0_i32_1 = arith.constant 0 : i32
    return %c0_i32, %c0_i32_0 : i32, i32
  }
  func.func @transform_8(%arg0: i32) -> (i32, i32) {
    %c0_i32 = arith.constant 0 : i32
    %c0_i32_0 = arith.constant 0 : i32
    %c0_i32_1 = arith.constant 0 : i32
    return %c0_i32, %c0_i32_0 : i32, i32
  }
  func.func @transform_9(%arg0: i32) -> (i32, i32) {
    %c0_i32 = arith.constant 0 : i32
    %c0_i32_0 = arith.constant 0 : i32
    %c0_i32_1 = arith.constant 0 : i32
    return %c0_i32, %c0_i32_0 : i32, i32
  }
  func.func @transform_10(%arg0: i32) -> (i32, i32) {
    %c0_i32 = arith.constant 0 : i32
    %c0_i32_0 = arith.constant 0 : i32
    %c0_i32_1 = arith.constant 0 : i32
    return %c0_i32, %c0_i32_0 : i32, i32
  }
  func.func @transform_11(%arg0: i32) -> (i32, i32) {
    %c0_i32 = arith.constant 0 : i32
    %c0_i32_0 = arith.constant 0 : i32
    return %arg0, %c0_i32 : i32, i32
  }
}

</mosaic_0001>

<llo_original>
// kernel: net_forward.1
$region0: #{net_forward.1}
  #allocation0 [shape = 'u32[]', space=smem, size = 0x4, offset = 0x4, fixed_abs, tag = 'smem constant byte address 0x4 - core index']
  #allocation1 [shape = 'u32[144,128]{1,0:T(1,128)}', space=vmem, size = 0x12000, scoped, tag = 'internal scratch']
  %s0 = inlined_call_operand.vmem [shape: bf16[448,28], index: 0, kind: input, shape index: {}]
  %s1 = inlined_call_operand.hbm [shape: bf16[3,28,1024], index: 1, kind: input, shape index: {}]
  %s2 = inlined_call_operand.hbm [shape: f32[1,512], index: 2, kind: input, shape index: {}]
  %s3 = inlined_call_operand.hbm [shape: bf16[3,512,768], index: 3, kind: input, shape index: {}]
  %s4 = inlined_call_operand.hbm [shape: f32[1,384], index: 4, kind: input, shape index: {}]
  %s5 = inlined_call_operand.vmem [shape: bf16[3,384,192], index: 5, kind: input, shape index: {}]
  %s6 = inlined_call_operand.hbm [shape: f32[1,192], index: 6, kind: input, shape index: {}]
  %s7 = inlined_call_operand.hbm [shape: bf16[576,128], index: 7, kind: input, shape index: {}]
  %s8 = inlined_call_operand.hbm [shape: f32[1,128], index: 8, kind: input, shape index: {}]
  %s9 = inlined_call_operand.vmem [shape: bf16[128,10], index: 9, kind: input, shape index: {}]
  %s10 = inlined_call_operand.hbm [shape: f32[1,10], index: 10, kind: input, shape index: {}]
  %s11 = inlined_call_operand.hbm [shape: f32[16,10], index: 11, kind: output, shape index: {}]
  %s12 = sld [smem:[#allocation0]]
  $region109: #{net_forward.1} parent=0
    _
  %s14 = ssub.s32 1, %s12
  %s15 = scalar_select 0, %s14, %s12
  $region1: #{net_forward.1} parent=0
    #allocation2 [shape = 'u8[196608]{0}', space=vmem, size = 0x30000, scoped, tag = 'input window, operand 1, single buffered']
    #allocation3 [shape = 's32[2]{0}', space=sflag, size = 0x8, scoped, tag = 'scoped memory for net_forward.1']
    #allocation4 [shape = 's32[2]{0}', space=sflag, size = 0x8, scoped, tag = 'scoped memory for net_forward.1']
    #allocation5 [shape = 'u8[2048]{0}', space=vmem, size = 0x800, scoped, tag = 'input window, operand 2, single buffered']
    #allocation6 [shape = 's32[1]{0}', space=sflag, size = 0x4, scoped, tag = 'scoped memory for net_forward.1']
    #allocation7 [shape = 'u8[2359296]{0}', space=vmem, size = 0x240000, scoped, tag = 'input window, operand 3, single buffered']
    #allocation8 [shape = 'u8[1536]{0}', space=vmem, size = 0x800, scoped, tag = 'input window, operand 4, single buffered']
    #allocation9 [shape = 's32[1]{0}', space=sflag, size = 0x4, scoped, tag = 'scoped memory for net_forward.1']
    #allocation10 [shape = 'u8[1024]{0}', space=vmem, size = 0x400, scoped, tag = 'input window, operand 6, single buffered']
    #allocation11 [shape = 'u8[147456]{0}', space=vmem, size = 0x24000, scoped, tag = 'input window, operand 7, single buffered']
    #allocation12 [shape = 's32[1]{0}', space=sflag, size = 0x4, scoped, tag = 'scoped memory for net_forward.1']
    #allocation13 [shape = 'u8[512]{0}', space=vmem, size = 0x400, scoped, tag = 'input window, operand 8, single buffered']
    #allocation14 [shape = 'u8[512]{0}', space=vmem, size = 0x400, scoped, tag = 'input window, operand 10, single buffered']
    #allocation15 [shape = 's32[1]{0}', space=sflag, size = 0x4, scoped, tag = 'scoped memory for net_forward.1']
    #allocation16 [shape = 'u8[8192]{0}', space=vmem, size = 0x2000, scoped, tag = 'output window, operand 0']
    %16 = vsyncpa [#allocation3], 0
    %17 = vsyncpa [#allocation6], 0
    %18 = vsyncpa [#allocation9], 0
    %19 = vsyncpa [#allocation12], 0
    %20 = vsyncpa [#allocation15], 0
    %21 = vsyncpa [#allocation4], 0
    %s22 = scalar_lea.sflag [#allocation4], 1
    %23 = vsyncpa %s22, 0
    loop: start=0, step=1, limit=4
    $region2: #{net_forward.1} parent=1 // loop_pre_header
      _
    $region3: #{net_forward.1} parent=1 // loop_header
      %s25 = sphi 0, %s29
      %p26 = scmp.ge.s32.totalorder %s25, 4
      %s35 = sphi 0, %s37
      %s38 = sphi 0, %s35
      %s39 = sphi 0, %s38
      %s55 = sphi 0, %s39
      %s59 = sphi 0, %s59
      %s61 = sphi 0, %s59
      %s62 = sphi 0, %s61
      %s76 = sphi 0, %s62
      %s80 = sphi 0, %s80
      %s82 = sphi 0, %s80
      %s83 = sphi 0, %s82
      %s97 = sphi 0, %s83
      %s101 = sphi 0, %s101
      %s103 = sphi 0, %s101
      %s104 = sphi 0, %s103
      %s118 = sphi 0, %s104
      %s122 = sphi 0, %s122
      %s124 = sphi 0, %s122
      %s125 = sphi 0, %s124
      %s139 = sphi 0, %s125
      %s143 = sphi 0, %s143
      %s145 = sphi 0, %s143
      %s146 = sphi 0, %s145
      %s160 = sphi 0, %s146
      %s164 = sphi 0, %s164
      %s166 = sphi 0, %s164
      %s167 = sphi 0, %s166
      %s181 = sphi 0, %s167
      %s185 = sphi 0, %s185
      %s187 = sphi 0, %s185
      %s188 = sphi 0, %s187
      %s202 = sphi 0, %s188
      %s206 = sphi 0, %s206
      %s208 = sphi 0, %s206
      %s209 = sphi 0, %s208
      %s223 = sphi 0, %s209
      %s227 = sphi 0, %s227
      %s229 = sphi 0, %s227
      %s230 = sphi 0, %s229
      %s244 = sphi 0, %s230
      %s248 = sphi 0, %s248
      %s250 = sphi 0, %s248
      %s251 = sphi 0, %s250
      %s265 = sphi 0, %s251
      %s271 = sphi 0, %s273
      %s274 = sphi 0, %s271
      %s275 = sphi 0, %s274
      %s291 = sphi 0, %s275
    $region4: #{net_forward.1} parent=1 // loop_header_branch
      %28 = sbr.rel (%p26) target = $region8
    $region5: #{net_forward.1} parent=1 // loop_body
      %s30 = ssub.s32 %s25, 1
      %s31 = ssub.s32 %s25, 2
      %s32 = sadd.s32 %s25, 1
      %s33 = ssub.s32 %s25, %s32
      %p34 = scmp.eq.s32.totalorder %s33, 0
      %s36 = sadd.s32 %s35, 1
      %s37 = scalar_select %p34, %s35, %s36
      %p40 = pneg %p34
      %p41 = scmp.eq.s32.totalorder %s25, 1
      %p42 = por %p40, %p41
      %p43 = scmp.ne.s32.totalorder %s35, %s38
      %p44 = scmp.eq.s32.totalorder %s25, 0
      %p45 = por %p43, %p44
      %p46 = scmp.ne.s32.totalorder %s35, %s38
      %p47 = scmp.eq.s32.totalorder %s30, 1
      %p48 = por %p46, %p47
      %p49 = scmp.ne.s32.totalorder %s38, %s39
      %p50 = scmp.eq.s32.totalorder %s30, 0
      %p51 = por %p49, %p50
      %p52 = scmp.ne.s32.totalorder %s38, %s39
      %p53 = scmp.eq.s32.totalorder %s31, 1
      %p54 = por %p52, %p53
      %p56 = scmp.ne.s32.totalorder %s39, %s55
      %p57 = scmp.eq.s32.totalorder %s31, 0
      %p58 = por %p56, %p57
      %s60 = sadd.s32 %s59, 1
      %p63 = scmp.eq.s32.totalorder %s25, 1
      %p64 = scmp.ne.s32.totalorder %s59, %s61
      %p65 = scmp.eq.s32.totalorder %s25, 0
      %p66 = por %p64, %p65
      %p67 = scmp.ne.s32.totalorder %s59, %s61
      %p68 = scmp.eq.s32.totalorder %s30, 1
      %p69 = por %p67, %p68
      %p70 = scmp.ne.s32.totalorder %s61, %s62
      %p71 = scmp.eq.s32.totalorder %s30, 0
      %p72 = por %p70, %p71
      %p73 = scmp.ne.s32.totalorder %s61, %s62
      %p74 = scmp.eq.s32.totalorder %s31, 1
      %p75 = por %p73, %p74
      %p77 = scmp.ne.s32.totalorder %s62, %s76
      %p78 = scmp.eq.s32.totalorder %s31, 0
      %p79 = por %p77, %p78
      %s81 = sadd.s32 %s80, 1
      %p84 = scmp.eq.s32.totalorder %s25, 1
      %p85 = scmp.ne.s32.totalorder %s80, %s82
      %p86 = scmp.eq.s32.totalorder %s25, 0
      %p87 = por %p85, %p86
      %p88 = scmp.ne.s32.totalorder %s80, %s82
      %p89 = scmp.eq.s32.totalorder %s30, 1
      %p90 = por %p88, %p89
      %p91 = scmp.ne.s32.totalorder %s82, %s83
      %p92 = scmp.eq.s32.totalorder %s30, 0
      %p93 = por %p91, %p92
      %p94 = scmp.ne.s32.totalorder %s82, %s83
      %p95 = scmp.eq.s32.totalorder %s31, 1
      %p96 = por %p94, %p95
      %p98 = scmp.ne.s32.totalorder %s83, %s97
      %p99 = scmp.eq.s32.totalorder %s31, 0
      %p100 = por %p98, %p99
      %s102 = sadd.s32 %s101, 1
      %p105 = scmp.eq.s32.totalorder %s25, 1
      %p106 = scmp.ne.s32.totalorder %s101, %s103
      %p107 = scmp.eq.s32.totalorder %s25, 0
      %p108 = por %p106, %p107
      %p109 = scmp.ne.s32.totalorder %s101, %s103
      %p110 = scmp.eq.s32.totalorder %s30, 1
      %p111 = por %p109, %p110
      %p112 = scmp.ne.s32.totalorder %s103, %s104
      %p113 = scmp.eq.s32.totalorder %s30, 0
      %p114 = por %p112, %p113
      %p115 = scmp.ne.s32.totalorder %s103, %s104
      %p116 = scmp.eq.s32.totalorder %s31, 1
      %p117 = por %p115, %p116
      %p119 = scmp.ne.s32.totalorder %s104, %s118
      %p120 = scmp.eq.s32.totalorder %s31, 0
      %p121 = por %p119, %p120
      %s123 = sadd.s32 %s122, 1
      %p126 = scmp.eq.s32.totalorder %s25, 1
      %p127 = scmp.ne.s32.totalorder %s122, %s124
      %p128 = scmp.eq.s32.totalorder %s25, 0
      %p129 = por %p127, %p128
      %p130 = scmp.ne.s32.totalorder %s122, %s124
      %p131 = scmp.eq.s32.totalorder %s30, 1
      %p132 = por %p130, %p131
      %p133 = scmp.ne.s32.totalorder %s124, %s125
      %p134 = scmp.eq.s32.totalorder %s30, 0
      %p135 = por %p133, %p134
      %p136 = scmp.ne.s32.totalorder %s124, %s125
      %p137 = scmp.eq.s32.totalorder %s31, 1
      %p138 = por %p136, %p137
      %p140 = scmp.ne.s32.totalorder %s125, %s139
      %p141 = scmp.eq.s32.totalorder %s31, 0
      %p142 = por %p140, %p141
      %s144 = sadd.s32 %s143, 1
      %p147 = scmp.eq.s32.totalorder %s25, 1
      %p148 = scmp.ne.s32.totalorder %s143, %s145
      %p149 = scmp.eq.s32.totalorder %s25, 0
      %p150 = por %p148, %p149
      %p151 = scmp.ne.s32.totalorder %s143, %s145
      %p152 = scmp.eq.s32.totalorder %s30, 1
      %p153 = por %p151, %p152
      %p154 = scmp.ne.s32.totalorder %s145, %s146
      %p155 = scmp.eq.s32.totalorder %s30, 0
      %p156 = por %p154, %p155
      %p157 = scmp.ne.s32.totalorder %s145, %s146
      %p158 = scmp.eq.s32.totalorder %s31, 1
      %p159 = por %p157, %p158
      %p161 = scmp.ne.s32.totalorder %s146, %s160
      %p162 = scmp.eq.s32.totalorder %s31, 0
      %p163 = por %p161, %p162
      %s165 = sadd.s32 %s164, 1
      %p168 = scmp.eq.s32.totalorder %s25, 1
      %p169 = scmp.ne.s32.totalorder %s164, %s166
      %p170 = scmp.eq.s32.totalorder %s25, 0
      %p171 = por %p169, %p170
      %p172 = scmp.ne.s32.totalorder %s164, %s166
      %p173 = scmp.eq.s32.totalorder %s30, 1
      %p174 = por %p172, %p173
      %p175 = scmp.ne.s32.totalorder %s166, %s167
      %p176 = scmp.eq.s32.totalorder %s30, 0
      %p177 = por %p175, %p176
      %p178 = scmp.ne.s32.totalorder %s166, %s167
      %p179 = scmp.eq.s32.totalorder %s31, 1
      %p180 = por %p178, %p179
      %p182 = scmp.ne.s32.totalorder %s167, %s181
      %p183 = scmp.eq.s32.totalorder %s31, 0
      %p184 = por %p182, %p183
      %s186 = sadd.s32 %s185, 1
      %p189 = scmp.eq.s32.totalorder %s25, 1
      %p190 = scmp.ne.s32.totalorder %s185, %s187
      %p191 = scmp.eq.s32.totalorder %s25, 0
      %p192 = por %p190, %p191
      %p193 = scmp.ne.s32.totalorder %s185, %s187
      %p194 = scmp.eq.s32.totalorder %s30, 1
      %p195 = por %p193, %p194
      %p196 = scmp.ne.s32.totalorder %s187, %s188
      %p197 = scmp.eq.s32.totalorder %s30, 0
      %p198 = por %p196, %p197
      %p199 = scmp.ne.s32.totalorder %s187, %s188
      %p200 = scmp.eq.s32.totalorder %s31, 1
      %p201 = por %p199, %p200
      %p203 = scmp.ne.s32.totalorder %s188, %s202
      %p204 = scmp.eq.s32.totalorder %s31, 0
      %p205 = por %p203, %p204
      %s207 = sadd.s32 %s206, 1
      %p210 = scmp.eq.s32.totalorder %s25, 1
      %p211 = scmp.ne.s32.totalorder %s206, %s208
      %p212 = scmp.eq.s32.totalorder %s25, 0
      %p213 = por %p211, %p212
      %p214 = scmp.ne.s32.totalorder %s206, %s208
      %p215 = scmp.eq.s32.totalorder %s30, 1
      %p216 = por %p214, %p215
      %p217 = scmp.ne.s32.totalorder %s208, %s209
      %p218 = scmp.eq.s32.totalorder %s30, 0
      %p219 = por %p217, %p218
      %p220 = scmp.ne.s32.totalorder %s208, %s209
      %p221 = scmp.eq.s32.totalorder %s31, 1
      %p222 = por %p220, %p221
      %p224 = scmp.ne.s32.totalorder %s209, %s223
      %p225 = scmp.eq.s32.totalorder %s31, 0
      %p226 = por %p224, %p225
      %s228 = sadd.s32 %s227, 1
      %p231 = scmp.eq.s32.totalorder %s25, 1
      %p232 = scmp.ne.s32.totalorder %s227, %s229
      %p233 = scmp.eq.s32.totalorder %s25, 0
      %p234 = por %p232, %p233
      %p235 = scmp.ne.s32.totalorder %s227, %s229
      %p236 = scmp.eq.s32.totalorder %s30, 1
      %p237 = por %p235, %p236
      %p238 = scmp.ne.s32.totalorder %s229, %s230
      %p239 = scmp.eq.s32.totalorder %s30, 0
      %p240 = por %p238, %p239
      %p241 = scmp.ne.s32.totalorder %s229, %s230
      %p242 = scmp.eq.s32.totalorder %s31, 1
      %p243 = por %p241, %p242
      %p245 = scmp.ne.s32.totalorder %s230, %s244
      %p246 = scmp.eq.s32.totalorder %s31, 0
      %p247 = por %p245, %p246
      %s249 = sadd.s32 %s248, 1
      %p252 = scmp.eq.s32.totalorder %s25, 1
      %p253 = scmp.ne.s32.totalorder %s248, %s250
      %p254 = scmp.eq.s32.totalorder %s25, 0
      %p255 = por %p253, %p254
      %p256 = scmp.ne.s32.totalorder %s248, %s250
      %p257 = scmp.eq.s32.totalorder %s30, 1
      %p258 = por %p256, %p257
      %p259 = scmp.ne.s32.totalorder %s250, %s251
      %p260 = scmp.eq.s32.totalorder %s30, 0
      %p261 = por %p259, %p260
      %p262 = scmp.ne.s32.totalorder %s250, %s251
      %p263 = scmp.eq.s32.totalorder %s31, 1
      %p264 = por %p262, %p263
      %p266 = scmp.ne.s32.totalorder %s251, %s265
      %p267 = scmp.eq.s32.totalorder %s31, 0
      %p268 = por %p266, %p267
      %s269 = ssub.s32 %s25, %s32
      %p270 = scmp.eq.s32.totalorder %s269, 0
      %s272 = sadd.s32 %s271, 1
      %s273 = scalar_select %p270, %s271, %s272
      %p276 = pneg %p270
      %p277 = scmp.eq.s32.totalorder %s25, 1
      %p278 = por %p276, %p277
      %p279 = scmp.ne.s32.totalorder %s271, %s274
      %p280 = scmp.eq.s32.totalorder %s25, 0
      %p281 = por %p279, %p280
      %p282 = scmp.ne.s32.totalorder %s271, %s274
      %p283 = scmp.eq.s32.totalorder %s30, 1
      %p284 = por %p282, %p283
      %p285 = scmp.ne.s32.totalorder %s274, %s275
      %p286 = scmp.eq.s32.totalorder %s30, 0
      %p287 = por %p285, %p286
      %p288 = scmp.ne.s32.totalorder %s274, %s275
      %p289 = scmp.eq.s32.totalorder %s31, 1
      %p290 = por %p288, %p289
      %p292 = scmp.ne.s32.totalorder %s275, %s291
      %p293 = scmp.eq.s32.totalorder %s31, 0
      %p294 = por %p292, %p293
      %p295 = scmp.le.s32.totalorder 1, %s25
      %p296 = scmp.lt.s32.totalorder %s25, 3
      %p297 = pnand %p295, %p296
      %p298 = pneg %p297
      // Predicated region
      $region9: #{net_forward.1} parent=5 // pred_check
        _
      $region10: #{net_forward.1} parent=5 // pred_check_branch
        %300 = sbr.rel (%p297) target = $region12
      $region11: #{net_forward.1} parent=5 // pred_region
        %s301 = ssub.s32 %s25, 1
        // Predicated region
        $region13: #{net_forward.1} parent=11 // pred_check
          %p302 = pneg %p72
        $region14: #{net_forward.1} parent=11 // pred_check_branch
          %304 = sbr.rel (%p302) target = $region16
        $region15: #{net_forward.1} parent=11 // pred_region
          %s306 = ssub.s32 6144, 6144
          %307 = vsyncadd [#allocation3], %s306
          %s308 = sshll.u32 [#allocation2], 4
          %s309 = int_to_ptr.vmem [resolvable:$true] %s308
          %314 = dma.hbm_to_vmem [thread:$0]  %s1, 6144, %s309, [#allocation3], 512, 512, 32
        $region16: #{net_forward.1} parent=11 // pred_fallthru
          _
        // Predicated region
        $region17: #{net_forward.1} parent=11 // pred_check
          %p315 = pneg %p93
        $region18: #{net_forward.1} parent=11 // pred_check_branch
          %317 = sbr.rel (%p315) target = $region20
        $region19: #{net_forward.1} parent=11 // pred_region
          %s319 = ssub.s32 64, 64
          %320 = vsyncadd [#allocation6], %s319
          %s322 = sshll.u32 [#allocation5], 4
          %s323 = int_to_ptr.vmem [resolvable:$true] %s322
          %325 = dma.hbm_to_vmem [thread:$0]  %s2, 64, %s323, [#allocation6]
        $region20: #{net_forward.1} parent=11 // pred_fallthru
          _
        // Predicated region
        $region21: #{net_forward.1} parent=11 // pred_check
          %p326 = pneg %p114
        $region22: #{net_forward.1} parent=11 // pred_check_branch
          %328 = sbr.rel (%p326) target = $region24
        $region23: #{net_forward.1} parent=11 // pred_region
          %s330 = ssub.s32 73728, 73728
          %331 = vsyncadd [#allocation6], %s330
          %s332 = sshll.u32 [#allocation7], 4
          %s333 = int_to_ptr.vmem [resolvable:$true] %s332
          %338 = dma.hbm_to_vmem [thread:$0]  %s3, 73728, %s333, [#allocation6], 384, 384, 24
        $region24: #{net_forward.1} parent=11 // pred_fallthru
          _
        // Predicated region
        $region25: #{net_forward.1} parent=11 // pred_check
          %p339 = pneg %p135
        $region26: #{net_forward.1} parent=11 // pred_check_branch
          %341 = sbr.rel (%p339) target = $region28
        $region27: #{net_forward.1} parent=11 // pred_region
          %s343 = ssub.s32 48, 48
          %344 = vsyncadd [#allocation9], %s343
          %s346 = sshll.u32 [#allocation8], 4
          %s347 = int_to_ptr.vmem [resolvable:$true] %s346
          %349 = dma.hbm_to_vmem [thread:$0]  %s4, 48, %s347, [#allocation9]
        $region28: #{net_forward.1} parent=11 // pred_fallthru
          _
        // Predicated region
        $region29: #{net_forward.1} parent=11 // pred_check
          %p350 = pneg %p156
        $region30: #{net_forward.1} parent=11 // pred_check_branch
          %352 = sbr.rel (%p350) target = $region32
        $region31: #{net_forward.1} parent=11 // pred_region
          _
        $region32: #{net_forward.1} parent=11 // pred_fallthru
          _
        // Predicated region
        $region33: #{net_forward.1} parent=11 // pred_check
          %p353 = pneg %p177
        $region34: #{net_forward.1} parent=11 // pred_check_branch
          %355 = sbr.rel (%p353) target = $region36
        $region35: #{net_forward.1} parent=11 // pred_region
          %s357 = ssub.s32 32, 32
          %358 = vsyncadd [#allocation9], %s357
          %s360 = sshll.u32 [#allocation10], 4
          %s361 = int_to_ptr.vmem [resolvable:$true] %s360
          %363 = dma.hbm_to_vmem [thread:$0]  %s6, 32, %s361, [#allocation9]
        $region36: #{net_forward.1} parent=11 // pred_fallthru
          _
        // Predicated region
        $region37: #{net_forward.1} parent=11 // pred_check
          %p364 = pneg %p198
        $region38: #{net_forward.1} parent=11 // pred_check_branch
          %366 = sbr.rel (%p364) target = $region40
        $region39: #{net_forward.1} parent=11 // pred_region
          %s368 = ssub.s32 4608, 4608
          %369 = vsyncadd [#allocation12], %s368
          %s370 = sshll.u32 [#allocation11], 4
          %s371 = int_to_ptr.vmem [resolvable:$true] %s370
          %376 = dma.hbm_to_vmem [thread:$0]  %s7, 4608, %s371, [#allocation12], 64, 64, 4
        $region40: #{net_forward.1} parent=11 // pred_fallthru
          _
        // Predicated region
        $region41: #{net_forward.1} parent=11 // pred_check
          %p377 = pneg %p219
        $region42: #{net_forward.1} parent=11 // pred_check_branch
          %379 = sbr.rel (%p377) target = $region44
        $region43: #{net_forward.1} parent=11 // pred_region
          %s381 = ssub.s32 16, 16
          %382 = vsyncadd [#allocation12], %s381
          %s384 = sshll.u32 [#allocation13], 4
          %s385 = int_to_ptr.vmem [resolvable:$true] %s384
          %387 = dma.hbm_to_vmem [thread:$0]  %s8, 16, %s385, [#allocation12]
        $region44: #{net_forward.1} parent=11 // pred_fallthru
          _
        // Predicated region
        $region45: #{net_forward.1} parent=11 // pred_check
          %p388 = pneg %p240
        $region46: #{net_forward.1} parent=11 // pred_check_branch
          %390 = sbr.rel (%p388) target = $region48
        $region47: #{net_forward.1} parent=11 // pred_region
          _
        $region48: #{net_forward.1} parent=11 // pred_fallthru
          _
        // Predicated region
        $region49: #{net_forward.1} parent=11 // pred_check
          %p391 = pneg %p261
        $region50: #{net_forward.1} parent=11 // pred_check_branch
          %393 = sbr.rel (%p391) target = $region52
        $region51: #{net_forward.1} parent=11 // pred_region
          %s395 = ssub.s32 16, 16
          %396 = vsyncadd [#allocation15], %s395
          %s398 = sshll.u32 [#allocation14], 4
          %s399 = int_to_ptr.vmem [resolvable:$true] %s398
          %401 = dma.hbm_to_vmem [thread:$0]  %s10, 16, %s399, [#allocation15]
        $region52: #{net_forward.1} parent=11 // pred_fallthru
          _
      $region12: #{net_forward.1} parent=5 // pred_fallthru
        _
      %p402 = scmp.lt.s32.totalorder %s25, 2
      // Predicated region
      $region53: #{net_forward.1} parent=5 // pred_check
        %p403 = pneg %p402
      $region54: #{net_forward.1} parent=5 // pred_check_branch
        %405 = sbr.rel (%p403) target = $region56
      $region55: #{net_forward.1} parent=5 // pred_region
        // Predicated region
        $region57: #{net_forward.1} parent=55 // pred_check
          %p406 = pneg %p45
        $region58: #{net_forward.1} parent=55 // pred_check_branch
          %408 = sbr.rel (%p406) target = $region60
        $region59: #{net_forward.1} parent=55 // pred_region
          %s409 = smul.u32 28, %s25
          %p410 = scmp.lt.s32.totalorder %s409, 55
          %s411 = scalar_select %p410, %s409, 55
          %s412 = smul.addr %s411, 4
          %s413 = scalar_lea.vmem %s0, %s412
          %s414 = smul.u32 28, %s25
        $region60: #{net_forward.1} parent=55 // pred_fallthru
          _
      $region56: #{net_forward.1} parent=5 // pred_fallthru
        _
      %p415 = scmp.le.s32.totalorder 1, %s25
      %p416 = scmp.lt.s32.totalorder %s25, 3
      %p417 = pnand %p415, %p416
      %p418 = pneg %p417
      // Predicated region
      $region61: #{net_forward.1} parent=5 // pred_check
        _
      $region62: #{net_forward.1} parent=5 // pred_check_branch
        %420 = sbr.rel (%p417) target = $region64
      $region63: #{net_forward.1} parent=5 // pred_region
        %s421 = ssub.s32 %s25, 1
        // Predicated region
        $region65: #{net_forward.1} parent=63 // pred_check
          %p422 = pneg %p72
        $region66: #{net_forward.1} parent=63 // pred_check_branch
          %424 = sbr.rel (%p422) target = $region68
        $region67: #{net_forward.1} parent=63 // pred_region
          %425 = dma.done [#allocation3], 6144
        $region68: #{net_forward.1} parent=63 // pred_fallthru
          _
        // Predicated region
        $region69: #{net_forward.1} parent=63 // pred_check
          %p426 = pneg %p93
        $region70: #{net_forward.1} parent=63 // pred_check_branch
          %428 = sbr.rel (%p426) target = $region72
        $region71: #{net_forward.1} parent=63 // pred_region
          %429 = dma.done [#allocation6], 64
        $region72: #{net_forward.1} parent=63 // pred_fallthru
          _
        // Predicated region
        $region73: #{net_forward.1} parent=63 // pred_check
          %p430 = pneg %p114
        $region74: #{net_forward.1} parent=63 // pred_check_branch
          %432 = sbr.rel (%p430) target = $region76
        $region75: #{net_forward.1} parent=63 // pred_region
          %433 = dma.done [#allocation6], 73728
        $region76: #{net_forward.1} parent=63 // pred_fallthru
          _
        // Predicated region
        $region77: #{net_forward.1} parent=63 // pred_check
          %p434 = pneg %p135
        $region78: #{net_forward.1} parent=63 // pred_check_branch
          %436 = sbr.rel (%p434) target = $region80
        $region79: #{net_forward.1} parent=63 // pred_region
          %437 = dma.done [#allocation9], 48
        $region80: #{net_forward.1} parent=63 // pred_fallthru
          _
        // Predicated region
        $region81: #{net_forward.1} parent=63 // pred_check
          %p438 = pneg %p177
        $region82: #{net_forward.1} parent=63 // pred_check_branch
          %440 = sbr.rel (%p438) target = $region84
        $region83: #{net_forward.1} parent=63 // pred_region
          %441 = dma.done [#allocation9], 32
        $region84: #{net_forward.1} parent=63 // pred_fallthru
          _
        // Predicated region
        $region85: #{net_forward.1} parent=63 // pred_check
          %p442 = pneg %p198
        $region86: #{net_forward.1} parent=63 // pred_check_branch
          %444 = sbr.rel (%p442) target = $region88
        $region87: #{net_forward.1} parent=63 // pred_region
          %445 = dma.done [#allocation12], 4608
        $region88: #{net_forward.1} parent=63 // pred_fallthru
          _
        // Predicated region
        $region89: #{net_forward.1} parent=63 // pred_check
          %p446 = pneg %p219
        $region90: #{net_forward.1} parent=63 // pred_check_branch
          %448 = sbr.rel (%p446) target = $region92
        $region91: #{net_forward.1} parent=63 // pred_region
          %449 = dma.done [#allocation12], 16
        $region92: #{net_forward.1} parent=63 // pred_fallthru
          _
        // Predicated region
        $region93: #{net_forward.1} parent=63 // pred_check
          %p450 = pneg %p261
        $region94: #{net_forward.1} parent=63 // pred_check_branch
          %452 = sbr.rel (%p450) target = $region96
        $region95: #{net_forward.1} parent=63 // pred_region
          %453 = dma.done [#allocation15], 16
        $region96: #{net_forward.1} parent=63 // pred_fallthru
          _
        %s454 = smul.u32 28, %s30
        %p455 = scmp.lt.s32.totalorder %s454, 55
        %s456 = scalar_select %p455, %s454, 55
        %s457 = smul.addr %s456, 4
        %s458 = scalar_lea.vmem %s0, %s457
        %p459 = pneg %p51
        %p460 = pneg %p48
        %p461 = pneg %p72
        %p462 = pneg %p69
        %p463 = pneg %p93
        %p464 = pneg %p90
        %p465 = pneg %p114
        %p466 = pneg %p111
        %p467 = pneg %p135
        %p468 = pneg %p132
        %p469 = pneg %p156
        %p470 = pneg %p153
        %p471 = pneg %p177
        %p472 = pneg %p174
        %p473 = pneg %p198
        %p474 = pneg %p195
        %p475 = pneg %p219
        %p476 = pneg %p216
        %p477 = pneg %p240
        %p478 = pneg %p237
        %p479 = pneg %p261
        %p480 = pneg %p258
        %p481 = pneg %p287
        %p482 = pneg %p284
        %s483 = sand.u32 %s274, 1
        %s484 = scalar_lea.sflag [#allocation4], %s483
        %s485 = sand.u32 %s274, 1
        %s486 = smul.addr %s485, 8
        %s487 = scalar_lea.vmem [#allocation16], %s486
        %s488 = smul.u32 28, %s30
        %p489 = scmp.lt.s32.totalorder %s488, 55
        %s490 = scalar_select %p489, %s488, 55
        %s491 = smul.addr %s490, 4
        %s492 = scalar_lea.vmem %s0, %s491
        %s493 = smul.u32 28, %s30
        %v495 = vld [vmem:[%s492] sm:$0xf]
        %v496 = vld [vmem:[%s492 + $0x4] sm:$0xf]
        %v497 = vld [vmem:[%s492 + $0x8] sm:$0xf]
        %v498 = vld [vmem:[%s492 + $0xc] sm:$0xf]
        %v499 = vld [vmem:[%s492 + $0x10] sm:$0xf]
        %v500 = vld [vmem:[%s492 + $0x14] sm:$0xf]
        %v501 = vld [vmem:[%s492 + $0x18] sm:$0xf]
        %v502 = vld [vmem:[%s492 + $0x1c] sm:$0xf]
        %v503 = vld [vmem:[%s492 + $0x20] sm:$0xf]
        %v504 = vld [vmem:[%s492 + $0x24] sm:$0xf]
        %v505 = vld [vmem:[%s492 + $0x28] sm:$0xf]
        %v506 = vld [vmem:[%s492 + $0x2c] sm:$0xf]
        %v507 = vld [vmem:[%s492 + $0x30] sm:$0xf]
        %v508 = vld [vmem:[%s492 + $0x34] sm:$0xf]
        %v509 = vld [vmem:[%s492 + $0x38] sm:$0xf]
        %v510 = vld [vmem:[%s492 + $0x3c] sm:$0xf]
        %v511 = vld [vmem:[%s492 + $0x40] sm:$0xf]
        %v512 = vld [vmem:[%s492 + $0x44] sm:$0xf]
        %v513 = vld [vmem:[%s492 + $0x48] sm:$0xf]
        %v514 = vld [vmem:[%s492 + $0x4c] sm:$0xf]
        %v515 = vld [vmem:[%s492 + $0x50] sm:$0xf]
        %v516 = vld [vmem:[%s492 + $0x54] sm:$0xf]
        %v517 = vld [vmem:[%s492 + $0x58] sm:$0xf]
        %v518 = vld [vmem:[%s492 + $0x5c] sm:$0xf]
        %v519 = vld [vmem:[%s492 + $0x60] sm:$0xf]
        %v520 = vld [vmem:[%s492 + $0x64] sm:$0xf]
        %v521 = vld [vmem:[%s492 + $0x68] sm:$0xf]
        %v522 = vld [vmem:[%s492 + $0x6c] sm:$0xf]
        %v523 = vld [vmem:[#allocation2] sm:$0xff]
        %v524 = vld [vmem:[#allocation2 + $0x8] sm:$0xff]
        %v525 = vld [vmem:[#allocation2 + $0x10] sm:$0xff]
        %v526 = vld [vmem:[#allocation2 + $0x18] sm:$0xff]
        %v527 = vld [vmem:[#allocation2 + $0x20] sm:$0xff]
        %v528 = vld [vmem:[#allocation2 + $0x28] sm:$0xff]
        %v529 = vld [vmem:[#allocation2 + $0x30] sm:$0xff]
        %v530 = vld [vmem:[#allocation2 + $0x38] sm:$0xff]
        %v531 = vld [vmem:[#allocation2 + $0x40] sm:$0xff]
        %v532 = vld [vmem:[#allocation2 + $0x48] sm:$0xff]
        %v533 = vld [vmem:[#allocation2 + $0x50] sm:$0xff]
        %v534 = vld [vmem:[#allocation2 + $0x58] sm:$0xff]
        %v535 = vld [vmem:[#allocation2 + $0x60] sm:$0x33]
        %v536 = vld [vmem:[#allocation2 + $0x68] sm:$0x33]
        %v537 = vld [vmem:[#allocation2 + $0x70] sm:$0x33]
        %v538 = vld [vmem:[#allocation2 + $0x78] sm:$0x33]
        %s539 = scalar_lea.vmem [#allocation2], 128
        %v540 = vld [vmem:[%s539] sm:$0xff]
        %v541 = vld [vmem:[%s539 + $0x8] sm:$0xff]
        %v542 = vld [vmem:[%s539 + $0x10] sm:$0xff]
        %v543 = vld [vmem:[%s539 + $0x18] sm:$0xff]
        %v544 = vld [vmem:[%s539 + $0x20] sm:$0xff]
        %v545 = vld [vmem:[%s539 + $0x28] sm:$0xff]
        %v546 = vld [vmem:[%s539 + $0x30] sm:$0xff]
        %v547 = vld [vmem:[%s539 + $0x38] sm:$0xff]
        %v548 = vld [vmem:[%s539 + $0x40] sm:$0xff]
        %v549 = vld [vmem:[%s539 + $0x48] sm:$0xff]
        %v550 = vld [vmem:[%s539 + $0x50] sm:$0xff]
        %v551 = vld [vmem:[%s539 + $0x58] sm:$0xff]
        %v552 = vld [vmem:[%s539 + $0x60] sm:$0x33]
        %v553 = vld [vmem:[%s539 + $0x68] sm:$0x33]
        %v554 = vld [vmem:[%s539 + $0x70] sm:$0x33]
        %v555 = vld [vmem:[%s539 + $0x78] sm:$0x33]
        %v582 = vunpack.c.l.b16 %v496
        %v583 = vunpack.c.l.b16 %v497
        %v584 = vunpack.c.l.b16 %v498
        %v585 = vunpack.c.l.b16 %v499
        %v586 = vunpack.c.l.b16 %v500
        %v587 = vunpack.c.l.b16 %v501
        %v588 = vunpack.c.l.b16 %v502
        %v589 = vunpack.c.l.b16 %v503
        %v590 = vunpack.c.l.b16 %v504
        %v591 = vunpack.c.l.b16 %v505
        %v592 = vunpack.c.l.b16 %v506
        %v593 = vunpack.c.l.b16 %v507
        %v594 = vunpack.c.l.b16 %v508
        %v595 = vunpack.c.l.b16 %v509
        %v596 = vunpack.c.l.b16 %v510
        %v597 = vunpack.c.l.b16 %v511
        %v598 = vunpack.c.l.b16 %v512
        %v599 = vunpack.c.l.b16 %v513
        %v600 = vunpack.c.l.b16 %v514
        %v601 = vunpack.c.l.b16 %v515
        %v602 = vunpack.c.l.b16 %v516
        %v603 = vunpack.c.l.b16 %v517
        %v604 = vunpack.c.l.b16 %v518
        %v605 = vunpack.c.l.b16 %v519
        %v606 = vunpack.c.l.b16 %v520
        %v607 = vunpack.c.l.b16 %v521
        %v608 = vpack.c.b16 %v583, %v582
        %v609 = vpack.c.b16 %v585, %v584
        %v610 = vpack.c.b16 %v587, %v586
        %v611 = vpack.c.b16 %v589, %v588
        %v612 = vpack.c.b16 %v591, %v590
        %v613 = vpack.c.b16 %v593, %v592
        %v614 = vpack.c.b16 %v595, %v594
        %v615 = vpack.c.b16 %v597, %v596
        %v616 = vpack.c.b16 %v599, %v598
        %v617 = vpack.c.b16 %v601, %v600
        %v618 = vpack.c.b16 %v603, %v602
        %v619 = vpack.c.b16 %v605, %v604
        %v620 = vpack.c.b16 %v607, %v606
        %v637 = vunpack.c.l.b16 %v540
        %v638 = vunpack.c.h.b16 %v540
        %v639 = vunpack.c.l.b16 %v541
        %v640 = vunpack.c.h.b16 %v541
        %v641 = vunpack.c.l.b16 %v542
        %v642 = vunpack.c.h.b16 %v542
        %v643 = vunpack.c.l.b16 %v543
        %v644 = vunpack.c.h.b16 %v543
        %v645 = vunpack.c.l.b16 %v544
        %v646 = vunpack.c.h.b16 %v544
        %v647 = vunpack.c.l.b16 %v545
        %v648 = vunpack.c.h.b16 %v545
        %v649 = vunpack.c.l.b16 %v546
        %v650 = vunpack.c.h.b16 %v546
        %v651 = vunpack.c.l.b16 %v547
        %v652 = vunpack.c.h.b16 %v547
        %v653 = vunpack.c.l.b16 %v548
        %v654 = vunpack.c.h.b16 %v548
        %v655 = vunpack.c.l.b16 %v549
        %v656 = vunpack.c.h.b16 %v549
        %v657 = vunpack.c.l.b16 %v550
        %v658 = vunpack.c.h.b16 %v550
        %v659 = vunpack.c.l.b16 %v551
        %v660 = vunpack.c.h.b16 %v551
        %v661 = vunpack.c.l.b16 %v552
        %v662 = vunpack.c.h.b16 %v552
        %v663 = vunpack.c.l.b16 %v553
        %v664 = vunpack.c.h.b16 %v553
        %v665 = vunpack.c.l.b16 %v554
        %v666 = vunpack.c.h.b16 %v554
        %v667 = vunpack.c.l.b16 %v555
        %v668 = vunpack.c.h.b16 %v555
        %v669 = vpack.c.b16 %v645, %v637
        %v670 = vpack.c.b16 %v646, %v638
        %v671 = vpack.c.b16 %v647, %v639
        %v672 = vpack.c.b16 %v648, %v640
        %v673 = vpack.c.b16 %v649, %v641
        %v674 = vpack.c.b16 %v650, %v642
        %v675 = vpack.c.b16 %v651, %v643
        %v676 = vpack.c.b16 %v652, %v644
        %v677 = vpack.c.b16 %v661, %v653
        %v678 = vpack.c.b16 %v662, %v654
        %v679 = vpack.c.b16 %v663, %v655
        %v680 = vpack.c.b16 %v664, %v656
        %v681 = vpack.c.b16 %v665, %v657
        %v682 = vpack.c.b16 %v666, %v658
        %v683 = vpack.c.b16 %v667, %v659
        %v684 = vpack.c.b16 %v668, %v660
        %vm693 = vcmask 228352
        %v695 = vsel %vm693, %v608, 0
        %v698 = vsel %vm693, %v609, 0
        %v701 = vsel %vm693, %v610, 0
        %v704 = vsel %vm693, %v611, 0
        %v707 = vsel %vm693, %v612, 0
        %v710 = vsel %vm693, %v613, 0
        %v713 = vsel %vm693, %v614, 0
        %v716 = vsel %vm693, %v615, 0
        %v719 = vsel %vm693, %v616, 0
        %v722 = vsel %vm693, %v617, 0
        %v725 = vsel %vm693, %v618, 0
        %v728 = vsel %vm693, %v619, 0
        %v731 = vsel %vm693, %v620, 0
        %vm733 = vcmask 1045504
        %v735 = vsel %vm733, %v677, 0
        %v738 = vsel %vm733, %v678, 0
        %v741 = vsel %vm733, %v679, 0
        %v744 = vsel %vm733, %v680, 0
        %v747 = vsel %vm733, %v681, 0
        %v750 = vsel %vm733, %v682, 0
        %v753 = vsel %vm733, %v683, 0
        %v756 = vsel %vm733, %v684, 0
        %758 = vmatprep.subr.bf16.mxu0 %v670
        %759 = vmatpush1.bf16.msra.mxu0 %v669
        %760 = vmatprep.subr.bf16.mxu0 %v738
        %761 = vmatpush1.bf16.msra.mxu0 %v735
        %762 = vmatprep.subr.bf16.mxu0 0
        %763 = vmatpush1.bf16.msra.mxu0 0
        %764 = vmatprep.subr.bf16.mxu0 0
        %765 = vmatpush1.bf16.msra.mxu0 0
        %766 = vmatprep.subr.bf16.mxu0 0
        %767 = vmatpush1.bf16.msra.mxu0 0
        %768 = vmatprep.subr.bf16.mxu0 0
        %769 = vmatpush1.bf16.msra.mxu0 0
        %770 = vmatprep.subr.bf16.mxu0 0
        %771 = vmatpush1.bf16.msra.mxu0 0
        %772 = vmatprep.subr.bf16.mxu0 0
        %773 = vmatpush1.bf16.msra.mxu0 0
        %774 = vmatprep.subr.bf16.mxu0 0
        %775 = vmatpush1.bf16.msra.mxu0 0
        %776 = vmatprep.subr.bf16.mxu0 0
        %777 = vmatpush1.bf16.msra.mxu0 0
        %778 = vmatprep.subr.bf16.mxu0 0
        %779 = vmatpush1.bf16.msra.mxu0 0
        %780 = vmatprep.subr.bf16.mxu0 0
        %781 = vmatpush1.bf16.msra.mxu0 0
        %782 = vmatprep.subr.bf16.mxu0 0
        %783 = vmatpush1.bf16.msra.mxu0 0
        %784 = vmatprep.subr.bf16.mxu0 0
        %785 = vmatpush1.bf16.msra.mxu0 0
        %786 = vmatprep.subr.bf16.mxu0 0
        %787 = vmatpush1.bf16.msra.mxu0 0
        %788 = vmatprep.subr.bf16.mxu0 0
        %789 = vmatpush1.bf16.msra.mxu0 0
        %790 = vmatprep.mubr.bf16.mxu0 0
        %791 = vmatmul.mubr.bf16.gmra.mrb[0].mxu0 %v695
        %v792 = vpop.f32.mrb[0].mxu0
        %v793 = vadd.f32 0.0, %v792
        %v794 = vpop.f32.mrb[0].mxu0
        %v795 = vadd.f32 0.0, %v794
        %v796 = vpop.f32.mrb[0].mxu0
        %v797 = vadd.f32 0.0, %v796
        %v798 = vpop.f32.mrb[0].mxu0
        %v799 = vadd.f32 0.0, %v798
        %800 = vmatprep.mubr.bf16.mxu0 0
        %801 = vmatmul.mubr.bf16.gmra.mrb[0].mxu0 %v698
        %v802 = vpop.f32.mrb[0].mxu0
        %v803 = vadd.f32 0.0, %v802
        %v804 = vpop.f32.mrb[0].mxu0
        %v805 = vadd.f32 0.0, %v804
        %v806 = vpop.f32.mrb[0].mxu0
        %v807 = vadd.f32 0.0, %v806
        %v808 = vpop.f32.mrb[0].mxu0
        %v809 = vadd.f32 0.0, %v808
        %810 = vmatprep.mubr.bf16.mxu0 0
        %811 = vmatmul.mubr.bf16.gmra.mrb[0].mxu0 %v701
        %v812 = vpop.f32.mrb[0].mxu0
        %v813 = vadd.f32 0.0, %v812
        %v814 = vpop.f32.mrb[0].mxu0
        %v815 = vadd.f32 0.0, %v814
        %v816 = vpop.f32.mrb[0].mxu0
        %v817 = vadd.f32 0.0, %v816
        %v818 = vpop.f32.mrb[0].mxu0
        %v819 = vadd.f32 0.0, %v818
        %820 = vmatprep.mubr.bf16.mxu0 0
        %821 = vmatmul.mubr.bf16.gmra.mrb[0].mxu0 %v704
        %v822 = vpop.f32.mrb[0].mxu0
        %v823 = vadd.f32 0.0, %v822
        %v824 = vpop.f32.mrb[0].mxu0
        %v825 = vadd.f32 0.0, %v824
        %v826 = vpop.f32.mrb[0].mxu0
        %v827 = vadd.f32 0.0, %v826
        %v828 = vpop.f32.mrb[0].mxu0
        %v829 = vadd.f32 0.0, %v828
        %830 = vmatprep.mubr.bf16.mxu0 0
        %831 = vmatmul.mubr.bf16.gmra.mrb[0].mxu0 %v707
        %v832 = vpop.f32.mrb[0].mxu0
        %v833 = vadd.f32 0.0, %v832
        %v834 = vpop.f32.mrb[0].mxu0
        %v835 = vadd.f32 0.0, %v834
        %v836 = vpop.f32.mrb[0].mxu0
        %v837 = vadd.f32 0.0, %v836
        %v838 = vpop.f32.mrb[0].mxu0
        %v839 = vadd.f32 0.0, %v838
        %840 = vmatprep.mubr.bf16.mxu0 0
        %841 = vmatmul.mubr.bf16.gmra.mrb[0].mxu0 %v710
        %v842 = vpop.f32.mrb[0].mxu0
        %v843 = vadd.f32 0.0, %v842
        %v844 = vpop.f32.mrb[0].mxu0
        %v845 = vadd.f32 0.0, %v844
        %v846 = vpop.f32.mrb[0].mxu0
        %v847 = vadd.f32 0.0, %v846
        %v848 = vpop.f32.mrb[0].mxu0
        %v849 = vadd.f32 0.0, %v848
        %850 = vmatprep.mubr.bf16.mxu0 0
        %851 = vmatmul.mubr.bf16.gmra.mrb[0].mxu0 %v713
        %v852 = vpop.f32.mrb[0].mxu0
        %v853 = vadd.f32 0.0, %v852
        %v854 = vpop.f32.mrb[0].mxu0
        %v855 = vadd.f32 0.0, %v854
        %v856 = vpop.f32.mrb[0].mxu0
        %v857 = vadd.f32 0.0, %v856
        %v858 = vpop.f32.mrb[0].mxu0
        %v859 = vadd.f32 0.0, %v858
        %860 = vmatprep.mubr.bf16.mxu0 0
        %861 = vmatmul.mubr.bf16.gmra.mrb[0].mxu0 %v716
        %v862 = vpop.f32.mrb[0].mxu0
        %v863 = vadd.f32 0.0, %v862
        %v864 = vpop.f32.mrb[0].mxu0
        %v865 = vadd.f32 0.0, %v864
        %v866 = vpop.f32.mrb[0].mxu0
        %v867 = vadd.f32 0.0, %v866
        %v868 = vpop.f32.mrb[0].mxu0
        %v869 = vadd.f32 0.0, %v868
        %870 = vmatprep.mubr.bf16.mxu0 0
        %871 = vmatmul.mubr.bf16.gmra.mrb[0].mxu0 %v719
        %v872 = vpop.f32.mrb[0].mxu0
        %v873 = vadd.f32 0.0, %v872
        %v874 = vpop.f32.mrb[0].mxu0
        %v875 = vadd.f32 0.0, %v874
        %v876 = vpop.f32.mrb[0].mxu0
        %v877 = vadd.f32 0.0, %v876
        %v878 = vpop.f32.mrb[0].mxu0
        %v879 = vadd.f32 0.0, %v878
        %880 = vmatprep.mubr.bf16.mxu0 0
        %881 = vmatmul.mubr.bf16.gmra.mrb[0].mxu0 %v722
        %v882 = vpop.f32.mrb[0].mxu0
        %v883 = vadd.f32 0.0, %v882
        %v884 = vpop.f32.mrb[0].mxu0
        %v885 = vadd.f32 0.0, %v884
        %v886 = vpop.f32.mrb[0].mxu0
        %v887 = vadd.f32 0.0, %v886
        %v888 = vpop.f32.mrb[0].mxu0
        %v889 = vadd.f32 0.0, %v888
        %890 = vmatprep.mubr.bf16.mxu0 0
        %891 = vmatmul.mubr.bf16.gmra.mrb[0].mxu0 %v725
        %v892 = vpop.f32.mrb[0].mxu0
        %v893 = vadd.f32 0.0, %v892
        %v894 = vpop.f32.mrb[0].mxu0
        %v895 = vadd.f32 0.0, %v894
        %v896 = vpop.f32.mrb[0].mxu0
        %v897 = vadd.f32 0.0, %v896
        %v898 = vpop.f32.mrb[0].mxu0
        %v899 = vadd.f32 0.0, %v898
        %900 = vmatprep.mubr.bf16.mxu0 0
        %901 = vmatmul.mubr.bf16.gmra.mrb[0].mxu0 %v728
        %v902 = vpop.f32.mrb[0].mxu0
        %v903 = vadd.f32 0.0, %v902
        %v904 = vpop.f32.mrb[0].mxu0
        %v905 = vadd.f32 0.0, %v904
        %v906 = vpop.f32.mrb[0].mxu0
        %v907 = vadd.f32 0.0, %v906
        %v908 = vpop.f32.mrb[0].mxu0
        %v909 = vadd.f32 0.0, %v908
        %910 = vmatprep.mubr.bf16.mxu0 0
        %911 = vmatmul.mubr.bf16.gmra.mrb[0].mxu0 %v731
        %v912 = vpop.f32.mrb[0].mxu0
        %v913 = vpop.f32.mrb[0].mxu0
        %v914 = vpop.f32.mrb[0].mxu0
        %v915 = vpop.f32.mrb[0].mxu0
        %916 = vdwg.mxu0
        %917 = vmatprep.subr.bf16.mxu0 %v672
        %918 = vmatpush1.bf16.msra.mxu0 %v671
        %919 = vmatprep.subr.bf16.mxu0 %v744
        %920 = vmatpush1.bf16.msra.mxu0 %v741
        %921 = vmatprep.subr.bf16.mxu0 0
        %922 = vmatpush1.bf16.msra.mxu0 0
        %923 = vmatprep.subr.bf16.mxu0 0
        %924 = vmatpush1.bf16.msra.mxu0 0
        %925 = vmatprep.subr.bf16.mxu0 0
        %926 = vmatpush1.bf16.msra.mxu0 0
        %927 = vmatprep.subr.bf16.mxu0 0
        %928 = vmatpush1.bf16.msra.mxu0 0
        %929 = vmatprep.subr.bf16.mxu0 0
        %930 = vmatpush1.bf16.msra.mxu0 0
        %931 = vmatprep.subr.bf16.mxu0 0
        %932 = vmatpush1.bf16.msra.mxu0 0
        %933 = vmatprep.subr.bf16.mxu0 0
        %934 = vmatpush1.bf16.msra.mxu0 0
        %935 = vmatprep.subr.bf16.mxu0 0
        %936 = vmatpush1.bf16.msra.mxu0 0
        %937 = vmatprep.subr.bf16.mxu0 0
        %938 = vmatpush1.bf16.msra.mxu0 0
        %939 = vmatprep.subr.bf16.mxu0 0
        %940 = vmatpush1.bf16.msra.mxu0 0
        %941 = vmatprep.subr.bf16.mxu0 0
        %942 = vmatpush1.bf16.msra.mxu0 0
        %943 = vmatprep.subr.bf16.mxu0 0
        %944 = vmatpush1.bf16.msra.mxu0 0
        %945 = vmatprep.subr.bf16.mxu0 0
        %946 = vmatpush1.bf16.msra.mxu0 0
        %947 = vmatprep.subr.bf16.mxu0 0
        %948 = vmatpush1.bf16.msra.mxu0 0
        %949 = vmatprep.mubr.bf16.mxu0 0
        %950 = vmatmul.mubr.bf16.gmra.mrb[0].mxu0 %v695
        %v951 = vpop.f32.mrb[0].mxu0
        %v952 = vadd.f32 0.0, %v951
        %v953 = vpop.f32.mrb[0].mxu0
        %v954 = vadd.f32 0.0, %v953
        %v955 = vpop.f32.mrb[0].mxu0
        %v956 = vadd.f32 0.0, %v955
        %v957 = vpop.f32.mrb[0].mxu0
        %v958 = vadd.f32 0.0, %v957
        %959 = vmatprep.mubr.bf16.mxu0 0
        %960 = vmatmul.mubr.bf16.gmra.mrb[0].mxu0 %v698
        %v961 = vpop.f32.mrb[0].mxu0
        %v962 = vadd.f32 0.0, %v961
        %v963 = vpop.f32.mrb[0].mxu0
        %v964 = vadd.f32 0.0, %v963
        %v965 = vpop.f32.mrb[0].mxu0
        %v966 = vadd.f32 0.0, %v965
        %v967 = vpop.f32.mrb[0].mxu0
        %v968 = vadd.f32 0.0, %v967
        %969 = vmatprep.mubr.bf16.mxu0 0
        %970 = vmatmul.mubr.bf16.gmra.mrb[0].mxu0 %v701
        %v971 = vpop.f32.mrb[0].mxu0
        %v972 = vadd.f32 0.0, %v971
        %v973 = vpop.f32.mrb[0].mxu0
        %v974 = vadd.f32 0.0, %v973
        %v975 = vpop.f32.mrb[0].mxu0
        %v976 = vadd.f32 0.0, %v975
        %v977 = vpop.f32.mrb[0].mxu0
        %v978 = vadd.f32 0.0, %v977
        %979 = vmatprep.mubr.bf16.mxu0 0
        %980 = vmatmul.mubr.bf16.gmra.mrb[0].mxu0 %v704
        %v981 = vpop.f32.mrb[0].mxu0
        %v982 = vadd.f32 0.0, %v981
        %v983 = vpop.f32.mrb[0].mxu0
        %v984 = vadd.f32 0.0, %v983
        %v985 = vpop.f32.mrb[0].mxu0
        %v986 = vadd.f32 0.0, %v985
        %v987 = vpop.f32.mrb[0].mxu0
        %v988 = vadd.f32 0.0, %v987
        %989 = vmatprep.mubr.bf16.mxu0 0
        %990 = vmatmul.mubr.bf16.gmra.mrb[0].mxu0 %v707
        %v991 = vpop.f32.mrb[0].mxu0
        %v992 = vadd.f32 0.0, %v991
        %v993 = vpop.f32.mrb[0].mxu0
        %v994 = vadd.f32 0.0, %v993
        %v995 = vpop.f32.mrb[0].mxu0
        %v996 = vadd.f32 0.0, %v995
        %v997 = vpop.f32.mrb[0].mxu0
        %v998 = vadd.f32 0.0, %v997
        %999 = vmatprep.mubr.bf16.mxu0 0
        %1000 = vmatmul.mubr.bf16.gmra.mrb[0].mxu0 %v710
        %v1001 = vpop.f32.mrb[0].mxu0
        %v1002 = vadd.f32 0.0, %v1001
        %v1003 = vpop.f32.mrb[0].mxu0
        %v1004 = vadd.f32 0.0, %v1003
        %v1005 = vpop.f32.mrb[0].mxu0
        %v1006 = vadd.f32 0.0, %v1005
        %v1007 = vpop.f32.mrb[0].mxu0
        %v1008 = vadd.f32 0.0, %v1007
        %1009 = vmatprep.mubr.bf16.mxu0 0
        %1010 = vmatmul.mubr.bf16.gmra.mrb[0].mxu0 %v713
        %v1011 = vpop.f32.mrb[0].mxu0
        %v1012 = vadd.f32 0.0, %v1011
        %v1013 = vpop.f32.mrb[0].mxu0
        %v1014 = vadd.f32 0.0, %v1013
        %v1015 = vpop.f32.mrb[0].mxu0
        %v1016 = vadd.f32 0.0, %v1015
        %v1017 = vpop.f32.mrb[0].mxu0
        %v1018 = vadd.f32 0.0, %v1017
        %1019 = vmatprep.mubr.bf16.mxu0 0
        %1020 = vmatmul.mubr.bf16.gmra.mrb[0].mxu0 %v716
        %v1021 = vpop.f32.mrb[0].mxu0
        %v1022 = vadd.f32 0.0, %v1021
        %v1023 = vpop.f32.mrb[0].mxu0
        %v1024 = vadd.f32 0.0, %v1023
        %v1025 = vpop.f32.mrb[0].mxu0
        %v1026 = vadd.f32 0.0, %v1025
        %v1027 = vpop.f32.mrb[0].mxu0
        %v1028 = vadd.f32 0.0, %v1027
        %1029 = vmatprep.mubr.bf16.mxu0 0
        %1030 = vmatmul.mubr.bf16.gmra.mrb[0].mxu0 %v719
        %v1031 = vpop.f32.mrb[0].mxu0
        %v1032 = vadd.f32 0.0, %v1031
        %v1033 = vpop.f32.mrb[0].mxu0
        %v1034 = vadd.f32 0.0, %v1033
        %v1035 = vpop.f32.mrb[0].mxu0
        %v1036 = vadd.f32 0.0, %v1035
        %v1037 = vpop.f32.mrb[0].mxu0
        %v1038 = vadd.f32 0.0, %v1037
        %1039 = vmatprep.mubr.bf16.mxu0 0
        %1040 = vmatmul.mubr.bf16.gmra.mrb[0].mxu0 %v722
        %v1041 = vpop.f32.mrb[0].mxu0
        %v1042 = vadd.f32 0.0, %v1041
        %v1043 = vpop.f32.mrb[0].mxu0
        %v1044 = vadd.f32 0.0, %v1043
        %v1045 = vpop.f32.mrb[0].mxu0
        %v1046 = vadd.f32 0.0, %v1045
        %v1047 = vpop.f32.mrb[0].mxu0
        %v1048 = vadd.f32 0.0, %v1047
        %1049 = vmatprep.mubr.bf16.mxu0 0
        %1050 = vmatmul.mubr.bf16.gmra.mrb[0].mxu0 %v725
        %v1051 = vpop.f32.mrb[0].mxu0
        %v1052 = vadd.f32 0.0, %v1051
        %v1053 = vpop.f32.mrb[0].mxu0
        %v1054 = vadd.f32 0.0, %v1053
        %v1055 = vpop.f32.mrb[0].mxu0
        %v1056 = vadd.f32 0.0, %v1055
        %v1057 = vpop.f32.mrb[0].mxu0
        %v1058 = vadd.f32 0.0, %v1057
        %1059 = vmatprep.mubr.bf16.mxu0 0
        %1060 = vmatmul.mubr.bf16.gmra.mrb[0].mxu0 %v728
        %v1061 = vpop.f32.mrb[0].mxu0
        %v1062 = vadd.f32 0.0, %v1061
        %v1063 = vpop.f32.mrb[0].mxu0
        %v1064 = vadd.f32 0.0, %v1063
        %v1065 = vpop.f32.mrb[0].mxu0
        %v1066 = vadd.f32 0.0, %v1065
        %v1067 = vpop.f32.mrb[0].mxu0
        %v1068 = vadd.f32 0.0, %v1067
        %1069 = vmatprep.mubr.bf16.mxu0 0
        %1070 = vmatmul.mubr.bf16.gmra.mrb[0].mxu0 %v731
        %v1071 = vpop.f32.mrb[0].mxu0
        %v1072 = vpop.f32.mrb[0].mxu0
        %v1073 = vpop.f32.mrb[0].mxu0
        %v1074 = vpop.f32.mrb[0].mxu0
        %1075 = vdwg.mxu0
        %1076 = vmatprep.subr.bf16.mxu0 %v674
        %1077 = vmatpush1.bf16.msra.mxu0 %v673
        %1078 = vmatprep.subr.bf16.mxu0 %v750
        %1079 = vmatpush1.bf16.msra.mxu0 %v747
        %1080 = vmatprep.subr.bf16.mxu0 0
        %1081 = vmatpush1.bf16.msra.mxu0 0
        %1082 = vmatprep.subr.bf16.mxu0 0
        %1083 = vmatpush1.bf16.msra.mxu0 0
        %1084 = vmatprep.subr.bf16.mxu0 0
        %1085 = vmatpush1.bf16.msra.mxu0 0
        %1086 = vmatprep.subr.bf16.mxu0 0
        %1087 = vmatpush1.bf16.msra.mxu0 0
        %1088 = vmatprep.subr.bf16.mxu0 0
        %1089 = vmatpush1.bf16.msra.mxu0 0
        %1090 = vmatprep.subr.bf16.mxu0 0
        %1091 = vmatpush1.bf16.msra.mxu0 0
        %1092 = vmatprep.subr.bf16.mxu0 0
        %1093 = vmatpush1.bf16.msra.mxu0 0
        %1094 = vmatprep.subr.bf16.mxu0 0
        %1095 = vmatpush1.bf16.msra.mxu0 0
        %1096 = vmatprep.subr.bf16.mxu0 0
        %1097 = vmatpush1.bf16.msra.mxu0 0
        %1098 = vmatprep.subr.bf16.mxu0 0
        %1099 = vmatpush1.bf16.msra.mxu0 0
        %1100 = vmatprep.subr.bf16.mxu0 0
        %1101 = vmatpush1.bf16.msra.mxu0 0
        %1102 = vmatprep.subr.bf16.mxu0 0
        %1103 = vmatpush1.bf16.msra.mxu0 0
        %1104 = vmatprep.subr.bf16.mxu0 0
        %1105 = vmatpush1.bf16.msra.mxu0 0
        %1106 = vmatprep.subr.bf16.mxu0 0
        %1107 = vmatpush1.bf16.msra.mxu0 0
        %1108 = vmatprep.mubr.bf16.mxu0 0
        %1109 = vmatmul.mubr.bf16.gmra.mrb[0].mxu0 %v695
        %v1110 = vpop.f32.mrb[0].mxu0
        %v1111 = vadd.f32 0.0, %v1110
        %v1112 = vpop.f32.mrb[0].mxu0
        %v1113 = vadd.f32 0.0, %v1112
        %v1114 = vpop.f32.mrb[0].mxu0
        %v1115 = vadd.f32 0.0, %v1114
        %v1116 = vpop.f32.mrb[0].mxu0
        %v1117 = vadd.f32 0.0, %v1116
        %1118 = vmatprep.mubr.bf16.mxu0 0
        %1119 = vmatmul.mubr.bf16.gmra.mrb[0].mxu0 %v698
        %v1120 = vpop.f32.mrb[0].mxu0
        %v1121 = vadd.f32 0.0, %v1120
        %v1122 = vpop.f32.mrb[0].mxu0
        %v1123 = vadd.f32 0.0, %v1122
        %v1124 = vpop.f32.mrb[0].mxu0
        %v1125 = vadd.f32 0.0, %v1124
        %v1126 = vpop.f32.mrb[0].mxu0
        %v1127 = vadd.f32 0.0, %v1126
        %1128 = vmatprep.mubr.bf16.mxu0 0
        %1129 = vmatmul.mubr.bf16.gmra.mrb[0].mxu0 %v701
        %v1130 = vpop.f32.mrb[0].mxu0
        %v1131 = vadd.f32 0.0, %v1130
        %v1132 = vpop.f32.mrb[0].mxu0
        %v1133 = vadd.f32 0.0, %v1132
        %v1134 = vpop.f32.mrb[0].mxu0
        %v1135 = vadd.f32 0.0, %v1134
        %v1136 = vpop.f32.mrb[0].mxu0
        %v1137 = vadd.f32 0.0, %v1136
        %1138 = vmatprep.mubr.bf16.mxu0 0
        %1139 = vmatmul.mubr.bf16.gmra.mrb[0].mxu0 %v704
        %v1140 = vpop.f32.mrb[0].mxu0
        %v1141 = vadd.f32 0.0, %v1140
        %v1142 = vpop.f32.mrb[0].mxu0
        %v1143 = vadd.f32 0.0, %v1142
        %v1144 = vpop.f32.mrb[0].mxu0
        %v1145 = vadd.f32 0.0, %v1144
        %v1146 = vpop.f32.mrb[0].mxu0
        %v1147 = vadd.f32 0.0, %v1146
        %1148 = vmatprep.mubr.bf16.mxu0 0
        %1149 = vmatmul.mubr.bf16.gmra.mrb[0].mxu0 %v707
        %v1150 = vpop.f32.mrb[0].mxu0
        %v1151 = vadd.f32 0.0, %v1150
        %v1152 = vpop.f32.mrb[0].mxu0
        %v1153 = vadd.f32 0.0, %v1152
        %v1154 = vpop.f32.mrb[0].mxu0
        %v1155 = vadd.f32 0.0, %v1154
        %v1156 = vpop.f32.mrb[0].mxu0
        %v1157 = vadd.f32 0.0, %v1156
        %1158 = vmatprep.mubr.bf16.mxu0 0
        %1159 = vmatmul.mubr.bf16.gmra.mrb[0].mxu0 %v710
        %v1160 = vpop.f32.mrb[0].mxu0
        %v1161 = vadd.f32 0.0, %v1160
        %v1162 = vpop.f32.mrb[0].mxu0
        %v1163 = vadd.f32 0.0, %v1162
        %v1164 = vpop.f32.mrb[0].mxu0
        %v1165 = vadd.f32 0.0, %v1164
        %v1166 = vpop.f32.mrb[0].mxu0
        %v1167 = vadd.f32 0.0, %v1166
        %1168 = vmatprep.mubr.bf16.mxu0 0
        %1169 = vmatmul.mubr.bf16.gmra.mrb[0].mxu0 %v713
        %v1170 = vpop.f32.mrb[0].mxu0
        %v1171 = vadd.f32 0.0, %v1170
        %v1172 = vpop.f32.mrb[0].mxu0
        %v1173 = vadd.f32 0.0, %v1172
        %v1174 = vpop.f32.mrb[0].mxu0
        %v1175 = vadd.f32 0.0, %v1174
        %v1176 = vpop.f32.mrb[0].mxu0
        %v1177 = vadd.f32 0.0, %v1176
        %1178 = vmatprep.mubr.bf16.mxu0 0
        %1179 = vmatmul.mubr.bf16.gmra.mrb[0].mxu0 %v716
        %v1180 = vpop.f32.mrb[0].mxu0
        %v1181 = vadd.f32 0.0, %v1180
        %v1182 = vpop.f32.mrb[0].mxu0
        %v1183 = vadd.f32 0.0, %v1182
        %v1184 = vpop.f32.mrb[0].mxu0
        %v1185 = vadd.f32 0.0, %v1184
        %v1186 = vpop.f32.mrb[0].mxu0
        %v1187 = vadd.f32 0.0, %v1186
        %1188 = vmatprep.mubr.bf16.mxu0 0
        %1189 = vmatmul.mubr.bf16.gmra.mrb[0].mxu0 %v719
        %v1190 = vpop.f32.mrb[0].mxu0
        %v1191 = vadd.f32 0.0, %v1190
        %v1192 = vpop.f32.mrb[0].mxu0
        %v1193 = vadd.f32 0.0, %v1192
        %v1194 = vpop.f32.mrb[0].mxu0
        %v1195 = vadd.f32 0.0, %v1194
        %v1196 = vpop.f32.mrb[0].mxu0
        %v1197 = vadd.f32 0.0, %v1196
        %1198 = vmatprep.mubr.bf16.mxu0 0
        %1199 = vmatmul.mubr.bf16.gmra.mrb[0].mxu0 %v722
        %v1200 = vpop.f32.mrb[0].mxu0
        %v1201 = vadd.f32 0.0, %v1200
        %v1202 = vpop.f32.mrb[0].mxu0
        %v1203 = vadd.f32 0.0, %v1202
        %v1204 = vpop.f32.mrb[0].mxu0
        %v1205 = vadd.f32 0.0, %v1204
        %v1206 = vpop.f32.mrb[0].mxu0
        %v1207 = vadd.f32 0.0, %v1206
        %1208 = vmatprep.mubr.bf16.mxu0 0
        %1209 = vmatmul.mubr.bf16.gmra.mrb[0].mxu0 %v725
        %v1210 = vpop.f32.mrb[0].mxu0
        %v1211 = vadd.f32 0.0, %v1210
        %v1212 = vpop.f32.mrb[0].mxu0
        %v1213 = vadd.f32 0.0, %v1212
        %v1214 = vpop.f32.mrb[0].mxu0
        %v1215 = vadd.f32 0.0, %v1214
        %v1216 = vpop.f32.mrb[0].mxu0
        %v1217 = vadd.f32 0.0, %v1216
        %1218 = vmatprep.mubr.bf16.mxu0 0
        %1219 = vmatmul.mubr.bf16.gmra.mrb[0].mxu0 %v728
        %v1220 = vpop.f32.mrb[0].mxu0
        %v1221 = vadd.f32 0.0, %v1220
        %v1222 = vpop.f32.mrb[0].mxu0
        %v1223 = vadd.f32 0.0, %v1222
        %v1224 = vpop.f32.mrb[0].mxu0
        %v1225 = vadd.f32 0.0, %v1224
        %v1226 = vpop.f32.mrb[0].mxu0
        %v1227 = vadd.f32 0.0, %v1226
        %1228 = vmatprep.mubr.bf16.mxu0 0
        %1229 = vmatmul.mubr.bf16.gmra.mrb[0].mxu0 %v731
        %v1230 = vpop.f32.mrb[0].mxu0
        %v1231 = vpop.f32.mrb[0].mxu0
        %v1232 = vpop.f32.mrb[0].mxu0
        %v1233 = vpop.f32.mrb[0].mxu0
        %1234 = vdwg.mxu0
        %1235 = vmatprep.subr.bf16.mxu0 %v676
        %1236 = vmatpush1.bf16.msra.mxu0 %v675
        %1237 = vmatprep.subr.bf16.mxu0 %v756
        %1238 = vmatpush1.bf16.msra.mxu0 %v753
        %1239 = vmatprep.subr.bf16.mxu0 0
        %1240 = vmatpush1.bf16.msra.mxu0 0
        %1241 = vmatprep.subr.bf16.mxu0 0
        %1242 = vmatpush1.bf16.msra.mxu0 0
        %1243 = vmatprep.subr.bf16.mxu0 0
        %1244 = vmatpush1.bf16.msra.mxu0 0
        %1245 = vmatprep.subr.bf16.mxu0 0
        %1246 = vmatpush1.bf16.msra.mxu0 0
        %1247 = vmatprep.subr.bf16.mxu0 0
        %1248 = vmatpush1.bf16.msra.mxu0 0
        %1249 = vmatprep.subr.bf16.mxu0 0
        %1250 = vmatpush1.bf16.msra.mxu0 0
        %1251 = vmatprep.subr.bf16.mxu0 0
        %1252 = vmatpush1.bf16.msra.mxu0 0
        %1253 = vmatprep.subr.bf16.mxu0 0
        %1254 = vmatpush1.bf16.msra.mxu0 0
        %1255 = vmatprep.subr.bf16.mxu0 0
        %1256 = vmatpush1.bf16.msra.mxu0 0
        %1257 = vmatprep.subr.bf16.mxu0 0
        %1258 = vmatpush1.bf16.msra.mxu0 0
        %1259 = vmatprep.subr.bf16.mxu0 0
        %1260 = vmatpush1.bf16.msra.mxu0 0
        %1261 = vmatprep.subr.bf16.mxu0 0
        %1262 = vmatpush1.bf16.msra.mxu0 0
        %1263 = vmatprep.subr.bf16.mxu0 0
        %1264 = vmatpush1.bf16.msra.mxu0 0
        %1265 = vmatprep.subr.bf16.mxu0 0
        %1266 = vmatpush1.bf16.msra.mxu0 0
        %1267 = vmatprep.mubr.bf16.mxu0 0
        %1268 = vmatmul.mubr.bf16.gmra.mrb[0].mxu0 %v695
        %v1269 = vpop.f32.mrb[0].mxu0
        %v1270 = vadd.f32 0.0, %v1269
        %v1271 = vpop.f32.mrb[0].mxu0
        %v1272 = vadd.f32 0.0, %v1271
        %v1273 = vpop.f32.mrb[0].mxu0
        %v1274 = vadd.f32 0.0, %v1273
        %v1275 = vpop.f32.mrb[0].mxu0
        %v1276 = vadd.f32 0.0, %v1275
        %1277 = vmatprep.mubr.bf16.mxu0 0
        %1278 = vmatmul.mubr.bf16.gmra.mrb[0].mxu0 %v698
        %v1279 = vpop.f32.mrb[0].mxu0
        %v1280 = vadd.f32 0.0, %v1279
        %v1281 = vpop.f32.mrb[0].mxu0
        %v1282 = vadd.f32 0.0, %v1281
        %v1283 = vpop.f32.mrb[0].mxu0
        %v1284 = vadd.f32 0.0, %v1283
        %v1285 = vpop.f32.mrb[0].mxu0
        %v1286 = vadd.f32 0.0, %v1285
        %1287 = vmatprep.mubr.bf16.mxu0 0
        %1288 = vmatmul.mubr.bf16.gmra.mrb[0].mxu0 %v701
        %v1289 = vpop.f32.mrb[0].mxu0
        %v1290 = vadd.f32 0.0, %v1289
        %v1291 = vpop.f32.mrb[0].mxu0
        %v1292 = vadd.f32 0.0, %v1291
        %v1293 = vpop.f32.mrb[0].mxu0
        %v1294 = vadd.f32 0.0, %v1293
        %v1295 = vpop.f32.mrb[0].mxu0
        %v1296 = vadd.f32 0.0, %v1295
        %1297 = vmatprep.mubr.bf16.mxu0 0
        %1298 = vmatmul.mubr.bf16.gmra.mrb[0].mxu0 %v704
        %v1299 = vpop.f32.mrb[0].mxu0
        %v1300 = vadd.f32 0.0, %v1299
        %v1301 = vpop.f32.mrb[0].mxu0
        %v1302 = vadd.f32 0.0, %v1301
        %v1303 = vpop.f32.mrb[0].mxu0
        %v1304 = vadd.f32 0.0, %v1303
        %v1305 = vpop.f32.mrb[0].mxu0
        %v1306 = vadd.f32 0.0, %v1305
        %1307 = vmatprep.mubr.bf16.mxu0 0
        %1308 = vmatmul.mubr.bf16.gmra.mrb[0].mxu0 %v707
        %v1309 = vpop.f32.mrb[0].mxu0
        %v1310 = vadd.f32 0.0, %v1309
        %v1311 = vpop.f32.mrb[0].mxu0
        %v1312 = vadd.f32 0.0, %v1311
        %v1313 = vpop.f32.mrb[0].mxu0
        %v1314 = vadd.f32 0.0, %v1313
        %v1315 = vpop.f32.mrb[0].mxu0
        %v1316 = vadd.f32 0.0, %v1315
        %1317 = vmatprep.mubr.bf16.mxu0 0
        %1318 = vmatmul.mubr.bf16.gmra.mrb[0].mxu0 %v710
        %v1319 = vpop.f32.mrb[0].mxu0
        %v1320 = vadd.f32 0.0, %v1319
        %v1321 = vpop.f32.mrb[0].mxu0
        %v1322 = vadd.f32 0.0, %v1321
        %v1323 = vpop.f32.mrb[0].mxu0
        %v1324 = vadd.f32 0.0, %v1323
        %v1325 = vpop.f32.mrb[0].mxu0
        %v1326 = vadd.f32 0.0, %v1325
        %1327 = vmatprep.mubr.bf16.mxu0 0
        %1328 = vmatmul.mubr.bf16.gmra.mrb[0].mxu0 %v713
        %v1329 = vpop.f32.mrb[0].mxu0
        %v1330 = vadd.f32 0.0, %v1329
        %v1331 = vpop.f32.mrb[0].mxu0
        %v1332 = vadd.f32 0.0, %v1331
        %v1333 = vpop.f32.mrb[0].mxu0
        %v1334 = vadd.f32 0.0, %v1333
        %v1335 = vpop.f32.mrb[0].mxu0
        %v1336 = vadd.f32 0.0, %v1335
        %1337 = vmatprep.mubr.bf16.mxu0 0
        %1338 = vmatmul.mubr.bf16.gmra.mrb[0].mxu0 %v716
        %v1339 = vpop.f32.mrb[0].mxu0
        %v1340 = vadd.f32 0.0, %v1339
        %v1341 = vpop.f32.mrb[0].mxu0
        %v1342 = vadd.f32 0.0, %v1341
        %v1343 = vpop.f32.mrb[0].mxu0
        %v1344 = vadd.f32 0.0, %v1343
        %v1345 = vpop.f32.mrb[0].mxu0
        %v1346 = vadd.f32 0.0, %v1345
        %1347 = vmatprep.mubr.bf16.mxu0 0
        %1348 = vmatmul.mubr.bf16.gmra.mrb[0].mxu0 %v719
        %v1349 = vpop.f32.mrb[0].mxu0
        %v1350 = vadd.f32 0.0, %v1349
        %v1351 = vpop.f32.mrb[0].mxu0
        %v1352 = vadd.f32 0.0, %v1351
        %v1353 = vpop.f32.mrb[0].mxu0
        %v1354 = vadd.f32 0.0, %v1353
        %v1355 = vpop.f32.mrb[0].mxu0
        %v1356 = vadd.f32 0.0, %v1355
        %1357 = vmatprep.mubr.bf16.mxu0 0
        %1358 = vmatmul.mubr.bf16.gmra.mrb[0].mxu0 %v722
        %v1359 = vpop.f32.mrb[0].mxu0
        %v1360 = vadd.f32 0.0, %v1359
        %v1361 = vpop.f32.mrb[0].mxu0
        %v1362 = vadd.f32 0.0, %v1361
        %v1363 = vpop.f32.mrb[0].mxu0
        %v1364 = vadd.f32 0.0, %v1363
        %v1365 = vpop.f32.mrb[0].mxu0
        %v1366 = vadd.f32 0.0, %v1365
        %1367 = vmatprep.mubr.bf16.mxu0 0
        %1368 = vmatmul.mubr.bf16.gmra.mrb[0].mxu0 %v725
        %v1369 = vpop.f32.mrb[0].mxu0
        %v1370 = vadd.f32 0.0, %v1369
        %v1371 = vpop.f32.mrb[0].mxu0
        %v1372 = vadd.f32 0.0, %v1371
        %v1373 = vpop.f32.mrb[0].mxu0
        %v1374 = vadd.f32 0.0, %v1373
        %v1375 = vpop.f32.mrb[0].mxu0
        %v1376 = vadd.f32 0.0, %v1375
        %1377 = vmatprep.mubr.bf16.mxu0 0
        %1378 = vmatmul.mubr.bf16.gmra.mrb[0].mxu0 %v728
        %v1379 = vpop.f32.mrb[0].mxu0
        %v1380 = vadd.f32 0.0, %v1379
        %v1381 = vpop.f32.mrb[0].mxu0
        %v1382 = vadd.f32 0.0, %v1381
        %v1383 = vpop.f32.mrb[0].mxu0
        %v1384 = vadd.f32 0.0, %v1383
        %v1385 = vpop.f32.mrb[0].mxu0
        %v1386 = vadd.f32 0.0, %v1385
        %1387 = vmatprep.mubr.bf16.mxu0 0
        %1388 = vmatmul.mubr.bf16.gmra.mrb[0].mxu0 %v731
        %v1389 = vpop.f32.mrb[0].mxu0
        %v1390 = vpop.f32.mrb[0].mxu0
        %v1391 = vpop.f32.mrb[0].mxu0
        %v1392 = vpop.f32.mrb[0].mxu0
        %1393 = vdwg.mxu0
        %v1395 = vunpack.c.l.b16 %v495
        %v1396 = vpack.c.b16 %v582, %v1395
        %v1397 = vpack.c.b16 %v584, %v583
        %v1398 = vpack.c.b16 %v586, %v585
        %v1399 = vpack.c.b16 %v588, %v587
        %v1400 = vpack.c.b16 %v590, %v589
        %v1401 = vpack.c.b16 %v592, %v591
        %v1402 = vpack.c.b16 %v594, %v593
        %v1403 = vpack.c.b16 %v596, %v595
        %v1404 = vpack.c.b16 %v598, %v597
        %v1405 = vpack.c.b16 %v600, %v599
        %v1406 = vpack.c.b16 %v602, %v601
        %v1407 = vpack.c.b16 %v604, %v603
        %v1408 = vpack.c.b16 %v606, %v605
        %v1425 = vunpack.c.l.b16 %v523
        %v1426 = vunpack.c.h.b16 %v523
        %v1427 = vunpack.c.l.b16 %v524
        %v1428 = vunpack.c.h.b16 %v524
        %v1429 = vunpack.c.l.b16 %v525
        %v1430 = vunpack.c.h.b16 %v525
        %v1431 = vunpack.c.l.b16 %v526
        %v1432 = vunpack.c.h.b16 %v526
        %v1433 = vunpack.c.l.b16 %v527
        %v1434 = vunpack.c.h.b16 %v527
        %v1435 = vunpack.c.l.b16 %v528
        %v1436 = vunpack.c.h.b16 %v528
        %v1437 = vunpack.c.l.b16 %v529
        %v1438 = vunpack.c.h.b16 %v529
        %v1439 = vunpack.c.l.b16 %v530
        %v1440 = vunpack.c.h.b16 %v530
        %v1441 = vunpack.c.l.b16 %v531
        %v1442 = vunpack.c.h.b16 %v531
        %v1443 = vunpack.c.l.b16 %v532
        %v1444 = vunpack.c.h.b16 %v532
        %v1445 = vunpack.c.l.b16 %v533
        %v1446 = vunpack.c.h.b16 %v533
        %v1447 = vunpack.c.l.b16 %v534
        %v1448 = vunpack.c.h.b16 %v534
        %v1449 = vunpack.c.l.b16 %v535
        %v1450 = vunpack.c.h.b16 %v535
        %v1451 = vunpack.c.l.b16 %v536
        %v1452 = vunpack.c.h.b16 %v536
        %v1453 = vunpack.c.l.b16 %v537
        %v1454 = vunpack.c.h.b16 %v537
        %v1455 = vunpack.c.l.b16 %v538
        %v1456 = vunpack.c.h.b16 %v538
        %v1457 = vpack.c.b16 %v1433, %v1425
        %v1458 = vpack.c.b16 %v1434, %v1426
        %v1459 = vpack.c.b16 %v1435, %v1427
        %v1460 = vpack.c.b16 %v1436, %v1428
        %v1461 = vpack.c.b16 %v1437, %v1429
        %v1462 = vpack.c.b16 %v1438, %v1430
        %v1463 = vpack.c.b16 %v1439, %v1431
        %v1464 = vpack.c.b16 %v1440, %v1432
        %v1465 = vpack.c.b16 %v1449, %v1441
        %v1466 = vpack.c.b16 %v1450, %v1442
        %v1467 = vpack.c.b16 %v1451, %v1443
        %v1468 = vpack.c.b16 %v1452, %v1444
        %v1469 = vpack.c.b16 %v1453, %v1445
        %v1470 = vpack.c.b16 %v1454, %v1446
        %v1471 = vpack.c.b16 %v1455, %v1447
        %v1472 = vpack.c.b16 %v1456, %v1448
        %v1482 = vsel %vm693, %v1396, 0
        %v1485 = vsel %vm693, %v1397, 0
        %v1488 = vsel %vm693, %v1398, 0
        %v1491 = vsel %vm693, %v1399, 0
        %v1494 = vsel %vm693, %v1400, 0
        %v1497 = vsel %vm693, %v1401, 0
        %v1500 = vsel %vm693, %v1402, 0
        %v1503 = vsel %vm693, %v1403, 0
        %v1506 = vsel %vm693, %v1404, 0
        %v1509 = vsel %vm693, %v1405, 0
        %v1512 = vsel %vm693, %v1406, 0
        %v1515 = vsel %vm693, %v1407, 0
        %v1518 = vsel %vm693, %v1408, 0
        %v1521 = vsel %vm733, %v1465, 0
        %v1524 = vsel %vm733, %v1466, 0
        %v1527 = vsel %vm733, %v1467, 0
        %v1530 = vsel %vm733, %v1468, 0
        %v1533 = vsel %vm733, %v1469, 0
        %v1536 = vsel %vm733, %v1470, 0
        %v1539 = vsel %vm733, %v1471, 0
        %v1542 = vsel %vm733, %v1472, 0
        %1544 = vmatprep.subr.bf16.mxu0 %v1458
        %1545 = vmatpush1.bf16.msra.mxu0 %v1457
        %1546 = vmatprep.subr.bf16.mxu0 %v1524
        %1547 = vmatpush1.bf16.msra.mxu0 %v1521
        %1548 = vmatprep.subr.bf16.mxu0 0
        %1549 = vmatpush1.bf16.msra.mxu0 0
        %1550 = vmatprep.subr.bf16.mxu0 0
        %1551 = vmatpush1.bf16.msra.mxu0 0
        %1552 = vmatprep.subr.bf16.mxu0 0
        %1553 = vmatpush1.bf16.msra.mxu0 0
        %1554 = vmatprep.subr.bf16.mxu0 0
        %1555 = vmatpush1.bf16.msra.mxu0 0
        %1556 = vmatprep.subr.bf16.mxu0 0
        %1557 = vmatpush1.bf16.msra.mxu0 0
        %1558 = vmatprep.subr.bf16.mxu0 0
        %1559 = vmatpush1.bf16.msra.mxu0 0
        %1560 = vmatprep.subr.bf16.mxu0 0
        %1561 = vmatpush1.bf16.msra.mxu0 0
        %1562 = vmatprep.subr.bf16.mxu0 0
        %1563 = vmatpush1.bf16.msra.mxu0 0
        %1564 = vmatprep.subr.bf16.mxu0 0
        %1565 = vmatpush1.bf16.msra.mxu0 0
        %1566 = vmatprep.subr.bf16.mxu0 0
        %1567 = vmatpush1.bf16.msra.mxu0 0
        %1568 = vmatprep.subr.bf16.mxu0 0
        %1569 = vmatpush1.bf16.msra.mxu0 0
        %1570 = vmatprep.subr.bf16.mxu0 0
        %1571 = vmatpush1.bf16.msra.mxu0 0
        %1572 = vmatprep.subr.bf16.mxu0 0
        %1573 = vmatpush1.bf16.msra.mxu0 0
        %1574 = vmatprep.subr.bf16.mxu0 0
        %1575 = vmatpush1.bf16.msra.mxu0 0
        %1576 = vmatprep.mubr.bf16.mxu0 0
        %1577 = vmatmul.mubr.bf16.gmra.mrb[0].mxu0 %v1482
        %v1578 = vpop.f32.mrb[0].mxu0
        %v1579 = vadd.f32 %v793, %v1578
        %v1580 = vpop.f32.mrb[0].mxu0
        %v1581 = vadd.f32 %v795, %v1580
        %v1582 = vpop.f32.mrb[0].mxu0
        %v1583 = vadd.f32 %v797, %v1582
        %v1584 = vpop.f32.mrb[0].mxu0
        %v1585 = vadd.f32 %v799, %v1584
        %1586 = vmatprep.mubr.bf16.mxu0 0
        %1587 = vmatmul.mubr.bf16.gmra.mrb[0].mxu0 %v1485
        %v1588 = vpop.f32.mrb[0].mxu0
        %v1589 = vadd.f32 %v803, %v1588
        %v1590 = vpop.f32.mrb[0].mxu0
        %v1591 = vadd.f32 %v805, %v1590
        %v1592 = vpop.f32.mrb[0].mxu0
        %v1593 = vadd.f32 %v807, %v1592
        %v1594 = vpop.f32.mrb[0].mxu0
        %v1595 = vadd.f32 %v809, %v1594
        %1596 = vmatprep.mubr.bf16.mxu0 0
        %1597 = vmatmul.mubr.bf16.gmra.mrb[0].mxu0 %v1488
        %v1598 = vpop.f32.mrb[0].mxu0
        %v1599 = vadd.f32 %v813, %v1598
        %v1600 = vpop.f32.mrb[0].mxu0
        %v1601 = vadd.f32 %v815, %v1600
        %v1602 = vpop.f32.mrb[0].mxu0
        %v1603 = vadd.f32 %v817, %v1602
        %v1604 = vpop.f32.mrb[0].mxu0
        %v1605 = vadd.f32 %v819, %v1604
        %1606 = vmatprep.mubr.bf16.mxu0 0
        %1607 = vmatmul.mubr.bf16.gmra.mrb[0].mxu0 %v1491
        %v1608 = vpop.f32.mrb[0].mxu0
        %v1609 = vadd.f32 %v823, %v1608
        %v1610 = vpop.f32.mrb[0].mxu0
        %v1611 = vadd.f32 %v825, %v1610
        %v1612 = vpop.f32.mrb[0].mxu0
        %v1613 = vadd.f32 %v827, %v1612
        %v1614 = vpop.f32.mrb[0].mxu0
        %v1615 = vadd.f32 %v829, %v1614
        %1616 = vmatprep.mubr.bf16.mxu0 0
        %1617 = vmatmul.mubr.bf16.gmra.mrb[0].mxu0 %v1494
        %v1618 = vpop.f32.mrb[0].mxu0
        %v1619 = vadd.f32 %v833, %v1618
        %v1620 = vpop.f32.mrb[0].mxu0
        %v1621 = vadd.f32 %v835, %v1620
        %v1622 = vpop.f32.mrb[0].mxu0
        %v1623 = vadd.f32 %v837, %v1622
        %v1624 = vpop.f32.mrb[0].mxu0
        %v1625 = vadd.f32 %v839, %v1624
        %1626 = vmatprep.mubr.bf16.mxu0 0
        %1627 = vmatmul.mubr.bf16.gmra.mrb[0].mxu0 %v1497
        %v1628 = vpop.f32.mrb[0].mxu0
        %v1629 = vadd.f32 %v843, %v1628
        %v1630 = vpop.f32.mrb[0].mxu0
        %v1631 = vadd.f32 %v845, %v1630
        %v1632 = vpop.f32.mrb[0].mxu0
        %v1633 = vadd.f32 %v847, %v1632
        %v1634 = vpop.f32.mrb[0].mxu0
        %v1635 = vadd.f32 %v849, %v1634
        %1636 = vmatprep.mubr.bf16.mxu0 0
        %1637 = vmatmul.mubr.bf16.gmra.mrb[0].mxu0 %v1500
        %v1638 = vpop.f32.mrb[0].mxu0
        %v1639 = vadd.f32 %v853, %v1638
        %v1640 = vpop.f32.mrb[0].mxu0
        %v1641 = vadd.f32 %v855, %v1640
        %v1642 = vpop.f32.mrb[0].mxu0
        %v1643 = vadd.f32 %v857, %v1642
        %v1644 = vpop.f32.mrb[0].mxu0
        %v1645 = vadd.f32 %v859, %v1644
        %1646 = vmatprep.mubr.bf16.mxu0 0
        %1647 = vmatmul.mubr.bf16.gmra.mrb[0].mxu0 %v1503
        %v1648 = vpop.f32.mrb[0].mxu0
        %v1649 = vadd.f32 %v863, %v1648
        %v1650 = vpop.f32.mrb[0].mxu0
        %v1651 = vadd.f32 %v865, %v1650
        %v1652 = vpop.f32.mrb[0].mxu0
        %v1653 = vadd.f32 %v867, %v1652
        %v1654 = vpop.f32.mrb[0].mxu0
        %v1655 = vadd.f32 %v869, %v1654
        %1656 = vmatprep.mubr.bf16.mxu0 0
        %1657 = vmatmul.mubr.bf16.gmra.mrb[0].mxu0 %v1506
        %v1658 = vpop.f32.mrb[0].mxu0
        %v1659 = vadd.f32 %v873, %v1658
        %v1660 = vpop.f32.mrb[0].mxu0
        %v1661 = vadd.f32 %v875, %v1660
        %v1662 = vpop.f32.mrb[0].mxu0
        %v1663 = vadd.f32 %v877, %v1662
        %v1664 = vpop.f32.mrb[0].mxu0
        %v1665 = vadd.f32 %v879, %v1664
        %1666 = vmatprep.mubr.bf16.mxu0 0
        %1667 = vmatmul.mubr.bf16.gmra.mrb[0].mxu0 %v1509
        %v1668 = vpop.f32.mrb[0].mxu0
        %v1669 = vadd.f32 %v883, %v1668
        %v1670 = vpop.f32.mrb[0].mxu0
        %v1671 = vadd.f32 %v885, %v1670
        %v1672 = vpop.f32.mrb[0].mxu0
        %v1673 = vadd.f32 %v887, %v1672
        %v1674 = vpop.f32.mrb[0].mxu0
        %v1675 = vadd.f32 %v889, %v1674
        %1676 = vmatprep.mubr.bf16.mxu0 0
        %1677 = vmatmul.mubr.bf16.gmra.mrb[0].mxu0 %v1512
        %v1678 = vpop.f32.mrb[0].mxu0
        %v1679 = vadd.f32 %v893, %v1678
        %v1680 = vpop.f32.mrb[0].mxu0
        %v1681 = vadd.f32 %v895, %v1680
        %v1682 = vpop.f32.mrb[0].mxu0
        %v1683 = vadd.f32 %v897, %v1682
        %v1684 = vpop.f32.mrb[0].mxu0
        %v1685 = vadd.f32 %v899, %v1684
        %1686 = vmatprep.mubr.bf16.mxu0 0
        %1687 = vmatmul.mubr.bf16.gmra.mrb[0].mxu0 %v1515
        %v1688 = vpop.f32.mrb[0].mxu0
        %v1689 = vadd.f32 %v903, %v1688
        %v1690 = vpop.f32.mrb[0].mxu0
        %v1691 = vadd.f32 %v905, %v1690
        %v1692 = vpop.f32.mrb[0].mxu0
        %v1693 = vadd.f32 %v907, %v1692
        %v1694 = vpop.f32.mrb[0].mxu0
        %v1695 = vadd.f32 %v909, %v1694
        %1696 = vmatprep.mubr.bf16.mxu0 0
        %1697 = vmatmul.mubr.bf16.gmra.mrb[0].mxu0 %v1518
        %v1698 = vpop.f32.mrb[0].mxu0
        %v1699 = vpop.f32.mrb[0].mxu0
        %v1700 = vpop.f32.mrb[0].mxu0
        %v1701 = vpop.f32.mrb[0].mxu0
        %1702 = vdwg.mxu0
        %1703 = vmatprep.subr.bf16.mxu0 %v1460
        %1704 = vmatpush1.bf16.msra.mxu0 %v1459
        %1705 = vmatprep.subr.bf16.mxu0 %v1530
        %1706 = vmatpush1.bf16.msra.mxu0 %v1527
        %1707 = vmatprep.subr.bf16.mxu0 0
        %1708 = vmatpush1.bf16.msra.mxu0 0
        %1709 = vmatprep.subr.bf16.mxu0 0
        %1710 = vmatpush1.bf16.msra.mxu0 0
        %1711 = vmatprep.subr.bf16.mxu0 0
        %1712 = vmatpush1.bf16.msra.mxu0 0
        %1713 = vmatprep.subr.bf16.mxu0 0
        %1714 = vmatpush1.bf16.msra.mxu0 0
        %1715 = vmatprep.subr.bf16.mxu0 0
        %1716 = vmatpush1.bf16.msra.mxu0 0
        %1717 = vmatprep.subr.bf16.mxu0 0
        %1718 = vmatpush1.bf16.msra.mxu0 0
        %1719 = vmatprep.subr.bf16.mxu0 0
        %1720 = vmatpush1.bf16.msra.mxu0 0
        %1721 = vmatprep.subr.bf16.mxu0 0
        %1722 = vmatpush1.bf16.msra.mxu0 0
        %1723 = vmatprep.subr.bf16.mxu0 0
        %1724 = vmatpush1.bf16.msra.mxu0 0
        %1725 = vmatprep.subr.bf16.mxu0 0
        %1726 = vmatpush1.bf16.msra.mxu0 0
        %1727 = vmatprep.subr.bf16.mxu0 0
        %1728 = vmatpush1.bf16.msra.mxu0 0
        %1729 = vmatprep.subr.bf16.mxu0 0
        %1730 = vmatpush1.bf16.msra.mxu0 0
        %1731 = vmatprep.subr.bf16.mxu0 0
        %1732 = vmatpush1.bf16.msra.mxu0 0
        %1733 = vmatprep.subr.bf16.mxu0 0
        %1734 = vmatpush1.bf16.msra.mxu0 0
        %1735 = vmatprep.mubr.bf16.mxu0 0
        %1736 = vmatmul.mubr.bf16.gmra.mrb[0].mxu0 %v1482
        %v1737 = vpop.f32.mrb[0].mxu0
        %v1738 = vadd.f32 %v952, %v1737
        %v1739 = vpop.f32.mrb[0].mxu0
        %v1740 = vadd.f32 %v954, %v1739
        %v1741 = vpop.f32.mrb[0].mxu0
        %v1742 = vadd.f32 %v956, %v1741
        %v1743 = vpop.f32.mrb[0].mxu0
        %v1744 = vadd.f32 %v958, %v1743
        %1745 = vmatprep.mubr.bf16.mxu0 0
        %1746 = vmatmul.mubr.bf16.gmra.mrb[0].mxu0 %v1485
        %v1747 = vpop.f32.mrb[0].mxu0
        %v1748 = vadd.f32 %v962, %v1747
        %v1749 = vpop.f32.mrb[0].mxu0
        %v1750 = vadd.f32 %v964, %v1749
        %v1751 = vpop.f32.mrb[0].mxu0
        %v1752 = vadd.f32 %v966, %v1751
        %v1753 = vpop.f32.mrb[0].mxu0
        %v1754 = vadd.f32 %v968, %v1753
        %1755 = vmatprep.mubr.bf16.mxu0 0
        %1756 = vmatmul.mubr.bf16.gmra.mrb[0].mxu0 %v1488
        %v1757 = vpop.f32.mrb[0].mxu0
        %v1758 = vadd.f32 %v972, %v1757
        %v1759 = vpop.f32.mrb[0].mxu0
        %v1760 = vadd.f32 %v974, %v1759
        %v1761 = vpop.f32.mrb[0].mxu0
        %v1762 = vadd.f32 %v976, %v1761
        %v1763 = vpop.f32.mrb[0].mxu0
        %v1764 = vadd.f32 %v978, %v1763
        %1765 = vmatprep.mubr.bf16.mxu0 0
        %1766 = vmatmul.mubr.bf16.gmra.mrb[0].mxu0 %v1491
        %v1767 = vpop.f32.mrb[0].mxu0
        %v1768 = vadd.f32 %v982, %v1767
        %v1769 = vpop.f32.mrb[0].mxu0
        %v1770 = vadd.f32 %v984, %v1769
        %v1771 = vpop.f32.mrb[0].mxu0
        %v1772 = vadd.f32 %v986, %v1771
        %v1773 = vpop.f32.mrb[0].mxu0
        %v1774 = vadd.f32 %v988, %v1773
        %1775 = vmatprep.mubr.bf16.mxu0 0
        %1776 = vmatmul.mubr.bf16.gmra.mrb[0].mxu0 %v1494
        %v1777 = vpop.f32.mrb[0].mxu0
        %v1778 = vadd.f32 %v992, %v1777
        %v1779 = vpop.f32.mrb[0].mxu0
        %v1780 = vadd.f32 %v994, %v1779
        %v1781 = vpop.f32.mrb[0].mxu0
        %v1782 = vadd.f32 %v996, %v1781
        %v1783 = vpop.f32.mrb[0].mxu0
        %v1784 = vadd.f32 %v998, %v1783
        %1785 = vmatprep.mubr.bf16.mxu0 0
        %1786 = vmatmul.mubr.bf16.gmra.mrb[0].mxu0 %v1497
        %v1787 = vpop.f32.mrb[0].mxu0
        %v1788 = vadd.f32 %v1002, %v1787
        %v1789 = vpop.f32.mrb[0].mxu0
        %v1790 = vadd.f32 %v1004, %v1789
        %v1791 = vpop.f32.mrb[0].mxu0
        %v1792 = vadd.f32 %v1006, %v1791
        %v1793 = vpop.f32.mrb[0].mxu0
        %v1794 = vadd.f32 %v1008, %v1793
        %1795 = vmatprep.mubr.bf16.mxu0 0
        %1796 = vmatmul.mubr.bf16.gmra.mrb[0].mxu0 %v1500
        %v1797 = vpop.f32.mrb[0].mxu0
        %v1798 = vadd.f32 %v1012, %v1797
        %v1799 = vpop.f32.mrb[0].mxu0
        %v1800 = vadd.f32 %v1014, %v1799
        %v1801 = vpop.f32.mrb[0].mxu0
        %v1802 = vadd.f32 %v1016, %v1801
        %v1803 = vpop.f32.mrb[0].mxu0
        %v1804 = vadd.f32 %v1018, %v1803
        %1805 = vmatprep.mubr.bf16.mxu0 0
        %1806 = vmatmul.mubr.bf16.gmra.mrb[0].mxu0 %v1503
        %v1807 = vpop.f32.mrb[0].mxu0
        %v1808 = vadd.f32 %v1022, %v1807
        %v1809 = vpop.f32.mrb[0].mxu0
        %v1810 = vadd.f32 %v1024, %v1809
        %v1811 = vpop.f32.mrb[0].mxu0
        %v1812 = vadd.f32 %v1026, %v1811
        %v1813 = vpop.f32.mrb[0].mxu0
        %v1814 = vadd.f32 %v1028, %v1813
        %1815 = vmatprep.mubr.bf16.mxu0 0
        %1816 = vmatmul.mubr.bf16.gmra.mrb[0].mxu0 %v1506
        %v1817 = vpop.f32.mrb[0].mxu0
        %v1818 = vadd.f32 %v1032, %v1817
        %v1819 = vpop.f32.mrb[0].mxu0
        %v1820 = vadd.f32 %v1034, %v1819
        %v1821 = vpop.f32.mrb[0].mxu0
        %v1822 = vadd.f32 %v1036, %v1821
        %v1823 = vpop.f32.mrb[0].mxu0
        %v1824 = vadd.f32 %v1038, %v1823
        %1825 = vmatprep.mubr.bf16.mxu0 0
        %1826 = vmatmul.mubr.bf16.gmra.mrb[0].mxu0 %v1509
        %v1827 = vpop.f32.mrb[0].mxu0
        %v1828 = vadd.f32 %v1042, %v1827
        %v1829 = vpop.f32.mrb[0].mxu0
        %v1830 = vadd.f32 %v1044, %v1829
        %v1831 = vpop.f32.mrb[0].mxu0
        %v1832 = vadd.f32 %v1046, %v1831
        %v1833 = vpop.f32.mrb[0].mxu0
        %v1834 = vadd.f32 %v1048, %v1833
        %1835 = vmatprep.mubr.bf16.mxu0 0
        %1836 = vmatmul.mubr.bf16.gmra.mrb[0].mxu0 %v1512
        %v1837 = vpop.f32.mrb[0].mxu0
        %v1838 = vadd.f32 %v1052, %v1837
        %v1839 = vpop.f32.mrb[0].mxu0
        %v1840 = vadd.f32 %v1054, %v1839
        %v1841 = vpop.f32.mrb[0].mxu0
        %v1842 = vadd.f32 %v1056, %v1841
        %v1843 = vpop.f32.mrb[0].mxu0
        %v1844 = vadd.f32 %v1058, %v1843
        %1845 = vmatprep.mubr.bf16.mxu0 0
        %1846 = vmatmul.mubr.bf16.gmra.mrb[0].mxu0 %v1515
        %v1847 = vpop.f32.mrb[0].mxu0
        %v1848 = vadd.f32 %v1062, %v1847
        %v1849 = vpop.f32.mrb[0].mxu0
        %v1850 = vadd.f32 %v1064, %v1849
        %v1851 = vpop.f32.mrb[0].mxu0
        %v1852 = vadd.f32 %v1066, %v1851
        %v1853 = vpop.f32.mrb[0].mxu0
        %v1854 = vadd.f32 %v1068, %v1853
        %1855 = vmatprep.mubr.bf16.mxu0 0
        %1856 = vmatmul.mubr.bf16.gmra.mrb[0].mxu0 %v1518
        %v1857 = vpop.f32.mrb[0].mxu0
        %v1858 = vpop.f32.mrb[0].mxu0
        %v1859 = vpop.f32.mrb[0].mxu0
        %v1860 = vpop.f32.mrb[0].mxu0
        %1861 = vdwg.mxu0
        %1862 = vmatprep.subr.bf16.mxu0 %v1462
        %1863 = vmatpush1.bf16.msra.mxu0 %v1461
        %1864 = vmatprep.subr.bf16.mxu0 %v1536
        %1865 = vmatpush1.bf16.msra.mxu0 %v1533
        %1866 = vmatprep.subr.bf16.mxu0 0
        %1867 = vmatpush1.bf16.msra.mxu0 0
        %1868 = vmatprep.subr.bf16.mxu0 0
        %1869 = vmatpush1.bf16.msra.mxu0 0
        %1870 = vmatprep.subr.bf16.mxu0 0
        %1871 = vmatpush1.bf16.msra.mxu0 0
        %1872 = vmatprep.subr.bf16.mxu0 0
        %1873 = vmatpush1.bf16.msra.mxu0 0
        %1874 = vmatprep.subr.bf16.mxu0 0
        %1875 = vmatpush1.bf16.msra.mxu0 0
        %1876 = vmatprep.subr.bf16.mxu0 0
        %1877 = vmatpush1.bf16.msra.mxu0 0
        %1878 = vmatprep.subr.bf16.mxu0 0
        %1879 = vmatpush1.bf16.msra.mxu0 0
        %1880 = vmatprep.subr.bf16.mxu0 0
        %1881 = vmatpush1.bf16.msra.mxu0 0
        %1882 = vmatprep.subr.bf16.mxu0 0
        %1883 = vmatpush1.bf16.msra.mxu0 0
        %1884 = vmatprep.subr.bf16.mxu0 0
        %1885 = vmatpush1.bf16.msra.mxu0 0
        %1886 = vmatprep.subr.bf16.mxu0 0
        %1887 = vmatpush1.bf16.msra.mxu0 0
        %1888 = vmatprep.subr.bf16.mxu0 0
        %1889 = vmatpush1.bf16.msra.mxu0 0
        %1890 = vmatprep.subr.bf16.mxu0 0
        %1891 = vmatpush1.bf16.msra.mxu0 0
        %1892 = vmatprep.subr.bf16.mxu0 0
        %1893 = vmatpush1.bf16.msra.mxu0 0
        %1894 = vmatprep.mubr.bf16.mxu0 0
        %1895 = vmatmul.mubr.bf16.gmra.mrb[0].mxu0 %v1482
        %v1896 = vpop.f32.mrb[0].mxu0
        %v1897 = vadd.f32 %v1111, %v1896
        %v1898 = vpop.f32.mrb[0].mxu0
        %v1899 = vadd.f32 %v1113, %v1898
        %v1900 = vpop.f32.mrb[0].mxu0
        %v1901 = vadd.f32 %v1115, %v1900
        %v1902 = vpop.f32.mrb[0].mxu0
        %v1903 = vadd.f32 %v1117, %v1902
        %1904 = vmatprep.mubr.bf16.mxu0 0
        %1905 = vmatmul.mubr.bf16.gmra.mrb[0].mxu0 %v1485
        %v1906 = vpop.f32.mrb[0].mxu0
        %v1907 = vadd.f32 %v1121, %v1906
        %v1908 = vpop.f32.mrb[0].mxu0
        %v1909 = vadd.f32 %v1123, %v1908
        %v1910 = vpop.f32.mrb[0].mxu0
        %v1911 = vadd.f32 %v1125, %v1910
        %v1912 = vpop.f32.mrb[0].mxu0
        %v1913 = vadd.f32 %v1127, %v1912
        %1914 = vmatprep.mubr.bf16.mxu0 0
        %1915 = vmatmul.mubr.bf16.gmra.mrb[0].mxu0 %v1488
        %v1916 = vpop.f32.mrb[0].mxu0
        %v1917 = vadd.f32 %v1131, %v1916
        %v1918 = vpop.f32.mrb[0].mxu0
        %v1919 = vadd.f32 %v1133, %v1918
        %v1920 = vpop.f32.mrb[0].mxu0
        %v1921 = vadd.f32 %v1135, %v1920
        %v1922 = vpop.f32.mrb[0].mxu0
        %v1923 = vadd.f32 %v1137, %v1922
        %1924 = vmatprep.mubr.bf16.mxu0 0
        %1925 = vmatmul.mubr.bf16.gmra.mrb[0].mxu0 %v1491
        %v1926 = vpop.f32.mrb[0].mxu0
        %v1927 = vadd.f32 %v1141, %v1926
        %v1928 = vpop.f32.mrb[0].mxu0
        %v1929 = vadd.f32 %v1143, %v1928
        %v1930 = vpop.f32.mrb[0].mxu0
        %v1931 = vadd.f32 %v1145, %v1930
        %v1932 = vpop.f32.mrb[0].mxu0
        %v1933 = vadd.f32 %v1147, %v1932
        %1934 = vmatprep.mubr.bf16.mxu0 0
        %1935 = vmatmul.mubr.bf16.gmra.mrb[0].mxu0 %v1494
        %v1936 = vpop.f32.mrb[0].mxu0
        %v1937 = vadd.f32 %v1151, %v1936
        %v1938 = vpop.f32.mrb[0].mxu0
        %v1939 = vadd.f32 %v1153, %v1938
        %v1940 = vpop.f32.mrb[0].mxu0
        %v1941 = vadd.f32 %v1155, %v1940
        %v1942 = vpop.f32.mrb[0].mxu0
        %v1943 = vadd.f32 %v1157, %v1942
        %1944 = vmatprep.mubr.bf16.mxu0 0
        %1945 = vmatmul.mubr.bf16.gmra.mrb[0].mxu0 %v1497
        %v1946 = vpop.f32.mrb[0].mxu0
        %v1947 = vadd.f32 %v1161, %v1946
        %v1948 = vpop.f32.mrb[0].mxu0
        %v1949 = vadd.f32 %v1163, %v1948
        %v1950 = vpop.f32.mrb[0].mxu0
        %v1951 = vadd.f32 %v1165, %v1950
        %v1952 = vpop.f32.mrb[0].mxu0
        %v1953 = vadd.f32 %v1167, %v1952
        %1954 = vmatprep.mubr.bf16.mxu0 0
        %1955 = vmatmul.mubr.bf16.gmra.mrb[0].mxu0 %v1500
        %v1956 = vpop.f32.mrb[0].mxu0
        %v1957 = vadd.f32 %v1171, %v1956
        %v1958 = vpop.f32.mrb[0].mxu0
        %v1959 = vadd.f32 %v1173, %v1958
        %v1960 = vpop.f32.mrb[0].mxu0
        %v1961 = vadd.f32 %v1175, %v1960
        %v1962 = vpop.f32.mrb[0].mxu0
        %v1963 = vadd.f32 %v1177, %v1962
        %1964 = vmatprep.mubr.bf16.mxu0 0
        %1965 = vmatmul.mubr.bf16.gmra.mrb[0].mxu0 %v1503
        %v1966 = vpop.f32.mrb[0].mxu0
        %v1967 = vadd.f32 %v1181, %v1966
        %v1968 = vpop.f32.mrb[0].mxu0
        %v1969 = vadd.f32 %v1183, %v1968
        %v1970 = vpop.f32.mrb[0].mxu0
        %v1971 = vadd.f32 %v1185, %v1970
        %v1972 = vpop.f32.mrb[0].mxu0
        %v1973 = vadd.f32 %v1187, %v1972
        %1974 = vmatprep.mubr.bf16.mxu0 0
        %1975 = vmatmul.mubr.bf16.gmra.mrb[0].mxu0 %v1506
        %v1976 = vpop.f32.mrb[0].mxu0
        %v1977 = vadd.f32 %v1191, %v1976
        %v1978 = vpop.f32.mrb[0].mxu0
        %v1979 = vadd.f32 %v1193, %v1978
        %v1980 = vpop.f32.mrb[0].mxu0
        %v1981 = vadd.f32 %v1195, %v1980
        %v1982 = vpop.f32.mrb[0].mxu0
        %v1983 = vadd.f32 %v1197, %v1982
        %1984 = vmatprep.mubr.bf16.mxu0 0
        %1985 = vmatmul.mubr.bf16.gmra.mrb[0].mxu0 %v1509
        %v1986 = vpop.f32.mrb[0].mxu0
        %v1987 = vadd.f32 %v1201, %v1986
        %v1988 = vpop.f32.mrb[0].mxu0
        %v1989 = vadd.f32 %v1203, %v1988
        %v1990 = vpop.f32.mrb[0].mxu0
        %v1991 = vadd.f32 %v1205, %v1990
        %v1992 = vpop.f32.mrb[0].mxu0
        %v1993 = vadd.f32 %v1207, %v1992
        %1994 = vmatprep.mubr.bf16.mxu0 0
        %1995 = vmatmul.mubr.bf16.gmra.mrb[0].mxu0 %v1512
        %v1996 = vpop.f32.mrb[0].mxu0
        %v1997 = vadd.f32 %v1211, %v1996
        %v1998 = vpop.f32.mrb[0].mxu0
        %v1999 = vadd.f32 %v1213, %v1998
        %v2000 = vpop.f32.mrb[0].mxu0
        %v2001 = vadd.f32 %v1215, %v2000
        %v2002 = vpop.f32.mrb[0].mxu0
        %v2003 = vadd.f32 %v1217, %v2002
        %2004 = vmatprep.mubr.bf16.mxu0 0
        %2005 = vmatmul.mubr.bf16.gmra.mrb[0].mxu0 %v1515
        %v2006 = vpop.f32.mrb[0].mxu0
        %v2007 = vadd.f32 %v1221, %v2006
        %v2008 = vpop.f32.mrb[0].mxu0
        %v2009 = vadd.f32 %v1223, %v2008
        %v2010 = vpop.f32.mrb[0].mxu0
        %v2011 = vadd.f32 %v1225, %v2010
        %v2012 = vpop.f32.mrb[0].mxu0
        %v2013 = vadd.f32 %v1227, %v2012
        %2014 = vmatprep.mubr.bf16.mxu0 0
        %2015 = vmatmul.mubr.bf16.gmra.mrb[0].mxu0 %v1518
        %v2016 = vpop.f32.mrb[0].mxu0
        %v2017 = vpop.f32.mrb[0].mxu0
        %v2018 = vpop.f32.mrb[0].mxu0
        %v2019 = vpop.f32.mrb[0].mxu0
        %2020 = vdwg.mxu0
        %2021 = vmatprep.subr.bf16.mxu0 %v1464
        %2022 = vmatpush1.bf16.msra.mxu0 %v1463
        %2023 = vmatprep.subr.bf16.mxu0 %v1542
        %2024 = vmatpush1.bf16.msra.mxu0 %v1539
        %2025 = vmatprep.subr.bf16.mxu0 0
        %2026 = vmatpush1.bf16.msra.mxu0 0
        %2027 = vmatprep.subr.bf16.mxu0 0
        %2028 = vmatpush1.bf16.msra.mxu0 0
        %2029 = vmatprep.subr.bf16.mxu0 0
        %2030 = vmatpush1.bf16.msra.mxu0 0
        %2031 = vmatprep.subr.bf16.mxu0 0
        %2032 = vmatpush1.bf16.msra.mxu0 0
        %2033 = vmatprep.subr.bf16.mxu0 0
        %2034 = vmatpush1.bf16.msra.mxu0 0
        %2035 = vmatprep.subr.bf16.mxu0 0
        %2036 = vmatpush1.bf16.msra.mxu0 0
        %2037 = vmatprep.subr.bf16.mxu0 0
        %2038 = vmatpush1.bf16.msra.mxu0 0
        %2039 = vmatprep.subr.bf16.mxu0 0
        %2040 = vmatpush1.bf16.msra.mxu0 0
        %2041 = vmatprep.subr.bf16.mxu0 0
        %2042 = vmatpush1.bf16.msra.mxu0 0
        %2043 = vmatprep.subr.bf16.mxu0 0
        %2044 = vmatpush1.bf16.msra.mxu0 0
        %2045 = vmatprep.subr.bf16.mxu0 0
        %2046 = vmatpush1.bf16.msra.mxu0 0
        %2047 = vmatprep.subr.bf16.mxu0 0
        %2048 = vmatpush1.bf16.msra.mxu0 0
        %2049 = vmatprep.subr.bf16.mxu0 0
        %2050 = vmatpush1.bf16.msra.mxu0 0
        %2051 = vmatprep.subr.bf16.mxu0 0
        %2052 = vmatpush1.bf16.msra.mxu0 0
        %2053 = vmatprep.mubr.bf16.mxu0 0
        %2054 = vmatmul.mubr.bf16.gmra.mrb[0].mxu0 %v1482
        %v2055 = vpop.f32.mrb[0].mxu0
        %v2056 = vadd.f32 %v1270, %v2055
        %v2057 = vpop.f32.mrb[0].mxu0
        %v2058 = vadd.f32 %v1272, %v2057
        %v2059 = vpop.f32.mrb[0].mxu0
        %v2060 = vadd.f32 %v1274, %v2059
        %v2061 = vpop.f32.mrb[0].mxu0
        %v2062 = vadd.f32 %v1276, %v2061
        %2063 = vmatprep.mubr.bf16.mxu0 0
        %2064 = vmatmul.mubr.bf16.gmra.mrb[0].mxu0 %v1485
        %v2065 = vpop.f32.mrb[0].mxu0
        %v2066 = vadd.f32 %v1280, %v2065
        %v2067 = vpop.f32.mrb[0].mxu0
        %v2068 = vadd.f32 %v1282, %v2067
        %v2069 = vpop.f32.mrb[0].mxu0
        %v2070 = vadd.f32 %v1284, %v2069
        %v2071 = vpop.f32.mrb[0].mxu0
        %v2072 = vadd.f32 %v1286, %v2071
        %2073 = vmatprep.mubr.bf16.mxu0 0
        %2074 = vmatmul.mubr.bf16.gmra.mrb[0].mxu0 %v1488
        %v2075 = vpop.f32.mrb[0].mxu0
        %v2076 = vadd.f32 %v1290, %v2075
        %v2077 = vpop.f32.mrb[0].mxu0
        %v2078 = vadd.f32 %v1292, %v2077
        %v2079 = vpop.f32.mrb[0].mxu0
        %v2080 = vadd.f32 %v1294, %v2079
        %v2081 = vpop.f32.mrb[0].mxu0
        %v2082 = vadd.f32 %v1296, %v2081
        %2083 = vmatprep.mubr.bf16.mxu0 0
        %2084 = vmatmul.mubr.bf16.gmra.mrb[0].mxu0 %v1491
        %v2085 = vpop.f32.mrb[0].mxu0
        %v2086 = vadd.f32 %v1300, %v2085
        %v2087 = vpop.f32.mrb[0].mxu0
        %v2088 = vadd.f32 %v1302, %v2087
        %v2089 = vpop.f32.mrb[0].mxu0
        %v2090 = vadd.f32 %v1304, %v2089
        %v2091 = vpop.f32.mrb[0].mxu0
        %v2092 = vadd.f32 %v1306, %v2091
        %2093 = vmatprep.mubr.bf16.mxu0 0
        %2094 = vmatmul.mubr.bf16.gmra.mrb[0].mxu0 %v1494
        %v2095 = vpop.f32.mrb[0].mxu0
        %v2096 = vadd.f32 %v1310, %v2095
        %v2097 = vpop.f32.mrb[0].mxu0
        %v2098 = vadd.f32 %v1312, %v2097
        %v2099 = vpop.f32.mrb[0].mxu0
        %v2100 = vadd.f32 %v1314, %v2099
        %v2101 = vpop.f32.mrb[0].mxu0
        %v2102 = vadd.f32 %v1316, %v2101
        %2103 = vmatprep.mubr.bf16.mxu0 0
        %2104 = vmatmul.mubr.bf16.gmra.mrb[0].mxu0 %v1497
        %v2105 = vpop.f32.mrb[0].mxu0
        %v2106 = vadd.f32 %v1320, %v2105
        %v2107 = vpop.f32.mrb[0].mxu0
        %v2108 = vadd.f32 %v1322, %v2107
        %v2109 = vpop.f32.mrb[0].mxu0
        %v2110 = vadd.f32 %v1324, %v2109
        %v2111 = vpop.f32.mrb[0].mxu0
        %v2112 = vadd.f32 %v1326, %v2111
        %2113 = vmatprep.mubr.bf16.mxu0 0
        %2114 = vmatmul.mubr.bf16.gmra.mrb[0].mxu0 %v1500
        %v2115 = vpop.f32.mrb[0].mxu0
        %v2116 = vadd.f32 %v1330, %v2115
        %v2117 = vpop.f32.mrb[0].mxu0
        %v2118 = vadd.f32 %v1332, %v2117
        %v2119 = vpop.f32.mrb[0].mxu0
        %v2120 = vadd.f32 %v1334, %v2119
        %v2121 = vpop.f32.mrb[0].mxu0
        %v2122 = vadd.f32 %v1336, %v2121
        %2123 = vmatprep.mubr.bf16.mxu0 0
        %2124 = vmatmul.mubr.bf16.gmra.mrb[0].mxu0 %v1503
        %v2125 = vpop.f32.mrb[0].mxu0
        %v2126 = vadd.f32 %v1340, %v2125
        %v2127 = vpop.f32.mrb[0].mxu0
        %v2128 = vadd.f32 %v1342, %v2127
        %v2129 = vpop.f32.mrb[0].mxu0
        %v2130 = vadd.f32 %v1344, %v2129
        %v2131 = vpop.f32.mrb[0].mxu0
        %v2132 = vadd.f32 %v1346, %v2131
        %2133 = vmatprep.mubr.bf16.mxu0 0
        %2134 = vmatmul.mubr.bf16.gmra.mrb[0].mxu0 %v1506
        %v2135 = vpop.f32.mrb[0].mxu0
        %v2136 = vadd.f32 %v1350, %v2135
        %v2137 = vpop.f32.mrb[0].mxu0
        %v2138 = vadd.f32 %v1352, %v2137
        %v2139 = vpop.f32.mrb[0].mxu0
        %v2140 = vadd.f32 %v1354, %v2139
        %v2141 = vpop.f32.mrb[0].mxu0
        %v2142 = vadd.f32 %v1356, %v2141
        %2143 = vmatprep.mubr.bf16.mxu0 0
        %2144 = vmatmul.mubr.bf16.gmra.mrb[0].mxu0 %v1509
        %v2145 = vpop.f32.mrb[0].mxu0
        %v2146 = vadd.f32 %v1360, %v2145
        %v2147 = vpop.f32.mrb[0].mxu0
        %v2148 = vadd.f32 %v1362, %v2147
        %v2149 = vpop.f32.mrb[0].mxu0
        %v2150 = vadd.f32 %v1364, %v2149
        %v2151 = vpop.f32.mrb[0].mxu0
        %v2152 = vadd.f32 %v1366, %v2151
        %2153 = vmatprep.mubr.bf16.mxu0 0
        %2154 = vmatmul.mubr.bf16.gmra.mrb[0].mxu0 %v1512
        %v2155 = vpop.f32.mrb[0].mxu0
        %v2156 = vadd.f32 %v1370, %v2155
        %v2157 = vpop.f32.mrb[0].mxu0
        %v2158 = vadd.f32 %v1372, %v2157
        %v2159 = vpop.f32.mrb[0].mxu0
        %v2160 = vadd.f32 %v1374, %v2159
        %v2161 = vpop.f32.mrb[0].mxu0
        %v2162 = vadd.f32 %v1376, %v2161
        %2163 = vmatprep.mubr.bf16.mxu0 0
        %2164 = vmatmul.mubr.bf16.gmra.mrb[0].mxu0 %v1515
        %v2165 = vpop.f32.mrb[0].mxu0
        %v2166 = vadd.f32 %v1380, %v2165
        %v2167 = vpop.f32.mrb[0].mxu0
        %v2168 = vadd.f32 %v1382, %v2167
        %v2169 = vpop.f32.mrb[0].mxu0
        %v2170 = vadd.f32 %v1384, %v2169
        %v2171 = vpop.f32.mrb[0].mxu0
        %v2172 = vadd.f32 %v1386, %v2171
        %2173 = vmatprep.mubr.bf16.mxu0 0
        %2174 = vmatmul.mubr.bf16.gmra.mrb[0].mxu0 %v1518
        %v2175 = vpop.f32.mrb[0].mxu0
        %v2176 = vpop.f32.mrb[0].mxu0
        %v2177 = vpop.f32.mrb[0].mxu0
        %v2178 = vpop.f32.mrb[0].mxu0
        %2179 = vdwg.mxu0
        %s2180 = scalar_lea.vmem [#allocation2], 256
        %v2181 = vld [vmem:[%s2180] sm:$0xff]
        %v2182 = vld [vmem:[%s2180 + $0x8] sm:$0xff]
        %v2183 = vld [vmem:[%s2180 + $0x10] sm:$0xff]
        %v2184 = vld [vmem:[%s2180 + $0x18] sm:$0xff]
        %v2185 = vld [vmem:[%s2180 + $0x20] sm:$0xff]
        %v2186 = vld [vmem:[%s2180 + $0x28] sm:$0xff]
        %v2187 = vld [vmem:[%s2180 + $0x30] sm:$0xff]
        %v2188 = vld [vmem:[%s2180 + $0x38] sm:$0xff]
        %v2189 = vld [vmem:[%s2180 + $0x40] sm:$0xff]
        %v2190 = vld [vmem:[%s2180 + $0x48] sm:$0xff]
        %v2191 = vld [vmem:[%s2180 + $0x50] sm:$0xff]
        %v2192 = vld [vmem:[%s2180 + $0x58] sm:$0xff]
        %v2193 = vld [vmem:[%s2180 + $0x60] sm:$0x33]
        %v2194 = vld [vmem:[%s2180 + $0x68] sm:$0x33]
        %v2195 = vld [vmem:[%s2180 + $0x70] sm:$0x33]
        %v2196 = vld [vmem:[%s2180 + $0x78] sm:$0x33]
        %v2198 = vunpack.c.l.b16 %v522
        %v2199 = vpack.c.b16 %v2198, %v607
        %v2216 = vunpack.c.l.b16 %v2181
        %v2217 = vunpack.c.h.b16 %v2181
        %v2218 = vunpack.c.l.b16 %v2182
        %v2219 = vunpack.c.h.b16 %v2182
        %v2220 = vunpack.c.l.b16 %v2183
        %v2221 = vunpack.c.h.b16 %v2183
        %v2222 = vunpack.c.l.b16 %v2184
        %v2223 = vunpack.c.h.b16 %v2184
        %v2224 = vunpack.c.l.b16 %v2185
        %v2225 = vunpack.c.h.b16 %v2185
        %v2226 = vunpack.c.l.b16 %v2186
        %v2227 = vunpack.c.h.b16 %v2186
        %v2228 = vunpack.c.l.b16 %v2187
        %v2229 = vunpack.c.h.b16 %v2187
        %v2230 = vunpack.c.l.b16 %v2188
        %v2231 = vunpack.c.h.b16 %v2188
        %v2232 = vunpack.c.l.b16 %v2189
        %v2233 = vunpack.c.h.b16 %v2189
        %v2234 = vunpack.c.l.b16 %v2190
        %v2235 = vunpack.c.h.b16 %v2190
        %v2236 = vunpack.c.l.b16 %v2191
        %v2237 = vunpack.c.h.b16 %v2191
        %v2238 = vunpack.c.l.b16 %v2192
        %v2239 = vunpack.c.h.b16 %v2192
        %v2240 = vunpack.c.l.b16 %v2193
        %v2241 = vunpack.c.h.b16 %v2193
        %v2242 = vunpack.c.l.b16 %v2194
        %v2243 = vunpack.c.h.b16 %v2194
        %v2244 = vunpack.c.l.b16 %v2195
        %v2245 = vunpack.c.h.b16 %v2195
        %v2246 = vunpack.c.l.b16 %v2196
        %v2247 = vunpack.c.h.b16 %v2196
        %v2248 = vpack.c.b16 %v2224, %v2216
        %v2249 = vpack.c.b16 %v2225, %v2217
        %v2250 = vpack.c.b16 %v2226, %v2218
        %v2251 = vpack.c.b16 %v2227, %v2219
        %v2252 = vpack.c.b16 %v2228, %v2220
        %v2253 = vpack.c.b16 %v2229, %v2221
        %v2254 = vpack.c.b16 %v2230, %v2222
        %v2255 = vpack.c.b16 %v2231, %v2223
        %v2256 = vpack.c.b16 %v2240, %v2232
        %v2257 = vpack.c.b16 %v2241, %v2233
        %v2258 = vpack.c.b16 %v2242, %v2234
        %v2259 = vpack.c.b16 %v2243, %v2235
        %v2260 = vpack.c.b16 %v2244, %v2236
        %v2261 = vpack.c.b16 %v2245, %v2237
        %v2262 = vpack.c.b16 %v2246, %v2238
        %v2263 = vpack.c.b16 %v2247, %v2239
        %v2273 = vsel %vm693, %v2199, 0
        %v2276 = vsel %vm733, %v2256, 0
        %v2279 = vsel %vm733, %v2257, 0
        %v2282 = vsel %vm733, %v2258, 0
        %v2285 = vsel %vm733, %v2259, 0
        %v2288 = vsel %vm733, %v2260, 0
        %v2291 = vsel %vm733, %v2261, 0
        %v2294 = vsel %vm733, %v2262, 0
        %v2297 = vsel %vm733, %v2263, 0
        %2299 = vmatprep.subr.bf16.mxu0 %v2249
        %2300 = vmatpush1.bf16.msra.mxu0 %v2248
        %2301 = vmatprep.subr.bf16.mxu0 %v2279
        %2302 = vmatpush1.bf16.msra.mxu0 %v2276
        %2303 = vmatprep.subr.bf16.mxu0 0
        %2304 = vmatpush1.bf16.msra.mxu0 0
        %2305 = vmatprep.subr.bf16.mxu0 0
        %2306 = vmatpush1.bf16.msra.mxu0 0
        %2307 = vmatprep.subr.bf16.mxu0 0
        %2308 = vmatpush1.bf16.msra.mxu0 0
        %2309 = vmatprep.subr.bf16.mxu0 0
        %2310 = vmatpush1.bf16.msra.mxu0 0
        %2311 = vmatprep.subr.bf16.mxu0 0
        %2312 = vmatpush1.bf16.msra.mxu0 0
        %2313 = vmatprep.subr.bf16.mxu0 0
        %2314 = vmatpush1.bf16.msra.mxu0 0
        %2315 = vmatprep.subr.bf16.mxu0 0
        %2316 = vmatpush1.bf16.msra.mxu0 0
        %2317 = vmatprep.subr.bf16.mxu0 0
        %2318 = vmatpush1.bf16.msra.mxu0 0
        %2319 = vmatprep.subr.bf16.mxu0 0
        %2320 = vmatpush1.bf16.msra.mxu0 0
        %2321 = vmatprep.subr.bf16.mxu0 0
        %2322 = vmatpush1.bf16.msra.mxu0 0
        %2323 = vmatprep.subr.bf16.mxu0 0
        %2324 = vmatpush1.bf16.msra.mxu0 0
        %2325 = vmatprep.subr.bf16.mxu0 0
        %2326 = vmatpush1.bf16.msra.mxu0 0
        %2327 = vmatprep.subr.bf16.mxu0 0
        %2328 = vmatpush1.bf16.msra.mxu0 0
        %2329 = vmatprep.subr.bf16.mxu0 0
        %2330 = vmatpush1.bf16.msra.mxu0 0
        %2331 = vmatprep.mubr.bf16.mxu0 0
        %2332 = vmatmul.mubr.bf16.gmra.mrb[0].mxu0 %v1485
        %v2333 = vpop.f32.mrb[0].mxu0
        %v2334 = vadd.f32 0.0, %v2333
        %v2335 = vpop.f32.mrb[0].mxu0
        %v2336 = vadd.f32 0.0, %v2335
        %v2337 = vpop.f32.mrb[0].mxu0
        %v2338 = vadd.f32 0.0, %v2337
        %v2339 = vpop.f32.mrb[0].mxu0
        %v2340 = vadd.f32 0.0, %v2339
        %2341 = vmatprep.mubr.bf16.mxu0 0
        %2342 = vmatmul.mubr.bf16.gmra.mrb[0].mxu0 %v1488
        %v2343 = vpop.f32.mrb[0].mxu0
        %v2344 = vadd.f32 0.0, %v2343
        %v2345 = vpop.f32.mrb[0].mxu0
        %v2346 = vadd.f32 0.0, %v2345
        %v2347 = vpop.f32.mrb[0].mxu0
        %v2348 = vadd.f32 0.0, %v2347
        %v2349 = vpop.f32.mrb[0].mxu0
        %v2350 = vadd.f32 0.0, %v2349
        %2351 = vmatprep.mubr.bf16.mxu0 0
        %2352 = vmatmul.mubr.bf16.gmra.mrb[0].mxu0 %v1491
        %v2353 = vpop.f32.mrb[0].mxu0
        %v2354 = vadd.f32 0.0, %v2353
        %v2355 = vpop.f32.mrb[0].mxu0
        %v2356 = vadd.f32 0.0, %v2355
        %v2357 = vpop.f32.mrb[0].mxu0
        %v2358 = vadd.f32 0.0, %v2357
        %v2359 = vpop.f32.mrb[0].mxu0
        %v2360 = vadd.f32 0.0, %v2359
        %2361 = vmatprep.mubr.bf16.mxu0 0
        %2362 = vmatmul.mubr.bf16.gmra.mrb[0].mxu0 %v1494
        %v2363 = vpop.f32.mrb[0].mxu0
        %v2364 = vadd.f32 0.0, %v2363
        %v2365 = vpop.f32.mrb[0].mxu0
        %v2366 = vadd.f32 0.0, %v2365
        %v2367 = vpop.f32.mrb[0].mxu0
        %v2368 = vadd.f32 0.0, %v2367
        %v2369 = vpop.f32.mrb[0].mxu0
        %v2370 = vadd.f32 0.0, %v2369
        %2371 = vmatprep.mubr.bf16.mxu0 0
        %2372 = vmatmul.mubr.bf16.gmra.mrb[0].mxu0 %v1497
        %v2373 = vpop.f32.mrb[0].mxu0
        %v2374 = vadd.f32 0.0, %v2373
        %v2375 = vpop.f32.mrb[0].mxu0
        %v2376 = vadd.f32 0.0, %v2375
        %v2377 = vpop.f32.mrb[0].mxu0
        %v2378 = vadd.f32 0.0, %v2377
        %v2379 = vpop.f32.mrb[0].mxu0
        %v2380 = vadd.f32 0.0, %v2379
        %2381 = vmatprep.mubr.bf16.mxu0 0
        %2382 = vmatmul.mubr.bf16.gmra.mrb[0].mxu0 %v1500
        %v2383 = vpop.f32.mrb[0].mxu0
        %v2384 = vadd.f32 0.0, %v2383
        %v2385 = vpop.f32.mrb[0].mxu0
        %v2386 = vadd.f32 0.0, %v2385
        %v2387 = vpop.f32.mrb[0].mxu0
        %v2388 = vadd.f32 0.0, %v2387
        %v2389 = vpop.f32.mrb[0].mxu0
        %v2390 = vadd.f32 0.0, %v2389
        %2391 = vmatprep.mubr.bf16.mxu0 0
        %2392 = vmatmul.mubr.bf16.gmra.mrb[0].mxu0 %v1503
        %v2393 = vpop.f32.mrb[0].mxu0
        %v2394 = vadd.f32 0.0, %v2393
        %v2395 = vpop.f32.mrb[0].mxu0
        %v2396 = vadd.f32 0.0, %v2395
        %v2397 = vpop.f32.mrb[0].mxu0
        %v2398 = vadd.f32 0.0, %v2397
        %v2399 = vpop.f32.mrb[0].mxu0
        %v2400 = vadd.f32 0.0, %v2399
        %2401 = vmatprep.mubr.bf16.mxu0 0
        %2402 = vmatmul.mubr.bf16.gmra.mrb[0].mxu0 %v1506
        %v2403 = vpop.f32.mrb[0].mxu0
        %v2404 = vadd.f32 0.0, %v2403
        %v2405 = vpop.f32.mrb[0].mxu0
        %v2406 = vadd.f32 0.0, %v2405
        %v2407 = vpop.f32.mrb[0].mxu0
        %v2408 = vadd.f32 0.0, %v2407
        %v2409 = vpop.f32.mrb[0].mxu0
        %v2410 = vadd.f32 0.0, %v2409
        %2411 = vmatprep.mubr.bf16.mxu0 0
        %2412 = vmatmul.mubr.bf16.gmra.mrb[0].mxu0 %v1509
        %v2413 = vpop.f32.mrb[0].mxu0
        %v2414 = vadd.f32 0.0, %v2413
        %v2415 = vpop.f32.mrb[0].mxu0
        %v2416 = vadd.f32 0.0, %v2415
        %v2417 = vpop.f32.mrb[0].mxu0
        %v2418 = vadd.f32 0.0, %v2417
        %v2419 = vpop.f32.mrb[0].mxu0
        %v2420 = vadd.f32 0.0, %v2419
        %2421 = vmatprep.mubr.bf16.mxu0 0
        %2422 = vmatmul.mubr.bf16.gmra.mrb[0].mxu0 %v1512
        %v2423 = vpop.f32.mrb[0].mxu0
        %v2424 = vadd.f32 0.0, %v2423
        %v2425 = vpop.f32.mrb[0].mxu0
        %v2426 = vadd.f32 0.0, %v2425
        %v2427 = vpop.f32.mrb[0].mxu0
        %v2428 = vadd.f32 0.0, %v2427
        %v2429 = vpop.f32.mrb[0].mxu0
        %v2430 = vadd.f32 0.0, %v2429
        %2431 = vmatprep.mubr.bf16.mxu0 0
        %2432 = vmatmul.mubr.bf16.gmra.mrb[0].mxu0 %v1515
        %v2433 = vpop.f32.mrb[0].mxu0
        %v2434 = vadd.f32 0.0, %v2433
        %v2435 = vpop.f32.mrb[0].mxu0
        %v2436 = vadd.f32 0.0, %v2435
        %v2437 = vpop.f32.mrb[0].mxu0
        %v2438 = vadd.f32 0.0, %v2437
        %v2439 = vpop.f32.mrb[0].mxu0
        %v2440 = vadd.f32 0.0, %v2439
        %2441 = vmatprep.mubr.bf16.mxu0 0
        %2442 = vmatmul.mubr.bf16.gmra.mrb[0].mxu0 %v1518
        %v2443 = vpop.f32.mrb[0].mxu0
        %v2444 = vadd.f32 0.0, %v2443
        %v2445 = vpop.f32.mrb[0].mxu0
        %v2446 = vadd.f32 0.0, %v2445
        %v2447 = vpop.f32.mrb[0].mxu0
        %v2448 = vadd.f32 0.0, %v2447
        %v2449 = vpop.f32.mrb[0].mxu0
        %v2450 = vadd.f32 0.0, %v2449
        %2451 = vmatprep.mubr.bf16.mxu0 0
        %2452 = vmatmul.mubr.bf16.gmra.mrb[0].mxu0 %v2273
        %v2453 = vpop.f32.mrb[0].mxu0
        %v2454 = vpop.f32.mrb[0].mxu0
        %v2455 = vpop.f32.mrb[0].mxu0
        %v2456 = vpop.f32.mrb[0].mxu0
        %2457 = vdwg.mxu0
        %2458 = vmatprep.subr.bf16.mxu0 %v2251
        %2459 = vmatpush1.bf16.msra.mxu0 %v2250
        %2460 = vmatprep.subr.bf16.mxu0 %v2285
        %2461 = vmatpush1.bf16.msra.mxu0 %v2282
        %2462 = vmatprep.subr.bf16.mxu0 0
        %2463 = vmatpush1.bf16.msra.mxu0 0
        %2464 = vmatprep.subr.bf16.mxu0 0
        %2465 = vmatpush1.bf16.msra.mxu0 0
        %2466 = vmatprep.subr.bf16.mxu0 0
        %2467 = vmatpush1.bf16.msra.mxu0 0
        %2468 = vmatprep.subr.bf16.mxu0 0
        %2469 = vmatpush1.bf16.msra.mxu0 0
        %2470 = vmatprep.subr.bf16.mxu0 0
        %2471 = vmatpush1.bf16.msra.mxu0 0
        %2472 = vmatprep.subr.bf16.mxu0 0
        %2473 = vmatpush1.bf16.msra.mxu0 0
        %2474 = vmatprep.subr.bf16.mxu0 0
        %2475 = vmatpush1.bf16.msra.mxu0 0
        %2476 = vmatprep.subr.bf16.mxu0 0
        %2477 = vmatpush1.bf16.msra.mxu0 0
        %2478 = vmatprep.subr.bf16.mxu0 0
        %2479 = vmatpush1.bf16.msra.mxu0 0
        %2480 = vmatprep.subr.bf16.mxu0 0
        %2481 = vmatpush1.bf16.msra.mxu0 0
        %2482 = vmatprep.subr.bf16.mxu0 0
        %2483 = vmatpush1.bf16.msra.mxu0 0
        %2484 = vmatprep.subr.bf16.mxu0 0
        %2485 = vmatpush1.bf16.msra.mxu0 0
        %2486 = vmatprep.subr.bf16.mxu0 0
        %2487 = vmatpush1.bf16.msra.mxu0 0
        %2488 = vmatprep.subr.bf16.mxu0 0
        %2489 = vmatpush1.bf16.msra.mxu0 0
        %2490 = vmatprep.mubr.bf16.mxu0 0
        %2491 = vmatmul.mubr.bf16.gmra.mrb[0].mxu0 %v1485
        %v2492 = vpop.f32.mrb[0].mxu0
        %v2493 = vadd.f32 0.0, %v2492
        %v2494 = vpop.f32.mrb[0].mxu0
        %v2495 = vadd.f32 0.0, %v2494
        %v2496 = vpop.f32.mrb[0].mxu0
        %v2497 = vadd.f32 0.0, %v2496
        %v2498 = vpop.f32.mrb[0].mxu0
        %v2499 = vadd.f32 0.0, %v2498
        %2500 = vmatprep.mubr.bf16.mxu0 0
        %2501 = vmatmul.mubr.bf16.gmra.mrb[0].mxu0 %v1488
        %v2502 = vpop.f32.mrb[0].mxu0
        %v2503 = vadd.f32 0.0, %v2502
        %v2504 = vpop.f32.mrb[0].mxu0
        %v2505 = vadd.f32 0.0, %v2504
        %v2506 = vpop.f32.mrb[0].mxu0
        %v2507 = vadd.f32 0.0, %v2506
        %v2508 = vpop.f32.mrb[0].mxu0
        %v2509 = vadd.f32 0.0, %v2508
        %2510 = vmatprep.mubr.bf16.mxu0 0
        %2511 = vmatmul.mubr.bf16.gmra.mrb[0].mxu0 %v1491
        %v2512 = vpop.f32.mrb[0].mxu0
        %v2513 = vadd.f32 0.0, %v2512
        %v2514 = vpop.f32.mrb[0].mxu0
        %v2515 = vadd.f32 0.0, %v2514
        %v2516 = vpop.f32.mrb[0].mxu0
        %v2517 = vadd.f32 0.0, %v2516
        %v2518 = vpop.f32.mrb[0].mxu0
        %v2519 = vadd.f32 0.0, %v2518
        %2520 = vmatprep.mubr.bf16.mxu0 0
        %2521 = vmatmul.mubr.bf16.gmra.mrb[0].mxu0 %v1494
        %v2522 = vpop.f32.mrb[0].mxu0
        %v2523 = vadd.f32 0.0, %v2522
        %v2524 = vpop.f32.mrb[0].mxu0
        %v2525 = vadd.f32 0.0, %v2524
        %v2526 = vpop.f32.mrb[0].mxu0
        %v2527 = vadd.f32 0.0, %v2526
        %v2528 = vpop.f32.mrb[0].mxu0
        %v2529 = vadd.f32 0.0, %v2528
        %2530 = vmatprep.mubr.bf16.mxu0 0
        %2531 = vmatmul.mubr.bf16.gmra.mrb[0].mxu0 %v1497
        %v2532 = vpop.f32.mrb[0].mxu0
        %v2533 = vadd.f32 0.0, %v2532
        %v2534 = vpop.f32.mrb[0].mxu0
        %v2535 = vadd.f32 0.0, %v2534
        %v2536 = vpop.f32.mrb[0].mxu0
        %v2537 = vadd.f32 0.0, %v2536
        %v2538 = vpop.f32.mrb[0].mxu0
        %v2539 = vadd.f32 0.0, %v2538
        %2540 = vmatprep.mubr.bf16.mxu0 0
        %2541 = vmatmul.mubr.bf16.gmra.mrb[0].mxu0 %v1500
        %v2542 = vpop.f32.mrb[0].mxu0
        %v2543 = vadd.f32 0.0, %v2542
        %v2544 = vpop.f32.mrb[0].mxu0
        %v2545 = vadd.f32 0.0, %v2544
        %v2546 = vpop.f32.mrb[0].mxu0
        %v2547 = vadd.f32 0.0, %v2546
        %v2548 = vpop.f32.mrb[0].mxu0
        %v2549 = vadd.f32 0.0, %v2548
        %2550 = vmatprep.mubr.bf16.mxu0 0
        %2551 = vmatmul.mubr.bf16.gmra.mrb[0].mxu0 %v1503
        %v2552 = vpop.f32.mrb[0].mxu0
        %v2553 = vadd.f32 0.0, %v2552
        %v2554 = vpop.f32.mrb[0].mxu0
        %v2555 = vadd.f32 0.0, %v2554
        %v2556 = vpop.f32.mrb[0].mxu0
        %v2557 = vadd.f32 0.0, %v2556
        %v2558 = vpop.f32.mrb[0].mxu0
        %v2559 = vadd.f32 0.0, %v2558
        %2560 = vmatprep.mubr.bf16.mxu0 0
        %2561 = vmatmul.mubr.bf16.gmra.mrb[0].mxu0 %v1506
        %v2562 = vpop.f32.mrb[0].mxu0
        %v2563 = vadd.f32 0.0, %v2562
        %v2564 = vpop.f32.mrb[0].mxu0
        %v2565 = vadd.f32 0.0, %v2564
        %v2566 = vpop.f32.mrb[0].mxu0
        %v2567 = vadd.f32 0.0, %v2566
        %v2568 = vpop.f32.mrb[0].mxu0
        %v2569 = vadd.f32 0.0, %v2568
        %2570 = vmatprep.mubr.bf16.mxu0 0
        %2571 = vmatmul.mubr.bf16.gmra.mrb[0].mxu0 %v1509
        %v2572 = vpop.f32.mrb[0].mxu0
        %v2573 = vadd.f32 0.0, %v2572
        %v2574 = vpop.f32.mrb[0].mxu0
        %v2575 = vadd.f32 0.0, %v2574
        %v2576 = vpop.f32.mrb[0].mxu0
        %v2577 = vadd.f32 0.0, %v2576
        %v2578 = vpop.f32.mrb[0].mxu0
        %v2579 = vadd.f32 0.0, %v2578
        %2580 = vmatprep.mubr.bf16.mxu0 0
        %2581 = vmatmul.mubr.bf16.gmra.mrb[0].mxu0 %v1512
        %v2582 = vpop.f32.mrb[0].mxu0
        %v2583 = vadd.f32 0.0, %v2582
        %v2584 = vpop.f32.mrb[0].mxu0
        %v2585 = vadd.f32 0.0, %v2584
        %v2586 = vpop.f32.mrb[0].mxu0
        %v2587 = vadd.f32 0.0, %v2586
        %v2588 = vpop.f32.mrb[0].mxu0
        %v2589 = vadd.f32 0.0, %v2588
        %2590 = vmatprep.mubr.bf16.mxu0 0
        %2591 = vmatmul.mubr.bf16.gmra.mrb[0].mxu0 %v1515
        %v2592 = vpop.f32.mrb[0].mxu0
        %v2593 = vadd.f32 0.0, %v2592
        %v2594 = vpop.f32.mrb[0].mxu0
        %v2595 = vadd.f32 0.0, %v2594
        %v2596 = vpop.f32.mrb[0].mxu0
        %v2597 = vadd.f32 0.0, %v2596
        %v2598 = vpop.f32.mrb[0].mxu0
        %v2599 = vadd.f32 0.0, %v2598
        %2600 = vmatprep.mubr.bf16.mxu0 0
        %2601 = vmatmul.mubr.bf16.gmra.mrb[0].mxu0 %v1518
        %v2602 = vpop.f32.mrb[0].mxu0
        %v2603 = vadd.f32 0.0, %v2602
        %v2604 = vpop.f32.mrb[0].mxu0
        %v2605 = vadd.f32 0.0, %v2604
        %v2606 = vpop.f32.mrb[0].mxu0
        %v2607 = vadd.f32 0.0, %v2606
        %v2608 = vpop.f32.mrb[0].mxu0
        %v2609 = vadd.f32 0.0, %v2608
        %2610 = vmatprep.mubr.bf16.mxu0 0
        %2611 = vmatmul.mubr.bf16.gmra.mrb[0].mxu0 %v2273
        %v2612 = vpop.f32.mrb[0].mxu0
        %v2613 = vpop.f32.mrb[0].mxu0
        %v2614 = vpop.f32.mrb[0].mxu0
        %v2615 = vpop.f32.mrb[0].mxu0
        %2616 = vdwg.mxu0
        %2617 = vmatprep.subr.bf16.mxu0 %v2253
        %2618 = vmatpush1.bf16.msra.mxu0 %v2252
        %2619 = vmatprep.subr.bf16.mxu0 %v2291
        %2620 = vmatpush1.bf16.msra.mxu0 %v2288
        %2621 = vmatprep.subr.bf16.mxu0 0
        %2622 = vmatpush1.bf16.msra.mxu0 0
        %2623 = vmatprep.subr.bf16.mxu0 0
        %2624 = vmatpush1.bf16.msra.mxu0 0
        %2625 = vmatprep.subr.bf16.mxu0 0
        %2626 = vmatpush1.bf16.msra.mxu0 0
        %2627 = vmatprep.subr.bf16.mxu0 0
        %2628 = vmatpush1.bf16.msra.mxu0 0
        %2629 = vmatprep.subr.bf16.mxu0 0
        %2630 = vmatpush1.bf16.msra.mxu0 0
        %2631 = vmatprep.subr.bf16.mxu0 0
        %2632 = vmatpush1.bf16.msra.mxu0 0
        %2633 = vmatprep.subr.bf16.mxu0 0
        %2634 = vmatpush1.bf16.msra.mxu0 0
        %2635 = vmatprep.subr.bf16.mxu0 0
        %2636 = vmatpush1.bf16.msra.mxu0 0
        %2637 = vmatprep.subr.bf16.mxu0 0
        %2638 = vmatpush1.bf16.msra.mxu0 0
        %2639 = vmatprep.subr.bf16.mxu0 0
        %2640 = vmatpush1.bf16.msra.mxu0 0
        %2641 = vmatprep.subr.bf16.mxu0 0
        %2642 = vmatpush1.bf16.msra.mxu0 0
        %2643 = vmatprep.subr.bf16.mxu0 0
        %2644 = vmatpush1.bf16.msra.mxu0 0
        %2645 = vmatprep.subr.bf16.mxu0 0
        %2646 = vmatpush1.bf16.msra.mxu0 0
        %2647 = vmatprep.subr.bf16.mxu0 0
        %2648 = vmatpush1.bf16.msra.mxu0 0
        %2649 = vmatprep.mubr.bf16.mxu0 0
        %2650 = vmatmul.mubr.bf16.gmra.mrb[0].mxu0 %v1485
        %v2651 = vpop.f32.mrb[0].mxu0
        %v2652 = vadd.f32 0.0, %v2651
        %v2653 = vpop.f32.mrb[0].mxu0
        %v2654 = vadd.f32 0.0, %v2653
        %v2655 = vpop.f32.mrb[0].mxu0
        %v2656 = vadd.f32 0.0, %v2655
        %v2657 = vpop.f32.mrb[0].mxu0
        %v2658 = vadd.f32 0.0, %v2657
        %2659 = vmatprep.mubr.bf16.mxu0 0
        %2660 = vmatmul.mubr.bf16.gmra.mrb[0].mxu0 %v1488
        %v2661 = vpop.f32.mrb[0].mxu0
        %v2662 = vadd.f32 0.0, %v2661
        %v2663 = vpop.f32.mrb[0].mxu0
        %v2664 = vadd.f32 0.0, %v2663
        %v2665 = vpop.f32.mrb[0].mxu0
        %v2666 = vadd.f32 0.0, %v2665
        %v2667 = vpop.f32.mrb[0].mxu0
        %v2668 = vadd.f32 0.0, %v2667
        %2669 = vmatprep.mubr.bf16.mxu0 0
        %2670 = vmatmul.mubr.bf16.gmra.mrb[0].mxu0 %v1491
        %v2671 = vpop.f32.mrb[0].mxu0
        %v2672 = vadd.f32 0.0, %v2671
        %v2673 = vpop.f32.mrb[0].mxu0
        %v2674 = vadd.f32 0.0, %v2673
        %v2675 = vpop.f32.mrb[0].mxu0
        %v2676 = vadd.f32 0.0, %v2675
        %v2677 = vpop.f32.mrb[0].mxu0
        %v2678 = vadd.f32 0.0, %v2677
        %2679 = vmatprep.mubr.bf16.mxu0 0
        %2680 = vmatmul.mubr.bf16.gmra.mrb[0].mxu0 %v1494
        %v2681 = vpop.f32.mrb[0].mxu0
        %v2682 = vadd.f32 0.0, %v2681
        %v2683 = vpop.f32.mrb[0].mxu0
        %v2684 = vadd.f32 0.0, %v2683
        %v2685 = vpop.f32.mrb[0].mxu0
        %v2686 = vadd.f32 0.0, %v2685
        %v2687 = vpop.f32.mrb[0].mxu0
        %v2688 = vadd.f32 0.0, %v2687
        %2689 = vmatprep.mubr.bf16.mxu0 0
        %2690 = vmatmul.mubr.bf16.gmra.mrb[0].mxu0 %v1497
        %v2691 = vpop.f32.mrb[0].mxu0
        %v2692 = vadd.f32 0.0, %v2691
        %v2693 = vpop.f32.mrb[0].mxu0
        %v2694 = vadd.f32 0.0, %v2693
        %v2695 = vpop.f32.mrb[0].mxu0
        %v2696 = vadd.f32 0.0, %v2695
        %v2697 = vpop.f32.mrb[0].mxu0
        %v2698 = vadd.f32 0.0, %v2697
        %2699 = vmatprep.mubr.bf16.mxu0 0
        %2700 = vmatmul.mubr.bf16.gmra.mrb[0].mxu0 %v1500
        %v2701 = vpop.f32.mrb[0].mxu0
        %v2702 = vadd.f32 0.0, %v2701
        %v2703 = vpop.f32.mrb[0].mxu0
        %v2704 = vadd.f32 0.0, %v2703
        %v2705 = vpop.f32.mrb[0].mxu0
        %v2706 = vadd.f32 0.0, %v2705
        %v2707 = vpop.f32.mrb[0].mxu0
        %v2708 = vadd.f32 0.0, %v2707
        %2709 = vmatprep.mubr.bf16.mxu0 0
        %2710 = vmatmul.mubr.bf16.gmra.mrb[0].mxu0 %v1503
        %v2711 = vpop.f32.mrb[0].mxu0
        %v2712 = vadd.f32 0.0, %v2711
        %v2713 = vpop.f32.mrb[0].mxu0
        %v2714 = vadd.f32 0.0, %v2713
        %v2715 = vpop.f32.mrb[0].mxu0
        %v2716 = vadd.f32 0.0, %v2715
        %v2717 = vpop.f32.mrb[0].mxu0
        %v2718 = vadd.f32 0.0, %v2717
        %2719 = vmatprep.mubr.bf16.mxu0 0
        %2720 = vmatmul.mubr.bf16.gmra.mrb[0].mxu0 %v1506
        %v2721 = vpop.f32.mrb[0].mxu0
        %v2722 = vadd.f32 0.0, %v2721
        %v2723 = vpop.f32.mrb[0].mxu0
        %v2724 = vadd.f32 0.0, %v2723
        %v2725 = vpop.f32.mrb[0].mxu0
        %v2726 = vadd.f32 0.0, %v2725
        %v2727 = vpop.f32.mrb[0].mxu0
        %v2728 = vadd.f32 0.0, %v2727
        %2729 = vmatprep.mubr.bf16.mxu0 0
        %2730 = vmatmul.mubr.bf16.gmra.mrb[0].mxu0 %v1509
        %v2731 = vpop.f32.mrb[0].mxu0
        %v2732 = vadd.f32 0.0, %v2731
        %v2733 = vpop.f32.mrb[0].mxu0
        %v2734 = vadd.f32 0.0, %v2733
        %v2735 = vpop.f32.mrb[0].mxu0
        %v2736 = vadd.f32 0.0, %v2735
        %v2737 = vpop.f32.mrb[0].mxu0
        %v2738 = vadd.f32 0.0, %v2737
        %2739 = vmatprep.mubr.bf16.mxu0 0
        %2740 = vmatmul.mubr.bf16.gmra.mrb[0].mxu0 %v1512
        %v2741 = vpop.f32.mrb[0].mxu0
        %v2742 = vadd.f32 0.0, %v2741
        %v2743 = vpop.f32.mrb[0].mxu0
        %v2744 = vadd.f32 0.0, %v2743
        %v2745 = vpop.f32.mrb[0].mxu0
        %v2746 = vadd.f32 0.0, %v2745
        %v2747 = vpop.f32.mrb[0].mxu0
        %v2748 = vadd.f32 0.0, %v2747
        %2749 = vmatprep.mubr.bf16.mxu0 0
        %2750 = vmatmul.mubr.bf16.gmra.mrb[0].mxu0 %v1515
        %v2751 = vpop.f32.mrb[0].mxu0
        %v2752 = vadd.f32 0.0, %v2751
        %v2753 = vpop.f32.mrb[0].mxu0
        %v2754 = vadd.f32 0.0, %v2753
        %v2755 = vpop.f32.mrb[0].mxu0
        %v2756 = vadd.f32 0.0, %v2755
        %v2757 = vpop.f32.mrb[0].mxu0
        %v2758 = vadd.f32 0.0, %v2757
        %2759 = vmatprep.mubr.bf16.mxu0 0
        %2760 = vmatmul.mubr.bf16.gmra.mrb[0].mxu0 %v1518
        %v2761 = vpop.f32.mrb[0].mxu0
        %v2762 = vadd.f32 0.0, %v2761
        %v2763 = vpop.f32.mrb[0].mxu0
        %v2764 = vadd.f32 0.0, %v2763
        %v2765 = vpop.f32.mrb[0].mxu0
        %v2766 = vadd.f32 0.0, %v2765
        %v2767 = vpop.f32.mrb[0].mxu0
        %v2768 = vadd.f32 0.0, %v2767
        %2769 = vmatprep.mubr.bf16.mxu0 0
        %2770 = vmatmul.mubr.bf16.gmra.mrb[0].mxu0 %v2273
        %v2771 = vpop.f32.mrb[0].mxu0
        %v2772 = vpop.f32.mrb[0].mxu0
        %v2773 = vpop.f32.mrb[0].mxu0
        %v2774 = vpop.f32.mrb[0].mxu0
        %2775 = vdwg.mxu0
        %2776 = vmatprep.subr.bf16.mxu0 %v2255
        %2777 = vmatpush1.bf16.msra.mxu0 %v2254
        %2778 = vmatprep.subr.bf16.mxu0 %v2297
        %2779 = vmatpush1.bf16.msra.mxu0 %v2294
        %2780 = vmatprep.subr.bf16.mxu0 0
        %2781 = vmatpush1.bf16.msra.mxu0 0
        %2782 = vmatprep.subr.bf16.mxu0 0
        %2783 = vmatpush1.bf16.msra.mxu0 0
        %2784 = vmatprep.subr.bf16.mxu0 0
        %2785 = vmatpush1.bf16.msra.mxu0 0
        %2786 = vmatprep.subr.bf16.mxu0 0
        %2787 = vmatpush1.bf16.msra.mxu0 0
        %2788 = vmatprep.subr.bf16.mxu0 0
        %2789 = vmatpush1.bf16.msra.mxu0 0
        %2790 = vmatprep.subr.bf16.mxu0 0
        %2791 = vmatpush1.bf16.msra.mxu0 0
        %2792 = vmatprep.subr.bf16.mxu0 0
        %2793 = vmatpush1.bf16.msra.mxu0 0
        %2794 = vmatprep.subr.bf16.mxu0 0
        %2795 = vmatpush1.bf16.msra.mxu0 0
        %2796 = vmatprep.subr.bf16.mxu0 0
        %2797 = vmatpush1.bf16.msra.mxu0 0
        %2798 = vmatprep.subr.bf16.mxu0 0
        %2799 = vmatpush1.bf16.msra.mxu0 0
        %2800 = vmatprep.subr.bf16.mxu0 0
        %2801 = vmatpush1.bf16.msra.mxu0 0
        %2802 = vmatprep.subr.bf16.mxu0 0
        %2803 = vmatpush1.bf16.msra.mxu0 0
        %2804 = vmatprep.subr.bf16.mxu0 0
        %2805 = vmatpush1.bf16.msra.mxu0 0
        %2806 = vmatprep.subr.bf16.mxu0 0
        %2807 = vmatpush1.bf16.msra.mxu0 0
        %2808 = vmatprep.mubr.bf16.mxu0 0
        %2809 = vmatmul.mubr.bf16.gmra.mrb[0].mxu0 %v1485
        %v2810 = vpop.f32.mrb[0].mxu0
        %v2811 = vadd.f32 0.0, %v2810
        %v2812 = vpop.f32.mrb[0].mxu0
        %v2813 = vadd.f32 0.0, %v2812
        %v2814 = vpop.f32.mrb[0].mxu0
        %v2815 = vadd.f32 0.0, %v2814
        %v2816 = vpop.f32.mrb[0].mxu0
        %v2817 = vadd.f32 0.0, %v2816
        %2818 = vmatprep.mubr.bf16.mxu0 0
        %2819 = vmatmul.mubr.bf16.gmra.mrb[0].mxu0 %v1488
        %v2820 = vpop.f32.mrb[0].mxu0
        %v2821 = vadd.f32 0.0, %v2820
        %v2822 = vpop.f32.mrb[0].mxu0
        %v2823 = vadd.f32 0.0, %v2822
        %v2824 = vpop.f32.mrb[0].mxu0
        %v2825 = vadd.f32 0.0, %v2824
        %v2826 = vpop.f32.mrb[0].mxu0
        %v2827 = vadd.f32 0.0, %v2826
        %2828 = vmatprep.mubr.bf16.mxu0 0
        %2829 = vmatmul.mubr.bf16.gmra.mrb[0].mxu0 %v1491
        %v2830 = vpop.f32.mrb[0].mxu0
        %v2831 = vadd.f32 0.0, %v2830
        %v2832 = vpop.f32.mrb[0].mxu0
        %v2833 = vadd.f32 0.0, %v2832
        %v2834 = vpop.f32.mrb[0].mxu0
        %v2835 = vadd.f32 0.0, %v2834
        %v2836 = vpop.f32.mrb[0].mxu0
        %v2837 = vadd.f32 0.0, %v2836
        %2838 = vmatprep.mubr.bf16.mxu0 0
        %2839 = vmatmul.mubr.bf16.gmra.mrb[0].mxu0 %v1494
        %v2840 = vpop.f32.mrb[0].mxu0
        %v2841 = vadd.f32 0.0, %v2840
        %v2842 = vpop.f32.mrb[0].mxu0
        %v2843 = vadd.f32 0.0, %v2842
        %v2844 = vpop.f32.mrb[0].mxu0
        %v2845 = vadd.f32 0.0, %v2844
        %v2846 = vpop.f32.mrb[0].mxu0
        %v2847 = vadd.f32 0.0, %v2846
        %2848 = vmatprep.mubr.bf16.mxu0 0
        %2849 = vmatmul.mubr.bf16.gmra.mrb[0].mxu0 %v1497
        %v2850 = vpop.f32.mrb[0].mxu0
        %v2851 = vadd.f32 0.0, %v2850
        %v2852 = vpop.f32.mrb[0].mxu0
        %v2853 = vadd.f32 0.0, %v2852
        %v2854 = vpop.f32.mrb[0].mxu0
        %v2855 = vadd.f32 0.0, %v2854
        %v2856 = vpop.f32.mrb[0].mxu0
        %v2857 = vadd.f32 0.0, %v2856
        %2858 = vmatprep.mubr.bf16.mxu0 0
        %2859 = vmatmul.mubr.bf16.gmra.mrb[0].mxu0 %v1500
        %v2860 = vpop.f32.mrb[0].mxu0
        %v2861 = vadd.f32 0.0, %v2860
        %v2862 = vpop.f32.mrb[0].mxu0
        %v2863 = vadd.f32 0.0, %v2862
        %v2864 = vpop.f32.mrb[0].mxu0
        %v2865 = vadd.f32 0.0, %v2864
        %v2866 = vpop.f32.mrb[0].mxu0
        %v2867 = vadd.f32 0.0, %v2866
        %2868 = vmatprep.mubr.bf16.mxu0 0
        %2869 = vmatmul.mubr.bf16.gmra.mrb[0].mxu0 %v1503
        %v2870 = vpop.f32.mrb[0].mxu0
        %v2871 = vadd.f32 0.0, %v2870
        %v2872 = vpop.f32.mrb[0].mxu0
        %v2873 = vadd.f32 0.0, %v2872
        %v2874 = vpop.f32.mrb[0].mxu0
        %v2875 = vadd.f32 0.0, %v2874
        %v2876 = vpop.f32.mrb[0].mxu0
        %v2877 = vadd.f32 0.0, %v2876
        %2878 = vmatprep.mubr.bf16.mxu0 0
        %2879 = vmatmul.mubr.bf16.gmra.mrb[0].mxu0 %v1506
        %v2880 = vpop.f32.mrb[0].mxu0
        %v2881 = vadd.f32 0.0, %v2880
        %v2882 = vpop.f32.mrb[0].mxu0
        %v2883 = vadd.f32 0.0, %v2882
        %v2884 = vpop.f32.mrb[0].mxu0
        %v2885 = vadd.f32 0.0, %v2884
        %v2886 = vpop.f32.mrb[0].mxu0
        %v2887 = vadd.f32 0.0, %v2886
        %2888 = vmatprep.mubr.bf16.mxu0 0
        %2889 = vmatmul.mubr.bf16.gmra.mrb[0].mxu0 %v1509
        %v2890 = vpop.f32.mrb[0].mxu0
        %v2891 = vadd.f32 0.0, %v2890
        %v2892 = vpop.f32.mrb[0].mxu0
        %v2893 = vadd.f32 0.0, %v2892
        %v2894 = vpop.f32.mrb[0].mxu0
        %v2895 = vadd.f32 0.0, %v2894
        %v2896 = vpop.f32.mrb[0].mxu0
        %v2897 = vadd.f32 0.0, %v2896
        %2898 = vmatprep.mubr.bf16.mxu0 0
        %2899 = vmatmul.mubr.bf16.gmra.mrb[0].mxu0 %v1512
        %v2900 = vpop.f32.mrb[0].mxu0
        %v2901 = vadd.f32 0.0, %v2900
        %v2902 = vpop.f32.mrb[0].mxu0
        %v2903 = vadd.f32 0.0, %v2902
        %v2904 = vpop.f32.mrb[0].mxu0
        %v2905 = vadd.f32 0.0, %v2904
        %v2906 = vpop.f32.mrb[0].mxu0
        %v2907 = vadd.f32 0.0, %v2906
        %2908 = vmatprep.mubr.bf16.mxu0 0
        %2909 = vmatmul.mubr.bf16.gmra.mrb[0].mxu0 %v1515
        %v2910 = vpop.f32.mrb[0].mxu0
        %v2911 = vadd.f32 0.0, %v2910
        %v2912 = vpop.f32.mrb[0].mxu0
        %v2913 = vadd.f32 0.0, %v2912
        %v2914 = vpop.f32.mrb[0].mxu0
        %v2915 = vadd.f32 0.0, %v2914
        %v2916 = vpop.f32.mrb[0].mxu0
        %v2917 = vadd.f32 0.0, %v2916
        %2918 = vmatprep.mubr.bf16.mxu0 0
        %2919 = vmatmul.mubr.bf16.gmra.mrb[0].mxu0 %v1518
        %v2920 = vpop.f32.mrb[0].mxu0
        %v2921 = vadd.f32 0.0, %v2920
        %v2922 = vpop.f32.mrb[0].mxu0
        %v2923 = vadd.f32 0.0, %v2922
        %v2924 = vpop.f32.mrb[0].mxu0
        %v2925 = vadd.f32 0.0, %v2924
        %v2926 = vpop.f32.mrb[0].mxu0
        %v2927 = vadd.f32 0.0, %v2926
        %2928 = vmatprep.mubr.bf16.mxu0 0
        %2929 = vmatmul.mubr.bf16.gmra.mrb[0].mxu0 %v2273
        %v2930 = vpop.f32.mrb[0].mxu0
        %v2931 = vpop.f32.mrb[0].mxu0
        %v2932 = vpop.f32.mrb[0].mxu0
        %v2933 = vpop.f32.mrb[0].mxu0
        %2934 = vdwg.mxu0
        %v2935 = vadd.f32 %v1579, %v2334
        %v2936 = vadd.f32 %v1581, %v2336
        %v2937 = vadd.f32 %v1738, %v2493
        %v2938 = vadd.f32 %v1740, %v2495
        %v2939 = vadd.f32 %v1897, %v2652
        %v2940 = vadd.f32 %v1899, %v2654
        %v2941 = vadd.f32 %v2056, %v2811
        %v2942 = vadd.f32 %v2058, %v2813
        %v2943 = vadd.f32 %v1583, %v2338
        %v2944 = vadd.f32 %v1585, %v2340
        %v2945 = vadd.f32 %v1742, %v2497
        %v2946 = vadd.f32 %v1744, %v2499
        %v2947 = vadd.f32 %v1901, %v2656
        %v2948 = vadd.f32 %v1903, %v2658
        %v2949 = vadd.f32 %v2060, %v2815
        %v2950 = vadd.f32 %v2062, %v2817
        %v2951 = vadd.f32 %v1589, %v2344
        %v2952 = vadd.f32 %v1591, %v2346
        %v2953 = vadd.f32 %v1748, %v2503
        %v2954 = vadd.f32 %v1750, %v2505
        %v2955 = vadd.f32 %v1907, %v2662
        %v2956 = vadd.f32 %v1909, %v2664
        %v2957 = vadd.f32 %v2066, %v2821
        %v2958 = vadd.f32 %v2068, %v2823
        %v2959 = vadd.f32 %v1593, %v2348
        %v2960 = vadd.f32 %v1595, %v2350
        %v2961 = vadd.f32 %v1752, %v2507
        %v2962 = vadd.f32 %v1754, %v2509
        %v2963 = vadd.f32 %v1911, %v2666
        %v2964 = vadd.f32 %v1913, %v2668
        %v2965 = vadd.f32 %v2070, %v2825
        %v2966 = vadd.f32 %v2072, %v2827
        %v2967 = vadd.f32 %v1599, %v2354
        %v2968 = vadd.f32 %v1601, %v2356
        %v2969 = vadd.f32 %v1758, %v2513
        %v2970 = vadd.f32 %v1760, %v2515
        %v2971 = vadd.f32 %v1917, %v2672
        %v2972 = vadd.f32 %v1919, %v2674
        %v2973 = vadd.f32 %v2076, %v2831
        %v2974 = vadd.f32 %v2078, %v2833
        %v2975 = vadd.f32 %v1603, %v2358
        %v2976 = vadd.f32 %v1605, %v2360
        %v2977 = vadd.f32 %v1762, %v2517
        %v2978 = vadd.f32 %v1764, %v2519
        %v2979 = vadd.f32 %v1921, %v2676
        %v2980 = vadd.f32 %v1923, %v2678
        %v2981 = vadd.f32 %v2080, %v2835
        %v2982 = vadd.f32 %v2082, %v2837
        %v2983 = vadd.f32 %v1609, %v2364
        %v2984 = vadd.f32 %v1611, %v2366
        %v2985 = vadd.f32 %v1768, %v2523
        %v2986 = vadd.f32 %v1770, %v2525
        %v2987 = vadd.f32 %v1927, %v2682
        %v2988 = vadd.f32 %v1929, %v2684
        %v2989 = vadd.f32 %v2086, %v2841
        %v2990 = vadd.f32 %v2088, %v2843
        %v2991 = vadd.f32 %v1613, %v2368
        %v2992 = vadd.f32 %v1615, %v2370
        %v2993 = vadd.f32 %v1772, %v2527
        %v2994 = vadd.f32 %v1774, %v2529
        %v2995 = vadd.f32 %v1931, %v2686
        %v2996 = vadd.f32 %v1933, %v2688
        %v2997 = vadd.f32 %v2090, %v2845
        %v2998 = vadd.f32 %v2092, %v2847
        %v2999 = vadd.f32 %v1619, %v2374
        %v3000 = vadd.f32 %v1621, %v2376
        %v3001 = vadd.f32 %v1778, %v2533
        %v3002 = vadd.f32 %v1780, %v2535
        %v3003 = vadd.f32 %v1937, %v2692
        %v3004 = vadd.f32 %v1939, %v2694
        %v3005 = vadd.f32 %v2096, %v2851
        %v3006 = vadd.f32 %v2098, %v2853
        %v3007 = vadd.f32 %v1623, %v2378
        %v3008 = vadd.f32 %v1625, %v2380
        %v3009 = vadd.f32 %v1782, %v2537
        %v3010 = vadd.f32 %v1784, %v2539
        %v3011 = vadd.f32 %v1941, %v2696
        %v3012 = vadd.f32 %v1943, %v2698
        %v3013 = vadd.f32 %v2100, %v2855
        %v3014 = vadd.f32 %v2102, %v2857
        %v3015 = vadd.f32 %v1629, %v2384
        %v3016 = vadd.f32 %v1631, %v2386
        %v3017 = vadd.f32 %v1788, %v2543
        %v3018 = vadd.f32 %v1790, %v2545
        %v3019 = vadd.f32 %v1947, %v2702
        %v3020 = vadd.f32 %v1949, %v2704
        %v3021 = vadd.f32 %v2106, %v2861
        %v3022 = vadd.f32 %v2108, %v2863
        %v3023 = vadd.f32 %v1633, %v2388
        %v3024 = vadd.f32 %v1635, %v2390
        %v3025 = vadd.f32 %v1792, %v2547
        %v3026 = vadd.f32 %v1794, %v2549
        %v3027 = vadd.f32 %v1951, %v2706
        %v3028 = vadd.f32 %v1953, %v2708
        %v3029 = vadd.f32 %v2110, %v2865
        %v3030 = vadd.f32 %v2112, %v2867
        %v3031 = vadd.f32 %v1639, %v2394
        %v3032 = vadd.f32 %v1641, %v2396
        %v3033 = vadd.f32 %v1798, %v2553
        %v3034 = vadd.f32 %v1800, %v2555
        %v3035 = vadd.f32 %v1957, %v2712
        %v3036 = vadd.f32 %v1959, %v2714
        %v3037 = vadd.f32 %v2116, %v2871
        %v3038 = vadd.f32 %v2118, %v2873
        %v3039 = vadd.f32 %v1643, %v2398
        %v3040 = vadd.f32 %v1645, %v2400
        %v3041 = vadd.f32 %v1802, %v2557
        %v3042 = vadd.f32 %v1804, %v2559
        %v3043 = vadd.f32 %v1961, %v2716
        %v3044 = vadd.f32 %v1963, %v2718
        %v3045 = vadd.f32 %v2120, %v2875
        %v3046 = vadd.f32 %v2122, %v2877
        %v3047 = vadd.f32 %v1649, %v2404
        %v3048 = vadd.f32 %v1651, %v2406
        %v3049 = vadd.f32 %v1808, %v2563
        %v3050 = vadd.f32 %v1810, %v2565
        %v3051 = vadd.f32 %v1967, %v2722
        %v3052 = vadd.f32 %v1969, %v2724
        %v3053 = vadd.f32 %v2126, %v2881
        %v3054 = vadd.f32 %v2128, %v2883
        %v3055 = vadd.f32 %v1653, %v2408
        %v3056 = vadd.f32 %v1655, %v2410
        %v3057 = vadd.f32 %v1812, %v2567
        %v3058 = vadd.f32 %v1814, %v2569
        %v3059 = vadd.f32 %v1971, %v2726
        %v3060 = vadd.f32 %v1973, %v2728
        %v3061 = vadd.f32 %v2130, %v2885
        %v3062 = vadd.f32 %v2132, %v2887
        %v3063 = vadd.f32 %v1659, %v2414
        %v3064 = vadd.f32 %v1661, %v2416
        %v3065 = vadd.f32 %v1818, %v2573
        %v3066 = vadd.f32 %v1820, %v2575
        %v3067 = vadd.f32 %v1977, %v2732
        %v3068 = vadd.f32 %v1979, %v2734
        %v3069 = vadd.f32 %v2136, %v2891
        %v3070 = vadd.f32 %v2138, %v2893
        %v3071 = vadd.f32 %v1663, %v2418
        %v3072 = vadd.f32 %v1665, %v2420
        %v3073 = vadd.f32 %v1822, %v2577
        %v3074 = vadd.f32 %v1824, %v2579
        %v3075 = vadd.f32 %v1981, %v2736
        %v3076 = vadd.f32 %v1983, %v2738
        %v3077 = vadd.f32 %v2140, %v2895
        %v3078 = vadd.f32 %v2142, %v2897
        %v3079 = vadd.f32 %v1669, %v2424
        %v3080 = vadd.f32 %v1671, %v2426
        %v3081 = vadd.f32 %v1828, %v2583
        %v3082 = vadd.f32 %v1830, %v2585
        %v3083 = vadd.f32 %v1987, %v2742
        %v3084 = vadd.f32 %v1989, %v2744
        %v3085 = vadd.f32 %v2146, %v2901
        %v3086 = vadd.f32 %v2148, %v2903
        %v3087 = vadd.f32 %v1673, %v2428
        %v3088 = vadd.f32 %v1675, %v2430
        %v3089 = vadd.f32 %v1832, %v2587
        %v3090 = vadd.f32 %v1834, %v2589
        %v3091 = vadd.f32 %v1991, %v2746
        %v3092 = vadd.f32 %v1993, %v2748
        %v3093 = vadd.f32 %v2150, %v2905
        %v3094 = vadd.f32 %v2152, %v2907
        %v3095 = vadd.f32 %v1679, %v2434
        %v3096 = vadd.f32 %v1681, %v2436
        %v3097 = vadd.f32 %v1838, %v2593
        %v3098 = vadd.f32 %v1840, %v2595
        %v3099 = vadd.f32 %v1997, %v2752
        %v3100 = vadd.f32 %v1999, %v2754
        %v3101 = vadd.f32 %v2156, %v2911
        %v3102 = vadd.f32 %v2158, %v2913
        %v3103 = vadd.f32 %v1683, %v2438
        %v3104 = vadd.f32 %v1685, %v2440
        %v3105 = vadd.f32 %v1842, %v2597
        %v3106 = vadd.f32 %v1844, %v2599
        %v3107 = vadd.f32 %v2001, %v2756
        %v3108 = vadd.f32 %v2003, %v2758
        %v3109 = vadd.f32 %v2160, %v2915
        %v3110 = vadd.f32 %v2162, %v2917
        %v3111 = vadd.f32 %v1689, %v2444
        %v3112 = vadd.f32 %v1691, %v2446
        %v3113 = vadd.f32 %v1848, %v2603
        %v3114 = vadd.f32 %v1850, %v2605
        %v3115 = vadd.f32 %v2007, %v2762
        %v3116 = vadd.f32 %v2009, %v2764
        %v3117 = vadd.f32 %v2166, %v2921
        %v3118 = vadd.f32 %v2168, %v2923
        %v3119 = vadd.f32 %v1693, %v2448
        %v3120 = vadd.f32 %v1695, %v2450
        %v3121 = vadd.f32 %v1852, %v2607
        %v3122 = vadd.f32 %v1854, %v2609
        %v3123 = vadd.f32 %v2011, %v2766
        %v3124 = vadd.f32 %v2013, %v2768
        %v3125 = vadd.f32 %v2170, %v2925
        %v3126 = vadd.f32 %v2172, %v2927
        %v3127 = vld [vmem:[#allocation5] sm:$0xf]
        %v3128 = vmax.f32 %v2935, %v2939
        %v3129 = vmax.f32 %v2936, %v2940
        %v3130 = vmax.f32 %v2937, %v2941
        %v3131 = vmax.f32 %v2938, %v2942
        %v3132 = vmax.f32 %v2943, %v2947
        %v3133 = vmax.f32 %v2944, %v2948
        %v3134 = vmax.f32 %v2945, %v2949
        %v3135 = vmax.f32 %v2946, %v2950
        %v3136 = vmax.f32 %v3128, %v3132
        %v3137 = vmax.f32 %v3129, %v3133
        %v3138 = vmax.f32 %v3130, %v3134
        %v3139 = vmax.f32 %v3131, %v3135
        %v3141 = vlaneseq
        %v3142 = vshrl.u32 %v3141, 7
        %v3143 = vsub.s32 0, %v3142
        %v3144 = vrot.slane %v3127, %v3143
        %v3145 = vlaneseq
        %v3146 = vshrl.u32 %v3145, 7
        %v3147 = vsub.s32 1, %v3146
        %v3148 = vrot.slane %v3127, %v3147
        %v3149 = vlaneseq
        %v3150 = vshrl.u32 %v3149, 7
        %v3151 = vsub.s32 2, %v3150
        %v3152 = vrot.slane %v3127, %v3151
        %v3153 = vlaneseq
        %v3154 = vshrl.u32 %v3153, 7
        %v3155 = vsub.s32 3, %v3154
        %v3156 = vrot.slane %v3127, %v3155
        %v3161 = vadd.f32 %v3136, %v3144
        %v3162 = vadd.f32 %v3137, %v3148
        %v3163 = vadd.f32 %v3138, %v3152
        %v3164 = vadd.f32 %v3139, %v3156
        %v3165 = vmax.f32 %v3161, 0.0
        %v3166 = vmax.f32 %v3162, 0.0
        %v3167 = vmax.f32 %v3163, 0.0
        %v3168 = vmax.f32 %v3164, 0.0
        %v3169 = vpack.c.bf16 %v3165, %v3165
        %v3170 = vpack.c.bf16 %v3166, %v3166
        %v3171 = vpack.c.bf16 %v3167, %v3167
        %v3172 = vpack.c.bf16 %v3168, %v3168
        %v3173 = vmax.f32 %v2951, %v2955
        %v3174 = vmax.f32 %v2952, %v2956
        %v3175 = vmax.f32 %v2953, %v2957
        %v3176 = vmax.f32 %v2954, %v2958
        %v3177 = vmax.f32 %v2959, %v2963
        %v3178 = vmax.f32 %v2960, %v2964
        %v3179 = vmax.f32 %v2961, %v2965
        %v3180 = vmax.f32 %v2962, %v2966
        %v3181 = vmax.f32 %v3173, %v3177
        %v3182 = vmax.f32 %v3174, %v3178
        %v3183 = vmax.f32 %v3175, %v3179
        %v3184 = vmax.f32 %v3176, %v3180
        %v3185 = vadd.f32 %v3181, %v3144
        %v3186 = vadd.f32 %v3182, %v3148
        %v3187 = vadd.f32 %v3183, %v3152
        %v3188 = vadd.f32 %v3184, %v3156
        %v3189 = vmax.f32 %v3185, 0.0
        %v3190 = vmax.f32 %v3186, 0.0
        %v3191 = vmax.f32 %v3187, 0.0
        %v3192 = vmax.f32 %v3188, 0.0
        %v3193 = vpack.c.bf16 %v3189, %v3189
        %v3194 = vpack.c.bf16 %v3190, %v3190
        %v3195 = vpack.c.bf16 %v3191, %v3191
        %v3196 = vpack.c.bf16 %v3192, %v3192
        %v3197 = vmax.f32 %v2967, %v2971
        %v3198 = vmax.f32 %v2968, %v2972
        %v3199 = vmax.f32 %v2969, %v2973
        %v3200 = vmax.f32 %v2970, %v2974
        %v3201 = vmax.f32 %v2975, %v2979
        %v3202 = vmax.f32 %v2976, %v2980
        %v3203 = vmax.f32 %v2977, %v2981
        %v3204 = vmax.f32 %v2978, %v2982
        %v3205 = vmax.f32 %v3197, %v3201
        %v3206 = vmax.f32 %v3198, %v3202
        %v3207 = vmax.f32 %v3199, %v3203
        %v3208 = vmax.f32 %v3200, %v3204
        %v3209 = vadd.f32 %v3205, %v3144
        %v3210 = vadd.f32 %v3206, %v3148
        %v3211 = vadd.f32 %v3207, %v3152
        %v3212 = vadd.f32 %v3208, %v3156
        %v3213 = vmax.f32 %v3209, 0.0
        %v3214 = vmax.f32 %v3210, 0.0
        %v3215 = vmax.f32 %v3211, 0.0
        %v3216 = vmax.f32 %v3212, 0.0
        %v3217 = vpack.c.bf16 %v3213, %v3213
        %v3218 = vpack.c.bf16 %v3214, %v3214
        %v3219 = vpack.c.bf16 %v3215, %v3215
        %v3220 = vpack.c.bf16 %v3216, %v3216
        %v3221 = vmax.f32 %v2983, %v2987
        %v3222 = vmax.f32 %v2984, %v2988
        %v3223 = vmax.f32 %v2985, %v2989
        %v3224 = vmax.f32 %v2986, %v2990
        %v3225 = vmax.f32 %v2991, %v2995
        %v3226 = vmax.f32 %v2992, %v2996
        %v3227 = vmax.f32 %v2993, %v2997
        %v3228 = vmax.f32 %v2994, %v2998
        %v3229 = vmax.f32 %v3221, %v3225
        %v3230 = vmax.f32 %v3222, %v3226
        %v3231 = vmax.f32 %v3223, %v3227
        %v3232 = vmax.f32 %v3224, %v3228
        %v3233 = vadd.f32 %v3229, %v3144
        %v3234 = vadd.f32 %v3230, %v3148
        %v3235 = vadd.f32 %v3231, %v3152
        %v3236 = vadd.f32 %v3232, %v3156
        %v3237 = vmax.f32 %v3233, 0.0
        %v3238 = vmax.f32 %v3234, 0.0
        %v3239 = vmax.f32 %v3235, 0.0
        %v3240 = vmax.f32 %v3236, 0.0
        %v3241 = vpack.c.bf16 %v3237, %v3237
        %v3242 = vpack.c.bf16 %v3238, %v3238
        %v3243 = vpack.c.bf16 %v3239, %v3239
        %v3244 = vpack.c.bf16 %v3240, %v3240
        %v3245 = vmax.f32 %v2999, %v3003
        %v3246 = vmax.f32 %v3000, %v3004
        %v3247 = vmax.f32 %v3001, %v3005
        %v3248 = vmax.f32 %v3002, %v3006
        %v3249 = vmax.f32 %v3007, %v3011
        %v3250 = vmax.f32 %v3008, %v3012
        %v3251 = vmax.f32 %v3009, %v3013
        %v3252 = vmax.f32 %v3010, %v3014
        %v3253 = vmax.f32 %v3245, %v3249
        %v3254 = vmax.f32 %v3246, %v3250
        %v3255 = vmax.f32 %v3247, %v3251
        %v3256 = vmax.f32 %v3248, %v3252
        %v3257 = vadd.f32 %v3253, %v3144
        %v3258 = vadd.f32 %v3254, %v3148
        %v3259 = vadd.f32 %v3255, %v3152
        %v3260 = vadd.f32 %v3256, %v3156
        %v3261 = vmax.f32 %v3257, 0.0
        %v3262 = vmax.f32 %v3258, 0.0
        %v3263 = vmax.f32 %v3259, 0.0
        %v3264 = vmax.f32 %v3260, 0.0
        %v3265 = vpack.c.bf16 %v3261, %v3261
        %v3266 = vpack.c.bf16 %v3262, %v3262
        %v3267 = vpack.c.bf16 %v3263, %v3263
        %v3268 = vpack.c.bf16 %v3264, %v3264
        %v3269 = vmax.f32 %v3015, %v3019
        %v3270 = vmax.f32 %v3016, %v3020
        %v3271 = vmax.f32 %v3017, %v3021
        %v3272 = vmax.f32 %v3018, %v3022
        %v3273 = vmax.f32 %v3023, %v3027
        %v3274 = vmax.f32 %v3024, %v3028
        %v3275 = vmax.f32 %v3025, %v3029
        %v3276 = vmax.f32 %v3026, %v3030
        %v3277 = vmax.f32 %v3269, %v3273
        %v3278 = vmax.f32 %v3270, %v3274
        %v3279 = vmax.f32 %v3271, %v3275
        %v3280 = vmax.f32 %v3272, %v3276
        %v3281 = vadd.f32 %v3277, %v3144
        %v3282 = vadd.f32 %v3278, %v3148
        %v3283 = vadd.f32 %v3279, %v3152
        %v3284 = vadd.f32 %v3280, %v3156
        %v3285 = vmax.f32 %v3281, 0.0
        %v3286 = vmax.f32 %v3282, 0.0
        %v3287 = vmax.f32 %v3283, 0.0
        %v3288 = vmax.f32 %v3284, 0.0
        %v3289 = vpack.c.bf16 %v3285, %v3285
        %v3290 = vpack.c.bf16 %v3286, %v3286
        %v3291 = vpack.c.bf16 %v3287, %v3287
        %v3292 = vpack.c.bf16 %v3288, %v3288
        %v3293 = vmax.f32 %v3031, %v3035
        %v3294 = vmax.f32 %v3032, %v3036
        %v3295 = vmax.f32 %v3033, %v3037
        %v3296 = vmax.f32 %v3034, %v3038
        %v3297 = vmax.f32 %v3039, %v3043
        %v3298 = vmax.f32 %v3040, %v3044
        %v3299 = vmax.f32 %v3041, %v3045
        %v3300 = vmax.f32 %v3042, %v3046
        %v3301 = vmax.f32 %v3293, %v3297
        %v3302 = vmax.f32 %v3294, %v3298
        %v3303 = vmax.f32 %v3295, %v3299
        %v3304 = vmax.f32 %v3296, %v3300
        %v3305 = vadd.f32 %v3301, %v3144
        %v3306 = vadd.f32 %v3302, %v3148
        %v3307 = vadd.f32 %v3303, %v3152
        %v3308 = vadd.f32 %v3304, %v3156
        %v3309 = vmax.f32 %v3305, 0.0
        %v3310 = vmax.f32 %v3306, 0.0
        %v3311 = vmax.f32 %v3307, 0.0
        %v3312 = vmax.f32 %v3308, 0.0
        %v3313 = vpack.c.bf16 %v3309, %v3309
        %v3314 = vpack.c.bf16 %v3310, %v3310
        %v3315 = vpack.c.bf16 %v3311, %v3311
        %v3316 = vpack.c.bf16 %v3312, %v3312
        %v3317 = vmax.f32 %v3047, %v3051
        %v3318 = vmax.f32 %v3048, %v3052
        %v3319 = vmax.f32 %v3049, %v3053
        %v3320 = vmax.f32 %v3050, %v3054
        %v3321 = vmax.f32 %v3055, %v3059
        %v3322 = vmax.f32 %v3056, %v3060
        %v3323 = vmax.f32 %v3057, %v3061
        %v3324 = vmax.f32 %v3058, %v3062
        %v3325 = vmax.f32 %v3317, %v3321
        %v3326 = vmax.f32 %v3318, %v3322
        %v3327 = vmax.f32 %v3319, %v3323
        %v3328 = vmax.f32 %v3320, %v3324
        %v3329 = vadd.f32 %v3325, %v3144
        %v3330 = vadd.f32 %v3326, %v3148
        %v3331 = vadd.f32 %v3327, %v3152
        %v3332 = vadd.f32 %v3328, %v3156
        %v3333 = vmax.f32 %v3329, 0.0
        %v3334 = vmax.f32 %v3330, 0.0
        %v3335 = vmax.f32 %v3331, 0.0
        %v3336 = vmax.f32 %v3332, 0.0
        %v3337 = vpack.c.bf16 %v3333, %v3333
        %v3338 = vpack.c.bf16 %v3334, %v3334
        %v3339 = vpack.c.bf16 %v3335, %v3335
        %v3340 = vpack.c.bf16 %v3336, %v3336
        %v3341 = vmax.f32 %v3063, %v3067
        %v3342 = vmax.f32 %v3064, %v3068
        %v3343 = vmax.f32 %v3065, %v3069
        %v3344 = vmax.f32 %v3066, %v3070
        %v3345 = vmax.f32 %v3071, %v3075
        %v3346 = vmax.f32 %v3072, %v3076
        %v3347 = vmax.f32 %v3073, %v3077
        %v3348 = vmax.f32 %v3074, %v3078
        %v3349 = vmax.f32 %v3341, %v3345
        %v3350 = vmax.f32 %v3342, %v3346
        %v3351 = vmax.f32 %v3343, %v3347
        %v3352 = vmax.f32 %v3344, %v3348
        %v3353 = vadd.f32 %v3349, %v3144
        %v3354 = vadd.f32 %v3350, %v3148
        %v3355 = vadd.f32 %v3351, %v3152
        %v3356 = vadd.f32 %v3352, %v3156
        %v3357 = vmax.f32 %v3353, 0.0
        %v3358 = vmax.f32 %v3354, 0.0
        %v3359 = vmax.f32 %v3355, 0.0
        %v3360 = vmax.f32 %v3356, 0.0
        %v3361 = vpack.c.bf16 %v3357, %v3357
        %v3362 = vpack.c.bf16 %v3358, %v3358
        %v3363 = vpack.c.bf16 %v3359, %v3359
        %v3364 = vpack.c.bf16 %v3360, %v3360
        %v3365 = vmax.f32 %v3079, %v3083
        %v3366 = vmax.f32 %v3080, %v3084
        %v3367 = vmax.f32 %v3081, %v3085
        %v3368 = vmax.f32 %v3082, %v3086
        %v3369 = vmax.f32 %v3087, %v3091
        %v3370 = vmax.f32 %v3088, %v3092
        %v3371 = vmax.f32 %v3089, %v3093
        %v3372 = vmax.f32 %v3090, %v3094
        %v3373 = vmax.f32 %v3365, %v3369
        %v3374 = vmax.f32 %v3366, %v3370
        %v3375 = vmax.f32 %v3367, %v3371
        %v3376 = vmax.f32 %v3368, %v3372
        %v3377 = vadd.f32 %v3373, %v3144
        %v3378 = vadd.f32 %v3374, %v3148
        %v3379 = vadd.f32 %v3375, %v3152
        %v3380 = vadd.f32 %v3376, %v3156
        %v3381 = vmax.f32 %v3377, 0.0
        %v3382 = vmax.f32 %v3378, 0.0
        %v3383 = vmax.f32 %v3379, 0.0
        %v3384 = vmax.f32 %v3380, 0.0
        %v3385 = vpack.c.bf16 %v3381, %v3381
        %v3386 = vpack.c.bf16 %v3382, %v3382
        %v3387 = vpack.c.bf16 %v3383, %v3383
        %v3388 = vpack.c.bf16 %v3384, %v3384
        %v3389 = vmax.f32 %v3095, %v3099
        %v3390 = vmax.f32 %v3096, %v3100
        %v3391 = vmax.f32 %v3097, %v3101
        %v3392 = vmax.f32 %v3098, %v3102
        %v3393 = vmax.f32 %v3103, %v3107
        %v3394 = vmax.f32 %v3104, %v3108
        %v3395 = vmax.f32 %v3105, %v3109
        %v3396 = vmax.f32 %v3106, %v3110
        %v3397 = vmax.f32 %v3389, %v3393
        %v3398 = vmax.f32 %v3390, %v3394
        %v3399 = vmax.f32 %v3391, %v3395
        %v3400 = vmax.f32 %v3392, %v3396
        %v3401 = vadd.f32 %v3397, %v3144
        %v3402 = vadd.f32 %v3398, %v3148
        %v3403 = vadd.f32 %v3399, %v3152
        %v3404 = vadd.f32 %v3400, %v3156
        %v3405 = vmax.f32 %v3401, 0.0
        %v3406 = vmax.f32 %v3402, 0.0
        %v3407 = vmax.f32 %v3403, 0.0
        %v3408 = vmax.f32 %v3404, 0.0
        %v3409 = vpack.c.bf16 %v3405, %v3405
        %v3410 = vpack.c.bf16 %v3406, %v3406
        %v3411 = vpack.c.bf16 %v3407, %v3407
        %v3412 = vpack.c.bf16 %v3408, %v3408
        %v3413 = vmax.f32 %v3111, %v3115
        %v3414 = vmax.f32 %v3112, %v3116
        %v3415 = vmax.f32 %v3113, %v3117
        %v3416 = vmax.f32 %v3114, %v3118
        %v3417 = vmax.f32 %v3119, %v3123
        %v3418 = vmax.f32 %v3120, %v3124
        %v3419 = vmax.f32 %v3121, %v3125
        %v3420 = vmax.f32 %v3122, %v3126
        %v3421 = vmax.f32 %v3413, %v3417
        %v3422 = vmax.f32 %v3414, %v3418
        %v3423 = vmax.f32 %v3415, %v3419
        %v3424 = vmax.f32 %v3416, %v3420
        %v3425 = vadd.f32 %v3421, %v3144
        %v3426 = vadd.f32 %v3422, %v3148
        %v3427 = vadd.f32 %v3423, %v3152
        %v3428 = vadd.f32 %v3424, %v3156
        %v3429 = vmax.f32 %v3425, 0.0
        %v3430 = vmax.f32 %v3426, 0.0
        %v3431 = vmax.f32 %v3427, 0.0
        %v3432 = vmax.f32 %v3428, 0.0
        %v3433 = vpack.c.bf16 %v3429, %v3429
        %v3434 = vpack.c.bf16 %v3430, %v3430
        %v3435 = vpack.c.bf16 %v3431, %v3431
        %v3436 = vpack.c.bf16 %v3432, %v3432
        %v3441 = vrot.slane %v3193, 4
        %v3442 = vrot.slane %v3194, 4
        %v3443 = vrot.slane %v3195, 4
        %v3444 = vrot.slane %v3196, 4
        %v3449 = vrot.slane %v3241, 4
        %v3450 = vrot.slane %v3242, 4
        %v3451 = vrot.slane %v3243, 4
        %v3452 = vrot.slane %v3244, 4
        %v3457 = vrot.slane %v3289, 4
        %v3458 = vrot.slane %v3290, 4
        %v3459 = vrot.slane %v3291, 4
        %v3460 = vrot.slane %v3292, 4
        %v3465 = vrot.slane %v3337, 4
        %v3466 = vrot.slane %v3338, 4
        %v3467 = vrot.slane %v3339, 4
        %v3468 = vrot.slane %v3340, 4
        %v3473 = vrot.slane %v3385, 4
        %v3474 = vrot.slane %v3386, 4
        %v3475 = vrot.slane %v3387, 4
        %v3476 = vrot.slane %v3388, 4
        %v3481 = vrot.slane %v3433, 4
        %v3482 = vrot.slane %v3434, 4
        %v3483 = vrot.slane %v3435, 4
        %v3484 = vrot.slane %v3436, 4
        %vm3485 = vcmask 1043456
        %v3488 = vsel %vm3485, %v3169, %v3441
        %v3492 = vsel %vm3485, %v3170, %v3442
        %v3496 = vsel %vm3485, %v3171, %v3443
        %v3500 = vsel %vm3485, %v3172, %v3444
        %v3504 = vsel %vm3485, %v3217, %v3449
        %v3508 = vsel %vm3485, %v3218, %v3450
        %v3512 = vsel %vm3485, %v3219, %v3451
        %v3516 = vsel %vm3485, %v3220, %v3452
        %v3520 = vsel %vm3485, %v3265, %v3457
        %v3524 = vsel %vm3485, %v3266, %v3458
        %v3528 = vsel %vm3485, %v3267, %v3459
        %v3532 = vsel %vm3485, %v3268, %v3460
        %v3536 = vsel %vm3485, %v3313, %v3465
        %v3540 = vsel %vm3485, %v3314, %v3466
        %v3544 = vsel %vm3485, %v3315, %v3467
        %v3548 = vsel %vm3485, %v3316, %v3468
        %v3552 = vsel %vm3485, %v3361, %v3473
        %v3556 = vsel %vm3485, %v3362, %v3474
        %v3560 = vsel %vm3485, %v3363, %v3475
        %v3564 = vsel %vm3485, %v3364, %v3476
        %v3568 = vsel %vm3485, %v3409, %v3481
        %v3572 = vsel %vm3485, %v3410, %v3482
        %v3576 = vsel %vm3485, %v3411, %v3483
        %v3580 = vsel %vm3485, %v3412, %v3484
        %v3582 = vld [vmem:[#allocation7] sm:$0xff]
        %v3583 = vld [vmem:[#allocation7 + $0x8] sm:$0xff]
        %v3584 = vld [vmem:[#allocation7 + $0x10] sm:$0xff]
        %v3585 = vld [vmem:[#allocation7 + $0x18] sm:$0xff]
        %v3586 = vld [vmem:[#allocation7 + $0x20] sm:$0xff]
        %v3587 = vld [vmem:[#allocation7 + $0x28] sm:$0xff]
        %v3588 = vld [vmem:[#allocation7 + $0x30] sm:$0xff]
        %v3589 = vld [vmem:[#allocation7 + $0x38] sm:$0xff]
        %v3590 = vld [vmem:[#allocation7 + $0x40] sm:$0xff]
        %v3591 = vld [vmem:[#allocation7 + $0x48] sm:$0xff]
        %v3592 = vld [vmem:[#allocation7 + $0x50] sm:$0xff]
        %v3593 = vld [vmem:[#allocation7 + $0x58] sm:$0xff]
        %v3594 = vld [vmem:[#allocation7 + $0x60] sm:$0xff]
        %v3595 = vld [vmem:[#allocation7 + $0x68] sm:$0xff]
        %v3596 = vld [vmem:[#allocation7 + $0x70] sm:$0xff]
        %v3597 = vld [vmem:[#allocation7 + $0x78] sm:$0xff]
        %v3598 = vld [vmem:[#allocation7 + $0x80] sm:$0xff]
        %v3599 = vld [vmem:[#allocation7 + $0x88] sm:$0xff]
        %v3600 = vld [vmem:[#allocation7 + $0x90] sm:$0xff]
        %v3601 = vld [vmem:[#allocation7 + $0x98] sm:$0xff]
        %v3602 = vld [vmem:[#allocation7 + $0xa0] sm:$0xff]
        %v3603 = vld [vmem:[#allocation7 + $0xa8] sm:$0xff]
        %v3604 = vld [vmem:[#allocation7 + $0xb0] sm:$0xff]
        %v3605 = vld [vmem:[#allocation7 + $0xb8] sm:$0xff]
        %v3606 = vld [vmem:[#allocation7 + $0xc0] sm:$0xff]
        %v3607 = vld [vmem:[#allocation7 + $0xc8] sm:$0xff]
        %v3608 = vld [vmem:[#allocation7 + $0xd0] sm:$0xff]
        %v3609 = vld [vmem:[#allocation7 + $0xd8] sm:$0xff]
        %v3610 = vld [vmem:[#allocation7 + $0xe0] sm:$0xff]
        %v3611 = vld [vmem:[#allocation7 + $0xe8] sm:$0xff]
        %v3612 = vld [vmem:[#allocation7 + $0xf0] sm:$0xff]
        %v3613 = vld [vmem:[#allocation7 + $0xf8] sm:$0xff]
        %v3614 = vld [vmem:[#allocation7 + $0x100] sm:$0xff]
        %v3615 = vld [vmem:[#allocation7 + $0x108] sm:$0xff]
        %v3616 = vld [vmem:[#allocation7 + $0x110] sm:$0xff]
        %v3617 = vld [vmem:[#allocation7 + $0x118] sm:$0xff]
        %v3618 = vld [vmem:[#allocation7 + $0x120] sm:$0xff]
        %v3619 = vld [vmem:[#allocation7 + $0x128] sm:$0xff]
        %v3620 = vld [vmem:[#allocation7 + $0x130] sm:$0xff]
        %v3621 = vld [vmem:[#allocation7 + $0x138] sm:$0xff]
        %v3622 = vld [vmem:[#allocation7 + $0x140] sm:$0xff]
        %v3623 = vld [vmem:[#allocation7 + $0x148] sm:$0xff]
        %v3624 = vld [vmem:[#allocation7 + $0x150] sm:$0xff]
        %v3625 = vld [vmem:[#allocation7 + $0x158] sm:$0xff]
        %v3626 = vld [vmem:[#allocation7 + $0x160] sm:$0xff]
        %v3627 = vld [vmem:[#allocation7 + $0x168] sm:$0xff]
        %v3628 = vld [vmem:[#allocation7 + $0x170] sm:$0xff]
        %v3629 = vld [vmem:[#allocation7 + $0x178] sm:$0xff]
        %v3630 = vld [vmem:[#allocation7 + $0x180] sm:$0xff]
        %v3631 = vld [vmem:[#allocation7 + $0x188] sm:$0xff]
        %v3632 = vld [vmem:[#allocation7 + $0x190] sm:$0xff]
        %v3633 = vld [vmem:[#allocation7 + $0x198] sm:$0xff]
        %v3634 = vld [vmem:[#allocation7 + $0x1a0] sm:$0xff]
        %v3635 = vld [vmem:[#allocation7 + $0x1a8] sm:$0xff]
        %v3636 = vld [vmem:[#allocation7 + $0x1b0] sm:$0xff]
        %v3637 = vld [vmem:[#allocation7 + $0x1b8] sm:$0xff]
        %v3638 = vld [vmem:[#allocation7 + $0x1c0] sm:$0xff]
        %v3639 = vld [vmem:[#allocation7 + $0x1c8] sm:$0xff]
        %v3640 = vld [vmem:[#allocation7 + $0x1d0] sm:$0xff]
        %v3641 = vld [vmem:[#allocation7 + $0x1d8] sm:$0xff]
        %v3642 = vld [vmem:[#allocation7 + $0x1e0] sm:$0xff]
        %v3643 = vld [vmem:[#allocation7 + $0x1e8] sm:$0xff]
        %v3644 = vld [vmem:[#allocation7 + $0x1f0] sm:$0xff]
        %v3645 = vld [vmem:[#allocation7 + $0x1f8] sm:$0xff]
        %v3646 = vld [vmem:[#allocation7 + $0x200] sm:$0xff]
        %v3647 = vld [vmem:[#allocation7 + $0x208] sm:$0xff]
        %v3648 = vld [vmem:[#allocation7 + $0x210] sm:$0xff]
        %v3649 = vld [vmem:[#allocation7 + $0x218] sm:$0xff]
        %v3650 = vld [vmem:[#allocation7 + $0x220] sm:$0xff]
        %v3651 = vld [vmem:[#allocation7 + $0x228] sm:$0xff]
        %v3652 = vld [vmem:[#allocation7 + $0x230] sm:$0xff]
        %v3653 = vld [vmem:[#allocation7 + $0x238] sm:$0xff]
        %v3654 = vld [vmem:[#allocation7 + $0x240] sm:$0xff]
        %v3655 = vld [vmem:[#allocation7 + $0x248] sm:$0xff]
        %v3656 = vld [vmem:[#allocation7 + $0x250] sm:$0xff]
        %v3657 = vld [vmem:[#allocation7 + $0x258] sm:$0xff]
        %v3658 = vld [vmem:[#allocation7 + $0x260] sm:$0xff]
        %v3659 = vld [vmem:[#allocation7 + $0x268] sm:$0xff]
        %v3660 = vld [vmem:[#allocation7 + $0x270] sm:$0xff]
        %v3661 = vld [vmem:[#allocation7 + $0x278] sm:$0xff]
        %v3662 = vld [vmem:[#allocation7 + $0x280] sm:$0xff]
        %v3663 = vld [vmem:[#allocation7 + $0x288] sm:$0xff]
        %v3664 = vld [vmem:[#allocation7 + $0x290] sm:$0xff]
        %v3665 = vld [vmem:[#allocation7 + $0x298] sm:$0xff]
        %v3666 = vld [vmem:[#allocation7 + $0x2a0] sm:$0xff]
        %v3667 = vld [vmem:[#allocation7 + $0x2a8] sm:$0xff]
        %v3668 = vld [vmem:[#allocation7 + $0x2b0] sm:$0xff]
        %v3669 = vld [vmem:[#allocation7 + $0x2b8] sm:$0xff]
        %v3670 = vld [vmem:[#allocation7 + $0x2c0] sm:$0xff]
        %v3671 = vld [vmem:[#allocation7 + $0x2c8] sm:$0xff]
        %v3672 = vld [vmem:[#allocation7 + $0x2d0] sm:$0xff]
        %v3673 = vld [vmem:[#allocation7 + $0x2d8] sm:$0xff]
        %v3674 = vld [vmem:[#allocation7 + $0x2e0] sm:$0xff]
        %v3675 = vld [vmem:[#allocation7 + $0x2e8] sm:$0xff]
        %v3676 = vld [vmem:[#allocation7 + $0x2f0] sm:$0xff]
        %v3677 = vld [vmem:[#allocation7 + $0x2f8] sm:$0xff]
        %v3678 = vld [vmem:[#allocation7 + $0x300] sm:$0xff]
        %v3679 = vld [vmem:[#allocation7 + $0x308] sm:$0xff]
        %v3680 = vld [vmem:[#allocation7 + $0x310] sm:$0xff]
        %v3681 = vld [vmem:[#allocation7 + $0x318] sm:$0xff]
        %v3682 = vld [vmem:[#allocation7 + $0x320] sm:$0xff]
        %v3683 = vld [vmem:[#allocation7 + $0x328] sm:$0xff]
        %v3684 = vld [vmem:[#allocation7 + $0x330] sm:$0xff]
        %v3685 = vld [vmem:[#allocation7 + $0x338] sm:$0xff]
        %v3686 = vld [vmem:[#allocation7 + $0x340] sm:$0xff]
        %v3687 = vld [vmem:[#allocation7 + $0x348] sm:$0xff]
        %v3688 = vld [vmem:[#allocation7 + $0x350] sm:$0xff]
        %v3689 = vld [vmem:[#allocation7 + $0x358] sm:$0xff]
        %v3690 = vld [vmem:[#allocation7 + $0x360] sm:$0xff]
        %v3691 = vld [vmem:[#allocation7 + $0x368] sm:$0xff]
        %v3692 = vld [vmem:[#allocation7 + $0x370] sm:$0xff]
        %v3693 = vld [vmem:[#allocation7 + $0x378] sm:$0xff]
        %v3694 = vld [vmem:[#allocation7 + $0x380] sm:$0xff]
        %v3695 = vld [vmem:[#allocation7 + $0x388] sm:$0xff]
        %v3696 = vld [vmem:[#allocation7 + $0x390] sm:$0xff]
        %v3697 = vld [vmem:[#allocation7 + $0x398] sm:$0xff]
        %v3698 = vld [vmem:[#allocation7 + $0x3a0] sm:$0xff]
        %v3699 = vld [vmem:[#allocation7 + $0x3a8] sm:$0xff]
        %v3700 = vld [vmem:[#allocation7 + $0x3b0] sm:$0xff]
        %v3701 = vld [vmem:[#allocation7 + $0x3b8] sm:$0xff]
        %v3702 = vld [vmem:[#allocation7 + $0x3c0] sm:$0xff]
        %v3703 = vld [vmem:[#allocation7 + $0x3c8] sm:$0xff]
        %v3704 = vld [vmem:[#allocation7 + $0x3d0] sm:$0xff]
        %v3705 = vld [vmem:[#allocation7 + $0x3d8] sm:$0xff]
        %v3706 = vld [vmem:[#allocation7 + $0x3e0] sm:$0xff]
        %v3707 = vld [vmem:[#allocation7 + $0x3e8] sm:$0xff]
        %v3708 = vld [vmem:[#allocation7 + $0x3f0] sm:$0xff]
        %v3709 = vld [vmem:[#allocation7 + $0x3f8] sm:$0xff]
        %v3710 = vld [vmem:[#allocation7 + $0x400] sm:$0xff]
        %v3711 = vld [vmem:[#allocation7 + $0x408] sm:$0xff]
        %v3712 = vld [vmem:[#allocation7 + $0x410] sm:$0xff]
        %v3713 = vld [vmem:[#allocation7 + $0x418] sm:$0xff]
        %v3714 = vld [vmem:[#allocation7 + $0x420] sm:$0xff]
        %v3715 = vld [vmem:[#allocation7 + $0x428] sm:$0xff]
        %v3716 = vld [vmem:[#allocation7 + $0x430] sm:$0xff]
        %v3717 = vld [vmem:[#allocation7 + $0x438] sm:$0xff]
        %v3718 = vld [vmem:[#allocation7 + $0x440] sm:$0xff]
        %v3719 = vld [vmem:[#allocation7 + $0x448] sm:$0xff]
        %v3720 = vld [vmem:[#allocation7 + $0x450] sm:$0xff]
        %v3721 = vld [vmem:[#allocation7 + $0x458] sm:$0xff]
        %v3722 = vld [vmem:[#allocation7 + $0x460] sm:$0xff]
        %v3723 = vld [vmem:[#allocation7 + $0x468] sm:$0xff]
        %v3724 = vld [vmem:[#allocation7 + $0x470] sm:$0xff]
        %v3725 = vld [vmem:[#allocation7 + $0x478] sm:$0xff]
        %v3726 = vld [vmem:[#allocation7 + $0x480] sm:$0xff]
        %v3727 = vld [vmem:[#allocation7 + $0x488] sm:$0xff]
        %v3728 = vld [vmem:[#allocation7 + $0x490] sm:$0xff]
        %v3729 = vld [vmem:[#allocation7 + $0x498] sm:$0xff]
        %v3730 = vld [vmem:[#allocation7 + $0x4a0] sm:$0xff]
        %v3731 = vld [vmem:[#allocation7 + $0x4a8] sm:$0xff]
        %v3732 = vld [vmem:[#allocation7 + $0x4b0] sm:$0xff]
        %v3733 = vld [vmem:[#allocation7 + $0x4b8] sm:$0xff]
        %v3734 = vld [vmem:[#allocation7 + $0x4c0] sm:$0xff]
        %v3735 = vld [vmem:[#allocation7 + $0x4c8] sm:$0xff]
        %v3736 = vld [vmem:[#allocation7 + $0x4d0] sm:$0xff]
        %v3737 = vld [vmem:[#allocation7 + $0x4d8] sm:$0xff]
        %v3738 = vld [vmem:[#allocation7 + $0x4e0] sm:$0xff]
        %v3739 = vld [vmem:[#allocation7 + $0x4e8] sm:$0xff]
        %v3740 = vld [vmem:[#allocation7 + $0x4f0] sm:$0xff]
        %v3741 = vld [vmem:[#allocation7 + $0x4f8] sm:$0xff]
        %v3742 = vld [vmem:[#allocation7 + $0x500] sm:$0xff]
        %v3743 = vld [vmem:[#allocation7 + $0x508] sm:$0xff]
        %v3744 = vld [vmem:[#allocation7 + $0x510] sm:$0xff]
        %v3745 = vld [vmem:[#allocation7 + $0x518] sm:$0xff]
        %v3746 = vld [vmem:[#allocation7 + $0x520] sm:$0xff]
        %v3747 = vld [vmem:[#allocation7 + $0x528] sm:$0xff]
        %v3748 = vld [vmem:[#allocation7 + $0x530] sm:$0xff]
        %v3749 = vld [vmem:[#allocation7 + $0x538] sm:$0xff]
        %v3750 = vld [vmem:[#allocation7 + $0x540] sm:$0xff]
        %v3751 = vld [vmem:[#allocation7 + $0x548] sm:$0xff]
        %v3752 = vld [vmem:[#allocation7 + $0x550] sm:$0xff]
        %v3753 = vld [vmem:[#allocation7 + $0x558] sm:$0xff]
        %v3754 = vld [vmem:[#allocation7 + $0x560] sm:$0xff]
        %v3755 = vld [vmem:[#allocation7 + $0x568] sm:$0xff]
        %v3756 = vld [vmem:[#allocation7 + $0x570] sm:$0xff]
        %v3757 = vld [vmem:[#allocation7 + $0x578] sm:$0xff]
        %v3758 = vld [vmem:[#allocation7 + $0x580] sm:$0xff]
        %v3759 = vld [vmem:[#allocation7 + $0x588] sm:$0xff]
        %v3760 = vld [vmem:[#allocation7 + $0x590] sm:$0xff]
        %v3761 = vld [vmem:[#allocation7 + $0x598] sm:$0xff]
        %v3762 = vld [vmem:[#allocation7 + $0x5a0] sm:$0xff]
        %v3763 = vld [vmem:[#allocation7 + $0x5a8] sm:$0xff]
        %v3764 = vld [vmem:[#allocation7 + $0x5b0] sm:$0xff]
        %v3765 = vld [vmem:[#allocation7 + $0x5b8] sm:$0xff]
        %v3766 = vld [vmem:[#allocation7 + $0x5c0] sm:$0xff]
        %v3767 = vld [vmem:[#allocation7 + $0x5c8] sm:$0xff]
        %v3768 = vld [vmem:[#allocation7 + $0x5d0] sm:$0xff]
        %v3769 = vld [vmem:[#allocation7 + $0x5d8] sm:$0xff]
        %v3770 = vld [vmem:[#allocation7 + $0x5e0] sm:$0xff]
        %v3771 = vld [vmem:[#allocation7 + $0x5e8] sm:$0xff]
        %v3772 = vld [vmem:[#allocation7 + $0x5f0] sm:$0xff]
        %v3773 = vld [vmem:[#allocation7 + $0x5f8] sm:$0xff]
        %s3774 = scalar_lea.vmem [#allocation7], 1536
        %v3775 = vld [vmem:[%s3774] sm:$0xff]
        %v3776 = vld [vmem:[%s3774 + $0x8] sm:$0xff]
        %v3777 = vld [vmem:[%s3774 + $0x10] sm:$0xff]
        %v3778 = vld [vmem:[%s3774 + $0x18] sm:$0xff]
        %v3779 = vld [vmem:[%s3774 + $0x20] sm:$0xff]
        %v3780 = vld [vmem:[%s3774 + $0x28] sm:$0xff]
        %v3781 = vld [vmem:[%s3774 + $0x30] sm:$0xff]
        %v3782 = vld [vmem:[%s3774 + $0x38] sm:$0xff]
        %v3783 = vld [vmem:[%s3774 + $0x40] sm:$0xff]
        %v3784 = vld [vmem:[%s3774 + $0x48] sm:$0xff]
        %v3785 = vld [vmem:[%s3774 + $0x50] sm:$0xff]
        %v3786 = vld [vmem:[%s3774 + $0x58] sm:$0xff]
        %v3787 = vld [vmem:[%s3774 + $0x60] sm:$0xff]
        %v3788 = vld [vmem:[%s3774 + $0x68] sm:$0xff]
        %v3789 = vld [vmem:[%s3774 + $0x70] sm:$0xff]
        %v3790 = vld [vmem:[%s3774 + $0x78] sm:$0xff]
        %v3791 = vld [vmem:[%s3774 + $0x80] sm:$0xff]
        %v3792 = vld [vmem:[%s3774 + $0x88] sm:$0xff]
        %v3793 = vld [vmem:[%s3774 + $0x90] sm:$0xff]
        %v3794 = vld [vmem:[%s3774 + $0x98] sm:$0xff]
        %v3795 = vld [vmem:[%s3774 + $0xa0] sm:$0xff]
        %v3796 = vld [vmem:[%s3774 + $0xa8] sm:$0xff]
        %v3797 = vld [vmem:[%s3774 + $0xb0] sm:$0xff]
        %v3798 = vld [vmem:[%s3774 + $0xb8] sm:$0xff]
        %v3799 = vld [vmem:[%s3774 + $0xc0] sm:$0xff]
        %v3800 = vld [vmem:[%s3774 + $0xc8] sm:$0xff]
        %v3801 = vld [vmem:[%s3774 + $0xd0] sm:$0xff]
        %v3802 = vld [vmem:[%s3774 + $0xd8] sm:$0xff]
        %v3803 = vld [vmem:[%s3774 + $0xe0] sm:$0xff]
        %v3804 = vld [vmem:[%s3774 + $0xe8] sm:$0xff]
        %v3805 = vld [vmem:[%s3774 + $0xf0] sm:$0xff]
        %v3806 = vld [vmem:[%s3774 + $0xf8] sm:$0xff]
        %v3807 = vld [vmem:[%s3774 + $0x100] sm:$0xff]
        %v3808 = vld [vmem:[%s3774 + $0x108] sm:$0xff]
        %v3809 = vld [vmem:[%s3774 + $0x110] sm:$0xff]
        %v3810 = vld [vmem:[%s3774 + $0x118] sm:$0xff]
        %v3811 = vld [vmem:[%s3774 + $0x120] sm:$0xff]
        %v3812 = vld [vmem:[%s3774 + $0x128] sm:$0xff]
        %v3813 = vld [vmem:[%s3774 + $0x130] sm:$0xff]
        %v3814 = vld [vmem:[%s3774 + $0x138] sm:$0xff]
        %v3815 = vld [vmem:[%s3774 + $0x140] sm:$0xff]
        %v3816 = vld [vmem:[%s3774 + $0x148] sm:$0xff]
        %v3817 = vld [vmem:[%s3774 + $0x150] sm:$0xff]
        %v3818 = vld [vmem:[%s3774 + $0x158] sm:$0xff]
        %v3819 = vld [vmem:[%s3774 + $0x160] sm:$0xff]
        %v3820 = vld [vmem:[%s3774 + $0x168] sm:$0xff]
        %v3821 = vld [vmem:[%s3774 + $0x170] sm:$0xff]
        %v3822 = vld [vmem:[%s3774 + $0x178] sm:$0xff]
        %v3823 = vld [vmem:[%s3774 + $0x180] sm:$0xff]
        %v3824 = vld [vmem:[%s3774 + $0x188] sm:$0xff]
        %v3825 = vld [vmem:[%s3774 + $0x190] sm:$0xff]
        %v3826 = vld [vmem:[%s3774 + $0x198] sm:$0xff]
        %v3827 = vld [vmem:[%s3774 + $0x1a0] sm:$0xff]
        %v3828 = vld [vmem:[%s3774 + $0x1a8] sm:$0xff]
        %v3829 = vld [vmem:[%s3774 + $0x1b0] sm:$0xff]
        %v3830 = vld [vmem:[%s3774 + $0x1b8] sm:$0xff]
        %v3831 = vld [vmem:[%s3774 + $0x1c0] sm:$0xff]
        %v3832 = vld [vmem:[%s3774 + $0x1c8] sm:$0xff]
        %v3833 = vld [vmem:[%s3774 + $0x1d0] sm:$0xff]
        %v3834 = vld [vmem:[%s3774 + $0x1d8] sm:$0xff]
        %v3835 = vld [vmem:[%s3774 + $0x1e0] sm:$0xff]
        %v3836 = vld [vmem:[%s3774 + $0x1e8] sm:$0xff]
        %v3837 = vld [vmem:[%s3774 + $0x1f0] sm:$0xff]
        %v3838 = vld [vmem:[%s3774 + $0x1f8] sm:$0xff]
        %v3839 = vld [vmem:[%s3774 + $0x200] sm:$0xff]
        %v3840 = vld [vmem:[%s3774 + $0x208] sm:$0xff]
        %v3841 = vld [vmem:[%s3774 + $0x210] sm:$0xff]
        %v3842 = vld [vmem:[%s3774 + $0x218] sm:$0xff]
        %v3843 = vld [vmem:[%s3774 + $0x220] sm:$0xff]
        %v3844 = vld [vmem:[%s3774 + $0x228] sm:$0xff]
        %v3845 = vld [vmem:[%s3774 + $0x230] sm:$0xff]
        %v3846 = vld [vmem:[%s3774 + $0x238] sm:$0xff]
        %v3847 = vld [vmem:[%s3774 + $0x240] sm:$0xff]
        %v3848 = vld [vmem:[%s3774 + $0x248] sm:$0xff]
        %v3849 = vld [vmem:[%s3774 + $0x250] sm:$0xff]
        %v3850 = vld [vmem:[%s3774 + $0x258] sm:$0xff]
        %v3851 = vld [vmem:[%s3774 + $0x260] sm:$0xff]
        %v3852 = vld [vmem:[%s3774 + $0x268] sm:$0xff]
        %v3853 = vld [vmem:[%s3774 + $0x270] sm:$0xff]
        %v3854 = vld [vmem:[%s3774 + $0x278] sm:$0xff]
        %v3855 = vld [vmem:[%s3774 + $0x280] sm:$0xff]
        %v3856 = vld [vmem:[%s3774 + $0x288] sm:$0xff]
        %v3857 = vld [vmem:[%s3774 + $0x290] sm:$0xff]
        %v3858 = vld [vmem:[%s3774 + $0x298] sm:$0xff]
        %v3859 = vld [vmem:[%s3774 + $0x2a0] sm:$0xff]
        %v3860 = vld [vmem:[%s3774 + $0x2a8] sm:$0xff]
        %v3861 = vld [vmem:[%s3774 + $0x2b0] sm:$0xff]
        %v3862 = vld [vmem:[%s3774 + $0x2b8] sm:$0xff]
        %v3863 = vld [vmem:[%s3774 + $0x2c0] sm:$0xff]
        %v3864 = vld [vmem:[%s3774 + $0x2c8] sm:$0xff]
        %v3865 = vld [vmem:[%s3774 + $0x2d0] sm:$0xff]
        %v3866 = vld [vmem:[%s3774 + $0x2d8] sm:$0xff]
        %v3867 = vld [vmem:[%s3774 + $0x2e0] sm:$0xff]
        %v3868 = vld [vmem:[%s3774 + $0x2e8] sm:$0xff]
        %v3869 = vld [vmem:[%s3774 + $0x2f0] sm:$0xff]
        %v3870 = vld [vmem:[%s3774 + $0x2f8] sm:$0xff]
        %v3871 = vld [vmem:[%s3774 + $0x300] sm:$0xff]
        %v3872 = vld [vmem:[%s3774 + $0x308] sm:$0xff]
        %v3873 = vld [vmem:[%s3774 + $0x310] sm:$0xff]
        %v3874 = vld [vmem:[%s3774 + $0x318] sm:$0xff]
        %v3875 = vld [vmem:[%s3774 + $0x320] sm:$0xff]
        %v3876 = vld [vmem:[%s3774 + $0x328] sm:$0xff]
        %v3877 = vld [vmem:[%s3774 + $0x330] sm:$0xff]
        %v3878 = vld [vmem:[%s3774 + $0x338] sm:$0xff]
        %v3879 = vld [vmem:[%s3774 + $0x340] sm:$0xff]
        %v3880 = vld [vmem:[%s3774 + $0x348] sm:$0xff]
        %v3881 = vld [vmem:[%s3774 + $0x350] sm:$0xff]
        %v3882 = vld [vmem:[%s3774 + $0x358] sm:$0xff]
        %v3883 = vld [vmem:[%s3774 + $0x360] sm:$0xff]
        %v3884 = vld [vmem:[%s3774 + $0x368] sm:$0xff]
        %v3885 = vld [vmem:[%s3774 + $0x370] sm:$0xff]
        %v3886 = vld [vmem:[%s3774 + $0x378] sm:$0xff]
        %v3887 = vld [vmem:[%s3774 + $0x380] sm:$0xff]
        %v3888 = vld [vmem:[%s3774 + $0x388] sm:$0xff]
        %v3889 = vld [vmem:[%s3774 + $0x390] sm:$0xff]
        %v3890 = vld [vmem:[%s3774 + $0x398] sm:$0xff]
        %v3891 = vld [vmem:[%s3774 + $0x3a0] sm:$0xff]
        %v3892 = vld [vmem:[%s3774 + $0x3a8] sm:$0xff]
        %v3893 = vld [vmem:[%s3774 + $0x3b0] sm:$0xff]
        %v3894 = vld [vmem:[%s3774 + $0x3b8] sm:$0xff]
        %v3895 = vld [vmem:[%s3774 + $0x3c0] sm:$0xff]
        %v3896 = vld [vmem:[%s3774 + $0x3c8] sm:$0xff]
        %v3897 = vld [vmem:[%s3774 + $0x3d0] sm:$0xff]
        %v3898 = vld [vmem:[%s3774 + $0x3d8] sm:$0xff]
        %v3899 = vld [vmem:[%s3774 + $0x3e0] sm:$0xff]
        %v3900 = vld [vmem:[%s3774 + $0x3e8] sm:$0xff]
        %v3901 = vld [vmem:[%s3774 + $0x3f0] sm:$0xff]
        %v3902 = vld [vmem:[%s3774 + $0x3f8] sm:$0xff]
        %v3903 = vld [vmem:[%s3774 + $0x400] sm:$0xff]
        %v3904 = vld [vmem:[%s3774 + $0x408] sm:$0xff]
        %v3905 = vld [vmem:[%s3774 + $0x410] sm:$0xff]
        %v3906 = vld [vmem:[%s3774 + $0x418] sm:$0xff]
        %v3907 = vld [vmem:[%s3774 + $0x420] sm:$0xff]
        %v3908 = vld [vmem:[%s3774 + $0x428] sm:$0xff]
        %v3909 = vld [vmem:[%s3774 + $0x430] sm:$0xff]
        %v3910 = vld [vmem:[%s3774 + $0x438] sm:$0xff]
        %v3911 = vld [vmem:[%s3774 + $0x440] sm:$0xff]
        %v3912 = vld [vmem:[%s3774 + $0x448] sm:$0xff]
        %v3913 = vld [vmem:[%s3774 + $0x450] sm:$0xff]
        %v3914 = vld [vmem:[%s3774 + $0x458] sm:$0xff]
        %v3915 = vld [vmem:[%s3774 + $0x460] sm:$0xff]
        %v3916 = vld [vmem:[%s3774 + $0x468] sm:$0xff]
        %v3917 = vld [vmem:[%s3774 + $0x470] sm:$0xff]
        %v3918 = vld [vmem:[%s3774 + $0x478] sm:$0xff]
        %v3919 = vld [vmem:[%s3774 + $0x480] sm:$0xff]
        %v3920 = vld [vmem:[%s3774 + $0x488] sm:$0xff]
        %v3921 = vld [vmem:[%s3774 + $0x490] sm:$0xff]
        %v3922 = vld [vmem:[%s3774 + $0x498] sm:$0xff]
        %v3923 = vld [vmem:[%s3774 + $0x4a0] sm:$0xff]
        %v3924 = vld [vmem:[%s3774 + $0x4a8] sm:$0xff]
        %v3925 = vld [vmem:[%s3774 + $0x4b0] sm:$0xff]
        %v3926 = vld [vmem:[%s3774 + $0x4b8] sm:$0xff]
        %v3927 = vld [vmem:[%s3774 + $0x4c0] sm:$0xff]
        %v3928 = vld [vmem:[%s3774 + $0x4c8] sm:$0xff]
        %v3929 = vld [vmem:[%s3774 + $0x4d0] sm:$0xff]
        %v3930 = vld [vmem:[%s3774 + $0x4d8] sm:$0xff]
        %v3931 = vld [vmem:[%s3774 + $0x4e0] sm:$0xff]
        %v3932 = vld [vmem:[%s3774 + $0x4e8] sm:$0xff]
        %v3933 = vld [vmem:[%s3774 + $0x4f0] sm:$0xff]
        %v3934 = vld [vmem:[%s3774 + $0x4f8] sm:$0xff]
        %v3935 = vld [vmem:[%s3774 + $0x500] sm:$0xff]
        %v3936 = vld [vmem:[%s3774 + $0x508] sm:$0xff]
        %v3937 = vld [vmem:[%s3774 + $0x510] sm:$0xff]
        %v3938 = vld [vmem:[%s3774 + $0x518] sm:$0xff]
        %v3939 = vld [vmem:[%s3774 + $0x520] sm:$0xff]
        %v3940 = vld [vmem:[%s3774 + $0x528] sm:$0xff]
        %v3941 = vld [vmem:[%s3774 + $0x530] sm:$0xff]
        %v3942 = vld [vmem:[%s3774 + $0x538] sm:$0xff]
        %v3943 = vld [vmem:[%s3774 + $0x540] sm:$0xff]
        %v3944 = vld [vmem:[%s3774 + $0x548] sm:$0xff]
        %v3945 = vld [vmem:[%s3774 + $0x550] sm:$0xff]
        %v3946 = vld [vmem:[%s3774 + $0x558] sm:$0xff]
        %v3947 = vld [vmem:[%s3774 + $0x560] sm:$0xff]
        %v3948 = vld [vmem:[%s3774 + $0x568] sm:$0xff]
        %v3949 = vld [vmem:[%s3774 + $0x570] sm:$0xff]
        %v3950 = vld [vmem:[%s3774 + $0x578] sm:$0xff]
        %v3951 = vld [vmem:[%s3774 + $0x580] sm:$0xff]
        %v3952 = vld [vmem:[%s3774 + $0x588] sm:$0xff]
        %v3953 = vld [vmem:[%s3774 + $0x590] sm:$0xff]
        %v3954 = vld [vmem:[%s3774 + $0x598] sm:$0xff]
        %v3955 = vld [vmem:[%s3774 + $0x5a0] sm:$0xff]
        %v3956 = vld [vmem:[%s3774 + $0x5a8] sm:$0xff]
        %v3957 = vld [vmem:[%s3774 + $0x5b0] sm:$0xff]
        %v3958 = vld [vmem:[%s3774 + $0x5b8] sm:$0xff]
        %v3959 = vld [vmem:[%s3774 + $0x5c0] sm:$0xff]
        %v3960 = vld [vmem:[%s3774 + $0x5c8] sm:$0xff]
        %v3961 = vld [vmem:[%s3774 + $0x5d0] sm:$0xff]
        %v3962 = vld [vmem:[%s3774 + $0x5d8] sm:$0xff]
        %v3963 = vld [vmem:[%s3774 + $0x5e0] sm:$0xff]
        %v3964 = vld [vmem:[%s3774 + $0x5e8] sm:$0xff]
        %v3965 = vld [vmem:[%s3774 + $0x5f0] sm:$0xff]
        %v3966 = vld [vmem:[%s3774 + $0x5f8] sm:$0xff]
        %vm3991 = vcmask 1043456
        %v3992 = vrot.slane %v3488, 4
        %v3993 = vrot.slane %v3504, 4
        %v3994 = vsel %vm3991, %v3992, %v3993
        %v3995 = vrot.slane %v3492, 4
        %v3996 = vrot.slane %v3508, 4
        %v3997 = vsel %vm3991, %v3995, %v3996
        %v3998 = vrot.slane %v3496, 4
        %v3999 = vrot.slane %v3512, 4
        %v4000 = vsel %vm3991, %v3998, %v3999
        %v4001 = vrot.slane %v3500, 4
        %v4002 = vrot.slane %v3516, 4
        %v4003 = vsel %vm3991, %v4001, %v4002
        %v4004 = vrot.slane %v3520, 4
        %v4005 = vsel %vm3991, %v3993, %v4004
        %v4006 = vrot.slane %v3524, 4
        %v4007 = vsel %vm3991, %v3996, %v4006
        %v4008 = vrot.slane %v3528, 4
        %v4009 = vsel %vm3991, %v3999, %v4008
        %v4010 = vrot.slane %v3532, 4
        %v4011 = vsel %vm3991, %v4002, %v4010
        %v4012 = vrot.slane %v3536, 4
        %v4013 = vsel %vm3991, %v4004, %v4012
        %v4014 = vrot.slane %v3540, 4
        %v4015 = vsel %vm3991, %v4006, %v4014
        %v4016 = vrot.slane %v3544, 4
        %v4017 = vsel %vm3991, %v4008, %v4016
        %v4018 = vrot.slane %v3548, 4
        %v4019 = vsel %vm3991, %v4010, %v4018
        %v4020 = vrot.slane %v3552, 4
        %v4021 = vsel %vm3991, %v4012, %v4020
        %v4022 = vrot.slane %v3556, 4
        %v4023 = vsel %vm3991, %v4014, %v4022
        %v4024 = vrot.slane %v3560, 4
        %v4025 = vsel %vm3991, %v4016, %v4024
        %v4026 = vrot.slane %v3564, 4
        %v4027 = vsel %vm3991, %v4018, %v4026
        %v4028 = vrot.slane %v3568, 4
        %v4029 = vsel %vm3991, %v4020, %v4028
        %v4030 = vrot.slane %v3572, 4
        %v4031 = vsel %vm3991, %v4022, %v4030
        %v4032 = vrot.slane %v3576, 4
        %v4033 = vsel %vm3991, %v4024, %v4032
        %v4034 = vrot.slane %v3580, 4
        %v4035 = vsel %vm3991, %v4026, %v4034
        %v4248 = vunpack.c.l.b16 %v3775
        %v4249 = vunpack.c.h.b16 %v3775
        %v4250 = vunpack.c.l.b16 %v3776
        %v4251 = vunpack.c.h.b16 %v3776
        %v4252 = vunpack.c.l.b16 %v3777
        %v4253 = vunpack.c.h.b16 %v3777
        %v4254 = vunpack.c.l.b16 %v3778
        %v4255 = vunpack.c.h.b16 %v3778
        %v4256 = vunpack.c.l.b16 %v3779
        %v4257 = vunpack.c.h.b16 %v3779
        %v4258 = vunpack.c.l.b16 %v3780
        %v4259 = vunpack.c.h.b16 %v3780
        %v4260 = vunpack.c.l.b16 %v3781
        %v4261 = vunpack.c.h.b16 %v3781
        %v4262 = vunpack.c.l.b16 %v3782
        %v4263 = vunpack.c.h.b16 %v3782
        %v4264 = vunpack.c.l.b16 %v3783
        %v4265 = vunpack.c.h.b16 %v3783
        %v4266 = vunpack.c.l.b16 %v3784
        %v4267 = vunpack.c.h.b16 %v3784
        %v4268 = vunpack.c.l.b16 %v3785
        %v4269 = vunpack.c.h.b16 %v3785
        %v4270 = vunpack.c.l.b16 %v3786
        %v4271 = vunpack.c.h.b16 %v3786
        %v4272 = vunpack.c.l.b16 %v3787
        %v4273 = vunpack.c.h.b16 %v3787
        %v4274 = vunpack.c.l.b16 %v3788
        %v4275 = vunpack.c.h.b16 %v3788
        %v4276 = vunpack.c.l.b16 %v3789
        %v4277 = vunpack.c.h.b16 %v3789
        %v4278 = vunpack.c.l.b16 %v3790
        %v4279 = vunpack.c.h.b16 %v3790
        %v4280 = vunpack.c.l.b16 %v3791
        %v4281 = vunpack.c.h.b16 %v3791
        %v4282 = vunpack.c.l.b16 %v3792
        %v4283 = vunpack.c.h.b16 %v3792
        %v4284 = vunpack.c.l.b16 %v3793
        %v4285 = vunpack.c.h.b16 %v3793
        %v4286 = vunpack.c.l.b16 %v3794
        %v4287 = vunpack.c.h.b16 %v3794
        %v4288 = vunpack.c.l.b16 %v3795
        %v4289 = vunpack.c.h.b16 %v3795
        %v4290 = vunpack.c.l.b16 %v3796
        %v4291 = vunpack.c.h.b16 %v3796
        %v4292 = vunpack.c.l.b16 %v3797
        %v4293 = vunpack.c.h.b16 %v3797
        %v4294 = vunpack.c.l.b16 %v3798
        %v4295 = vunpack.c.h.b16 %v3798
        %v4296 = vunpack.c.l.b16 %v3799
        %v4297 = vunpack.c.h.b16 %v3799
        %v4298 = vunpack.c.l.b16 %v3800
        %v4299 = vunpack.c.h.b16 %v3800
        %v4300 = vunpack.c.l.b16 %v3801
        %v4301 = vunpack.c.h.b16 %v3801
        %v4302 = vunpack.c.l.b16 %v3802
        %v4303 = vunpack.c.h.b16 %v3802
        %v4304 = vunpack.c.l.b16 %v3803
        %v4305 = vunpack.c.h.b16 %v3803
        %v4306 = vunpack.c.l.b16 %v3804
        %v4307 = vunpack.c.h.b16 %v3804
        %v4308 = vunpack.c.l.b16 %v3805
        %v4309 = vunpack.c.h.b16 %v3805
        %v4310 = vunpack.c.l.b16 %v3806
        %v4311 = vunpack.c.h.b16 %v3806
        %v4312 = vunpack.c.l.b16 %v3807
        %v4313 = vunpack.c.h.b16 %v3807
        %v4314 = vunpack.c.l.b16 %v3808
        %v4315 = vunpack.c.h.b16 %v3808
        %v4316 = vunpack.c.l.b16 %v3809
        %v4317 = vunpack.c.h.b16 %v3809
        %v4318 = vunpack.c.l.b16 %v3810
        %v4319 = vunpack.c.h.b16 %v3810
        %v4320 = vunpack.c.l.b16 %v3811
        %v4321 = vunpack.c.h.b16 %v3811
        %v4322 = vunpack.c.l.b16 %v3812
        %v4323 = vunpack.c.h.b16 %v3812
        %v4324 = vunpack.c.l.b16 %v3813
        %v4325 = vunpack.c.h.b16 %v3813
        %v4326 = vunpack.c.l.b16 %v3814
        %v4327 = vunpack.c.h.b16 %v3814
        %v4328 = vunpack.c.l.b16 %v3815
        %v4329 = vunpack.c.h.b16 %v3815
        %v4330 = vunpack.c.l.b16 %v3816
        %v4331 = vunpack.c.h.b16 %v3816
        %v4332 = vunpack.c.l.b16 %v3817
        %v4333 = vunpack.c.h.b16 %v3817
        %v4334 = vunpack.c.l.b16 %v3818
        %v4335 = vunpack.c.h.b16 %v3818
        %v4336 = vunpack.c.l.b16 %v3819
        %v4337 = vunpack.c.h.b16 %v3819
        %v4338 = vunpack.c.l.b16 %v3820
        %v4339 = vunpack.c.h.b16 %v3820
        %v4340 = vunpack.c.l.b16 %v3821
        %v4341 = vunpack.c.h.b16 %v3821
        %v4342 = vunpack.c.l.b16 %v3822
        %v4343 = vunpack.c.h.b16 %v3822
        %v4344 = vunpack.c.l.b16 %v3823
        %v4345 = vunpack.c.h.b16 %v3823
        %v4346 = vunpack.c.l.b16 %v3824
        %v4347 = vunpack.c.h.b16 %v3824
        %v4348 = vunpack.c.l.b16 %v3825
        %v4349 = vunpack.c.h.b16 %v3825
        %v4350 = vunpack.c.l.b16 %v3826
        %v4351 = vunpack.c.h.b16 %v3826
        %v4352 = vunpack.c.l.b16 %v3827
        %v4353 = vunpack.c.h.b16 %v3827
        %v4354 = vunpack.c.l.b16 %v3828
        %v4355 = vunpack.c.h.b16 %v3828
        %v4356 = vunpack.c.l.b16 %v3829
        %v4357 = vunpack.c.h.b16 %v3829
        %v4358 = vunpack.c.l.b16 %v3830
        %v4359 = vunpack.c.h.b16 %v3830
        %v4360 = vunpack.c.l.b16 %v3831
        %v4361 = vunpack.c.h.b16 %v3831
        %v4362 = vunpack.c.l.b16 %v3832
        %v4363 = vunpack.c.h.b16 %v3832
        %v4364 = vunpack.c.l.b16 %v3833
        %v4365 = vunpack.c.h.b16 %v3833
        %v4366 = vunpack.c.l.b16 %v3834
        %v4367 = vunpack.c.h.b16 %v3834
        %v4368 = vunpack.c.l.b16 %v3835
        %v4369 = vunpack.c.h.b16 %v3835
        %v4370 = vunpack.c.l.b16 %v3836
        %v4371 = vunpack.c.h.b16 %v3836
        %v4372 = vunpack.c.l.b16 %v3837
        %v4373 = vunpack.c.h.b16 %v3837
        %v4374 = vunpack.c.l.b16 %v3838
        %v4375 = vunpack.c.h.b16 %v3838
        %v4376 = vunpack.c.l.b16 %v3839
        %v4377 = vunpack.c.h.b16 %v3839
        %v4378 = vunpack.c.l.b16 %v3840
        %v4379 = vunpack.c.h.b16 %v3840
        %v4380 = vunpack.c.l.b16 %v3841
        %v4381 = vunpack.c.h.b16 %v3841
        %v4382 = vunpack.c.l.b16 %v3842
        %v4383 = vunpack.c.h.b16 %v3842
        %v4384 = vunpack.c.l.b16 %v3843
        %v4385 = vunpack.c.h.b16 %v3843
        %v4386 = vunpack.c.l.b16 %v3844
        %v4387 = vunpack.c.h.b16 %v3844
        %v4388 = vunpack.c.l.b16 %v3845
        %v4389 = vunpack.c.h.b16 %v3845
        %v4390 = vunpack.c.l.b16 %v3846
        %v4391 = vunpack.c.h.b16 %v3846
        %v4392 = vunpack.c.l.b16 %v3847
        %v4393 = vunpack.c.h.b16 %v3847
        %v4394 = vunpack.c.l.b16 %v3848
        %v4395 = vunpack.c.h.b16 %v3848
        %v4396 = vunpack.c.l.b16 %v3849
        %v4397 = vunpack.c.h.b16 %v3849
        %v4398 = vunpack.c.l.b16 %v3850
        %v4399 = vunpack.c.h.b16 %v3850
        %v4400 = vunpack.c.l.b16 %v3851
        %v4401 = vunpack.c.h.b16 %v3851
        %v4402 = vunpack.c.l.b16 %v3852
        %v4403 = vunpack.c.h.b16 %v3852
        %v4404 = vunpack.c.l.b16 %v3853
        %v4405 = vunpack.c.h.b16 %v3853
        %v4406 = vunpack.c.l.b16 %v3854
        %v4407 = vunpack.c.h.b16 %v3854
        %v4408 = vunpack.c.l.b16 %v3855
        %v4409 = vunpack.c.h.b16 %v3855
        %v4410 = vunpack.c.l.b16 %v3856
        %v4411 = vunpack.c.h.b16 %v3856
        %v4412 = vunpack.c.l.b16 %v3857
        %v4413 = vunpack.c.h.b16 %v3857
        %v4414 = vunpack.c.l.b16 %v3858
        %v4415 = vunpack.c.h.b16 %v3858
        %v4416 = vunpack.c.l.b16 %v3859
        %v4417 = vunpack.c.h.b16 %v3859
        %v4418 = vunpack.c.l.b16 %v3860
        %v4419 = vunpack.c.h.b16 %v3860
        %v4420 = vunpack.c.l.b16 %v3861
        %v4421 = vunpack.c.h.b16 %v3861
        %v4422 = vunpack.c.l.b16 %v3862
        %v4423 = vunpack.c.h.b16 %v3862
        %v4424 = vunpack.c.l.b16 %v3863
        %v4425 = vunpack.c.h.b16 %v3863
        %v4426 = vunpack.c.l.b16 %v3864
        %v4427 = vunpack.c.h.b16 %v3864
        %v4428 = vunpack.c.l.b16 %v3865
        %v4429 = vunpack.c.h.b16 %v3865
        %v4430 = vunpack.c.l.b16 %v3866
        %v4431 = vunpack.c.h.b16 %v3866
        %v4432 = vunpack.c.l.b16 %v3867
        %v4433 = vunpack.c.h.b16 %v3867
        %v4434 = vunpack.c.l.b16 %v3868
        %v4435 = vunpack.c.h.b16 %v3868
        %v4436 = vunpack.c.l.b16 %v3869
        %v4437 = vunpack.c.h.b16 %v3869
        %v4438 = vunpack.c.l.b16 %v3870
        %v4439 = vunpack.c.h.b16 %v3870
        %v4440 = vunpack.c.l.b16 %v3871
        %v4441 = vunpack.c.h.b16 %v3871
        %v4442 = vunpack.c.l.b16 %v3872
        %v4443 = vunpack.c.h.b16 %v3872
        %v4444 = vunpack.c.l.b16 %v3873
        %v4445 = vunpack.c.h.b16 %v3873
        %v4446 = vunpack.c.l.b16 %v3874
        %v4447 = vunpack.c.h.b16 %v3874
        %v4448 = vunpack.c.l.b16 %v3875
        %v4449 = vunpack.c.h.b16 %v3875
        %v4450 = vunpack.c.l.b16 %v3876
        %v4451 = vunpack.c.h.b16 %v3876
        %v4452 = vunpack.c.l.b16 %v3877
        %v4453 = vunpack.c.h.b16 %v3877
        %v4454 = vunpack.c.l.b16 %v3878
        %v4455 = vunpack.c.h.b16 %v3878
        %v4456 = vunpack.c.l.b16 %v3879
        %v4457 = vunpack.c.h.b16 %v3879
        %v4458 = vunpack.c.l.b16 %v3880
        %v4459 = vunpack.c.h.b16 %v3880
        %v4460 = vunpack.c.l.b16 %v3881
        %v4461 = vunpack.c.h.b16 %v3881
        %v4462 = vunpack.c.l.b16 %v3882
        %v4463 = vunpack.c.h.b16 %v3882
        %v4464 = vunpack.c.l.b16 %v3883
        %v4465 = vunpack.c.h.b16 %v3883
        %v4466 = vunpack.c.l.b16 %v3884
        %v4467 = vunpack.c.h.b16 %v3884
        %v4468 = vunpack.c.l.b16 %v3885
        %v4469 = vunpack.c.h.b16 %v3885
        %v4470 = vunpack.c.l.b16 %v3886
        %v4471 = vunpack.c.h.b16 %v3886
        %v4472 = vunpack.c.l.b16 %v3887
        %v4473 = vunpack.c.h.b16 %v3887
        %v4474 = vunpack.c.l.b16 %v3888
        %v4475 = vunpack.c.h.b16 %v3888
        %v4476 = vunpack.c.l.b16 %v3889
        %v4477 = vunpack.c.h.b16 %v3889
        %v4478 = vunpack.c.l.b16 %v3890
        %v4479 = vunpack.c.h.b16 %v3890
        %v4480 = vunpack.c.l.b16 %v3891
        %v4481 = vunpack.c.h.b16 %v3891
        %v4482 = vunpack.c.l.b16 %v3892
        %v4483 = vunpack.c.h.b16 %v3892
        %v4484 = vunpack.c.l.b16 %v3893
        %v4485 = vunpack.c.h.b16 %v3893
        %v4486 = vunpack.c.l.b16 %v3894
        %v4487 = vunpack.c.h.b16 %v3894
        %v4488 = vunpack.c.l.b16 %v3895
        %v4489 = vunpack.c.h.b16 %v3895
        %v4490 = vunpack.c.l.b16 %v3896
        %v4491 = vunpack.c.h.b16 %v3896
        %v4492 = vunpack.c.l.b16 %v3897
        %v4493 = vunpack.c.h.b16 %v3897
        %v4494 = vunpack.c.l.b16 %v3898
        %v4495 = vunpack.c.h.b16 %v3898
        %v4496 = vunpack.c.l.b16 %v3899
        %v4497 = vunpack.c.h.b16 %v3899
        %v4498 = vunpack.c.l.b16 %v3900
        %v4499 = vunpack.c.h.b16 %v3900
        %v4500 = vunpack.c.l.b16 %v3901
        %v4501 = vunpack.c.h.b16 %v3901
        %v4502 = vunpack.c.l.b16 %v3902
        %v4503 = vunpack.c.h.b16 %v3902
        %v4504 = vunpack.c.l.b16 %v3903
        %v4505 = vunpack.c.h.b16 %v3903
        %v4506 = vunpack.c.l.b16 %v3904
        %v4507 = vunpack.c.h.b16 %v3904
        %v4508 = vunpack.c.l.b16 %v3905
        %v4509 = vunpack.c.h.b16 %v3905
        %v4510 = vunpack.c.l.b16 %v3906
        %v4511 = vunpack.c.h.b16 %v3906
        %v4512 = vunpack.c.l.b16 %v3907
        %v4513 = vunpack.c.h.b16 %v3907
        %v4514 = vunpack.c.l.b16 %v3908
        %v4515 = vunpack.c.h.b16 %v3908
        %v4516 = vunpack.c.l.b16 %v3909
        %v4517 = vunpack.c.h.b16 %v3909
        %v4518 = vunpack.c.l.b16 %v3910
        %v4519 = vunpack.c.h.b16 %v3910
        %v4520 = vunpack.c.l.b16 %v3911
        %v4521 = vunpack.c.h.b16 %v3911
        %v4522 = vunpack.c.l.b16 %v3912
        %v4523 = vunpack.c.h.b16 %v3912
        %v4524 = vunpack.c.l.b16 %v3913
        %v4525 = vunpack.c.h.b16 %v3913
        %v4526 = vunpack.c.l.b16 %v3914
        %v4527 = vunpack.c.h.b16 %v3914
        %v4528 = vunpack.c.l.b16 %v3915
        %v4529 = vunpack.c.h.b16 %v3915
        %v4530 = vunpack.c.l.b16 %v3916
        %v4531 = vunpack.c.h.b16 %v3916
        %v4532 = vunpack.c.l.b16 %v3917
        %v4533 = vunpack.c.h.b16 %v3917
        %v4534 = vunpack.c.l.b16 %v3918
        %v4535 = vunpack.c.h.b16 %v3918
        %v4536 = vunpack.c.l.b16 %v3919
        %v4537 = vunpack.c.h.b16 %v3919
        %v4538 = vunpack.c.l.b16 %v3920
        %v4539 = vunpack.c.h.b16 %v3920
        %v4540 = vunpack.c.l.b16 %v3921
        %v4541 = vunpack.c.h.b16 %v3921
        %v4542 = vunpack.c.l.b16 %v3922
        %v4543 = vunpack.c.h.b16 %v3922
        %v4544 = vunpack.c.l.b16 %v3923
        %v4545 = vunpack.c.h.b16 %v3923
        %v4546 = vunpack.c.l.b16 %v3924
        %v4547 = vunpack.c.h.b16 %v3924
        %v4548 = vunpack.c.l.b16 %v3925
        %v4549 = vunpack.c.h.b16 %v3925
        %v4550 = vunpack.c.l.b16 %v3926
        %v4551 = vunpack.c.h.b16 %v3926
        %v4552 = vunpack.c.l.b16 %v3927
        %v4553 = vunpack.c.h.b16 %v3927
        %v4554 = vunpack.c.l.b16 %v3928
        %v4555 = vunpack.c.h.b16 %v3928
        %v4556 = vunpack.c.l.b16 %v3929
        %v4557 = vunpack.c.h.b16 %v3929
        %v4558 = vunpack.c.l.b16 %v3930
        %v4559 = vunpack.c.h.b16 %v3930
        %v4560 = vunpack.c.l.b16 %v3931
        %v4561 = vunpack.c.h.b16 %v3931
        %v4562 = vunpack.c.l.b16 %v3932
        %v4563 = vunpack.c.h.b16 %v3932
        %v4564 = vunpack.c.l.b16 %v3933
        %v4565 = vunpack.c.h.b16 %v3933
        %v4566 = vunpack.c.l.b16 %v3934
        %v4567 = vunpack.c.h.b16 %v3934
        %v4568 = vunpack.c.l.b16 %v3935
        %v4569 = vunpack.c.h.b16 %v3935
        %v4570 = vunpack.c.l.b16 %v3936
        %v4571 = vunpack.c.h.b16 %v3936
        %v4572 = vunpack.c.l.b16 %v3937
        %v4573 = vunpack.c.h.b16 %v3937
        %v4574 = vunpack.c.l.b16 %v3938
        %v4575 = vunpack.c.h.b16 %v3938
        %v4576 = vunpack.c.l.b16 %v3939
        %v4577 = vunpack.c.h.b16 %v3939
        %v4578 = vunpack.c.l.b16 %v3940
        %v4579 = vunpack.c.h.b16 %v3940
        %v4580 = vunpack.c.l.b16 %v3941
        %v4581 = vunpack.c.h.b16 %v3941
        %v4582 = vunpack.c.l.b16 %v3942
        %v4583 = vunpack.c.h.b16 %v3942
        %v4584 = vunpack.c.l.b16 %v3943
        %v4585 = vunpack.c.h.b16 %v3943
        %v4586 = vunpack.c.l.b16 %v3944
        %v4587 = vunpack.c.h.b16 %v3944
        %v4588 = vunpack.c.l.b16 %v3945
        %v4589 = vunpack.c.h.b16 %v3945
        %v4590 = vunpack.c.l.b16 %v3946
        %v4591 = vunpack.c.h.b16 %v3946
        %v4592 = vunpack.c.l.b16 %v3947
        %v4593 = vunpack.c.h.b16 %v3947
        %v4594 = vunpack.c.l.b16 %v3948
        %v4595 = vunpack.c.h.b16 %v3948
        %v4596 = vunpack.c.l.b16 %v3949
        %v4597 = vunpack.c.h.b16 %v3949
        %v4598 = vunpack.c.l.b16 %v3950
        %v4599 = vunpack.c.h.b16 %v3950
        %v4600 = vunpack.c.l.b16 %v3951
        %v4601 = vunpack.c.h.b16 %v3951
        %v4602 = vunpack.c.l.b16 %v3952
        %v4603 = vunpack.c.h.b16 %v3952
        %v4604 = vunpack.c.l.b16 %v3953
        %v4605 = vunpack.c.h.b16 %v3953
        %v4606 = vunpack.c.l.b16 %v3954
        %v4607 = vunpack.c.h.b16 %v3954
        %v4608 = vunpack.c.l.b16 %v3955
        %v4609 = vunpack.c.h.b16 %v3955
        %v4610 = vunpack.c.l.b16 %v3956
        %v4611 = vunpack.c.h.b16 %v3956
        %v4612 = vunpack.c.l.b16 %v3957
        %v4613 = vunpack.c.h.b16 %v3957
        %v4614 = vunpack.c.l.b16 %v3958
        %v4615 = vunpack.c.h.b16 %v3958
        %v4616 = vunpack.c.l.b16 %v3959
        %v4617 = vunpack.c.h.b16 %v3959
        %v4618 = vunpack.c.l.b16 %v3960
        %v4619 = vunpack.c.h.b16 %v3960
        %v4620 = vunpack.c.l.b16 %v3961
        %v4621 = vunpack.c.h.b16 %v3961
        %v4622 = vunpack.c.l.b16 %v3962
        %v4623 = vunpack.c.h.b16 %v3962
        %v4624 = vunpack.c.l.b16 %v3963
        %v4625 = vunpack.c.h.b16 %v3963
        %v4626 = vunpack.c.l.b16 %v3964
        %v4627 = vunpack.c.h.b16 %v3964
        %v4628 = vunpack.c.l.b16 %v3965
        %v4629 = vunpack.c.h.b16 %v3965
        %v4630 = vunpack.c.l.b16 %v3966
        %v4631 = vunpack.c.h.b16 %v3966
        %v4632 = vpack.c.b16 %v4254, %v4248
        %v4633 = vpack.c.b16 %v4255, %v4249
        %v4634 = vpack.c.b16 %v4256, %v4250
        %v4635 = vpack.c.b16 %v4257, %v4251
        %v4636 = vpack.c.b16 %v4258, %v4252
        %v4637 = vpack.c.b16 %v4259, %v4253
        %v4638 = vpack.c.b16 %v4266, %v4260
        %v4639 = vpack.c.b16 %v4267, %v4261
        %v4640 = vpack.c.b16 %v4268, %v4262
        %v4641 = vpack.c.b16 %v4269, %v4263
        %v4642 = vpack.c.b16 %v4270, %v4264
        %v4643 = vpack.c.b16 %v4271, %v4265
        %v4644 = vpack.c.b16 %v4278, %v4272
        %v4645 = vpack.c.b16 %v4279, %v4273
        %v4646 = vpack.c.b16 %v4280, %v4274
        %v4647 = vpack.c.b16 %v4281, %v4275
        %v4648 = vpack.c.b16 %v4282, %v4276
        %v4649 = vpack.c.b16 %v4283, %v4277
        %v4650 = vpack.c.b16 %v4290, %v4284
        %v4651 = vpack.c.b16 %v4291, %v4285
        %v4652 = vpack.c.b16 %v4292, %v4286
        %v4653 = vpack.c.b16 %v4293, %v4287
        %v4654 = vpack.c.b16 %v4294, %v4288
        %v4655 = vpack.c.b16 %v4295, %v4289
        %v4656 = vpack.c.b16 %v4302, %v4296
        %v4657 = vpack.c.b16 %v4303, %v4297
        %v4658 = vpack.c.b16 %v4304, %v4298
        %v4659 = vpack.c.b16 %v4305, %v4299
        %v4660 = vpack.c.b16 %v4306, %v4300
        %v4661 = vpack.c.b16 %v4307, %v4301
        %v4662 = vpack.c.b16 %v4314, %v4308
        %v4663 = vpack.c.b16 %v4315, %v4309
        %v4664 = vpack.c.b16 %v4316, %v4310
        %v4665 = vpack.c.b16 %v4317, %v4311
        %v4666 = vpack.c.b16 %v4318, %v4312
        %v4667 = vpack.c.b16 %v4319, %v4313
        %v4668 = vpack.c.b16 %v4326, %v4320
        %v4669 = vpack.c.b16 %v4327, %v4321
        %v4670 = vpack.c.b16 %v4328, %v4322
        %v4671 = vpack.c.b16 %v4329, %v4323
        %v4672 = vpack.c.b16 %v4330, %v4324
        %v4673 = vpack.c.b16 %v4331, %v4325
        %v4674 = vpack.c.b16 %v4338, %v4332
        %v4675 = vpack.c.b16 %v4339, %v4333
        %v4676 = vpack.c.b16 %v4340, %v4334
        %v4677 = vpack.c.b16 %v4341, %v4335
        %v4678 = vpack.c.b16 %v4342, %v4336
        %v4679 = vpack.c.b16 %v4343, %v4337
        %v4680 = vpack.c.b16 %v4350, %v4344
        %v4681 = vpack.c.b16 %v4351, %v4345
        %v4682 = vpack.c.b16 %v4352, %v4346
        %v4683 = vpack.c.b16 %v4353, %v4347
        %v4684 = vpack.c.b16 %v4354, %v4348
        %v4685 = vpack.c.b16 %v4355, %v4349
        %v4686 = vpack.c.b16 %v4362, %v4356
        %v4687 = vpack.c.b16 %v4363, %v4357
        %v4688 = vpack.c.b16 %v4364, %v4358
        %v4689 = vpack.c.b16 %v4365, %v4359
        %v4690 = vpack.c.b16 %v4366, %v4360
        %v4691 = vpack.c.b16 %v4367, %v4361
        %v4692 = vpack.c.b16 %v4374, %v4368
        %v4693 = vpack.c.b16 %v4375, %v4369
        %v4694 = vpack.c.b16 %v4376, %v4370
        %v4695 = vpack.c.b16 %v4377, %v4371
        %v4696 = vpack.c.b16 %v4378, %v4372
        %v4697 = vpack.c.b16 %v4379, %v4373
        %v4698 = vpack.c.b16 %v4386, %v4380
        %v4699 = vpack.c.b16 %v4387, %v4381
        %v4700 = vpack.c.b16 %v4388, %v4382
        %v4701 = vpack.c.b16 %v4389, %v4383
        %v4702 = vpack.c.b16 %v4390, %v4384
        %v4703 = vpack.c.b16 %v4391, %v4385
        %v4704 = vpack.c.b16 %v4398, %v4392
        %v4705 = vpack.c.b16 %v4399, %v4393
        %v4706 = vpack.c.b16 %v4400, %v4394
        %v4707 = vpack.c.b16 %v4401, %v4395
        %v4708 = vpack.c.b16 %v4402, %v4396
        %v4709 = vpack.c.b16 %v4403, %v4397
        %v4710 = vpack.c.b16 %v4410, %v4404
        %v4711 = vpack.c.b16 %v4411, %v4405
        %v4712 = vpack.c.b16 %v4412, %v4406
        %v4713 = vpack.c.b16 %v4413, %v4407
        %v4714 = vpack.c.b16 %v4414, %v4408
        %v4715 = vpack.c.b16 %v4415, %v4409
        %v4716 = vpack.c.b16 %v4422, %v4416
        %v4717 = vpack.c.b16 %v4423, %v4417
        %v4718 = vpack.c.b16 %v4424, %v4418
        %v4719 = vpack.c.b16 %v4425, %v4419
        %v4720 = vpack.c.b16 %v4426, %v4420
        %v4721 = vpack.c.b16 %v4427, %v4421
        %v4722 = vpack.c.b16 %v4434, %v4428
        %v4723 = vpack.c.b16 %v4435, %v4429
        %v4724 = vpack.c.b16 %v4436, %v4430
        %v4725 = vpack.c.b16 %v4437, %v4431
        %v4726 = vpack.c.b16 %v4438, %v4432
        %v4727 = vpack.c.b16 %v4439, %v4433
        %v4728 = vpack.c.b16 %v4446, %v4440
        %v4729 = vpack.c.b16 %v4447, %v4441
        %v4730 = vpack.c.b16 %v4448, %v4442
        %v4731 = vpack.c.b16 %v4449, %v4443
        %v4732 = vpack.c.b16 %v4450, %v4444
        %v4733 = vpack.c.b16 %v4451, %v4445
        %v4734 = vpack.c.b16 %v4458, %v4452
        %v4735 = vpack.c.b16 %v4459, %v4453
        %v4736 = vpack.c.b16 %v4460, %v4454
        %v4737 = vpack.c.b16 %v4461, %v4455
        %v4738 = vpack.c.b16 %v4462, %v4456
        %v4739 = vpack.c.b16 %v4463, %v4457
        %v4740 = vpack.c.b16 %v4470, %v4464
        %v4741 = vpack.c.b16 %v4471, %v4465
        %v4742 = vpack.c.b16 %v4472, %v4466
        %v4743 = vpack.c.b16 %v4473, %v4467
        %v4744 = vpack.c.b16 %v4474, %v4468
        %v4745 = vpack.c.b16 %v4475, %v4469
        %v4746 = vpack.c.b16 %v4482, %v4476
        %v4747 = vpack.c.b16 %v4483, %v4477
        %v4748 = vpack.c.b16 %v4484, %v4478
        %v4749 = vpack.c.b16 %v4485, %v4479
        %v4750 = vpack.c.b16 %v4486, %v4480
        %v4751 = vpack.c.b16 %v4487, %v4481
        %v4752 = vpack.c.b16 %v4494, %v4488
        %v4753 = vpack.c.b16 %v4495, %v4489
        %v4754 = vpack.c.b16 %v4496, %v4490
        %v4755 = vpack.c.b16 %v4497, %v4491
        %v4756 = vpack.c.b16 %v4498, %v4492
        %v4757 = vpack.c.b16 %v4499, %v4493
        %v4758 = vpack.c.b16 %v4506, %v4500
        %v4759 = vpack.c.b16 %v4507, %v4501
        %v4760 = vpack.c.b16 %v4508, %v4502
        %v4761 = vpack.c.b16 %v4509, %v4503
        %v4762 = vpack.c.b16 %v4510, %v4504
        %v4763 = vpack.c.b16 %v4511, %v4505
        %v4764 = vpack.c.b16 %v4518, %v4512
        %v4765 = vpack.c.b16 %v4519, %v4513
        %v4766 = vpack.c.b16 %v4520, %v4514
        %v4767 = vpack.c.b16 %v4521, %v4515
        %v4768 = vpack.c.b16 %v4522, %v4516
        %v4769 = vpack.c.b16 %v4523, %v4517
        %v4770 = vpack.c.b16 %v4530, %v4524
        %v4771 = vpack.c.b16 %v4531, %v4525
        %v4772 = vpack.c.b16 %v4532, %v4526
        %v4773 = vpack.c.b16 %v4533, %v4527
        %v4774 = vpack.c.b16 %v4534, %v4528
        %v4775 = vpack.c.b16 %v4535, %v4529
        %v4776 = vpack.c.b16 %v4542, %v4536
        %v4777 = vpack.c.b16 %v4543, %v4537
        %v4778 = vpack.c.b16 %v4544, %v4538
        %v4779 = vpack.c.b16 %v4545, %v4539
        %v4780 = vpack.c.b16 %v4546, %v4540
        %v4781 = vpack.c.b16 %v4547, %v4541
        %v4782 = vpack.c.b16 %v4554, %v4548
        %v4783 = vpack.c.b16 %v4555, %v4549
        %v4784 = vpack.c.b16 %v4556, %v4550
        %v4785 = vpack.c.b16 %v4557, %v4551
        %v4786 = vpack.c.b16 %v4558, %v4552
        %v4787 = vpack.c.b16 %v4559, %v4553
        %v4788 = vpack.c.b16 %v4566, %v4560
        %v4789 = vpack.c.b16 %v4567, %v4561
        %v4790 = vpack.c.b16 %v4568, %v4562
        %v4791 = vpack.c.b16 %v4569, %v4563
        %v4792 = vpack.c.b16 %v4570, %v4564
        %v4793 = vpack.c.b16 %v4571, %v4565
        %v4794 = vpack.c.b16 %v4578, %v4572
        %v4795 = vpack.c.b16 %v4579, %v4573
        %v4796 = vpack.c.b16 %v4580, %v4574
        %v4797 = vpack.c.b16 %v4581, %v4575
        %v4798 = vpack.c.b16 %v4582, %v4576
        %v4799 = vpack.c.b16 %v4583, %v4577
        %v4800 = vpack.c.b16 %v4590, %v4584
        %v4801 = vpack.c.b16 %v4591, %v4585
        %v4802 = vpack.c.b16 %v4592, %v4586
        %v4803 = vpack.c.b16 %v4593, %v4587
        %v4804 = vpack.c.b16 %v4594, %v4588
        %v4805 = vpack.c.b16 %v4595, %v4589
        %v4806 = vpack.c.b16 %v4602, %v4596
        %v4807 = vpack.c.b16 %v4603, %v4597
        %v4808 = vpack.c.b16 %v4604, %v4598
        %v4809 = vpack.c.b16 %v4605, %v4599
        %v4810 = vpack.c.b16 %v4606, %v4600
        %v4811 = vpack.c.b16 %v4607, %v4601
        %v4812 = vpack.c.b16 %v4614, %v4608
        %v4813 = vpack.c.b16 %v4615, %v4609
        %v4814 = vpack.c.b16 %v4616, %v4610
        %v4815 = vpack.c.b16 %v4617, %v4611
        %v4816 = vpack.c.b16 %v4618, %v4612
        %v4817 = vpack.c.b16 %v4619, %v4613
        %v4818 = vpack.c.b16 %v4626, %v4620
        %v4819 = vpack.c.b16 %v4627, %v4621
        %v4820 = vpack.c.b16 %v4628, %v4622
        %v4821 = vpack.c.b16 %v4629, %v4623
        %v4822 = vpack.c.b16 %v4630, %v4624
        %v4823 = vpack.c.b16 %v4631, %v4625
        %5016 = vmatprep.subr.bf16.mxu0 %v4633
        %5017 = vmatpush1.bf16.msra.mxu0 %v4632
        %5018 = vmatprep.subr.bf16.mxu0 %v4639
        %5019 = vmatpush1.bf16.msra.mxu0 %v4638
        %5020 = vmatprep.subr.bf16.mxu0 %v4645
        %5021 = vmatpush1.bf16.msra.mxu0 %v4644
        %5022 = vmatprep.subr.bf16.mxu0 %v4651
        %5023 = vmatpush1.bf16.msra.mxu0 %v4650
        %5024 = vmatprep.subr.bf16.mxu0 %v4657
        %5025 = vmatpush1.bf16.msra.mxu0 %v4656
        %5026 = vmatprep.subr.bf16.mxu0 %v4663
        %5027 = vmatpush1.bf16.msra.mxu0 %v4662
        %5028 = vmatprep.subr.bf16.mxu0 %v4669
        %5029 = vmatpush1.bf16.msra.mxu0 %v4668
        %5030 = vmatprep.subr.bf16.mxu0 %v4675
        %5031 = vmatpush1.bf16.msra.mxu0 %v4674
        %5032 = vmatprep.subr.bf16.mxu0 %v4681
        %5033 = vmatpush1.bf16.msra.mxu0 %v4680
        %5034 = vmatprep.subr.bf16.mxu0 %v4687
        %5035 = vmatpush1.bf16.msra.mxu0 %v4686
        %5036 = vmatprep.subr.bf16.mxu0 %v4693
        %5037 = vmatpush1.bf16.msra.mxu0 %v4692
        %5038 = vmatprep.subr.bf16.mxu0 %v4699
        %5039 = vmatpush1.bf16.msra.mxu0 %v4698
        %5040 = vmatprep.subr.bf16.mxu0 %v4705
        %5041 = vmatpush1.bf16.msra.mxu0 %v4704
        %5042 = vmatprep.subr.bf16.mxu0 %v4711
        %5043 = vmatpush1.bf16.msra.mxu0 %v4710
        %5044 = vmatprep.subr.bf16.mxu0 %v4717
        %5045 = vmatpush1.bf16.msra.mxu0 %v4716
        %5046 = vmatprep.subr.bf16.mxu0 %v4723
        %5047 = vmatpush1.bf16.msra.mxu0 %v4722
        %5048 = vmatprep.mubr.bf16.mxu0 %v3997
        %5049 = vmatmul.mubr.bf16.gmra.mrb[0].mxu0 %v3994
        %v5050 = vpop.f32.mrb[0].mxu0
        %v5051 = vadd.f32 0.0, %v5050
        %v5052 = vpop.f32.mrb[0].mxu0
        %v5053 = vadd.f32 0.0, %v5052
        %v5054 = vpop.f32.mrb[0].mxu0
        %v5055 = vadd.f32 0.0, %v5054
        %v5056 = vpop.f32.mrb[0].mxu0
        %v5057 = vadd.f32 0.0, %v5056
        %5058 = vmatprep.mubr.bf16.mxu0 %v4007
        %5059 = vmatmul.mubr.bf16.gmra.mrb[0].mxu0 %v4005
        %v5060 = vpop.f32.mrb[0].mxu0
        %v5061 = vadd.f32 0.0, %v5060
        %v5062 = vpop.f32.mrb[0].mxu0
        %v5063 = vadd.f32 0.0, %v5062
        %v5064 = vpop.f32.mrb[0].mxu0
        %v5065 = vadd.f32 0.0, %v5064
        %v5066 = vpop.f32.mrb[0].mxu0
        %v5067 = vadd.f32 0.0, %v5066
        %5068 = vmatprep.mubr.bf16.mxu0 %v4015
        %5069 = vmatmul.mubr.bf16.gmra.mrb[0].mxu0 %v4013
        %v5070 = vpop.f32.mrb[0].mxu0
        %v5071 = vadd.f32 0.0, %v5070
        %v5072 = vpop.f32.mrb[0].mxu0
        %v5073 = vadd.f32 0.0, %v5072
        %v5074 = vpop.f32.mrb[0].mxu0
        %v5075 = vadd.f32 0.0, %v5074
        %v5076 = vpop.f32.mrb[0].mxu0
        %v5077 = vadd.f32 0.0, %v5076
        %5078 = vmatprep.mubr.bf16.mxu0 %v4023
        %5079 = vmatmul.mubr.bf16.gmra.mrb[0].mxu0 %v4021
        %v5080 = vpop.f32.mrb[0].mxu0
        %v5081 = vadd.f32 0.0, %v5080
        %v5082 = vpop.f32.mrb[0].mxu0
        %v5083 = vadd.f32 0.0, %v5082
        %v5084 = vpop.f32.mrb[0].mxu0
        %v5085 = vadd.f32 0.0, %v5084
        %v5086 = vpop.f32.mrb[0].mxu0
        %v5087 = vadd.f32 0.0, %v5086
        %5088 = vmatprep.mubr.bf16.mxu0 %v4031
        %5089 = vmatmul.mubr.bf16.gmra.mrb[0].mxu0 %v4029
        %v5090 = vpop.f32.mrb[0].mxu0
        %v5091 = vadd.f32 0.0, %v5090
        %v5092 = vpop.f32.mrb[0].mxu0
        %v5093 = vadd.f32 0.0, %v5092
        %v5094 = vpop.f32.mrb[0].mxu0
        %v5095 = vadd.f32 0.0, %v5094
        %v5096 = vpop.f32.mrb[0].mxu0
        %v5097 = vadd.f32 0.0, %v5096
        %5098 = vdwg.mxu0
        %5099 = vmatprep.subr.bf16.mxu0 %v4729
        %5100 = vmatpush1.bf16.msra.mxu0 %v4728
        %5101 = vmatprep.subr.bf16.mxu0 %v4735
        %5102 = vmatpush1.bf16.msra.mxu0 %v4734
        %5103 = vmatprep.subr.bf16.mxu0 %v4741
        %5104 = vmatpush1.bf16.msra.mxu0 %v4740
        %5105 = vmatprep.subr.bf16.mxu0 %v4747
        %5106 = vmatpush1.bf16.msra.mxu0 %v4746
        %5107 = vmatprep.subr.bf16.mxu0 %v4753
        %5108 = vmatpush1.bf16.msra.mxu0 %v4752
        %5109 = vmatprep.subr.bf16.mxu0 %v4759
        %5110 = vmatpush1.bf16.msra.mxu0 %v4758
        %5111 = vmatprep.subr.bf16.mxu0 %v4765
        %5112 = vmatpush1.bf16.msra.mxu0 %v4764
        %5113 = vmatprep.subr.bf16.mxu0 %v4771
        %5114 = vmatpush1.bf16.msra.mxu0 %v4770
        %5115 = vmatprep.subr.bf16.mxu0 %v4777
        %5116 = vmatpush1.bf16.msra.mxu0 %v4776
        %5117 = vmatprep.subr.bf16.mxu0 %v4783
        %5118 = vmatpush1.bf16.msra.mxu0 %v4782
        %5119 = vmatprep.subr.bf16.mxu0 %v4789
        %5120 = vmatpush1.bf16.msra.mxu0 %v4788
        %5121 = vmatprep.subr.bf16.mxu0 %v4795
        %5122 = vmatpush1.bf16.msra.mxu0 %v4794
        %5123 = vmatprep.subr.bf16.mxu0 %v4801
        %5124 = vmatpush1.bf16.msra.mxu0 %v4800
        %5125 = vmatprep.subr.bf16.mxu0 %v4807
        %5126 = vmatpush1.bf16.msra.mxu0 %v4806
        %5127 = vmatprep.subr.bf16.mxu0 %v4813
        %5128 = vmatpush1.bf16.msra.mxu0 %v4812
        %5129 = vmatprep.subr.bf16.mxu0 %v4819
        %5130 = vmatpush1.bf16.msra.mxu0 %v4818
        %5131 = vmatprep.mubr.bf16.mxu0 %v4003
        %5132 = vmatmul.mubr.bf16.gmra.mrb[0].mxu0 %v4000
        %v5133 = vpop.f32.mrb[0].mxu0
        %v5134 = vadd.f32 %v5051, %v5133
        %v5135 = vpop.f32.mrb[0].mxu0
        %v5136 = vadd.f32 %v5053, %v5135
        %v5137 = vpop.f32.mrb[0].mxu0
        %v5138 = vadd.f32 %v5055, %v5137
        %v5139 = vpop.f32.mrb[0].mxu0
        %v5140 = vadd.f32 %v5057, %v5139
        %5141 = vmatprep.mubr.bf16.mxu0 %v4011
        %5142 = vmatmul.mubr.bf16.gmra.mrb[0].mxu0 %v4009
        %v5143 = vpop.f32.mrb[0].mxu0
        %v5144 = vadd.f32 %v5061, %v5143
        %v5145 = vpop.f32.mrb[0].mxu0
        %v5146 = vadd.f32 %v5063, %v5145
        %v5147 = vpop.f32.mrb[0].mxu0
        %v5148 = vadd.f32 %v5065, %v5147
        %v5149 = vpop.f32.mrb[0].mxu0
        %v5150 = vadd.f32 %v5067, %v5149
        %5151 = vmatprep.mubr.bf16.mxu0 %v4019
        %5152 = vmatmul.mubr.bf16.gmra.mrb[0].mxu0 %v4017
        %v5153 = vpop.f32.mrb[0].mxu0
        %v5154 = vadd.f32 %v5071, %v5153
        %v5155 = vpop.f32.mrb[0].mxu0
        %v5156 = vadd.f32 %v5073, %v5155
        %v5157 = vpop.f32.mrb[0].mxu0
        %v5158 = vadd.f32 %v5075, %v5157
        %v5159 = vpop.f32.mrb[0].mxu0
        %v5160 = vadd.f32 %v5077, %v5159
        %5161 = vmatprep.mubr.bf16.mxu0 %v4027
        %5162 = vmatmul.mubr.bf16.gmra.mrb[0].mxu0 %v4025
        %v5163 = vpop.f32.mrb[0].mxu0
        %v5164 = vadd.f32 %v5081, %v5163
        %v5165 = vpop.f32.mrb[0].mxu0
        %v5166 = vadd.f32 %v5083, %v5165
        %v5167 = vpop.f32.mrb[0].mxu0
        %v5168 = vadd.f32 %v5085, %v5167
        %v5169 = vpop.f32.mrb[0].mxu0
        %v5170 = vadd.f32 %v5087, %v5169
        %5171 = vmatprep.mubr.bf16.mxu0 %v4035
        %5172 = vmatmul.mubr.bf16.gmra.mrb[0].mxu0 %v4033
        %v5173 = vpop.f32.mrb[0].mxu0
        %v5174 = vadd.f32 %v5091, %v5173
        %v5175 = vpop.f32.mrb[0].mxu0
        %v5176 = vadd.f32 %v5093, %v5175
        %v5177 = vpop.f32.mrb[0].mxu0
        %v5178 = vadd.f32 %v5095, %v5177
        %v5179 = vpop.f32.mrb[0].mxu0
        %v5180 = vadd.f32 %v5097, %v5179
        %5181 = vdwg.mxu0
        %5182 = vmatprep.subr.bf16.mxu0 %v4635
        %5183 = vmatpush1.bf16.msra.mxu0 %v4634
        %5184 = vmatprep.subr.bf16.mxu0 %v4641
        %5185 = vmatpush1.bf16.msra.mxu0 %v4640
        %5186 = vmatprep.subr.bf16.mxu0 %v4647
        %5187 = vmatpush1.bf16.msra.mxu0 %v4646
        %5188 = vmatprep.subr.bf16.mxu0 %v4653
        %5189 = vmatpush1.bf16.msra.mxu0 %v4652
        %5190 = vmatprep.subr.bf16.mxu0 %v4659
        %5191 = vmatpush1.bf16.msra.mxu0 %v4658
        %5192 = vmatprep.subr.bf16.mxu0 %v4665
        %5193 = vmatpush1.bf16.msra.mxu0 %v4664
        %5194 = vmatprep.subr.bf16.mxu0 %v4671
        %5195 = vmatpush1.bf16.msra.mxu0 %v4670
        %5196 = vmatprep.subr.bf16.mxu0 %v4677
        %5197 = vmatpush1.bf16.msra.mxu0 %v4676
        %5198 = vmatprep.subr.bf16.mxu0 %v4683
        %5199 = vmatpush1.bf16.msra.mxu0 %v4682
        %5200 = vmatprep.subr.bf16.mxu0 %v4689
        %5201 = vmatpush1.bf16.msra.mxu0 %v4688
        %5202 = vmatprep.subr.bf16.mxu0 %v4695
        %5203 = vmatpush1.bf16.msra.mxu0 %v4694
        %5204 = vmatprep.subr.bf16.mxu0 %v4701
        %5205 = vmatpush1.bf16.msra.mxu0 %v4700
        %5206 = vmatprep.subr.bf16.mxu0 %v4707
        %5207 = vmatpush1.bf16.msra.mxu0 %v4706
        %5208 = vmatprep.subr.bf16.mxu0 %v4713
        %5209 = vmatpush1.bf16.msra.mxu0 %v4712
        %5210 = vmatprep.subr.bf16.mxu0 %v4719
        %5211 = vmatpush1.bf16.msra.mxu0 %v4718
        %5212 = vmatprep.subr.bf16.mxu0 %v4725
        %5213 = vmatpush1.bf16.msra.mxu0 %v4724
        %5214 = vmatprep.mubr.bf16.mxu0 %v3997
        %5215 = vmatmul.mubr.bf16.gmra.mrb[0].mxu0 %v3994
        %v5216 = vpop.f32.mrb[0].mxu0
        %v5217 = vadd.f32 0.0, %v5216
        %v5218 = vpop.f32.mrb[0].mxu0
        %v5219 = vadd.f32 0.0, %v5218
        %v5220 = vpop.f32.mrb[0].mxu0
        %v5221 = vadd.f32 0.0, %v5220
        %v5222 = vpop.f32.mrb[0].mxu0
        %v5223 = vadd.f32 0.0, %v5222
        %5224 = vmatprep.mubr.bf16.mxu0 %v4007
        %5225 = vmatmul.mubr.bf16.gmra.mrb[0].mxu0 %v4005
        %v5226 = vpop.f32.mrb[0].mxu0
        %v5227 = vadd.f32 0.0, %v5226
        %v5228 = vpop.f32.mrb[0].mxu0
        %v5229 = vadd.f32 0.0, %v5228
        %v5230 = vpop.f32.mrb[0].mxu0
        %v5231 = vadd.f32 0.0, %v5230
        %v5232 = vpop.f32.mrb[0].mxu0
        %v5233 = vadd.f32 0.0, %v5232
        %5234 = vmatprep.mubr.bf16.mxu0 %v4015
        %5235 = vmatmul.mubr.bf16.gmra.mrb[0].mxu0 %v4013
        %v5236 = vpop.f32.mrb[0].mxu0
        %v5237 = vadd.f32 0.0, %v5236
        %v5238 = vpop.f32.mrb[0].mxu0
        %v5239 = vadd.f32 0.0, %v5238
        %v5240 = vpop.f32.mrb[0].mxu0
        %v5241 = vadd.f32 0.0, %v5240
        %v5242 = vpop.f32.mrb[0].mxu0
        %v5243 = vadd.f32 0.0, %v5242
        %5244 = vmatprep.mubr.bf16.mxu0 %v4023
        %5245 = vmatmul.mubr.bf16.gmra.mrb[0].mxu0 %v4021
        %v5246 = vpop.f32.mrb[0].mxu0
        %v5247 = vadd.f32 0.0, %v5246
        %v5248 = vpop.f32.mrb[0].mxu0
        %v5249 = vadd.f32 0.0, %v5248
        %v5250 = vpop.f32.mrb[0].mxu0
        %v5251 = vadd.f32 0.0, %v5250
        %v5252 = vpop.f32.mrb[0].mxu0
        %v5253 = vadd.f32 0.0, %v5252
        %5254 = vmatprep.mubr.bf16.mxu0 %v4031
        %5255 = vmatmul.mubr.bf16.gmra.mrb[0].mxu0 %v4029
        %v5256 = vpop.f32.mrb[0].mxu0
        %v5257 = vadd.f32 0.0, %v5256
        %v5258 = vpop.f32.mrb[0].mxu0
        %v5259 = vadd.f32 0.0, %v5258
        %v5260 = vpop.f32.mrb[0].mxu0
        %v5261 = vadd.f32 0.0, %v5260
        %v5262 = vpop.f32.mrb[0].mxu0
        %v5263 = vadd.f32 0.0, %v5262
        %5264 = vdwg.mxu0
        %5265 = vmatprep.subr.bf16.mxu0 %v4731
        %5266 = vmatpush1.bf16.msra.mxu0 %v4730
        %5267 = vmatprep.subr.bf16.mxu0 %v4737
        %5268 = vmatpush1.bf16.msra.mxu0 %v4736
        %5269 = vmatprep.subr.bf16.mxu0 %v4743
        %5270 = vmatpush1.bf16.msra.mxu0 %v4742
        %5271 = vmatprep.subr.bf16.mxu0 %v4749
        %5272 = vmatpush1.bf16.msra.mxu0 %v4748
        %5273 = vmatprep.subr.bf16.mxu0 %v4755
        %5274 = vmatpush1.bf16.msra.mxu0 %v4754
        %5275 = vmatprep.subr.bf16.mxu0 %v4761
        %5276 = vmatpush1.bf16.msra.mxu0 %v4760
        %5277 = vmatprep.subr.bf16.mxu0 %v4767
        %5278 = vmatpush1.bf16.msra.mxu0 %v4766
        %5279 = vmatprep.subr.bf16.mxu0 %v4773
        %5280 = vmatpush1.bf16.msra.mxu0 %v4772
        %5281 = vmatprep.subr.bf16.mxu0 %v4779
        %5282 = vmatpush1.bf16.msra.mxu0 %v4778
        %5283 = vmatprep.subr.bf16.mxu0 %v4785
        %5284 = vmatpush1.bf16.msra.mxu0 %v4784
        %5285 = vmatprep.subr.bf16.mxu0 %v4791
        %5286 = vmatpush1.bf16.msra.mxu0 %v4790
        %5287 = vmatprep.subr.bf16.mxu0 %v4797
        %5288 = vmatpush1.bf16.msra.mxu0 %v4796
        %5289 = vmatprep.subr.bf16.mxu0 %v4803
        %5290 = vmatpush1.bf16.msra.mxu0 %v4802
        %5291 = vmatprep.subr.bf16.mxu0 %v4809
        %5292 = vmatpush1.bf16.msra.mxu0 %v4808
        %5293 = vmatprep.subr.bf16.mxu0 %v4815
        %5294 = vmatpush1.bf16.msra.mxu0 %v4814
        %5295 = vmatprep.subr.bf16.mxu0 %v4821
        %5296 = vmatpush1.bf16.msra.mxu0 %v4820
        %5297 = vmatprep.mubr.bf16.mxu0 %v4003
        %5298 = vmatmul.mubr.bf16.gmra.mrb[0].mxu0 %v4000
        %v5299 = vpop.f32.mrb[0].mxu0
        %v5300 = vadd.f32 %v5217, %v5299
        %v5301 = vpop.f32.mrb[0].mxu0
        %v5302 = vadd.f32 %v5219, %v5301
        %v5303 = vpop.f32.mrb[0].mxu0
        %v5304 = vadd.f32 %v5221, %v5303
        %v5305 = vpop.f32.mrb[0].mxu0
        %v5306 = vadd.f32 %v5223, %v5305
        %5307 = vmatprep.mubr.bf16.mxu0 %v4011
        %5308 = vmatmul.mubr.bf16.gmra.mrb[0].mxu0 %v4009
        %v5309 = vpop.f32.mrb[0].mxu0
        %v5310 = vadd.f32 %v5227, %v5309
        %v5311 = vpop.f32.mrb[0].mxu0
        %v5312 = vadd.f32 %v5229, %v5311
        %v5313 = vpop.f32.mrb[0].mxu0
        %v5314 = vadd.f32 %v5231, %v5313
        %v5315 = vpop.f32.mrb[0].mxu0
        %v5316 = vadd.f32 %v5233, %v5315
        %5317 = vmatprep.mubr.bf16.mxu0 %v4019
        %5318 = vmatmul.mubr.bf16.gmra.mrb[0].mxu0 %v4017
        %v5319 = vpop.f32.mrb[0].mxu0
        %v5320 = vadd.f32 %v5237, %v5319
        %v5321 = vpop.f32.mrb[0].mxu0
        %v5322 = vadd.f32 %v5239, %v5321
        %v5323 = vpop.f32.mrb[0].mxu0
        %v5324 = vadd.f32 %v5241, %v5323
        %v5325 = vpop.f32.mrb[0].mxu0
        %v5326 = vadd.f32 %v5243, %v5325
        %5327 = vmatprep.mubr.bf16.mxu0 %v4027
        %5328 = vmatmul.mubr.bf16.gmra.mrb[0].mxu0 %v4025
        %v5329 = vpop.f32.mrb[0].mxu0
        %v5330 = vadd.f32 %v5247, %v5329
        %v5331 = vpop.f32.mrb[0].mxu0
        %v5332 = vadd.f32 %v5249, %v5331
        %v5333 = vpop.f32.mrb[0].mxu0
        %v5334 = vadd.f32 %v5251, %v5333
        %v5335 = vpop.f32.mrb[0].mxu0
        %v5336 = vadd.f32 %v5253, %v5335
        %5337 = vmatprep.mubr.bf16.mxu0 %v4035
        %5338 = vmatmul.mubr.bf16.gmra.mrb[0].mxu0 %v4033
        %v5339 = vpop.f32.mrb[0].mxu0
        %v5340 = vadd.f32 %v5257, %v5339
        %v5341 = vpop.f32.mrb[0].mxu0
        %v5342 = vadd.f32 %v5259, %v5341
        %v5343 = vpop.f32.mrb[0].mxu0
        %v5344 = vadd.f32 %v5261, %v5343
        %v5345 = vpop.f32.mrb[0].mxu0
        %v5346 = vadd.f32 %v5263, %v5345
        %5347 = vdwg.mxu0
        %5348 = vmatprep.subr.bf16.mxu0 %v4637
        %5349 = vmatpush1.bf16.msra.mxu0 %v4636
        %5350 = vmatprep.subr.bf16.mxu0 %v4643
        %5351 = vmatpush1.bf16.msra.mxu0 %v4642
        %5352 = vmatprep.subr.bf16.mxu0 %v4649
        %5353 = vmatpush1.bf16.msra.mxu0 %v4648
        %5354 = vmatprep.subr.bf16.mxu0 %v4655
        %5355 = vmatpush1.bf16.msra.mxu0 %v4654
        %5356 = vmatprep.subr.bf16.mxu0 %v4661
        %5357 = vmatpush1.bf16.msra.mxu0 %v4660
        %5358 = vmatprep.subr.bf16.mxu0 %v4667
        %5359 = vmatpush1.bf16.msra.mxu0 %v4666
        %5360 = vmatprep.subr.bf16.mxu0 %v4673
        %5361 = vmatpush1.bf16.msra.mxu0 %v4672
        %5362 = vmatprep.subr.bf16.mxu0 %v4679
        %5363 = vmatpush1.bf16.msra.mxu0 %v4678
        %5364 = vmatprep.subr.bf16.mxu0 %v4685
        %5365 = vmatpush1.bf16.msra.mxu0 %v4684
        %5366 = vmatprep.subr.bf16.mxu0 %v4691
        %5367 = vmatpush1.bf16.msra.mxu0 %v4690
        %5368 = vmatprep.subr.bf16.mxu0 %v4697
        %5369 = vmatpush1.bf16.msra.mxu0 %v4696
        %5370 = vmatprep.subr.bf16.mxu0 %v4703
        %5371 = vmatpush1.bf16.msra.mxu0 %v4702
        %5372 = vmatprep.subr.bf16.mxu0 %v4709
        %5373 = vmatpush1.bf16.msra.mxu0 %v4708
        %5374 = vmatprep.subr.bf16.mxu0 %v4715
        %5375 = vmatpush1.bf16.msra.mxu0 %v4714
        %5376 = vmatprep.subr.bf16.mxu0 %v4721
        %5377 = vmatpush1.bf16.msra.mxu0 %v4720
        %5378 = vmatprep.subr.bf16.mxu0 %v4727
        %5379 = vmatpush1.bf16.msra.mxu0 %v4726
        %5380 = vmatprep.mubr.bf16.mxu0 %v3997
        %5381 = vmatmul.mubr.bf16.gmra.mrb[0].mxu0 %v3994
        %v5382 = vpop.f32.mrb[0].mxu0
        %v5383 = vadd.f32 0.0, %v5382
        %v5384 = vpop.f32.mrb[0].mxu0
        %v5385 = vadd.f32 0.0, %v5384
        %v5386 = vpop.f32.mrb[0].mxu0
        %v5387 = vadd.f32 0.0, %v5386
        %v5388 = vpop.f32.mrb[0].mxu0
        %v5389 = vadd.f32 0.0, %v5388
        %5390 = vmatprep.mubr.bf16.mxu0 %v4007
        %5391 = vmatmul.mubr.bf16.gmra.mrb[0].mxu0 %v4005
        %v5392 = vpop.f32.mrb[0].mxu0
        %v5393 = vadd.f32 0.0, %v5392
        %v5394 = vpop.f32.mrb[0].mxu0
        %v5395 = vadd.f32 0.0, %v5394
        %v5396 = vpop.f32.mrb[0].mxu0
        %v5397 = vadd.f32 0.0, %v5396
        %v5398 = vpop.f32.mrb[0].mxu0
        %v5399 = vadd.f32 0.0, %v5398
        %5400 = vmatprep.mubr.bf16.mxu0 %v4015
        %5401 = vmatmul.mubr.bf16.gmra.mrb[0].mxu0 %v4013
        %v5402 = vpop.f32.mrb[0].mxu0
        %v5403 = vadd.f32 0.0, %v5402
        %v5404 = vpop.f32.mrb[0].mxu0
        %v5405 = vadd.f32 0.0, %v5404
        %v5406 = vpop.f32.mrb[0].mxu0
        %v5407 = vadd.f32 0.0, %v5406
        %v5408 = vpop.f32.mrb[0].mxu0
        %v5409 = vadd.f32 0.0, %v5408
        %5410 = vmatprep.mubr.bf16.mxu0 %v4023
        %5411 = vmatmul.mubr.bf16.gmra.mrb[0].mxu0 %v4021
        %v5412 = vpop.f32.mrb[0].mxu0
        %v5413 = vadd.f32 0.0, %v5412
        %v5414 = vpop.f32.mrb[0].mxu0
        %v5415 = vadd.f32 0.0, %v5414
        %v5416 = vpop.f32.mrb[0].mxu0
        %v5417 = vadd.f32 0.0, %v5416
        %v5418 = vpop.f32.mrb[0].mxu0
        %v5419 = vadd.f32 0.0, %v5418
        %5420 = vmatprep.mubr.bf16.mxu0 %v4031
        %5421 = vmatmul.mubr.bf16.gmra.mrb[0].mxu0 %v4029
        %v5422 = vpop.f32.mrb[0].mxu0
        %v5423 = vadd.f32 0.0, %v5422
        %v5424 = vpop.f32.mrb[0].mxu0
        %v5425 = vadd.f32 0.0, %v5424
        %v5426 = vpop.f32.mrb[0].mxu0
        %v5427 = vadd.f32 0.0, %v5426
        %v5428 = vpop.f32.mrb[0].mxu0
        %v5429 = vadd.f32 0.0, %v5428
        %5430 = vdwg.mxu0
        %5431 = vmatprep.subr.bf16.mxu0 %v4733
        %5432 = vmatpush1.bf16.msra.mxu0 %v4732
        %5433 = vmatprep.subr.bf16.mxu0 %v4739
        %5434 = vmatpush1.bf16.msra.mxu0 %v4738
        %5435 = vmatprep.subr.bf16.mxu0 %v4745
        %5436 = vmatpush1.bf16.msra.mxu0 %v4744
        %5437 = vmatprep.subr.bf16.mxu0 %v4751
        %5438 = vmatpush1.bf16.msra.mxu0 %v4750
        %5439 = vmatprep.subr.bf16.mxu0 %v4757
        %5440 = vmatpush1.bf16.msra.mxu0 %v4756
        %5441 = vmatprep.subr.bf16.mxu0 %v4763
        %5442 = vmatpush1.bf16.msra.mxu0 %v4762
        %5443 = vmatprep.subr.bf16.mxu0 %v4769
        %5444 = vmatpush1.bf16.msra.mxu0 %v4768
        %5445 = vmatprep.subr.bf16.mxu0 %v4775
        %5446 = vmatpush1.bf16.msra.mxu0 %v4774
        %5447 = vmatprep.subr.bf16.mxu0 %v4781
        %5448 = vmatpush1.bf16.msra.mxu0 %v4780
        %5449 = vmatprep.subr.bf16.mxu0 %v4787
        %5450 = vmatpush1.bf16.msra.mxu0 %v4786
        %5451 = vmatprep.subr.bf16.mxu0 %v4793
        %5452 = vmatpush1.bf16.msra.mxu0 %v4792
        %5453 = vmatprep.subr.bf16.mxu0 %v4799
        %5454 = vmatpush1.bf16.msra.mxu0 %v4798
        %5455 = vmatprep.subr.bf16.mxu0 %v4805
        %5456 = vmatpush1.bf16.msra.mxu0 %v4804
        %5457 = vmatprep.subr.bf16.mxu0 %v4811
        %5458 = vmatpush1.bf16.msra.mxu0 %v4810
        %5459 = vmatprep.subr.bf16.mxu0 %v4817
        %5460 = vmatpush1.bf16.msra.mxu0 %v4816
        %5461 = vmatprep.subr.bf16.mxu0 %v4823
        %5462 = vmatpush1.bf16.msra.mxu0 %v4822
        %5463 = vmatprep.mubr.bf16.mxu0 %v4003
        %5464 = vmatmul.mubr.bf16.gmra.mrb[0].mxu0 %v4000
        %v5465 = vpop.f32.mrb[0].mxu0
        %v5466 = vadd.f32 %v5383, %v5465
        %v5467 = vpop.f32.mrb[0].mxu0
        %v5468 = vadd.f32 %v5385, %v5467
        %v5469 = vpop.f32.mrb[0].mxu0
        %v5470 = vadd.f32 %v5387, %v5469
        %v5471 = vpop.f32.mrb[0].mxu0
        %v5472 = vadd.f32 %v5389, %v5471
        %5473 = vmatprep.mubr.bf16.mxu0 %v4011
        %5474 = vmatmul.mubr.bf16.gmra.mrb[0].mxu0 %v4009
        %v5475 = vpop.f32.mrb[0].mxu0
        %v5476 = vadd.f32 %v5393, %v5475
        %v5477 = vpop.f32.mrb[0].mxu0
        %v5478 = vadd.f32 %v5395, %v5477
        %v5479 = vpop.f32.mrb[0].mxu0
        %v5480 = vadd.f32 %v5397, %v5479
        %v5481 = vpop.f32.mrb[0].mxu0
        %v5482 = vadd.f32 %v5399, %v5481
        %5483 = vmatprep.mubr.bf16.mxu0 %v4019
        %5484 = vmatmul.mubr.bf16.gmra.mrb[0].mxu0 %v4017
        %v5485 = vpop.f32.mrb[0].mxu0
        %v5486 = vadd.f32 %v5403, %v5485
        %v5487 = vpop.f32.mrb[0].mxu0
        %v5488 = vadd.f32 %v5405, %v5487
        %v5489 = vpop.f32.mrb[0].mxu0
        %v5490 = vadd.f32 %v5407, %v5489
        %v5491 = vpop.f32.mrb[0].mxu0
        %v5492 = vadd.f32 %v5409, %v5491
        %5493 = vmatprep.mubr.bf16.mxu0 %v4027
        %5494 = vmatmul.mubr.bf16.gmra.mrb[0].mxu0 %v4025
        %v5495 = vpop.f32.mrb[0].mxu0
        %v5496 = vadd.f32 %v5413, %v5495
        %v5497 = vpop.f32.mrb[0].mxu0
        %v5498 = vadd.f32 %v5415, %v5497
        %v5499 = vpop.f32.mrb[0].mxu0
        %v5500 = vadd.f32 %v5417, %v5499
        %v5501 = vpop.f32.mrb[0].mxu0
        %v5502 = vadd.f32 %v5419, %v5501
        %5503 = vmatprep.mubr.bf16.mxu0 %v4035
        %5504 = vmatmul.mubr.bf16.gmra.mrb[0].mxu0 %v4033
        %v5505 = vpop.f32.mrb[0].mxu0
        %v5506 = vadd.f32 %v5423, %v5505
        %v5507 = vpop.f32.mrb[0].mxu0
        %v5508 = vadd.f32 %v5425, %v5507
        %v5509 = vpop.f32.mrb[0].mxu0
        %v5510 = vadd.f32 %v5427, %v5509
        %v5511 = vpop.f32.mrb[0].mxu0
        %v5512 = vadd.f32 %v5429, %v5511
        %5513 = vdwg.mxu0
        %v5706 = vunpack.c.l.b16 %v3582
        %v5707 = vunpack.c.h.b16 %v3582
        %v5708 = vunpack.c.l.b16 %v3583
        %v5709 = vunpack.c.h.b16 %v3583
        %v5710 = vunpack.c.l.b16 %v3584
        %v5711 = vunpack.c.h.b16 %v3584
        %v5712 = vunpack.c.l.b16 %v3585
        %v5713 = vunpack.c.h.b16 %v3585
        %v5714 = vunpack.c.l.b16 %v3586
        %v5715 = vunpack.c.h.b16 %v3586
        %v5716 = vunpack.c.l.b16 %v3587
        %v5717 = vunpack.c.h.b16 %v3587
        %v5718 = vunpack.c.l.b16 %v3588
        %v5719 = vunpack.c.h.b16 %v3588
        %v5720 = vunpack.c.l.b16 %v3589
        %v5721 = vunpack.c.h.b16 %v3589
        %v5722 = vunpack.c.l.b16 %v3590
        %v5723 = vunpack.c.h.b16 %v3590
        %v5724 = vunpack.c.l.b16 %v3591
        %v5725 = vunpack.c.h.b16 %v3591
        %v5726 = vunpack.c.l.b16 %v3592
        %v5727 = vunpack.c.h.b16 %v3592
        %v5728 = vunpack.c.l.b16 %v3593
        %v5729 = vunpack.c.h.b16 %v3593
        %v5730 = vunpack.c.l.b16 %v3594
        %v5731 = vunpack.c.h.b16 %v3594
        %v5732 = vunpack.c.l.b16 %v3595
        %v5733 = vunpack.c.h.b16 %v3595
        %v5734 = vunpack.c.l.b16 %v3596
        %v5735 = vunpack.c.h.b16 %v3596
        %v5736 = vunpack.c.l.b16 %v3597
        %v5737 = vunpack.c.h.b16 %v3597
        %v5738 = vunpack.c.l.b16 %v3598
        %v5739 = vunpack.c.h.b16 %v3598
        %v5740 = vunpack.c.l.b16 %v3599
        %v5741 = vunpack.c.h.b16 %v3599
        %v5742 = vunpack.c.l.b16 %v3600
        %v5743 = vunpack.c.h.b16 %v3600
        %v5744 = vunpack.c.l.b16 %v3601
        %v5745 = vunpack.c.h.b16 %v3601
        %v5746 = vunpack.c.l.b16 %v3602
        %v5747 = vunpack.c.h.b16 %v3602
        %v5748 = vunpack.c.l.b16 %v3603
        %v5749 = vunpack.c.h.b16 %v3603
        %v5750 = vunpack.c.l.b16 %v3604
        %v5751 = vunpack.c.h.b16 %v3604
        %v5752 = vunpack.c.l.b16 %v3605
        %v5753 = vunpack.c.h.b16 %v3605
        %v5754 = vunpack.c.l.b16 %v3606
        %v5755 = vunpack.c.h.b16 %v3606
        %v5756 = vunpack.c.l.b16 %v3607
        %v5757 = vunpack.c.h.b16 %v3607
        %v5758 = vunpack.c.l.b16 %v3608
        %v5759 = vunpack.c.h.b16 %v3608
        %v5760 = vunpack.c.l.b16 %v3609
        %v5761 = vunpack.c.h.b16 %v3609
        %v5762 = vunpack.c.l.b16 %v3610
        %v5763 = vunpack.c.h.b16 %v3610
        %v5764 = vunpack.c.l.b16 %v3611
        %v5765 = vunpack.c.h.b16 %v3611
        %v5766 = vunpack.c.l.b16 %v3612
        %v5767 = vunpack.c.h.b16 %v3612
        %v5768 = vunpack.c.l.b16 %v3613
        %v5769 = vunpack.c.h.b16 %v3613
        %v5770 = vunpack.c.l.b16 %v3614
        %v5771 = vunpack.c.h.b16 %v3614
        %v5772 = vunpack.c.l.b16 %v3615
        %v5773 = vunpack.c.h.b16 %v3615
        %v5774 = vunpack.c.l.b16 %v3616
        %v5775 = vunpack.c.h.b16 %v3616
        %v5776 = vunpack.c.l.b16 %v3617
        %v5777 = vunpack.c.h.b16 %v3617
        %v5778 = vunpack.c.l.b16 %v3618
        %v5779 = vunpack.c.h.b16 %v3618
        %v5780 = vunpack.c.l.b16 %v3619
        %v5781 = vunpack.c.h.b16 %v3619
        %v5782 = vunpack.c.l.b16 %v3620
        %v5783 = vunpack.c.h.b16 %v3620
        %v5784 = vunpack.c.l.b16 %v3621
        %v5785 = vunpack.c.h.b16 %v3621
        %v5786 = vunpack.c.l.b16 %v3622
        %v5787 = vunpack.c.h.b16 %v3622
        %v5788 = vunpack.c.l.b16 %v3623
        %v5789 = vunpack.c.h.b16 %v3623
        %v5790 = vunpack.c.l.b16 %v3624
        %v5791 = vunpack.c.h.b16 %v3624
        %v5792 = vunpack.c.l.b16 %v3625
        %v5793 = vunpack.c.h.b16 %v3625
        %v5794 = vunpack.c.l.b16 %v3626
        %v5795 = vunpack.c.h.b16 %v3626
        %v5796 = vunpack.c.l.b16 %v3627
        %v5797 = vunpack.c.h.b16 %v3627
        %v5798 = vunpack.c.l.b16 %v3628
        %v5799 = vunpack.c.h.b16 %v3628
        %v5800 = vunpack.c.l.b16 %v3629
        %v5801 = vunpack.c.h.b16 %v3629
        %v5802 = vunpack.c.l.b16 %v3630
        %v5803 = vunpack.c.h.b16 %v3630
        %v5804 = vunpack.c.l.b16 %v3631
        %v5805 = vunpack.c.h.b16 %v3631
        %v5806 = vunpack.c.l.b16 %v3632
        %v5807 = vunpack.c.h.b16 %v3632
        %v5808 = vunpack.c.l.b16 %v3633
        %v5809 = vunpack.c.h.b16 %v3633
        %v5810 = vunpack.c.l.b16 %v3634
        %v5811 = vunpack.c.h.b16 %v3634
        %v5812 = vunpack.c.l.b16 %v3635
        %v5813 = vunpack.c.h.b16 %v3635
        %v5814 = vunpack.c.l.b16 %v3636
        %v5815 = vunpack.c.h.b16 %v3636
        %v5816 = vunpack.c.l.b16 %v3637
        %v5817 = vunpack.c.h.b16 %v3637
        %v5818 = vunpack.c.l.b16 %v3638
        %v5819 = vunpack.c.h.b16 %v3638
        %v5820 = vunpack.c.l.b16 %v3639
        %v5821 = vunpack.c.h.b16 %v3639
        %v5822 = vunpack.c.l.b16 %v3640
        %v5823 = vunpack.c.h.b16 %v3640
        %v5824 = vunpack.c.l.b16 %v3641
        %v5825 = vunpack.c.h.b16 %v3641
        %v5826 = vunpack.c.l.b16 %v3642
        %v5827 = vunpack.c.h.b16 %v3642
        %v5828 = vunpack.c.l.b16 %v3643
        %v5829 = vunpack.c.h.b16 %v3643
        %v5830 = vunpack.c.l.b16 %v3644
        %v5831 = vunpack.c.h.b16 %v3644
        %v5832 = vunpack.c.l.b16 %v3645
        %v5833 = vunpack.c.h.b16 %v3645
        %v5834 = vunpack.c.l.b16 %v3646
        %v5835 = vunpack.c.h.b16 %v3646
        %v5836 = vunpack.c.l.b16 %v3647
        %v5837 = vunpack.c.h.b16 %v3647
        %v5838 = vunpack.c.l.b16 %v3648
        %v5839 = vunpack.c.h.b16 %v3648
        %v5840 = vunpack.c.l.b16 %v3649
        %v5841 = vunpack.c.h.b16 %v3649
        %v5842 = vunpack.c.l.b16 %v3650
        %v5843 = vunpack.c.h.b16 %v3650
        %v5844 = vunpack.c.l.b16 %v3651
        %v5845 = vunpack.c.h.b16 %v3651
        %v5846 = vunpack.c.l.b16 %v3652
        %v5847 = vunpack.c.h.b16 %v3652
        %v5848 = vunpack.c.l.b16 %v3653
        %v5849 = vunpack.c.h.b16 %v3653
        %v5850 = vunpack.c.l.b16 %v3654
        %v5851 = vunpack.c.h.b16 %v3654
        %v5852 = vunpack.c.l.b16 %v3655
        %v5853 = vunpack.c.h.b16 %v3655
        %v5854 = vunpack.c.l.b16 %v3656
        %v5855 = vunpack.c.h.b16 %v3656
        %v5856 = vunpack.c.l.b16 %v3657
        %v5857 = vunpack.c.h.b16 %v3657
        %v5858 = vunpack.c.l.b16 %v3658
        %v5859 = vunpack.c.h.b16 %v3658
        %v5860 = vunpack.c.l.b16 %v3659
        %v5861 = vunpack.c.h.b16 %v3659
        %v5862 = vunpack.c.l.b16 %v3660
        %v5863 = vunpack.c.h.b16 %v3660
        %v5864 = vunpack.c.l.b16 %v3661
        %v5865 = vunpack.c.h.b16 %v3661
        %v5866 = vunpack.c.l.b16 %v3662
        %v5867 = vunpack.c.h.b16 %v3662
        %v5868 = vunpack.c.l.b16 %v3663
        %v5869 = vunpack.c.h.b16 %v3663
        %v5870 = vunpack.c.l.b16 %v3664
        %v5871 = vunpack.c.h.b16 %v3664
        %v5872 = vunpack.c.l.b16 %v3665
        %v5873 = vunpack.c.h.b16 %v3665
        %v5874 = vunpack.c.l.b16 %v3666
        %v5875 = vunpack.c.h.b16 %v3666
        %v5876 = vunpack.c.l.b16 %v3667
        %v5877 = vunpack.c.h.b16 %v3667
        %v5878 = vunpack.c.l.b16 %v3668
        %v5879 = vunpack.c.h.b16 %v3668
        %v5880 = vunpack.c.l.b16 %v3669
        %v5881 = vunpack.c.h.b16 %v3669
        %v5882 = vunpack.c.l.b16 %v3670
        %v5883 = vunpack.c.h.b16 %v3670
        %v5884 = vunpack.c.l.b16 %v3671
        %v5885 = vunpack.c.h.b16 %v3671
        %v5886 = vunpack.c.l.b16 %v3672
        %v5887 = vunpack.c.h.b16 %v3672
        %v5888 = vunpack.c.l.b16 %v3673
        %v5889 = vunpack.c.h.b16 %v3673
        %v5890 = vunpack.c.l.b16 %v3674
        %v5891 = vunpack.c.h.b16 %v3674
        %v5892 = vunpack.c.l.b16 %v3675
        %v5893 = vunpack.c.h.b16 %v3675
        %v5894 = vunpack.c.l.b16 %v3676
        %v5895 = vunpack.c.h.b16 %v3676
        %v5896 = vunpack.c.l.b16 %v3677
        %v5897 = vunpack.c.h.b16 %v3677
        %v5898 = vunpack.c.l.b16 %v3678
        %v5899 = vunpack.c.h.b16 %v3678
        %v5900 = vunpack.c.l.b16 %v3679
        %v5901 = vunpack.c.h.b16 %v3679
        %v5902 = vunpack.c.l.b16 %v3680
        %v5903 = vunpack.c.h.b16 %v3680
        %v5904 = vunpack.c.l.b16 %v3681
        %v5905 = vunpack.c.h.b16 %v3681
        %v5906 = vunpack.c.l.b16 %v3682
        %v5907 = vunpack.c.h.b16 %v3682
        %v5908 = vunpack.c.l.b16 %v3683
        %v5909 = vunpack.c.h.b16 %v3683
        %v5910 = vunpack.c.l.b16 %v3684
        %v5911 = vunpack.c.h.b16 %v3684
        %v5912 = vunpack.c.l.b16 %v3685
        %v5913 = vunpack.c.h.b16 %v3685
        %v5914 = vunpack.c.l.b16 %v3686
        %v5915 = vunpack.c.h.b16 %v3686
        %v5916 = vunpack.c.l.b16 %v3687
        %v5917 = vunpack.c.h.b16 %v3687
        %v5918 = vunpack.c.l.b16 %v3688
        %v5919 = vunpack.c.h.b16 %v3688
        %v5920 = vunpack.c.l.b16 %v3689
        %v5921 = vunpack.c.h.b16 %v3689
        %v5922 = vunpack.c.l.b16 %v3690
        %v5923 = vunpack.c.h.b16 %v3690
        %v5924 = vunpack.c.l.b16 %v3691
        %v5925 = vunpack.c.h.b16 %v3691
        %v5926 = vunpack.c.l.b16 %v3692
        %v5927 = vunpack.c.h.b16 %v3692
        %v5928 = vunpack.c.l.b16 %v3693
        %v5929 = vunpack.c.h.b16 %v3693
        %v5930 = vunpack.c.l.b16 %v3694
        %v5931 = vunpack.c.h.b16 %v3694
        %v5932 = vunpack.c.l.b16 %v3695
        %v5933 = vunpack.c.h.b16 %v3695
        %v5934 = vunpack.c.l.b16 %v3696
        %v5935 = vunpack.c.h.b16 %v3696
        %v5936 = vunpack.c.l.b16 %v3697
        %v5937 = vunpack.c.h.b16 %v3697
        %v5938 = vunpack.c.l.b16 %v3698
        %v5939 = vunpack.c.h.b16 %v3698
        %v5940 = vunpack.c.l.b16 %v3699
        %v5941 = vunpack.c.h.b16 %v3699
        %v5942 = vunpack.c.l.b16 %v3700
        %v5943 = vunpack.c.h.b16 %v3700
        %v5944 = vunpack.c.l.b16 %v3701
        %v5945 = vunpack.c.h.b16 %v3701
        %v5946 = vunpack.c.l.b16 %v3702
        %v5947 = vunpack.c.h.b16 %v3702
        %v5948 = vunpack.c.l.b16 %v3703
        %v5949 = vunpack.c.h.b16 %v3703
        %v5950 = vunpack.c.l.b16 %v3704
        %v5951 = vunpack.c.h.b16 %v3704
        %v5952 = vunpack.c.l.b16 %v3705
        %v5953 = vunpack.c.h.b16 %v3705
        %v5954 = vunpack.c.l.b16 %v3706
        %v5955 = vunpack.c.h.b16 %v3706
        %v5956 = vunpack.c.l.b16 %v3707
        %v5957 = vunpack.c.h.b16 %v3707
        %v5958 = vunpack.c.l.b16 %v3708
        %v5959 = vunpack.c.h.b16 %v3708
        %v5960 = vunpack.c.l.b16 %v3709
        %v5961 = vunpack.c.h.b16 %v3709
        %v5962 = vunpack.c.l.b16 %v3710
        %v5963 = vunpack.c.h.b16 %v3710
        %v5964 = vunpack.c.l.b16 %v3711
        %v5965 = vunpack.c.h.b16 %v3711
        %v5966 = vunpack.c.l.b16 %v3712
        %v5967 = vunpack.c.h.b16 %v3712
        %v5968 = vunpack.c.l.b16 %v3713
        %v5969 = vunpack.c.h.b16 %v3713
        %v5970 = vunpack.c.l.b16 %v3714
        %v5971 = vunpack.c.h.b16 %v3714
        %v5972 = vunpack.c.l.b16 %v3715
        %v5973 = vunpack.c.h.b16 %v3715
        %v5974 = vunpack.c.l.b16 %v3716
        %v5975 = vunpack.c.h.b16 %v3716
        %v5976 = vunpack.c.l.b16 %v3717
        %v5977 = vunpack.c.h.b16 %v3717
        %v5978 = vunpack.c.l.b16 %v3718
        %v5979 = vunpack.c.h.b16 %v3718
        %v5980 = vunpack.c.l.b16 %v3719
        %v5981 = vunpack.c.h.b16 %v3719
        %v5982 = vunpack.c.l.b16 %v3720
        %v5983 = vunpack.c.h.b16 %v3720
        %v5984 = vunpack.c.l.b16 %v3721
        %v5985 = vunpack.c.h.b16 %v3721
        %v5986 = vunpack.c.l.b16 %v3722
        %v5987 = vunpack.c.h.b16 %v3722
        %v5988 = vunpack.c.l.b16 %v3723
        %v5989 = vunpack.c.h.b16 %v3723
        %v5990 = vunpack.c.l.b16 %v3724
        %v5991 = vunpack.c.h.b16 %v3724
        %v5992 = vunpack.c.l.b16 %v3725
        %v5993 = vunpack.c.h.b16 %v3725
        %v5994 = vunpack.c.l.b16 %v3726
        %v5995 = vunpack.c.h.b16 %v3726
        %v5996 = vunpack.c.l.b16 %v3727
        %v5997 = vunpack.c.h.b16 %v3727
        %v5998 = vunpack.c.l.b16 %v3728
        %v5999 = vunpack.c.h.b16 %v3728
        %v6000 = vunpack.c.l.b16 %v3729
        %v6001 = vunpack.c.h.b16 %v3729
        %v6002 = vunpack.c.l.b16 %v3730
        %v6003 = vunpack.c.h.b16 %v3730
        %v6004 = vunpack.c.l.b16 %v3731
        %v6005 = vunpack.c.h.b16 %v3731
        %v6006 = vunpack.c.l.b16 %v3732
        %v6007 = vunpack.c.h.b16 %v3732
        %v6008 = vunpack.c.l.b16 %v3733
        %v6009 = vunpack.c.h.b16 %v3733
        %v6010 = vunpack.c.l.b16 %v3734
        %v6011 = vunpack.c.h.b16 %v3734
        %v6012 = vunpack.c.l.b16 %v3735
        %v6013 = vunpack.c.h.b16 %v3735
        %v6014 = vunpack.c.l.b16 %v3736
        %v6015 = vunpack.c.h.b16 %v3736
        %v6016 = vunpack.c.l.b16 %v3737
        %v6017 = vunpack.c.h.b16 %v3737
        %v6018 = vunpack.c.l.b16 %v3738
        %v6019 = vunpack.c.h.b16 %v3738
        %v6020 = vunpack.c.l.b16 %v3739
        %v6021 = vunpack.c.h.b16 %v3739
        %v6022 = vunpack.c.l.b16 %v3740
        %v6023 = vunpack.c.h.b16 %v3740
        %v6024 = vunpack.c.l.b16 %v3741
        %v6025 = vunpack.c.h.b16 %v3741
        %v6026 = vunpack.c.l.b16 %v3742
        %v6027 = vunpack.c.h.b16 %v3742
        %v6028 = vunpack.c.l.b16 %v3743
        %v6029 = vunpack.c.h.b16 %v3743
        %v6030 = vunpack.c.l.b16 %v3744
        %v6031 = vunpack.c.h.b16 %v3744
        %v6032 = vunpack.c.l.b16 %v3745
        %v6033 = vunpack.c.h.b16 %v3745
        %v6034 = vunpack.c.l.b16 %v3746
        %v6035 = vunpack.c.h.b16 %v3746
        %v6036 = vunpack.c.l.b16 %v3747
        %v6037 = vunpack.c.h.b16 %v3747
        %v6038 = vunpack.c.l.b16 %v3748
        %v6039 = vunpack.c.h.b16 %v3748
        %v6040 = vunpack.c.l.b16 %v3749
        %v6041 = vunpack.c.h.b16 %v3749
        %v6042 = vunpack.c.l.b16 %v3750
        %v6043 = vunpack.c.h.b16 %v3750
        %v6044 = vunpack.c.l.b16 %v3751
        %v6045 = vunpack.c.h.b16 %v3751
        %v6046 = vunpack.c.l.b16 %v3752
        %v6047 = vunpack.c.h.b16 %v3752
        %v6048 = vunpack.c.l.b16 %v3753
        %v6049 = vunpack.c.h.b16 %v3753
        %v6050 = vunpack.c.l.b16 %v3754
        %v6051 = vunpack.c.h.b16 %v3754
        %v6052 = vunpack.c.l.b16 %v3755
        %v6053 = vunpack.c.h.b16 %v3755
        %v6054 = vunpack.c.l.b16 %v3756
        %v6055 = vunpack.c.h.b16 %v3756
        %v6056 = vunpack.c.l.b16 %v3757
        %v6057 = vunpack.c.h.b16 %v3757
        %v6058 = vunpack.c.l.b16 %v3758
        %v6059 = vunpack.c.h.b16 %v3758
        %v6060 = vunpack.c.l.b16 %v3759
        %v6061 = vunpack.c.h.b16 %v3759
        %v6062 = vunpack.c.l.b16 %v3760
        %v6063 = vunpack.c.h.b16 %v3760
        %v6064 = vunpack.c.l.b16 %v3761
        %v6065 = vunpack.c.h.b16 %v3761
        %v6066 = vunpack.c.l.b16 %v3762
        %v6067 = vunpack.c.h.b16 %v3762
        %v6068 = vunpack.c.l.b16 %v3763
        %v6069 = vunpack.c.h.b16 %v3763
        %v6070 = vunpack.c.l.b16 %v3764
        %v6071 = vunpack.c.h.b16 %v3764
        %v6072 = vunpack.c.l.b16 %v3765
        %v6073 = vunpack.c.h.b16 %v3765
        %v6074 = vunpack.c.l.b16 %v3766
        %v6075 = vunpack.c.h.b16 %v3766
        %v6076 = vunpack.c.l.b16 %v3767
        %v6077 = vunpack.c.h.b16 %v3767
        %v6078 = vunpack.c.l.b16 %v3768
        %v6079 = vunpack.c.h.b16 %v3768
        %v6080 = vunpack.c.l.b16 %v3769
        %v6081 = vunpack.c.h.b16 %v3769
        %v6082 = vunpack.c.l.b16 %v3770
        %v6083 = vunpack.c.h.b16 %v3770
        %v6084 = vunpack.c.l.b16 %v3771
        %v6085 = vunpack.c.h.b16 %v3771
        %v6086 = vunpack.c.l.b16 %v3772
        %v6087 = vunpack.c.h.b16 %v3772
        %v6088 = vunpack.c.l.b16 %v3773
        %v6089 = vunpack.c.h.b16 %v3773
        %v6090 = vpack.c.b16 %v5712, %v5706
        %v6091 = vpack.c.b16 %v5713, %v5707
        %v6092 = vpack.c.b16 %v5714, %v5708
        %v6093 = vpack.c.b16 %v5715, %v5709
        %v6094 = vpack.c.b16 %v5716, %v5710
        %v6095 = vpack.c.b16 %v5717, %v5711
        %v6096 = vpack.c.b16 %v5724, %v5718
        %v6097 = vpack.c.b16 %v5725, %v5719
        %v6098 = vpack.c.b16 %v5726, %v5720
        %v6099 = vpack.c.b16 %v5727, %v5721
        %v6100 = vpack.c.b16 %v5728, %v5722
        %v6101 = vpack.c.b16 %v5729, %v5723
        %v6102 = vpack.c.b16 %v5736, %v5730
        %v6103 = vpack.c.b16 %v5737, %v5731
        %v6104 = vpack.c.b16 %v5738, %v5732
        %v6105 = vpack.c.b16 %v5739, %v5733
        %v6106 = vpack.c.b16 %v5740, %v5734
        %v6107 = vpack.c.b16 %v5741, %v5735
        %v6108 = vpack.c.b16 %v5748, %v5742
        %v6109 = vpack.c.b16 %v5749, %v5743
        %v6110 = vpack.c.b16 %v5750, %v5744
        %v6111 = vpack.c.b16 %v5751, %v5745
        %v6112 = vpack.c.b16 %v5752, %v5746
        %v6113 = vpack.c.b16 %v5753, %v5747
        %v6114 = vpack.c.b16 %v5760, %v5754
        %v6115 = vpack.c.b16 %v5761, %v5755
        %v6116 = vpack.c.b16 %v5762, %v5756
        %v6117 = vpack.c.b16 %v5763, %v5757
        %v6118 = vpack.c.b16 %v5764, %v5758
        %v6119 = vpack.c.b16 %v5765, %v5759
        %v6120 = vpack.c.b16 %v5772, %v5766
        %v6121 = vpack.c.b16 %v5773, %v5767
        %v6122 = vpack.c.b16 %v5774, %v5768
        %v6123 = vpack.c.b16 %v5775, %v5769
        %v6124 = vpack.c.b16 %v5776, %v5770
        %v6125 = vpack.c.b16 %v5777, %v5771
        %v6126 = vpack.c.b16 %v5784, %v5778
        %v6127 = vpack.c.b16 %v5785, %v5779
        %v6128 = vpack.c.b16 %v5786, %v5780
        %v6129 = vpack.c.b16 %v5787, %v5781
        %v6130 = vpack.c.b16 %v5788, %v5782
        %v6131 = vpack.c.b16 %v5789, %v5783
        %v6132 = vpack.c.b16 %v5796, %v5790
        %v6133 = vpack.c.b16 %v5797, %v5791
        %v6134 = vpack.c.b16 %v5798, %v5792
        %v6135 = vpack.c.b16 %v5799, %v5793
        %v6136 = vpack.c.b16 %v5800, %v5794
        %v6137 = vpack.c.b16 %v5801, %v5795
        %v6138 = vpack.c.b16 %v5808, %v5802
        %v6139 = vpack.c.b16 %v5809, %v5803
        %v6140 = vpack.c.b16 %v5810, %v5804
        %v6141 = vpack.c.b16 %v5811, %v5805
        %v6142 = vpack.c.b16 %v5812, %v5806
        %v6143 = vpack.c.b16 %v5813, %v5807
        %v6144 = vpack.c.b16 %v5820, %v5814
        %v6145 = vpack.c.b16 %v5821, %v5815
        %v6146 = vpack.c.b16 %v5822, %v5816
        %v6147 = vpack.c.b16 %v5823, %v5817
        %v6148 = vpack.c.b16 %v5824, %v5818
        %v6149 = vpack.c.b16 %v5825, %v5819
        %v6150 = vpack.c.b16 %v5832, %v5826
        %v6151 = vpack.c.b16 %v5833, %v5827
        %v6152 = vpack.c.b16 %v5834, %v5828
        %v6153 = vpack.c.b16 %v5835, %v5829
        %v6154 = vpack.c.b16 %v5836, %v5830
        %v6155 = vpack.c.b16 %v5837, %v5831
        %v6156 = vpack.c.b16 %v5844, %v5838
        %v6157 = vpack.c.b16 %v5845, %v5839
        %v6158 = vpack.c.b16 %v5846, %v5840
        %v6159 = vpack.c.b16 %v5847, %v5841
        %v6160 = vpack.c.b16 %v5848, %v5842
        %v6161 = vpack.c.b16 %v5849, %v5843
        %v6162 = vpack.c.b16 %v5856, %v5850
        %v6163 = vpack.c.b16 %v5857, %v5851
        %v6164 = vpack.c.b16 %v5858, %v5852
        %v6165 = vpack.c.b16 %v5859, %v5853
        %v6166 = vpack.c.b16 %v5860, %v5854
        %v6167 = vpack.c.b16 %v5861, %v5855
        %v6168 = vpack.c.b16 %v5868, %v5862
        %v6169 = vpack.c.b16 %v5869, %v5863
        %v6170 = vpack.c.b16 %v5870, %v5864
        %v6171 = vpack.c.b16 %v5871, %v5865
        %v6172 = vpack.c.b16 %v5872, %v5866
        %v6173 = vpack.c.b16 %v5873, %v5867
        %v6174 = vpack.c.b16 %v5880, %v5874
        %v6175 = vpack.c.b16 %v5881, %v5875
        %v6176 = vpack.c.b16 %v5882, %v5876
        %v6177 = vpack.c.b16 %v5883, %v5877
        %v6178 = vpack.c.b16 %v5884, %v5878
        %v6179 = vpack.c.b16 %v5885, %v5879
        %v6180 = vpack.c.b16 %v5892, %v5886
        %v6181 = vpack.c.b16 %v5893, %v5887
        %v6182 = vpack.c.b16 %v5894, %v5888
        %v6183 = vpack.c.b16 %v5895, %v5889
        %v6184 = vpack.c.b16 %v5896, %v5890
        %v6185 = vpack.c.b16 %v5897, %v5891
        %v6186 = vpack.c.b16 %v5904, %v5898
        %v6187 = vpack.c.b16 %v5905, %v5899
        %v6188 = vpack.c.b16 %v5906, %v5900
        %v6189 = vpack.c.b16 %v5907, %v5901
        %v6190 = vpack.c.b16 %v5908, %v5902
        %v6191 = vpack.c.b16 %v5909, %v5903
        %v6192 = vpack.c.b16 %v5916, %v5910
        %v6193 = vpack.c.b16 %v5917, %v5911
        %v6194 = vpack.c.b16 %v5918, %v5912
        %v6195 = vpack.c.b16 %v5919, %v5913
        %v6196 = vpack.c.b16 %v5920, %v5914
        %v6197 = vpack.c.b16 %v5921, %v5915
        %v6198 = vpack.c.b16 %v5928, %v5922
        %v6199 = vpack.c.b16 %v5929, %v5923
        %v6200 = vpack.c.b16 %v5930, %v5924
        %v6201 = vpack.c.b16 %v5931, %v5925
        %v6202 = vpack.c.b16 %v5932, %v5926
        %v6203 = vpack.c.b16 %v5933, %v5927
        %v6204 = vpack.c.b16 %v5940, %v5934
        %v6205 = vpack.c.b16 %v5941, %v5935
        %v6206 = vpack.c.b16 %v5942, %v5936
        %v6207 = vpack.c.b16 %v5943, %v5937
        %v6208 = vpack.c.b16 %v5944, %v5938
        %v6209 = vpack.c.b16 %v5945, %v5939
        %v6210 = vpack.c.b16 %v5952, %v5946
        %v6211 = vpack.c.b16 %v5953, %v5947
        %v6212 = vpack.c.b16 %v5954, %v5948
        %v6213 = vpack.c.b16 %v5955, %v5949
        %v6214 = vpack.c.b16 %v5956, %v5950
        %v6215 = vpack.c.b16 %v5957, %v5951
        %v6216 = vpack.c.b16 %v5964, %v5958
        %v6217 = vpack.c.b16 %v5965, %v5959
        %v6218 = vpack.c.b16 %v5966, %v5960
        %v6219 = vpack.c.b16 %v5967, %v5961
        %v6220 = vpack.c.b16 %v5968, %v5962
        %v6221 = vpack.c.b16 %v5969, %v5963
        %v6222 = vpack.c.b16 %v5976, %v5970
        %v6223 = vpack.c.b16 %v5977, %v5971
        %v6224 = vpack.c.b16 %v5978, %v5972
        %v6225 = vpack.c.b16 %v5979, %v5973
        %v6226 = vpack.c.b16 %v5980, %v5974
        %v6227 = vpack.c.b16 %v5981, %v5975
        %v6228 = vpack.c.b16 %v5988, %v5982
        %v6229 = vpack.c.b16 %v5989, %v5983
        %v6230 = vpack.c.b16 %v5990, %v5984
        %v6231 = vpack.c.b16 %v5991, %v5985
        %v6232 = vpack.c.b16 %v5992, %v5986
        %v6233 = vpack.c.b16 %v5993, %v5987
        %v6234 = vpack.c.b16 %v6000, %v5994
        %v6235 = vpack.c.b16 %v6001, %v5995
        %v6236 = vpack.c.b16 %v6002, %v5996
        %v6237 = vpack.c.b16 %v6003, %v5997
        %v6238 = vpack.c.b16 %v6004, %v5998
        %v6239 = vpack.c.b16 %v6005, %v5999
        %v6240 = vpack.c.b16 %v6012, %v6006
        %v6241 = vpack.c.b16 %v6013, %v6007
        %v6242 = vpack.c.b16 %v6014, %v6008
        %v6243 = vpack.c.b16 %v6015, %v6009
        %v6244 = vpack.c.b16 %v6016, %v6010
        %v6245 = vpack.c.b16 %v6017, %v6011
        %v6246 = vpack.c.b16 %v6024, %v6018
        %v6247 = vpack.c.b16 %v6025, %v6019
        %v6248 = vpack.c.b16 %v6026, %v6020
        %v6249 = vpack.c.b16 %v6027, %v6021
        %v6250 = vpack.c.b16 %v6028, %v6022
        %v6251 = vpack.c.b16 %v6029, %v6023
        %v6252 = vpack.c.b16 %v6036, %v6030
        %v6253 = vpack.c.b16 %v6037, %v6031
        %v6254 = vpack.c.b16 %v6038, %v6032
        %v6255 = vpack.c.b16 %v6039, %v6033
        %v6256 = vpack.c.b16 %v6040, %v6034
        %v6257 = vpack.c.b16 %v6041, %v6035
        %v6258 = vpack.c.b16 %v6048, %v6042
        %v6259 = vpack.c.b16 %v6049, %v6043
        %v6260 = vpack.c.b16 %v6050, %v6044
        %v6261 = vpack.c.b16 %v6051, %v6045
        %v6262 = vpack.c.b16 %v6052, %v6046
        %v6263 = vpack.c.b16 %v6053, %v6047
        %v6264 = vpack.c.b16 %v6060, %v6054
        %v6265 = vpack.c.b16 %v6061, %v6055
        %v6266 = vpack.c.b16 %v6062, %v6056
        %v6267 = vpack.c.b16 %v6063, %v6057
        %v6268 = vpack.c.b16 %v6064, %v6058
        %v6269 = vpack.c.b16 %v6065, %v6059
        %v6270 = vpack.c.b16 %v6072, %v6066
        %v6271 = vpack.c.b16 %v6073, %v6067
        %v6272 = vpack.c.b16 %v6074, %v6068
        %v6273 = vpack.c.b16 %v6075, %v6069
        %v6274 = vpack.c.b16 %v6076, %v6070
        %v6275 = vpack.c.b16 %v6077, %v6071
        %v6276 = vpack.c.b16 %v6084, %v6078
        %v6277 = vpack.c.b16 %v6085, %v6079
        %v6278 = vpack.c.b16 %v6086, %v6080
        %v6279 = vpack.c.b16 %v6087, %v6081
        %v6280 = vpack.c.b16 %v6088, %v6082
        %v6281 = vpack.c.b16 %v6089, %v6083
        %6474 = vmatprep.subr.bf16.mxu0 %v6091
        %6475 = vmatpush1.bf16.msra.mxu0 %v6090
        %6476 = vmatprep.subr.bf16.mxu0 %v6097
        %6477 = vmatpush1.bf16.msra.mxu0 %v6096
        %6478 = vmatprep.subr.bf16.mxu0 %v6103
        %6479 = vmatpush1.bf16.msra.mxu0 %v6102
        %6480 = vmatprep.subr.bf16.mxu0 %v6109
        %6481 = vmatpush1.bf16.msra.mxu0 %v6108
        %6482 = vmatprep.subr.bf16.mxu0 %v6115
        %6483 = vmatpush1.bf16.msra.mxu0 %v6114
        %6484 = vmatprep.subr.bf16.mxu0 %v6121
        %6485 = vmatpush1.bf16.msra.mxu0 %v6120
        %6486 = vmatprep.subr.bf16.mxu0 %v6127
        %6487 = vmatpush1.bf16.msra.mxu0 %v6126
        %6488 = vmatprep.subr.bf16.mxu0 %v6133
        %6489 = vmatpush1.bf16.msra.mxu0 %v6132
        %6490 = vmatprep.subr.bf16.mxu0 %v6139
        %6491 = vmatpush1.bf16.msra.mxu0 %v6138
        %6492 = vmatprep.subr.bf16.mxu0 %v6145
        %6493 = vmatpush1.bf16.msra.mxu0 %v6144
        %6494 = vmatprep.subr.bf16.mxu0 %v6151
        %6495 = vmatpush1.bf16.msra.mxu0 %v6150
        %6496 = vmatprep.subr.bf16.mxu0 %v6157
        %6497 = vmatpush1.bf16.msra.mxu0 %v6156
        %6498 = vmatprep.subr.bf16.mxu0 %v6163
        %6499 = vmatpush1.bf16.msra.mxu0 %v6162
        %6500 = vmatprep.subr.bf16.mxu0 %v6169
        %6501 = vmatpush1.bf16.msra.mxu0 %v6168
        %6502 = vmatprep.subr.bf16.mxu0 %v6175
        %6503 = vmatpush1.bf16.msra.mxu0 %v6174
        %6504 = vmatprep.subr.bf16.mxu0 %v6181
        %6505 = vmatpush1.bf16.msra.mxu0 %v6180
        %6506 = vmatprep.mubr.bf16.mxu0 %v3492
        %6507 = vmatmul.mubr.bf16.gmra.mrb[0].mxu0 %v3488
        %v6508 = vpop.f32.mrb[0].mxu0
        %v6509 = vadd.f32 %v5134, %v6508
        %v6510 = vpop.f32.mrb[0].mxu0
        %v6511 = vadd.f32 %v5136, %v6510
        %v6512 = vpop.f32.mrb[0].mxu0
        %v6513 = vadd.f32 %v5138, %v6512
        %v6514 = vpop.f32.mrb[0].mxu0
        %v6515 = vadd.f32 %v5140, %v6514
        %6516 = vmatprep.mubr.bf16.mxu0 %v3508
        %6517 = vmatmul.mubr.bf16.gmra.mrb[0].mxu0 %v3504
        %v6518 = vpop.f32.mrb[0].mxu0
        %v6519 = vadd.f32 %v5144, %v6518
        %v6520 = vpop.f32.mrb[0].mxu0
        %v6521 = vadd.f32 %v5146, %v6520
        %v6522 = vpop.f32.mrb[0].mxu0
        %v6523 = vadd.f32 %v5148, %v6522
        %v6524 = vpop.f32.mrb[0].mxu0
        %v6525 = vadd.f32 %v5150, %v6524
        %6526 = vmatprep.mubr.bf16.mxu0 %v3524
        %6527 = vmatmul.mubr.bf16.gmra.mrb[0].mxu0 %v3520
        %v6528 = vpop.f32.mrb[0].mxu0
        %v6529 = vadd.f32 %v5154, %v6528
        %v6530 = vpop.f32.mrb[0].mxu0
        %v6531 = vadd.f32 %v5156, %v6530
        %v6532 = vpop.f32.mrb[0].mxu0
        %v6533 = vadd.f32 %v5158, %v6532
        %v6534 = vpop.f32.mrb[0].mxu0
        %v6535 = vadd.f32 %v5160, %v6534
        %6536 = vmatprep.mubr.bf16.mxu0 %v3540
        %6537 = vmatmul.mubr.bf16.gmra.mrb[0].mxu0 %v3536
        %v6538 = vpop.f32.mrb[0].mxu0
        %v6539 = vadd.f32 %v5164, %v6538
        %v6540 = vpop.f32.mrb[0].mxu0
        %v6541 = vadd.f32 %v5166, %v6540
        %v6542 = vpop.f32.mrb[0].mxu0
        %v6543 = vadd.f32 %v5168, %v6542
        %v6544 = vpop.f32.mrb[0].mxu0
        %v6545 = vadd.f32 %v5170, %v6544
        %6546 = vmatprep.mubr.bf16.mxu0 %v3556
        %6547 = vmatmul.mubr.bf16.gmra.mrb[0].mxu0 %v3552
        %v6548 = vpop.f32.mrb[0].mxu0
        %v6549 = vadd.f32 %v5174, %v6548
        %v6550 = vpop.f32.mrb[0].mxu0
        %v6551 = vadd.f32 %v5176, %v6550
        %v6552 = vpop.f32.mrb[0].mxu0
        %v6553 = vadd.f32 %v5178, %v6552
        %v6554 = vpop.f32.mrb[0].mxu0
        %v6555 = vadd.f32 %v5180, %v6554
        %6556 = vdwg.mxu0
        %6557 = vmatprep.subr.bf16.mxu0 %v6187
        %6558 = vmatpush1.bf16.msra.mxu0 %v6186
        %6559 = vmatprep.subr.bf16.mxu0 %v6193
        %6560 = vmatpush1.bf16.msra.mxu0 %v6192
        %6561 = vmatprep.subr.bf16.mxu0 %v6199
        %6562 = vmatpush1.bf16.msra.mxu0 %v6198
        %6563 = vmatprep.subr.bf16.mxu0 %v6205
        %6564 = vmatpush1.bf16.msra.mxu0 %v6204
        %6565 = vmatprep.subr.bf16.mxu0 %v6211
        %6566 = vmatpush1.bf16.msra.mxu0 %v6210
        %6567 = vmatprep.subr.bf16.mxu0 %v6217
        %6568 = vmatpush1.bf16.msra.mxu0 %v6216
        %6569 = vmatprep.subr.bf16.mxu0 %v6223
        %6570 = vmatpush1.bf16.msra.mxu0 %v6222
        %6571 = vmatprep.subr.bf16.mxu0 %v6229
        %6572 = vmatpush1.bf16.msra.mxu0 %v6228
        %6573 = vmatprep.subr.bf16.mxu0 %v6235
        %6574 = vmatpush1.bf16.msra.mxu0 %v6234
        %6575 = vmatprep.subr.bf16.mxu0 %v6241
        %6576 = vmatpush1.bf16.msra.mxu0 %v6240
        %6577 = vmatprep.subr.bf16.mxu0 %v6247
        %6578 = vmatpush1.bf16.msra.mxu0 %v6246
        %6579 = vmatprep.subr.bf16.mxu0 %v6253
        %6580 = vmatpush1.bf16.msra.mxu0 %v6252
        %6581 = vmatprep.subr.bf16.mxu0 %v6259
        %6582 = vmatpush1.bf16.msra.mxu0 %v6258
        %6583 = vmatprep.subr.bf16.mxu0 %v6265
        %6584 = vmatpush1.bf16.msra.mxu0 %v6264
        %6585 = vmatprep.subr.bf16.mxu0 %v6271
        %6586 = vmatpush1.bf16.msra.mxu0 %v6270
        %6587 = vmatprep.subr.bf16.mxu0 %v6277
        %6588 = vmatpush1.bf16.msra.mxu0 %v6276
        %6589 = vmatprep.mubr.bf16.mxu0 %v3500
        %6590 = vmatmul.mubr.bf16.gmra.mrb[0].mxu0 %v3496
        %v6591 = vpop.f32.mrb[0].mxu0
        %v6592 = vadd.f32 %v6509, %v6591
        %v6593 = vpop.f32.mrb[0].mxu0
        %v6594 = vadd.f32 %v6511, %v6593
        %v6595 = vpop.f32.mrb[0].mxu0
        %v6596 = vadd.f32 %v6513, %v6595
        %v6597 = vpop.f32.mrb[0].mxu0
        %v6598 = vadd.f32 %v6515, %v6597
        %6599 = vmatprep.mubr.bf16.mxu0 %v3516
        %6600 = vmatmul.mubr.bf16.gmra.mrb[0].mxu0 %v3512
        %v6601 = vpop.f32.mrb[0].mxu0
        %v6602 = vadd.f32 %v6519, %v6601
        %v6603 = vpop.f32.mrb[0].mxu0
        %v6604 = vadd.f32 %v6521, %v6603
        %v6605 = vpop.f32.mrb[0].mxu0
        %v6606 = vadd.f32 %v6523, %v6605
        %v6607 = vpop.f32.mrb[0].mxu0
        %v6608 = vadd.f32 %v6525, %v6607
        %6609 = vmatprep.mubr.bf16.mxu0 %v3532
        %6610 = vmatmul.mubr.bf16.gmra.mrb[0].mxu0 %v3528
        %v6611 = vpop.f32.mrb[0].mxu0
        %v6612 = vadd.f32 %v6529, %v6611
        %v6613 = vpop.f32.mrb[0].mxu0
        %v6614 = vadd.f32 %v6531, %v6613
        %v6615 = vpop.f32.mrb[0].mxu0
        %v6616 = vadd.f32 %v6533, %v6615
        %v6617 = vpop.f32.mrb[0].mxu0
        %v6618 = vadd.f32 %v6535, %v6617
        %6619 = vmatprep.mubr.bf16.mxu0 %v3548
        %6620 = vmatmul.mubr.bf16.gmra.mrb[0].mxu0 %v3544
        %v6621 = vpop.f32.mrb[0].mxu0
        %v6622 = vadd.f32 %v6539, %v6621
        %v6623 = vpop.f32.mrb[0].mxu0
        %v6624 = vadd.f32 %v6541, %v6623
        %v6625 = vpop.f32.mrb[0].mxu0
        %v6626 = vadd.f32 %v6543, %v6625
        %v6627 = vpop.f32.mrb[0].mxu0
        %v6628 = vadd.f32 %v6545, %v6627
        %6629 = vmatprep.mubr.bf16.mxu0 %v3564
        %6630 = vmatmul.mubr.bf16.gmra.mrb[0].mxu0 %v3560
        %v6631 = vpop.f32.mrb[0].mxu0
        %v6632 = vadd.f32 %v6549, %v6631
        %v6633 = vpop.f32.mrb[0].mxu0
        %v6634 = vadd.f32 %v6551, %v6633
        %v6635 = vpop.f32.mrb[0].mxu0
        %v6636 = vadd.f32 %v6553, %v6635
        %v6637 = vpop.f32.mrb[0].mxu0
        %v6638 = vadd.f32 %v6555, %v6637
        %6639 = vdwg.mxu0
        %6640 = vmatprep.subr.bf16.mxu0 %v6093
        %6641 = vmatpush1.bf16.msra.mxu0 %v6092
        %6642 = vmatprep.subr.bf16.mxu0 %v6099
        %6643 = vmatpush1.bf16.msra.mxu0 %v6098
        %6644 = vmatprep.subr.bf16.mxu0 %v6105
        %6645 = vmatpush1.bf16.msra.mxu0 %v6104
        %6646 = vmatprep.subr.bf16.mxu0 %v6111
        %6647 = vmatpush1.bf16.msra.mxu0 %v6110
        %6648 = vmatprep.subr.bf16.mxu0 %v6117
        %6649 = vmatpush1.bf16.msra.mxu0 %v6116
        %6650 = vmatprep.subr.bf16.mxu0 %v6123
        %6651 = vmatpush1.bf16.msra.mxu0 %v6122
        %6652 = vmatprep.subr.bf16.mxu0 %v6129
        %6653 = vmatpush1.bf16.msra.mxu0 %v6128
        %6654 = vmatprep.subr.bf16.mxu0 %v6135
        %6655 = vmatpush1.bf16.msra.mxu0 %v6134
        %6656 = vmatprep.subr.bf16.mxu0 %v6141
        %6657 = vmatpush1.bf16.msra.mxu0 %v6140
        %6658 = vmatprep.subr.bf16.mxu0 %v6147
        %6659 = vmatpush1.bf16.msra.mxu0 %v6146
        %6660 = vmatprep.subr.bf16.mxu0 %v6153
        %6661 = vmatpush1.bf16.msra.mxu0 %v6152
        %6662 = vmatprep.subr.bf16.mxu0 %v6159
        %6663 = vmatpush1.bf16.msra.mxu0 %v6158
        %6664 = vmatprep.subr.bf16.mxu0 %v6165
        %6665 = vmatpush1.bf16.msra.mxu0 %v6164
        %6666 = vmatprep.subr.bf16.mxu0 %v6171
        %6667 = vmatpush1.bf16.msra.mxu0 %v6170
        %6668 = vmatprep.subr.bf16.mxu0 %v6177
        %6669 = vmatpush1.bf16.msra.mxu0 %v6176
        %6670 = vmatprep.subr.bf16.mxu0 %v6183
        %6671 = vmatpush1.bf16.msra.mxu0 %v6182
        %6672 = vmatprep.mubr.bf16.mxu0 %v3492
        %6673 = vmatmul.mubr.bf16.gmra.mrb[0].mxu0 %v3488
        %v6674 = vpop.f32.mrb[0].mxu0
        %v6675 = vadd.f32 %v5300, %v6674
        %v6676 = vpop.f32.mrb[0].mxu0
        %v6677 = vadd.f32 %v5302, %v6676
        %v6678 = vpop.f32.mrb[0].mxu0
        %v6679 = vadd.f32 %v5304, %v6678
        %v6680 = vpop.f32.mrb[0].mxu0
        %v6681 = vadd.f32 %v5306, %v6680
        %6682 = vmatprep.mubr.bf16.mxu0 %v3508
        %6683 = vmatmul.mubr.bf16.gmra.mrb[0].mxu0 %v3504
        %v6684 = vpop.f32.mrb[0].mxu0
        %v6685 = vadd.f32 %v5310, %v6684
        %v6686 = vpop.f32.mrb[0].mxu0
        %v6687 = vadd.f32 %v5312, %v6686
        %v6688 = vpop.f32.mrb[0].mxu0
        %v6689 = vadd.f32 %v5314, %v6688
        %v6690 = vpop.f32.mrb[0].mxu0
        %v6691 = vadd.f32 %v5316, %v6690
        %6692 = vmatprep.mubr.bf16.mxu0 %v3524
        %6693 = vmatmul.mubr.bf16.gmra.mrb[0].mxu0 %v3520
        %v6694 = vpop.f32.mrb[0].mxu0
        %v6695 = vadd.f32 %v5320, %v6694
        %v6696 = vpop.f32.mrb[0].mxu0
        %v6697 = vadd.f32 %v5322, %v6696
        %v6698 = vpop.f32.mrb[0].mxu0
        %v6699 = vadd.f32 %v5324, %v6698
        %v6700 = vpop.f32.mrb[0].mxu0
        %v6701 = vadd.f32 %v5326, %v6700
        %6702 = vmatprep.mubr.bf16.mxu0 %v3540
        %6703 = vmatmul.mubr.bf16.gmra.mrb[0].mxu0 %v3536
        %v6704 = vpop.f32.mrb[0].mxu0
        %v6705 = vadd.f32 %v5330, %v6704
        %v6706 = vpop.f32.mrb[0].mxu0
        %v6707 = vadd.f32 %v5332, %v6706
        %v6708 = vpop.f32.mrb[0].mxu0
        %v6709 = vadd.f32 %v5334, %v6708
        %v6710 = vpop.f32.mrb[0].mxu0
        %v6711 = vadd.f32 %v5336, %v6710
        %6712 = vmatprep.mubr.bf16.mxu0 %v3556
        %6713 = vmatmul.mubr.bf16.gmra.mrb[0].mxu0 %v3552
        %v6714 = vpop.f32.mrb[0].mxu0
        %v6715 = vadd.f32 %v5340, %v6714
        %v6716 = vpop.f32.mrb[0].mxu0
        %v6717 = vadd.f32 %v5342, %v6716
        %v6718 = vpop.f32.mrb[0].mxu0
        %v6719 = vadd.f32 %v5344, %v6718
        %v6720 = vpop.f32.mrb[0].mxu0
        %v6721 = vadd.f32 %v5346, %v6720
        %6722 = vdwg.mxu0
        %6723 = vmatprep.subr.bf16.mxu0 %v6189
        %6724 = vmatpush1.bf16.msra.mxu0 %v6188
        %6725 = vmatprep.subr.bf16.mxu0 %v6195
        %6726 = vmatpush1.bf16.msra.mxu0 %v6194
        %6727 = vmatprep.subr.bf16.mxu0 %v6201
        %6728 = vmatpush1.bf16.msra.mxu0 %v6200
        %6729 = vmatprep.subr.bf16.mxu0 %v6207
        %6730 = vmatpush1.bf16.msra.mxu0 %v6206
        %6731 = vmatprep.subr.bf16.mxu0 %v6213
        %6732 = vmatpush1.bf16.msra.mxu0 %v6212
        %6733 = vmatprep.subr.bf16.mxu0 %v6219
        %6734 = vmatpush1.bf16.msra.mxu0 %v6218
        %6735 = vmatprep.subr.bf16.mxu0 %v6225
        %6736 = vmatpush1.bf16.msra.mxu0 %v6224
        %6737 = vmatprep.subr.bf16.mxu0 %v6231
        %6738 = vmatpush1.bf16.msra.mxu0 %v6230
        %6739 = vmatprep.subr.bf16.mxu0 %v6237
        %6740 = vmatpush1.bf16.msra.mxu0 %v6236
        %6741 = vmatprep.subr.bf16.mxu0 %v6243
        %6742 = vmatpush1.bf16.msra.mxu0 %v6242
        %6743 = vmatprep.subr.bf16.mxu0 %v6249
        %6744 = vmatpush1.bf16.msra.mxu0 %v6248
        %6745 = vmatprep.subr.bf16.mxu0 %v6255
        %6746 = vmatpush1.bf16.msra.mxu0 %v6254
        %6747 = vmatprep.subr.bf16.mxu0 %v6261
        %6748 = vmatpush1.bf16.msra.mxu0 %v6260
        %6749 = vmatprep.subr.bf16.mxu0 %v6267
        %6750 = vmatpush1.bf16.msra.mxu0 %v6266
        %6751 = vmatprep.subr.bf16.mxu0 %v6273
        %6752 = vmatpush1.bf16.msra.mxu0 %v6272
        %6753 = vmatprep.subr.bf16.mxu0 %v6279
        %6754 = vmatpush1.bf16.msra.mxu0 %v6278
        %6755 = vmatprep.mubr.bf16.mxu0 %v3500
        %6756 = vmatmul.mubr.bf16.gmra.mrb[0].mxu0 %v3496
        %v6757 = vpop.f32.mrb[0].mxu0
        %v6758 = vadd.f32 %v6675, %v6757
        %v6759 = vpop.f32.mrb[0].mxu0
        %v6760 = vadd.f32 %v6677, %v6759
        %v6761 = vpop.f32.mrb[0].mxu0
        %v6762 = vadd.f32 %v6679, %v6761
        %v6763 = vpop.f32.mrb[0].mxu0
        %v6764 = vadd.f32 %v6681, %v6763
        %6765 = vmatprep.mubr.bf16.mxu0 %v3516
        %6766 = vmatmul.mubr.bf16.gmra.mrb[0].mxu0 %v3512
        %v6767 = vpop.f32.mrb[0].mxu0
        %v6768 = vadd.f32 %v6685, %v6767
        %v6769 = vpop.f32.mrb[0].mxu0
        %v6770 = vadd.f32 %v6687, %v6769
        %v6771 = vpop.f32.mrb[0].mxu0
        %v6772 = vadd.f32 %v6689, %v6771
        %v6773 = vpop.f32.mrb[0].mxu0
        %v6774 = vadd.f32 %v6691, %v6773
        %6775 = vmatprep.mubr.bf16.mxu0 %v3532
        %6776 = vmatmul.mubr.bf16.gmra.mrb[0].mxu0 %v3528
        %v6777 = vpop.f32.mrb[0].mxu0
        %v6778 = vadd.f32 %v6695, %v6777
        %v6779 = vpop.f32.mrb[0].mxu0
        %v6780 = vadd.f32 %v6697, %v6779
        %v6781 = vpop.f32.mrb[0].mxu0
        %v6782 = vadd.f32 %v6699, %v6781
        %v6783 = vpop.f32.mrb[0].mxu0
        %v6784 = vadd.f32 %v6701, %v6783
        %6785 = vmatprep.mubr.bf16.mxu0 %v3548
        %6786 = vmatmul.mubr.bf16.gmra.mrb[0].mxu0 %v3544
        %v6787 = vpop.f32.mrb[0].mxu0
        %v6788 = vadd.f32 %v6705, %v6787
        %v6789 = vpop.f32.mrb[0].mxu0
        %v6790 = vadd.f32 %v6707, %v6789
        %v6791 = vpop.f32.mrb[0].mxu0
        %v6792 = vadd.f32 %v6709, %v6791
        %v6793 = vpop.f32.mrb[0].mxu0
        %v6794 = vadd.f32 %v6711, %v6793
        %6795 = vmatprep.mubr.bf16.mxu0 %v3564
        %6796 = vmatmul.mubr.bf16.gmra.mrb[0].mxu0 %v3560
        %v6797 = vpop.f32.mrb[0].mxu0
        %v6798 = vadd.f32 %v6715, %v6797
        %v6799 = vpop.f32.mrb[0].mxu0
        %v6800 = vadd.f32 %v6717, %v6799
        %v6801 = vpop.f32.mrb[0].mxu0
        %v6802 = vadd.f32 %v6719, %v6801
        %v6803 = vpop.f32.mrb[0].mxu0
        %v6804 = vadd.f32 %v6721, %v6803
        %6805 = vdwg.mxu0
        %6806 = vmatprep.subr.bf16.mxu0 %v6095
        %6807 = vmatpush1.bf16.msra.mxu0 %v6094
        %6808 = vmatprep.subr.bf16.mxu0 %v6101
        %6809 = vmatpush1.bf16.msra.mxu0 %v6100
        %6810 = vmatprep.subr.bf16.mxu0 %v6107
        %6811 = vmatpush1.bf16.msra.mxu0 %v6106
        %6812 = vmatprep.subr.bf16.mxu0 %v6113
        %6813 = vmatpush1.bf16.msra.mxu0 %v6112
        %6814 = vmatprep.subr.bf16.mxu0 %v6119
        %6815 = vmatpush1.bf16.msra.mxu0 %v6118
        %6816 = vmatprep.subr.bf16.mxu0 %v6125
        %6817 = vmatpush1.bf16.msra.mxu0 %v6124
        %6818 = vmatprep.subr.bf16.mxu0 %v6131
        %6819 = vmatpush1.bf16.msra.mxu0 %v6130
        %6820 = vmatprep.subr.bf16.mxu0 %v6137
        %6821 = vmatpush1.bf16.msra.mxu0 %v6136
        %6822 = vmatprep.subr.bf16.mxu0 %v6143
        %6823 = vmatpush1.bf16.msra.mxu0 %v6142
        %6824 = vmatprep.subr.bf16.mxu0 %v6149
        %6825 = vmatpush1.bf16.msra.mxu0 %v6148
        %6826 = vmatprep.subr.bf16.mxu0 %v6155
        %6827 = vmatpush1.bf16.msra.mxu0 %v6154
        %6828 = vmatprep.subr.bf16.mxu0 %v6161
        %6829 = vmatpush1.bf16.msra.mxu0 %v6160
        %6830 = vmatprep.subr.bf16.mxu0 %v6167
        %6831 = vmatpush1.bf16.msra.mxu0 %v6166
        %6832 = vmatprep.subr.bf16.mxu0 %v6173
        %6833 = vmatpush1.bf16.msra.mxu0 %v6172
        %6834 = vmatprep.subr.bf16.mxu0 %v6179
        %6835 = vmatpush1.bf16.msra.mxu0 %v6178
        %6836 = vmatprep.subr.bf16.mxu0 %v6185
        %6837 = vmatpush1.bf16.msra.mxu0 %v6184
        %6838 = vmatprep.mubr.bf16.mxu0 %v3492
        %6839 = vmatmul.mubr.bf16.gmra.mrb[0].mxu0 %v3488
        %v6840 = vpop.f32.mrb[0].mxu0
        %v6841 = vadd.f32 %v5466, %v6840
        %v6842 = vpop.f32.mrb[0].mxu0
        %v6843 = vadd.f32 %v5468, %v6842
        %v6844 = vpop.f32.mrb[0].mxu0
        %v6845 = vadd.f32 %v5470, %v6844
        %v6846 = vpop.f32.mrb[0].mxu0
        %v6847 = vadd.f32 %v5472, %v6846
        %6848 = vmatprep.mubr.bf16.mxu0 %v3508
        %6849 = vmatmul.mubr.bf16.gmra.mrb[0].mxu0 %v3504
        %v6850 = vpop.f32.mrb[0].mxu0
        %v6851 = vadd.f32 %v5476, %v6850
        %v6852 = vpop.f32.mrb[0].mxu0
        %v6853 = vadd.f32 %v5478, %v6852
        %v6854 = vpop.f32.mrb[0].mxu0
        %v6855 = vadd.f32 %v5480, %v6854
        %v6856 = vpop.f32.mrb[0].mxu0
        %v6857 = vadd.f32 %v5482, %v6856
        %6858 = vmatprep.mubr.bf16.mxu0 %v3524
        %6859 = vmatmul.mubr.bf16.gmra.mrb[0].mxu0 %v3520
        %v6860 = vpop.f32.mrb[0].mxu0
        %v6861 = vadd.f32 %v5486, %v6860
        %v6862 = vpop.f32.mrb[0].mxu0
        %v6863 = vadd.f32 %v5488, %v6862
        %v6864 = vpop.f32.mrb[0].mxu0
        %v6865 = vadd.f32 %v5490, %v6864
        %v6866 = vpop.f32.mrb[0].mxu0
        %v6867 = vadd.f32 %v5492, %v6866
        %6868 = vmatprep.mubr.bf16.mxu0 %v3540
        %6869 = vmatmul.mubr.bf16.gmra.mrb[0].mxu0 %v3536
        %v6870 = vpop.f32.mrb[0].mxu0
        %v6871 = vadd.f32 %v5496, %v6870
        %v6872 = vpop.f32.mrb[0].mxu0
        %v6873 = vadd.f32 %v5498, %v6872
        %v6874 = vpop.f32.mrb[0].mxu0
        %v6875 = vadd.f32 %v5500, %v6874
        %v6876 = vpop.f32.mrb[0].mxu0
        %v6877 = vadd.f32 %v5502, %v6876
        %6878 = vmatprep.mubr.bf16.mxu0 %v3556
        %6879 = vmatmul.mubr.bf16.gmra.mrb[0].mxu0 %v3552
        %v6880 = vpop.f32.mrb[0].mxu0
        %v6881 = vadd.f32 %v5506, %v6880
        %v6882 = vpop.f32.mrb[0].mxu0
        %v6883 = vadd.f32 %v5508, %v6882
        %v6884 = vpop.f32.mrb[0].mxu0
        %v6885 = vadd.f32 %v5510, %v6884
        %v6886 = vpop.f32.mrb[0].mxu0
        %v6887 = vadd.f32 %v5512, %v6886
        %6888 = vdwg.mxu0
        %6889 = vmatprep.subr.bf16.mxu0 %v6191
        %6890 = vmatpush1.bf16.msra.mxu0 %v6190
        %6891 = vmatprep.subr.bf16.mxu0 %v6197
        %6892 = vmatpush1.bf16.msra.mxu0 %v6196
        %6893 = vmatprep.subr.bf16.mxu0 %v6203
        %6894 = vmatpush1.bf16.msra.mxu0 %v6202
        %6895 = vmatprep.subr.bf16.mxu0 %v6209
        %6896 = vmatpush1.bf16.msra.mxu0 %v6208
        %6897 = vmatprep.subr.bf16.mxu0 %v6215
        %6898 = vmatpush1.bf16.msra.mxu0 %v6214
        %6899 = vmatprep.subr.bf16.mxu0 %v6221
        %6900 = vmatpush1.bf16.msra.mxu0 %v6220
        %6901 = vmatprep.subr.bf16.mxu0 %v6227
        %6902 = vmatpush1.bf16.msra.mxu0 %v6226
        %6903 = vmatprep.subr.bf16.mxu0 %v6233
        %6904 = vmatpush1.bf16.msra.mxu0 %v6232
        %6905 = vmatprep.subr.bf16.mxu0 %v6239
        %6906 = vmatpush1.bf16.msra.mxu0 %v6238
        %6907 = vmatprep.subr.bf16.mxu0 %v6245
        %6908 = vmatpush1.bf16.msra.mxu0 %v6244
        %6909 = vmatprep.subr.bf16.mxu0 %v6251
        %6910 = vmatpush1.bf16.msra.mxu0 %v6250
        %6911 = vmatprep.subr.bf16.mxu0 %v6257
        %6912 = vmatpush1.bf16.msra.mxu0 %v6256
        %6913 = vmatprep.subr.bf16.mxu0 %v6263
        %6914 = vmatpush1.bf16.msra.mxu0 %v6262
        %6915 = vmatprep.subr.bf16.mxu0 %v6269
        %6916 = vmatpush1.bf16.msra.mxu0 %v6268
        %6917 = vmatprep.subr.bf16.mxu0 %v6275
        %6918 = vmatpush1.bf16.msra.mxu0 %v6274
        %6919 = vmatprep.subr.bf16.mxu0 %v6281
        %6920 = vmatpush1.bf16.msra.mxu0 %v6280
        %6921 = vmatprep.mubr.bf16.mxu0 %v3500
        %6922 = vmatmul.mubr.bf16.gmra.mrb[0].mxu0 %v3496
        %v6923 = vpop.f32.mrb[0].mxu0
        %v6924 = vadd.f32 %v6841, %v6923
        %v6925 = vpop.f32.mrb[0].mxu0
        %v6926 = vadd.f32 %v6843, %v6925
        %v6927 = vpop.f32.mrb[0].mxu0
        %v6928 = vadd.f32 %v6845, %v6927
        %v6929 = vpop.f32.mrb[0].mxu0
        %v6930 = vadd.f32 %v6847, %v6929
        %6931 = vmatprep.mubr.bf16.mxu0 %v3516
        %6932 = vmatmul.mubr.bf16.gmra.mrb[0].mxu0 %v3512
        %v6933 = vpop.f32.mrb[0].mxu0
        %v6934 = vadd.f32 %v6851, %v6933
        %v6935 = vpop.f32.mrb[0].mxu0
        %v6936 = vadd.f32 %v6853, %v6935
        %v6937 = vpop.f32.mrb[0].mxu0
        %v6938 = vadd.f32 %v6855, %v6937
        %v6939 = vpop.f32.mrb[0].mxu0
        %v6940 = vadd.f32 %v6857, %v6939
        %6941 = vmatprep.mubr.bf16.mxu0 %v3532
        %6942 = vmatmul.mubr.bf16.gmra.mrb[0].mxu0 %v3528
        %v6943 = vpop.f32.mrb[0].mxu0
        %v6944 = vadd.f32 %v6861, %v6943
        %v6945 = vpop.f32.mrb[0].mxu0
        %v6946 = vadd.f32 %v6863, %v6945
        %v6947 = vpop.f32.mrb[0].mxu0
        %v6948 = vadd.f32 %v6865, %v6947
        %v6949 = vpop.f32.mrb[0].mxu0
        %v6950 = vadd.f32 %v6867, %v6949
        %6951 = vmatprep.mubr.bf16.mxu0 %v3548
        %6952 = vmatmul.mubr.bf16.gmra.mrb[0].mxu0 %v3544
        %v6953 = vpop.f32.mrb[0].mxu0
        %v6954 = vadd.f32 %v6871, %v6953
        %v6955 = vpop.f32.mrb[0].mxu0
        %v6956 = vadd.f32 %v6873, %v6955
        %v6957 = vpop.f32.mrb[0].mxu0
        %v6958 = vadd.f32 %v6875, %v6957
        %v6959 = vpop.f32.mrb[0].mxu0
        %v6960 = vadd.f32 %v6877, %v6959
        %6961 = vmatprep.mubr.bf16.mxu0 %v3564
        %6962 = vmatmul.mubr.bf16.gmra.mrb[0].mxu0 %v3560
        %v6963 = vpop.f32.mrb[0].mxu0
        %v6964 = vadd.f32 %v6881, %v6963
        %v6965 = vpop.f32.mrb[0].mxu0
        %v6966 = vadd.f32 %v6883, %v6965
        %v6967 = vpop.f32.mrb[0].mxu0
        %v6968 = vadd.f32 %v6885, %v6967
        %v6969 = vpop.f32.mrb[0].mxu0
        %v6970 = vadd.f32 %v6887, %v6969
        %6971 = vdwg.mxu0
        %s6972 = scalar_lea.vmem [#allocation7], 3072
        %v6973 = vld [vmem:[%s6972] sm:$0xff]
        %v6974 = vld [vmem:[%s6972 + $0x8] sm:$0xff]
        %v6975 = vld [vmem:[%s6972 + $0x10] sm:$0xff]
        %v6976 = vld [vmem:[%s6972 + $0x18] sm:$0xff]
        %v6977 = vld [vmem:[%s6972 + $0x20] sm:$0xff]
        %v6978 = vld [vmem:[%s6972 + $0x28] sm:$0xff]
        %v6979 = vld [vmem:[%s6972 + $0x30] sm:$0xff]
        %v6980 = vld [vmem:[%s6972 + $0x38] sm:$0xff]
        %v6981 = vld [vmem:[%s6972 + $0x40] sm:$0xff]
        %v6982 = vld [vmem:[%s6972 + $0x48] sm:$0xff]
        %v6983 = vld [vmem:[%s6972 + $0x50] sm:$0xff]
        %v6984 = vld [vmem:[%s6972 + $0x58] sm:$0xff]
        %v6985 = vld [vmem:[%s6972 + $0x60] sm:$0xff]
        %v6986 = vld [vmem:[%s6972 + $0x68] sm:$0xff]
        %v6987 = vld [vmem:[%s6972 + $0x70] sm:$0xff]
        %v6988 = vld [vmem:[%s6972 + $0x78] sm:$0xff]
        %v6989 = vld [vmem:[%s6972 + $0x80] sm:$0xff]
        %v6990 = vld [vmem:[%s6972 + $0x88] sm:$0xff]
        %v6991 = vld [vmem:[%s6972 + $0x90] sm:$0xff]
        %v6992 = vld [vmem:[%s6972 + $0x98] sm:$0xff]
        %v6993 = vld [vmem:[%s6972 + $0xa0] sm:$0xff]
        %v6994 = vld [vmem:[%s6972 + $0xa8] sm:$0xff]
        %v6995 = vld [vmem:[%s6972 + $0xb0] sm:$0xff]
        %v6996 = vld [vmem:[%s6972 + $0xb8] sm:$0xff]
        %v6997 = vld [vmem:[%s6972 + $0xc0] sm:$0xff]
        %v6998 = vld [vmem:[%s6972 + $0xc8] sm:$0xff]
        %v6999 = vld [vmem:[%s6972 + $0xd0] sm:$0xff]
        %v7000 = vld [vmem:[%s6972 + $0xd8] sm:$0xff]
        %v7001 = vld [vmem:[%s6972 + $0xe0] sm:$0xff]
        %v7002 = vld [vmem:[%s6972 + $0xe8] sm:$0xff]
        %v7003 = vld [vmem:[%s6972 + $0xf0] sm:$0xff]
        %v7004 = vld [vmem:[%s6972 + $0xf8] sm:$0xff]
        %v7005 = vld [vmem:[%s6972 + $0x100] sm:$0xff]
        %v7006 = vld [vmem:[%s6972 + $0x108] sm:$0xff]
        %v7007 = vld [vmem:[%s6972 + $0x110] sm:$0xff]
        %v7008 = vld [vmem:[%s6972 + $0x118] sm:$0xff]
        %v7009 = vld [vmem:[%s6972 + $0x120] sm:$0xff]
        %v7010 = vld [vmem:[%s6972 + $0x128] sm:$0xff]
        %v7011 = vld [vmem:[%s6972 + $0x130] sm:$0xff]
        %v7012 = vld [vmem:[%s6972 + $0x138] sm:$0xff]
        %v7013 = vld [vmem:[%s6972 + $0x140] sm:$0xff]
        %v7014 = vld [vmem:[%s6972 + $0x148] sm:$0xff]
        %v7015 = vld [vmem:[%s6972 + $0x150] sm:$0xff]
        %v7016 = vld [vmem:[%s6972 + $0x158] sm:$0xff]
        %v7017 = vld [vmem:[%s6972 + $0x160] sm:$0xff]
        %v7018 = vld [vmem:[%s6972 + $0x168] sm:$0xff]
        %v7019 = vld [vmem:[%s6972 + $0x170] sm:$0xff]
        %v7020 = vld [vmem:[%s6972 + $0x178] sm:$0xff]
        %v7021 = vld [vmem:[%s6972 + $0x180] sm:$0xff]
        %v7022 = vld [vmem:[%s6972 + $0x188] sm:$0xff]
        %v7023 = vld [vmem:[%s6972 + $0x190] sm:$0xff]
        %v7024 = vld [vmem:[%s6972 + $0x198] sm:$0xff]
        %v7025 = vld [vmem:[%s6972 + $0x1a0] sm:$0xff]
        %v7026 = vld [vmem:[%s6972 + $0x1a8] sm:$0xff]
        %v7027 = vld [vmem:[%s6972 + $0x1b0] sm:$0xff]
        %v7028 = vld [vmem:[%s6972 + $0x1b8] sm:$0xff]
        %v7029 = vld [vmem:[%s6972 + $0x1c0] sm:$0xff]
        %v7030 = vld [vmem:[%s6972 + $0x1c8] sm:$0xff]
        %v7031 = vld [vmem:[%s6972 + $0x1d0] sm:$0xff]
        %v7032 = vld [vmem:[%s6972 + $0x1d8] sm:$0xff]
        %v7033 = vld [vmem:[%s6972 + $0x1e0] sm:$0xff]
        %v7034 = vld [vmem:[%s6972 + $0x1e8] sm:$0xff]
        %v7035 = vld [vmem:[%s6972 + $0x1f0] sm:$0xff]
        %v7036 = vld [vmem:[%s6972 + $0x1f8] sm:$0xff]
        %v7037 = vld [vmem:[%s6972 + $0x200] sm:$0xff]
        %v7038 = vld [vmem:[%s6972 + $0x208] sm:$0xff]
        %v7039 = vld [vmem:[%s6972 + $0x210] sm:$0xff]
        %v7040 = vld [vmem:[%s6972 + $0x218] sm:$0xff]
        %v7041 = vld [vmem:[%s6972 + $0x220] sm:$0xff]
        %v7042 = vld [vmem:[%s6972 + $0x228] sm:$0xff]
        %v7043 = vld [vmem:[%s6972 + $0x230] sm:$0xff]
        %v7044 = vld [vmem:[%s6972 + $0x238] sm:$0xff]
        %v7045 = vld [vmem:[%s6972 + $0x240] sm:$0xff]
        %v7046 = vld [vmem:[%s6972 + $0x248] sm:$0xff]
        %v7047 = vld [vmem:[%s6972 + $0x250] sm:$0xff]
        %v7048 = vld [vmem:[%s6972 + $0x258] sm:$0xff]
        %v7049 = vld [vmem:[%s6972 + $0x260] sm:$0xff]
        %v7050 = vld [vmem:[%s6972 + $0x268] sm:$0xff]
        %v7051 = vld [vmem:[%s6972 + $0x270] sm:$0xff]
        %v7052 = vld [vmem:[%s6972 + $0x278] sm:$0xff]
        %v7053 = vld [vmem:[%s6972 + $0x280] sm:$0xff]
        %v7054 = vld [vmem:[%s6972 + $0x288] sm:$0xff]
        %v7055 = vld [vmem:[%s6972 + $0x290] sm:$0xff]
        %v7056 = vld [vmem:[%s6972 + $0x298] sm:$0xff]
        %v7057 = vld [vmem:[%s6972 + $0x2a0] sm:$0xff]
        %v7058 = vld [vmem:[%s6972 + $0x2a8] sm:$0xff]
        %v7059 = vld [vmem:[%s6972 + $0x2b0] sm:$0xff]
        %v7060 = vld [vmem:[%s6972 + $0x2b8] sm:$0xff]
        %v7061 = vld [vmem:[%s6972 + $0x2c0] sm:$0xff]
        %v7062 = vld [vmem:[%s6972 + $0x2c8] sm:$0xff]
        %v7063 = vld [vmem:[%s6972 + $0x2d0] sm:$0xff]
        %v7064 = vld [vmem:[%s6972 + $0x2d8] sm:$0xff]
        %v7065 = vld [vmem:[%s6972 + $0x2e0] sm:$0xff]
        %v7066 = vld [vmem:[%s6972 + $0x2e8] sm:$0xff]
        %v7067 = vld [vmem:[%s6972 + $0x2f0] sm:$0xff]
        %v7068 = vld [vmem:[%s6972 + $0x2f8] sm:$0xff]
        %v7069 = vld [vmem:[%s6972 + $0x300] sm:$0xff]
        %v7070 = vld [vmem:[%s6972 + $0x308] sm:$0xff]
        %v7071 = vld [vmem:[%s6972 + $0x310] sm:$0xff]
        %v7072 = vld [vmem:[%s6972 + $0x318] sm:$0xff]
        %v7073 = vld [vmem:[%s6972 + $0x320] sm:$0xff]
        %v7074 = vld [vmem:[%s6972 + $0x328] sm:$0xff]
        %v7075 = vld [vmem:[%s6972 + $0x330] sm:$0xff]
        %v7076 = vld [vmem:[%s6972 + $0x338] sm:$0xff]
        %v7077 = vld [vmem:[%s6972 + $0x340] sm:$0xff]
        %v7078 = vld [vmem:[%s6972 + $0x348] sm:$0xff]
        %v7079 = vld [vmem:[%s6972 + $0x350] sm:$0xff]
        %v7080 = vld [vmem:[%s6972 + $0x358] sm:$0xff]
        %v7081 = vld [vmem:[%s6972 + $0x360] sm:$0xff]
        %v7082 = vld [vmem:[%s6972 + $0x368] sm:$0xff]
        %v7083 = vld [vmem:[%s6972 + $0x370] sm:$0xff]
        %v7084 = vld [vmem:[%s6972 + $0x378] sm:$0xff]
        %v7085 = vld [vmem:[%s6972 + $0x380] sm:$0xff]
        %v7086 = vld [vmem:[%s6972 + $0x388] sm:$0xff]
        %v7087 = vld [vmem:[%s6972 + $0x390] sm:$0xff]
        %v7088 = vld [vmem:[%s6972 + $0x398] sm:$0xff]
        %v7089 = vld [vmem:[%s6972 + $0x3a0] sm:$0xff]
        %v7090 = vld [vmem:[%s6972 + $0x3a8] sm:$0xff]
        %v7091 = vld [vmem:[%s6972 + $0x3b0] sm:$0xff]
        %v7092 = vld [vmem:[%s6972 + $0x3b8] sm:$0xff]
        %v7093 = vld [vmem:[%s6972 + $0x3c0] sm:$0xff]
        %v7094 = vld [vmem:[%s6972 + $0x3c8] sm:$0xff]
        %v7095 = vld [vmem:[%s6972 + $0x3d0] sm:$0xff]
        %v7096 = vld [vmem:[%s6972 + $0x3d8] sm:$0xff]
        %v7097 = vld [vmem:[%s6972 + $0x3e0] sm:$0xff]
        %v7098 = vld [vmem:[%s6972 + $0x3e8] sm:$0xff]
        %v7099 = vld [vmem:[%s6972 + $0x3f0] sm:$0xff]
        %v7100 = vld [vmem:[%s6972 + $0x3f8] sm:$0xff]
        %v7101 = vld [vmem:[%s6972 + $0x400] sm:$0xff]
        %v7102 = vld [vmem:[%s6972 + $0x408] sm:$0xff]
        %v7103 = vld [vmem:[%s6972 + $0x410] sm:$0xff]
        %v7104 = vld [vmem:[%s6972 + $0x418] sm:$0xff]
        %v7105 = vld [vmem:[%s6972 + $0x420] sm:$0xff]
        %v7106 = vld [vmem:[%s6972 + $0x428] sm:$0xff]
        %v7107 = vld [vmem:[%s6972 + $0x430] sm:$0xff]
        %v7108 = vld [vmem:[%s6972 + $0x438] sm:$0xff]
        %v7109 = vld [vmem:[%s6972 + $0x440] sm:$0xff]
        %v7110 = vld [vmem:[%s6972 + $0x448] sm:$0xff]
        %v7111 = vld [vmem:[%s6972 + $0x450] sm:$0xff]
        %v7112 = vld [vmem:[%s6972 + $0x458] sm:$0xff]
        %v7113 = vld [vmem:[%s6972 + $0x460] sm:$0xff]
        %v7114 = vld [vmem:[%s6972 + $0x468] sm:$0xff]
        %v7115 = vld [vmem:[%s6972 + $0x470] sm:$0xff]
        %v7116 = vld [vmem:[%s6972 + $0x478] sm:$0xff]
        %v7117 = vld [vmem:[%s6972 + $0x480] sm:$0xff]
        %v7118 = vld [vmem:[%s6972 + $0x488] sm:$0xff]
        %v7119 = vld [vmem:[%s6972 + $0x490] sm:$0xff]
        %v7120 = vld [vmem:[%s6972 + $0x498] sm:$0xff]
        %v7121 = vld [vmem:[%s6972 + $0x4a0] sm:$0xff]
        %v7122 = vld [vmem:[%s6972 + $0x4a8] sm:$0xff]
        %v7123 = vld [vmem:[%s6972 + $0x4b0] sm:$0xff]
        %v7124 = vld [vmem:[%s6972 + $0x4b8] sm:$0xff]
        %v7125 = vld [vmem:[%s6972 + $0x4c0] sm:$0xff]
        %v7126 = vld [vmem:[%s6972 + $0x4c8] sm:$0xff]
        %v7127 = vld [vmem:[%s6972 + $0x4d0] sm:$0xff]
        %v7128 = vld [vmem:[%s6972 + $0x4d8] sm:$0xff]
        %v7129 = vld [vmem:[%s6972 + $0x4e0] sm:$0xff]
        %v7130 = vld [vmem:[%s6972 + $0x4e8] sm:$0xff]
        %v7131 = vld [vmem:[%s6972 + $0x4f0] sm:$0xff]
        %v7132 = vld [vmem:[%s6972 + $0x4f8] sm:$0xff]
        %v7133 = vld [vmem:[%s6972 + $0x500] sm:$0xff]
        %v7134 = vld [vmem:[%s6972 + $0x508] sm:$0xff]
        %v7135 = vld [vmem:[%s6972 + $0x510] sm:$0xff]
        %v7136 = vld [vmem:[%s6972 + $0x518] sm:$0xff]
        %v7137 = vld [vmem:[%s6972 + $0x520] sm:$0xff]
        %v7138 = vld [vmem:[%s6972 + $0x528] sm:$0xff]
        %v7139 = vld [vmem:[%s6972 + $0x530] sm:$0xff]
        %v7140 = vld [vmem:[%s6972 + $0x538] sm:$0xff]
        %v7141 = vld [vmem:[%s6972 + $0x540] sm:$0xff]
        %v7142 = vld [vmem:[%s6972 + $0x548] sm:$0xff]
        %v7143 = vld [vmem:[%s6972 + $0x550] sm:$0xff]
        %v7144 = vld [vmem:[%s6972 + $0x558] sm:$0xff]
        %v7145 = vld [vmem:[%s6972 + $0x560] sm:$0xff]
        %v7146 = vld [vmem:[%s6972 + $0x568] sm:$0xff]
        %v7147 = vld [vmem:[%s6972 + $0x570] sm:$0xff]
        %v7148 = vld [vmem:[%s6972 + $0x578] sm:$0xff]
        %v7149 = vld [vmem:[%s6972 + $0x580] sm:$0xff]
        %v7150 = vld [vmem:[%s6972 + $0x588] sm:$0xff]
        %v7151 = vld [vmem:[%s6972 + $0x590] sm:$0xff]
        %v7152 = vld [vmem:[%s6972 + $0x598] sm:$0xff]
        %v7153 = vld [vmem:[%s6972 + $0x5a0] sm:$0xff]
        %v7154 = vld [vmem:[%s6972 + $0x5a8] sm:$0xff]
        %v7155 = vld [vmem:[%s6972 + $0x5b0] sm:$0xff]
        %v7156 = vld [vmem:[%s6972 + $0x5b8] sm:$0xff]
        %v7157 = vld [vmem:[%s6972 + $0x5c0] sm:$0xff]
        %v7158 = vld [vmem:[%s6972 + $0x5c8] sm:$0xff]
        %v7159 = vld [vmem:[%s6972 + $0x5d0] sm:$0xff]
        %v7160 = vld [vmem:[%s6972 + $0x5d8] sm:$0xff]
        %v7161 = vld [vmem:[%s6972 + $0x5e0] sm:$0xff]
        %v7162 = vld [vmem:[%s6972 + $0x5e8] sm:$0xff]
        %v7163 = vld [vmem:[%s6972 + $0x5f0] sm:$0xff]
        %v7164 = vld [vmem:[%s6972 + $0x5f8] sm:$0xff]
        %v7357 = vunpack.c.l.b16 %v6973
        %v7358 = vunpack.c.h.b16 %v6973
        %v7359 = vunpack.c.l.b16 %v6974
        %v7360 = vunpack.c.h.b16 %v6974
        %v7361 = vunpack.c.l.b16 %v6975
        %v7362 = vunpack.c.h.b16 %v6975
        %v7363 = vunpack.c.l.b16 %v6976
        %v7364 = vunpack.c.h.b16 %v6976
        %v7365 = vunpack.c.l.b16 %v6977
        %v7366 = vunpack.c.h.b16 %v6977
        %v7367 = vunpack.c.l.b16 %v6978
        %v7368 = vunpack.c.h.b16 %v6978
        %v7369 = vunpack.c.l.b16 %v6979
        %v7370 = vunpack.c.h.b16 %v6979
        %v7371 = vunpack.c.l.b16 %v6980
        %v7372 = vunpack.c.h.b16 %v6980
        %v7373 = vunpack.c.l.b16 %v6981
        %v7374 = vunpack.c.h.b16 %v6981
        %v7375 = vunpack.c.l.b16 %v6982
        %v7376 = vunpack.c.h.b16 %v6982
        %v7377 = vunpack.c.l.b16 %v6983
        %v7378 = vunpack.c.h.b16 %v6983
        %v7379 = vunpack.c.l.b16 %v6984
        %v7380 = vunpack.c.h.b16 %v6984
        %v7381 = vunpack.c.l.b16 %v6985
        %v7382 = vunpack.c.h.b16 %v6985
        %v7383 = vunpack.c.l.b16 %v6986
        %v7384 = vunpack.c.h.b16 %v6986
        %v7385 = vunpack.c.l.b16 %v6987
        %v7386 = vunpack.c.h.b16 %v6987
        %v7387 = vunpack.c.l.b16 %v6988
        %v7388 = vunpack.c.h.b16 %v6988
        %v7389 = vunpack.c.l.b16 %v6989
        %v7390 = vunpack.c.h.b16 %v6989
        %v7391 = vunpack.c.l.b16 %v6990
        %v7392 = vunpack.c.h.b16 %v6990
        %v7393 = vunpack.c.l.b16 %v6991
        %v7394 = vunpack.c.h.b16 %v6991
        %v7395 = vunpack.c.l.b16 %v6992
        %v7396 = vunpack.c.h.b16 %v6992
        %v7397 = vunpack.c.l.b16 %v6993
        %v7398 = vunpack.c.h.b16 %v6993
        %v7399 = vunpack.c.l.b16 %v6994
        %v7400 = vunpack.c.h.b16 %v6994
        %v7401 = vunpack.c.l.b16 %v6995
        %v7402 = vunpack.c.h.b16 %v6995
        %v7403 = vunpack.c.l.b16 %v6996
        %v7404 = vunpack.c.h.b16 %v6996
        %v7405 = vunpack.c.l.b16 %v6997
        %v7406 = vunpack.c.h.b16 %v6997
        %v7407 = vunpack.c.l.b16 %v6998
        %v7408 = vunpack.c.h.b16 %v6998
        %v7409 = vunpack.c.l.b16 %v6999
        %v7410 = vunpack.c.h.b16 %v6999
        %v7411 = vunpack.c.l.b16 %v7000
        %v7412 = vunpack.c.h.b16 %v7000
        %v7413 = vunpack.c.l.b16 %v7001
        %v7414 = vunpack.c.h.b16 %v7001
        %v7415 = vunpack.c.l.b16 %v7002
        %v7416 = vunpack.c.h.b16 %v7002
        %v7417 = vunpack.c.l.b16 %v7003
        %v7418 = vunpack.c.h.b16 %v7003
        %v7419 = vunpack.c.l.b16 %v7004
        %v7420 = vunpack.c.h.b16 %v7004
        %v7421 = vunpack.c.l.b16 %v7005
        %v7422 = vunpack.c.h.b16 %v7005
        %v7423 = vunpack.c.l.b16 %v7006
        %v7424 = vunpack.c.h.b16 %v7006
        %v7425 = vunpack.c.l.b16 %v7007
        %v7426 = vunpack.c.h.b16 %v7007
        %v7427 = vunpack.c.l.b16 %v7008
        %v7428 = vunpack.c.h.b16 %v7008
        %v7429 = vunpack.c.l.b16 %v7009
        %v7430 = vunpack.c.h.b16 %v7009
        %v7431 = vunpack.c.l.b16 %v7010
        %v7432 = vunpack.c.h.b16 %v7010
        %v7433 = vunpack.c.l.b16 %v7011
        %v7434 = vunpack.c.h.b16 %v7011
        %v7435 = vunpack.c.l.b16 %v7012
        %v7436 = vunpack.c.h.b16 %v7012
        %v7437 = vunpack.c.l.b16 %v7013
        %v7438 = vunpack.c.h.b16 %v7013
        %v7439 = vunpack.c.l.b16 %v7014
        %v7440 = vunpack.c.h.b16 %v7014
        %v7441 = vunpack.c.l.b16 %v7015
        %v7442 = vunpack.c.h.b16 %v7015
        %v7443 = vunpack.c.l.b16 %v7016
        %v7444 = vunpack.c.h.b16 %v7016
        %v7445 = vunpack.c.l.b16 %v7017
        %v7446 = vunpack.c.h.b16 %v7017
        %v7447 = vunpack.c.l.b16 %v7018
        %v7448 = vunpack.c.h.b16 %v7018
        %v7449 = vunpack.c.l.b16 %v7019
        %v7450 = vunpack.c.h.b16 %v7019
        %v7451 = vunpack.c.l.b16 %v7020
        %v7452 = vunpack.c.h.b16 %v7020
        %v7453 = vunpack.c.l.b16 %v7021
        %v7454 = vunpack.c.h.b16 %v7021
        %v7455 = vunpack.c.l.b16 %v7022
        %v7456 = vunpack.c.h.b16 %v7022
        %v7457 = vunpack.c.l.b16 %v7023
        %v7458 = vunpack.c.h.b16 %v7023
        %v7459 = vunpack.c.l.b16 %v7024
        %v7460 = vunpack.c.h.b16 %v7024
        %v7461 = vunpack.c.l.b16 %v7025
        %v7462 = vunpack.c.h.b16 %v7025
        %v7463 = vunpack.c.l.b16 %v7026
        %v7464 = vunpack.c.h.b16 %v7026
        %v7465 = vunpack.c.l.b16 %v7027
        %v7466 = vunpack.c.h.b16 %v7027
        %v7467 = vunpack.c.l.b16 %v7028
        %v7468 = vunpack.c.h.b16 %v7028
        %v7469 = vunpack.c.l.b16 %v7029
        %v7470 = vunpack.c.h.b16 %v7029
        %v7471 = vunpack.c.l.b16 %v7030
        %v7472 = vunpack.c.h.b16 %v7030
        %v7473 = vunpack.c.l.b16 %v7031
        %v7474 = vunpack.c.h.b16 %v7031
        %v7475 = vunpack.c.l.b16 %v7032
        %v7476 = vunpack.c.h.b16 %v7032
        %v7477 = vunpack.c.l.b16 %v7033
        %v7478 = vunpack.c.h.b16 %v7033
        %v7479 = vunpack.c.l.b16 %v7034
        %v7480 = vunpack.c.h.b16 %v7034
        %v7481 = vunpack.c.l.b16 %v7035
        %v7482 = vunpack.c.h.b16 %v7035
        %v7483 = vunpack.c.l.b16 %v7036
        %v7484 = vunpack.c.h.b16 %v7036
        %v7485 = vunpack.c.l.b16 %v7037
        %v7486 = vunpack.c.h.b16 %v7037
        %v7487 = vunpack.c.l.b16 %v7038
        %v7488 = vunpack.c.h.b16 %v7038
        %v7489 = vunpack.c.l.b16 %v7039
        %v7490 = vunpack.c.h.b16 %v7039
        %v7491 = vunpack.c.l.b16 %v7040
        %v7492 = vunpack.c.h.b16 %v7040
        %v7493 = vunpack.c.l.b16 %v7041
        %v7494 = vunpack.c.h.b16 %v7041
        %v7495 = vunpack.c.l.b16 %v7042
        %v7496 = vunpack.c.h.b16 %v7042
        %v7497 = vunpack.c.l.b16 %v7043
        %v7498 = vunpack.c.h.b16 %v7043
        %v7499 = vunpack.c.l.b16 %v7044
        %v7500 = vunpack.c.h.b16 %v7044
        %v7501 = vunpack.c.l.b16 %v7045
        %v7502 = vunpack.c.h.b16 %v7045
        %v7503 = vunpack.c.l.b16 %v7046
        %v7504 = vunpack.c.h.b16 %v7046
        %v7505 = vunpack.c.l.b16 %v7047
        %v7506 = vunpack.c.h.b16 %v7047
        %v7507 = vunpack.c.l.b16 %v7048
        %v7508 = vunpack.c.h.b16 %v7048
        %v7509 = vunpack.c.l.b16 %v7049
        %v7510 = vunpack.c.h.b16 %v7049
        %v7511 = vunpack.c.l.b16 %v7050
        %v7512 = vunpack.c.h.b16 %v7050
        %v7513 = vunpack.c.l.b16 %v7051
        %v7514 = vunpack.c.h.b16 %v7051
        %v7515 = vunpack.c.l.b16 %v7052
        %v7516 = vunpack.c.h.b16 %v7052
        %v7517 = vunpack.c.l.b16 %v7053
        %v7518 = vunpack.c.h.b16 %v7053
        %v7519 = vunpack.c.l.b16 %v7054
        %v7520 = vunpack.c.h.b16 %v7054
        %v7521 = vunpack.c.l.b16 %v7055
        %v7522 = vunpack.c.h.b16 %v7055
        %v7523 = vunpack.c.l.b16 %v7056
        %v7524 = vunpack.c.h.b16 %v7056
        %v7525 = vunpack.c.l.b16 %v7057
        %v7526 = vunpack.c.h.b16 %v7057
        %v7527 = vunpack.c.l.b16 %v7058
        %v7528 = vunpack.c.h.b16 %v7058
        %v7529 = vunpack.c.l.b16 %v7059
        %v7530 = vunpack.c.h.b16 %v7059
        %v7531 = vunpack.c.l.b16 %v7060
        %v7532 = vunpack.c.h.b16 %v7060
        %v7533 = vunpack.c.l.b16 %v7061
        %v7534 = vunpack.c.h.b16 %v7061
        %v7535 = vunpack.c.l.b16 %v7062
        %v7536 = vunpack.c.h.b16 %v7062
        %v7537 = vunpack.c.l.b16 %v7063
        %v7538 = vunpack.c.h.b16 %v7063
        %v7539 = vunpack.c.l.b16 %v7064
        %v7540 = vunpack.c.h.b16 %v7064
        %v7541 = vunpack.c.l.b16 %v7065
        %v7542 = vunpack.c.h.b16 %v7065
        %v7543 = vunpack.c.l.b16 %v7066
        %v7544 = vunpack.c.h.b16 %v7066
        %v7545 = vunpack.c.l.b16 %v7067
        %v7546 = vunpack.c.h.b16 %v7067
        %v7547 = vunpack.c.l.b16 %v7068
        %v7548 = vunpack.c.h.b16 %v7068
        %v7549 = vunpack.c.l.b16 %v7069
        %v7550 = vunpack.c.h.b16 %v7069
        %v7551 = vunpack.c.l.b16 %v7070
        %v7552 = vunpack.c.h.b16 %v7070
        %v7553 = vunpack.c.l.b16 %v7071
        %v7554 = vunpack.c.h.b16 %v7071
        %v7555 = vunpack.c.l.b16 %v7072
        %v7556 = vunpack.c.h.b16 %v7072
        %v7557 = vunpack.c.l.b16 %v7073
        %v7558 = vunpack.c.h.b16 %v7073
        %v7559 = vunpack.c.l.b16 %v7074
        %v7560 = vunpack.c.h.b16 %v7074
        %v7561 = vunpack.c.l.b16 %v7075
        %v7562 = vunpack.c.h.b16 %v7075
        %v7563 = vunpack.c.l.b16 %v7076
        %v7564 = vunpack.c.h.b16 %v7076
        %v7565 = vunpack.c.l.b16 %v7077
        %v7566 = vunpack.c.h.b16 %v7077
        %v7567 = vunpack.c.l.b16 %v7078
        %v7568 = vunpack.c.h.b16 %v7078
        %v7569 = vunpack.c.l.b16 %v7079
        %v7570 = vunpack.c.h.b16 %v7079
        %v7571 = vunpack.c.l.b16 %v7080
        %v7572 = vunpack.c.h.b16 %v7080
        %v7573 = vunpack.c.l.b16 %v7081
        %v7574 = vunpack.c.h.b16 %v7081
        %v7575 = vunpack.c.l.b16 %v7082
        %v7576 = vunpack.c.h.b16 %v7082
        %v7577 = vunpack.c.l.b16 %v7083
        %v7578 = vunpack.c.h.b16 %v7083
        %v7579 = vunpack.c.l.b16 %v7084
        %v7580 = vunpack.c.h.b16 %v7084
        %v7581 = vunpack.c.l.b16 %v7085
        %v7582 = vunpack.c.h.b16 %v7085
        %v7583 = vunpack.c.l.b16 %v7086
        %v7584 = vunpack.c.h.b16 %v7086
        %v7585 = vunpack.c.l.b16 %v7087
        %v7586 = vunpack.c.h.b16 %v7087
        %v7587 = vunpack.c.l.b16 %v7088
        %v7588 = vunpack.c.h.b16 %v7088
        %v7589 = vunpack.c.l.b16 %v7089
        %v7590 = vunpack.c.h.b16 %v7089
        %v7591 = vunpack.c.l.b16 %v7090
        %v7592 = vunpack.c.h.b16 %v7090
        %v7593 = vunpack.c.l.b16 %v7091
        %v7594 = vunpack.c.h.b16 %v7091
        %v7595 = vunpack.c.l.b16 %v7092
        %v7596 = vunpack.c.h.b16 %v7092
        %v7597 = vunpack.c.l.b16 %v7093
        %v7598 = vunpack.c.h.b16 %v7093
        %v7599 = vunpack.c.l.b16 %v7094
        %v7600 = vunpack.c.h.b16 %v7094
        %v7601 = vunpack.c.l.b16 %v7095
        %v7602 = vunpack.c.h.b16 %v7095
        %v7603 = vunpack.c.l.b16 %v7096
        %v7604 = vunpack.c.h.b16 %v7096
        %v7605 = vunpack.c.l.b16 %v7097
        %v7606 = vunpack.c.h.b16 %v7097
        %v7607 = vunpack.c.l.b16 %v7098
        %v7608 = vunpack.c.h.b16 %v7098
        %v7609 = vunpack.c.l.b16 %v7099
        %v7610 = vunpack.c.h.b16 %v7099
        %v7611 = vunpack.c.l.b16 %v7100
        %v7612 = vunpack.c.h.b16 %v7100
        %v7613 = vunpack.c.l.b16 %v7101
        %v7614 = vunpack.c.h.b16 %v7101
        %v7615 = vunpack.c.l.b16 %v7102
        %v7616 = vunpack.c.h.b16 %v7102
        %v7617 = vunpack.c.l.b16 %v7103
        %v7618 = vunpack.c.h.b16 %v7103
        %v7619 = vunpack.c.l.b16 %v7104
        %v7620 = vunpack.c.h.b16 %v7104
        %v7621 = vunpack.c.l.b16 %v7105
        %v7622 = vunpack.c.h.b16 %v7105
        %v7623 = vunpack.c.l.b16 %v7106
        %v7624 = vunpack.c.h.b16 %v7106
        %v7625 = vunpack.c.l.b16 %v7107
        %v7626 = vunpack.c.h.b16 %v7107
        %v7627 = vunpack.c.l.b16 %v7108
        %v7628 = vunpack.c.h.b16 %v7108
        %v7629 = vunpack.c.l.b16 %v7109
        %v7630 = vunpack.c.h.b16 %v7109
        %v7631 = vunpack.c.l.b16 %v7110
        %v7632 = vunpack.c.h.b16 %v7110
        %v7633 = vunpack.c.l.b16 %v7111
        %v7634 = vunpack.c.h.b16 %v7111
        %v7635 = vunpack.c.l.b16 %v7112
        %v7636 = vunpack.c.h.b16 %v7112
        %v7637 = vunpack.c.l.b16 %v7113
        %v7638 = vunpack.c.h.b16 %v7113
        %v7639 = vunpack.c.l.b16 %v7114
        %v7640 = vunpack.c.h.b16 %v7114
        %v7641 = vunpack.c.l.b16 %v7115
        %v7642 = vunpack.c.h.b16 %v7115
        %v7643 = vunpack.c.l.b16 %v7116
        %v7644 = vunpack.c.h.b16 %v7116
        %v7645 = vunpack.c.l.b16 %v7117
        %v7646 = vunpack.c.h.b16 %v7117
        %v7647 = vunpack.c.l.b16 %v7118
        %v7648 = vunpack.c.h.b16 %v7118
        %v7649 = vunpack.c.l.b16 %v7119
        %v7650 = vunpack.c.h.b16 %v7119
        %v7651 = vunpack.c.l.b16 %v7120
        %v7652 = vunpack.c.h.b16 %v7120
        %v7653 = vunpack.c.l.b16 %v7121
        %v7654 = vunpack.c.h.b16 %v7121
        %v7655 = vunpack.c.l.b16 %v7122
        %v7656 = vunpack.c.h.b16 %v7122
        %v7657 = vunpack.c.l.b16 %v7123
        %v7658 = vunpack.c.h.b16 %v7123
        %v7659 = vunpack.c.l.b16 %v7124
        %v7660 = vunpack.c.h.b16 %v7124
        %v7661 = vunpack.c.l.b16 %v7125
        %v7662 = vunpack.c.h.b16 %v7125
        %v7663 = vunpack.c.l.b16 %v7126
        %v7664 = vunpack.c.h.b16 %v7126
        %v7665 = vunpack.c.l.b16 %v7127
        %v7666 = vunpack.c.h.b16 %v7127
        %v7667 = vunpack.c.l.b16 %v7128
        %v7668 = vunpack.c.h.b16 %v7128
        %v7669 = vunpack.c.l.b16 %v7129
        %v7670 = vunpack.c.h.b16 %v7129
        %v7671 = vunpack.c.l.b16 %v7130
        %v7672 = vunpack.c.h.b16 %v7130
        %v7673 = vunpack.c.l.b16 %v7131
        %v7674 = vunpack.c.h.b16 %v7131
        %v7675 = vunpack.c.l.b16 %v7132
        %v7676 = vunpack.c.h.b16 %v7132
        %v7677 = vunpack.c.l.b16 %v7133
        %v7678 = vunpack.c.h.b16 %v7133
        %v7679 = vunpack.c.l.b16 %v7134
        %v7680 = vunpack.c.h.b16 %v7134
        %v7681 = vunpack.c.l.b16 %v7135
        %v7682 = vunpack.c.h.b16 %v7135
        %v7683 = vunpack.c.l.b16 %v7136
        %v7684 = vunpack.c.h.b16 %v7136
        %v7685 = vunpack.c.l.b16 %v7137
        %v7686 = vunpack.c.h.b16 %v7137
        %v7687 = vunpack.c.l.b16 %v7138
        %v7688 = vunpack.c.h.b16 %v7138
        %v7689 = vunpack.c.l.b16 %v7139
        %v7690 = vunpack.c.h.b16 %v7139
        %v7691 = vunpack.c.l.b16 %v7140
        %v7692 = vunpack.c.h.b16 %v7140
        %v7693 = vunpack.c.l.b16 %v7141
        %v7694 = vunpack.c.h.b16 %v7141
        %v7695 = vunpack.c.l.b16 %v7142
        %v7696 = vunpack.c.h.b16 %v7142
        %v7697 = vunpack.c.l.b16 %v7143
        %v7698 = vunpack.c.h.b16 %v7143
        %v7699 = vunpack.c.l.b16 %v7144
        %v7700 = vunpack.c.h.b16 %v7144
        %v7701 = vunpack.c.l.b16 %v7145
        %v7702 = vunpack.c.h.b16 %v7145
        %v7703 = vunpack.c.l.b16 %v7146
        %v7704 = vunpack.c.h.b16 %v7146
        %v7705 = vunpack.c.l.b16 %v7147
        %v7706 = vunpack.c.h.b16 %v7147
        %v7707 = vunpack.c.l.b16 %v7148
        %v7708 = vunpack.c.h.b16 %v7148
        %v7709 = vunpack.c.l.b16 %v7149
        %v7710 = vunpack.c.h.b16 %v7149
        %v7711 = vunpack.c.l.b16 %v7150
        %v7712 = vunpack.c.h.b16 %v7150
        %v7713 = vunpack.c.l.b16 %v7151
        %v7714 = vunpack.c.h.b16 %v7151
        %v7715 = vunpack.c.l.b16 %v7152
        %v7716 = vunpack.c.h.b16 %v7152
        %v7717 = vunpack.c.l.b16 %v7153
        %v7718 = vunpack.c.h.b16 %v7153
        %v7719 = vunpack.c.l.b16 %v7154
        %v7720 = vunpack.c.h.b16 %v7154
        %v7721 = vunpack.c.l.b16 %v7155
        %v7722 = vunpack.c.h.b16 %v7155
        %v7723 = vunpack.c.l.b16 %v7156
        %v7724 = vunpack.c.h.b16 %v7156
        %v7725 = vunpack.c.l.b16 %v7157
        %v7726 = vunpack.c.h.b16 %v7157
        %v7727 = vunpack.c.l.b16 %v7158
        %v7728 = vunpack.c.h.b16 %v7158
        %v7729 = vunpack.c.l.b16 %v7159
        %v7730 = vunpack.c.h.b16 %v7159
        %v7731 = vunpack.c.l.b16 %v7160
        %v7732 = vunpack.c.h.b16 %v7160
        %v7733 = vunpack.c.l.b16 %v7161
        %v7734 = vunpack.c.h.b16 %v7161
        %v7735 = vunpack.c.l.b16 %v7162
        %v7736 = vunpack.c.h.b16 %v7162
        %v7737 = vunpack.c.l.b16 %v7163
        %v7738 = vunpack.c.h.b16 %v7163
        %v7739 = vunpack.c.l.b16 %v7164
        %v7740 = vunpack.c.h.b16 %v7164
        %v7741 = vpack.c.b16 %v7363, %v7357
        %v7742 = vpack.c.b16 %v7364, %v7358
        %v7743 = vpack.c.b16 %v7365, %v7359
        %v7744 = vpack.c.b16 %v7366, %v7360
        %v7745 = vpack.c.b16 %v7367, %v7361
        %v7746 = vpack.c.b16 %v7368, %v7362
        %v7747 = vpack.c.b16 %v7375, %v7369
        %v7748 = vpack.c.b16 %v7376, %v7370
        %v7749 = vpack.c.b16 %v7377, %v7371
        %v7750 = vpack.c.b16 %v7378, %v7372
        %v7751 = vpack.c.b16 %v7379, %v7373
        %v7752 = vpack.c.b16 %v7380, %v7374
        %v7753 = vpack.c.b16 %v7387, %v7381
        %v7754 = vpack.c.b16 %v7388, %v7382
        %v7755 = vpack.c.b16 %v7389, %v7383
        %v7756 = vpack.c.b16 %v7390, %v7384
        %v7757 = vpack.c.b16 %v7391, %v7385
        %v7758 = vpack.c.b16 %v7392, %v7386
        %v7759 = vpack.c.b16 %v7399, %v7393
        %v7760 = vpack.c.b16 %v7400, %v7394
        %v7761 = vpack.c.b16 %v7401, %v7395
        %v7762 = vpack.c.b16 %v7402, %v7396
        %v7763 = vpack.c.b16 %v7403, %v7397
        %v7764 = vpack.c.b16 %v7404, %v7398
        %v7765 = vpack.c.b16 %v7411, %v7405
        %v7766 = vpack.c.b16 %v7412, %v7406
        %v7767 = vpack.c.b16 %v7413, %v7407
        %v7768 = vpack.c.b16 %v7414, %v7408
        %v7769 = vpack.c.b16 %v7415, %v7409
        %v7770 = vpack.c.b16 %v7416, %v7410
        %v7771 = vpack.c.b16 %v7423, %v7417
        %v7772 = vpack.c.b16 %v7424, %v7418
        %v7773 = vpack.c.b16 %v7425, %v7419
        %v7774 = vpack.c.b16 %v7426, %v7420
        %v7775 = vpack.c.b16 %v7427, %v7421
        %v7776 = vpack.c.b16 %v7428, %v7422
        %v7777 = vpack.c.b16 %v7435, %v7429
        %v7778 = vpack.c.b16 %v7436, %v7430
        %v7779 = vpack.c.b16 %v7437, %v7431
        %v7780 = vpack.c.b16 %v7438, %v7432
        %v7781 = vpack.c.b16 %v7439, %v7433
        %v7782 = vpack.c.b16 %v7440, %v7434
        %v7783 = vpack.c.b16 %v7447, %v7441
        %v7784 = vpack.c.b16 %v7448, %v7442
        %v7785 = vpack.c.b16 %v7449, %v7443
        %v7786 = vpack.c.b16 %v7450, %v7444
        %v7787 = vpack.c.b16 %v7451, %v7445
        %v7788 = vpack.c.b16 %v7452, %v7446
        %v7789 = vpack.c.b16 %v7459, %v7453
        %v7790 = vpack.c.b16 %v7460, %v7454
        %v7791 = vpack.c.b16 %v7461, %v7455
        %v7792 = vpack.c.b16 %v7462, %v7456
        %v7793 = vpack.c.b16 %v7463, %v7457
        %v7794 = vpack.c.b16 %v7464, %v7458
        %v7795 = vpack.c.b16 %v7471, %v7465
        %v7796 = vpack.c.b16 %v7472, %v7466
        %v7797 = vpack.c.b16 %v7473, %v7467
        %v7798 = vpack.c.b16 %v7474, %v7468
        %v7799 = vpack.c.b16 %v7475, %v7469
        %v7800 = vpack.c.b16 %v7476, %v7470
        %v7801 = vpack.c.b16 %v7483, %v7477
        %v7802 = vpack.c.b16 %v7484, %v7478
        %v7803 = vpack.c.b16 %v7485, %v7479
        %v7804 = vpack.c.b16 %v7486, %v7480
        %v7805 = vpack.c.b16 %v7487, %v7481
        %v7806 = vpack.c.b16 %v7488, %v7482
        %v7807 = vpack.c.b16 %v7495, %v7489
        %v7808 = vpack.c.b16 %v7496, %v7490
        %v7809 = vpack.c.b16 %v7497, %v7491
        %v7810 = vpack.c.b16 %v7498, %v7492
        %v7811 = vpack.c.b16 %v7499, %v7493
        %v7812 = vpack.c.b16 %v7500, %v7494
        %v7813 = vpack.c.b16 %v7507, %v7501
        %v7814 = vpack.c.b16 %v7508, %v7502
        %v7815 = vpack.c.b16 %v7509, %v7503
        %v7816 = vpack.c.b16 %v7510, %v7504
        %v7817 = vpack.c.b16 %v7511, %v7505
        %v7818 = vpack.c.b16 %v7512, %v7506
        %v7819 = vpack.c.b16 %v7519, %v7513
        %v7820 = vpack.c.b16 %v7520, %v7514
        %v7821 = vpack.c.b16 %v7521, %v7515
        %v7822 = vpack.c.b16 %v7522, %v7516
        %v7823 = vpack.c.b16 %v7523, %v7517
        %v7824 = vpack.c.b16 %v7524, %v7518
        %v7825 = vpack.c.b16 %v7531, %v7525
        %v7826 = vpack.c.b16 %v7532, %v7526
        %v7827 = vpack.c.b16 %v7533, %v7527
        %v7828 = vpack.c.b16 %v7534, %v7528
        %v7829 = vpack.c.b16 %v7535, %v7529
        %v7830 = vpack.c.b16 %v7536, %v7530
        %v7831 = vpack.c.b16 %v7543, %v7537
        %v7832 = vpack.c.b16 %v7544, %v7538
        %v7833 = vpack.c.b16 %v7545, %v7539
        %v7834 = vpack.c.b16 %v7546, %v7540
        %v7835 = vpack.c.b16 %v7547, %v7541
        %v7836 = vpack.c.b16 %v7548, %v7542
        %v7837 = vpack.c.b16 %v7555, %v7549
        %v7838 = vpack.c.b16 %v7556, %v7550
        %v7839 = vpack.c.b16 %v7557, %v7551
        %v7840 = vpack.c.b16 %v7558, %v7552
        %v7841 = vpack.c.b16 %v7559, %v7553
        %v7842 = vpack.c.b16 %v7560, %v7554
        %v7843 = vpack.c.b16 %v7567, %v7561
        %v7844 = vpack.c.b16 %v7568, %v7562
        %v7845 = vpack.c.b16 %v7569, %v7563
        %v7846 = vpack.c.b16 %v7570, %v7564
        %v7847 = vpack.c.b16 %v7571, %v7565
        %v7848 = vpack.c.b16 %v7572, %v7566
        %v7849 = vpack.c.b16 %v7579, %v7573
        %v7850 = vpack.c.b16 %v7580, %v7574
        %v7851 = vpack.c.b16 %v7581, %v7575
        %v7852 = vpack.c.b16 %v7582, %v7576
        %v7853 = vpack.c.b16 %v7583, %v7577
        %v7854 = vpack.c.b16 %v7584, %v7578
        %v7855 = vpack.c.b16 %v7591, %v7585
        %v7856 = vpack.c.b16 %v7592, %v7586
        %v7857 = vpack.c.b16 %v7593, %v7587
        %v7858 = vpack.c.b16 %v7594, %v7588
        %v7859 = vpack.c.b16 %v7595, %v7589
        %v7860 = vpack.c.b16 %v7596, %v7590
        %v7861 = vpack.c.b16 %v7603, %v7597
        %v7862 = vpack.c.b16 %v7604, %v7598
        %v7863 = vpack.c.b16 %v7605, %v7599
        %v7864 = vpack.c.b16 %v7606, %v7600
        %v7865 = vpack.c.b16 %v7607, %v7601
        %v7866 = vpack.c.b16 %v7608, %v7602
        %v7867 = vpack.c.b16 %v7615, %v7609
        %v7868 = vpack.c.b16 %v7616, %v7610
        %v7869 = vpack.c.b16 %v7617, %v7611
        %v7870 = vpack.c.b16 %v7618, %v7612
        %v7871 = vpack.c.b16 %v7619, %v7613
        %v7872 = vpack.c.b16 %v7620, %v7614
        %v7873 = vpack.c.b16 %v7627, %v7621
        %v7874 = vpack.c.b16 %v7628, %v7622
        %v7875 = vpack.c.b16 %v7629, %v7623
        %v7876 = vpack.c.b16 %v7630, %v7624
        %v7877 = vpack.c.b16 %v7631, %v7625
        %v7878 = vpack.c.b16 %v7632, %v7626
        %v7879 = vpack.c.b16 %v7639, %v7633
        %v7880 = vpack.c.b16 %v7640, %v7634
        %v7881 = vpack.c.b16 %v7641, %v7635
        %v7882 = vpack.c.b16 %v7642, %v7636
        %v7883 = vpack.c.b16 %v7643, %v7637
        %v7884 = vpack.c.b16 %v7644, %v7638
        %v7885 = vpack.c.b16 %v7651, %v7645
        %v7886 = vpack.c.b16 %v7652, %v7646
        %v7887 = vpack.c.b16 %v7653, %v7647
        %v7888 = vpack.c.b16 %v7654, %v7648
        %v7889 = vpack.c.b16 %v7655, %v7649
        %v7890 = vpack.c.b16 %v7656, %v7650
        %v7891 = vpack.c.b16 %v7663, %v7657
        %v7892 = vpack.c.b16 %v7664, %v7658
        %v7893 = vpack.c.b16 %v7665, %v7659
        %v7894 = vpack.c.b16 %v7666, %v7660
        %v7895 = vpack.c.b16 %v7667, %v7661
        %v7896 = vpack.c.b16 %v7668, %v7662
        %v7897 = vpack.c.b16 %v7675, %v7669
        %v7898 = vpack.c.b16 %v7676, %v7670
        %v7899 = vpack.c.b16 %v7677, %v7671
        %v7900 = vpack.c.b16 %v7678, %v7672
        %v7901 = vpack.c.b16 %v7679, %v7673
        %v7902 = vpack.c.b16 %v7680, %v7674
        %v7903 = vpack.c.b16 %v7687, %v7681
        %v7904 = vpack.c.b16 %v7688, %v7682
        %v7905 = vpack.c.b16 %v7689, %v7683
        %v7906 = vpack.c.b16 %v7690, %v7684
        %v7907 = vpack.c.b16 %v7691, %v7685
        %v7908 = vpack.c.b16 %v7692, %v7686
        %v7909 = vpack.c.b16 %v7699, %v7693
        %v7910 = vpack.c.b16 %v7700, %v7694
        %v7911 = vpack.c.b16 %v7701, %v7695
        %v7912 = vpack.c.b16 %v7702, %v7696
        %v7913 = vpack.c.b16 %v7703, %v7697
        %v7914 = vpack.c.b16 %v7704, %v7698
        %v7915 = vpack.c.b16 %v7711, %v7705
        %v7916 = vpack.c.b16 %v7712, %v7706
        %v7917 = vpack.c.b16 %v7713, %v7707
        %v7918 = vpack.c.b16 %v7714, %v7708
        %v7919 = vpack.c.b16 %v7715, %v7709
        %v7920 = vpack.c.b16 %v7716, %v7710
        %v7921 = vpack.c.b16 %v7723, %v7717
        %v7922 = vpack.c.b16 %v7724, %v7718
        %v7923 = vpack.c.b16 %v7725, %v7719
        %v7924 = vpack.c.b16 %v7726, %v7720
        %v7925 = vpack.c.b16 %v7727, %v7721
        %v7926 = vpack.c.b16 %v7728, %v7722
        %v7927 = vpack.c.b16 %v7735, %v7729
        %v7928 = vpack.c.b16 %v7736, %v7730
        %v7929 = vpack.c.b16 %v7737, %v7731
        %v7930 = vpack.c.b16 %v7738, %v7732
        %v7931 = vpack.c.b16 %v7739, %v7733
        %v7932 = vpack.c.b16 %v7740, %v7734
        %8125 = vmatprep.subr.bf16.mxu0 %v7742
        %8126 = vmatpush1.bf16.msra.mxu0 %v7741
        %8127 = vmatprep.subr.bf16.mxu0 %v7748
        %8128 = vmatpush1.bf16.msra.mxu0 %v7747
        %8129 = vmatprep.subr.bf16.mxu0 %v7754
        %8130 = vmatpush1.bf16.msra.mxu0 %v7753
        %8131 = vmatprep.subr.bf16.mxu0 %v7760
        %8132 = vmatpush1.bf16.msra.mxu0 %v7759
        %8133 = vmatprep.subr.bf16.mxu0 %v7766
        %8134 = vmatpush1.bf16.msra.mxu0 %v7765
        %8135 = vmatprep.subr.bf16.mxu0 %v7772
        %8136 = vmatpush1.bf16.msra.mxu0 %v7771
        %8137 = vmatprep.subr.bf16.mxu0 %v7778
        %8138 = vmatpush1.bf16.msra.mxu0 %v7777
        %8139 = vmatprep.subr.bf16.mxu0 %v7784
        %8140 = vmatpush1.bf16.msra.mxu0 %v7783
        %8141 = vmatprep.subr.bf16.mxu0 %v7790
        %8142 = vmatpush1.bf16.msra.mxu0 %v7789
        %8143 = vmatprep.subr.bf16.mxu0 %v7796
        %8144 = vmatpush1.bf16.msra.mxu0 %v7795
        %8145 = vmatprep.subr.bf16.mxu0 %v7802
        %8146 = vmatpush1.bf16.msra.mxu0 %v7801
        %8147 = vmatprep.subr.bf16.mxu0 %v7808
        %8148 = vmatpush1.bf16.msra.mxu0 %v7807
        %8149 = vmatprep.subr.bf16.mxu0 %v7814
        %8150 = vmatpush1.bf16.msra.mxu0 %v7813
        %8151 = vmatprep.subr.bf16.mxu0 %v7820
        %8152 = vmatpush1.bf16.msra.mxu0 %v7819
        %8153 = vmatprep.subr.bf16.mxu0 %v7826
        %8154 = vmatpush1.bf16.msra.mxu0 %v7825
        %8155 = vmatprep.subr.bf16.mxu0 %v7832
        %8156 = vmatpush1.bf16.msra.mxu0 %v7831
        %8157 = vmatprep.mubr.bf16.mxu0 %v3508
        %8158 = vmatmul.mubr.bf16.gmra.mrb[0].mxu0 %v3504
        %v8159 = vpop.f32.mrb[0].mxu0
        %v8160 = vadd.f32 0.0, %v8159
        %v8161 = vpop.f32.mrb[0].mxu0
        %v8162 = vadd.f32 0.0, %v8161
        %v8163 = vpop.f32.mrb[0].mxu0
        %v8164 = vadd.f32 0.0, %v8163
        %v8165 = vpop.f32.mrb[0].mxu0
        %v8166 = vadd.f32 0.0, %v8165
        %8167 = vmatprep.mubr.bf16.mxu0 %v3524
        %8168 = vmatmul.mubr.bf16.gmra.mrb[0].mxu0 %v3520
        %v8169 = vpop.f32.mrb[0].mxu0
        %v8170 = vadd.f32 0.0, %v8169
        %v8171 = vpop.f32.mrb[0].mxu0
        %v8172 = vadd.f32 0.0, %v8171
        %v8173 = vpop.f32.mrb[0].mxu0
        %v8174 = vadd.f32 0.0, %v8173
        %v8175 = vpop.f32.mrb[0].mxu0
        %v8176 = vadd.f32 0.0, %v8175
        %8177 = vmatprep.mubr.bf16.mxu0 %v3540
        %8178 = vmatmul.mubr.bf16.gmra.mrb[0].mxu0 %v3536
        %v8179 = vpop.f32.mrb[0].mxu0
        %v8180 = vadd.f32 0.0, %v8179
        %v8181 = vpop.f32.mrb[0].mxu0
        %v8182 = vadd.f32 0.0, %v8181
        %v8183 = vpop.f32.mrb[0].mxu0
        %v8184 = vadd.f32 0.0, %v8183
        %v8185 = vpop.f32.mrb[0].mxu0
        %v8186 = vadd.f32 0.0, %v8185
        %8187 = vmatprep.mubr.bf16.mxu0 %v3556
        %8188 = vmatmul.mubr.bf16.gmra.mrb[0].mxu0 %v3552
        %v8189 = vpop.f32.mrb[0].mxu0
        %v8190 = vadd.f32 0.0, %v8189
        %v8191 = vpop.f32.mrb[0].mxu0
        %v8192 = vadd.f32 0.0, %v8191
        %v8193 = vpop.f32.mrb[0].mxu0
        %v8194 = vadd.f32 0.0, %v8193
        %v8195 = vpop.f32.mrb[0].mxu0
        %v8196 = vadd.f32 0.0, %v8195
        %8197 = vmatprep.mubr.bf16.mxu0 %v3572
        %8198 = vmatmul.mubr.bf16.gmra.mrb[0].mxu0 %v3568
        %v8199 = vpop.f32.mrb[0].mxu0
        %v8200 = vadd.f32 0.0, %v8199
        %v8201 = vpop.f32.mrb[0].mxu0
        %v8202 = vadd.f32 0.0, %v8201
        %v8203 = vpop.f32.mrb[0].mxu0
        %v8204 = vadd.f32 0.0, %v8203
        %v8205 = vpop.f32.mrb[0].mxu0
        %v8206 = vadd.f32 0.0, %v8205
        %8207 = vdwg.mxu0
        %8208 = vmatprep.subr.bf16.mxu0 %v7838
        %8209 = vmatpush1.bf16.msra.mxu0 %v7837
        %8210 = vmatprep.subr.bf16.mxu0 %v7844
        %8211 = vmatpush1.bf16.msra.mxu0 %v7843
        %8212 = vmatprep.subr.bf16.mxu0 %v7850
        %8213 = vmatpush1.bf16.msra.mxu0 %v7849
        %8214 = vmatprep.subr.bf16.mxu0 %v7856
        %8215 = vmatpush1.bf16.msra.mxu0 %v7855
        %8216 = vmatprep.subr.bf16.mxu0 %v7862
        %8217 = vmatpush1.bf16.msra.mxu0 %v7861
        %8218 = vmatprep.subr.bf16.mxu0 %v7868
        %8219 = vmatpush1.bf16.msra.mxu0 %v7867
        %8220 = vmatprep.subr.bf16.mxu0 %v7874
        %8221 = vmatpush1.bf16.msra.mxu0 %v7873
        %8222 = vmatprep.subr.bf16.mxu0 %v7880
        %8223 = vmatpush1.bf16.msra.mxu0 %v7879
        %8224 = vmatprep.subr.bf16.mxu0 %v7886
        %8225 = vmatpush1.bf16.msra.mxu0 %v7885
        %8226 = vmatprep.subr.bf16.mxu0 %v7892
        %8227 = vmatpush1.bf16.msra.mxu0 %v7891
        %8228 = vmatprep.subr.bf16.mxu0 %v7898
        %8229 = vmatpush1.bf16.msra.mxu0 %v7897
        %8230 = vmatprep.subr.bf16.mxu0 %v7904
        %8231 = vmatpush1.bf16.msra.mxu0 %v7903
        %8232 = vmatprep.subr.bf16.mxu0 %v7910
        %8233 = vmatpush1.bf16.msra.mxu0 %v7909
        %8234 = vmatprep.subr.bf16.mxu0 %v7916
        %8235 = vmatpush1.bf16.msra.mxu0 %v7915
        %8236 = vmatprep.subr.bf16.mxu0 %v7922
        %8237 = vmatpush1.bf16.msra.mxu0 %v7921
        %8238 = vmatprep.subr.bf16.mxu0 %v7928
        %8239 = vmatpush1.bf16.msra.mxu0 %v7927
        %8240 = vmatprep.mubr.bf16.mxu0 %v3516
        %8241 = vmatmul.mubr.bf16.gmra.mrb[0].mxu0 %v3512
        %v8242 = vpop.f32.mrb[0].mxu0
        %v8243 = vadd.f32 %v8160, %v8242
        %v8244 = vpop.f32.mrb[0].mxu0
        %v8245 = vadd.f32 %v8162, %v8244
        %v8246 = vpop.f32.mrb[0].mxu0
        %v8247 = vadd.f32 %v8164, %v8246
        %v8248 = vpop.f32.mrb[0].mxu0
        %v8249 = vadd.f32 %v8166, %v8248
        %8250 = vmatprep.mubr.bf16.mxu0 %v3532
        %8251 = vmatmul.mubr.bf16.gmra.mrb[0].mxu0 %v3528
        %v8252 = vpop.f32.mrb[0].mxu0
        %v8253 = vadd.f32 %v8170, %v8252
        %v8254 = vpop.f32.mrb[0].mxu0
        %v8255 = vadd.f32 %v8172, %v8254
        %v8256 = vpop.f32.mrb[0].mxu0
        %v8257 = vadd.f32 %v8174, %v8256
        %v8258 = vpop.f32.mrb[0].mxu0
        %v8259 = vadd.f32 %v8176, %v8258
        %8260 = vmatprep.mubr.bf16.mxu0 %v3548
        %8261 = vmatmul.mubr.bf16.gmra.mrb[0].mxu0 %v3544
        %v8262 = vpop.f32.mrb[0].mxu0
        %v8263 = vadd.f32 %v8180, %v8262
        %v8264 = vpop.f32.mrb[0].mxu0
        %v8265 = vadd.f32 %v8182, %v8264
        %v8266 = vpop.f32.mrb[0].mxu0
        %v8267 = vadd.f32 %v8184, %v8266
        %v8268 = vpop.f32.mrb[0].mxu0
        %v8269 = vadd.f32 %v8186, %v8268
        %8270 = vmatprep.mubr.bf16.mxu0 %v3564
        %8271 = vmatmul.mubr.bf16.gmra.mrb[0].mxu0 %v3560
        %v8272 = vpop.f32.mrb[0].mxu0
        %v8273 = vadd.f32 %v8190, %v8272
        %v8274 = vpop.f32.mrb[0].mxu0
        %v8275 = vadd.f32 %v8192, %v8274
        %v8276 = vpop.f32.mrb[0].mxu0
        %v8277 = vadd.f32 %v8194, %v8276
        %v8278 = vpop.f32.mrb[0].mxu0
        %v8279 = vadd.f32 %v8196, %v8278
        %8280 = vmatprep.mubr.bf16.mxu0 %v3580
        %8281 = vmatmul.mubr.bf16.gmra.mrb[0].mxu0 %v3576
        %v8282 = vpop.f32.mrb[0].mxu0
        %v8283 = vadd.f32 %v8200, %v8282
        %v8284 = vpop.f32.mrb[0].mxu0
        %v8285 = vadd.f32 %v8202, %v8284
        %v8286 = vpop.f32.mrb[0].mxu0
        %v8287 = vadd.f32 %v8204, %v8286
        %v8288 = vpop.f32.mrb[0].mxu0
        %v8289 = vadd.f32 %v8206, %v8288
        %8290 = vdwg.mxu0
        %8291 = vmatprep.subr.bf16.mxu0 %v7744
        %8292 = vmatpush1.bf16.msra.mxu0 %v7743
        %8293 = vmatprep.subr.bf16.mxu0 %v7750
        %8294 = vmatpush1.bf16.msra.mxu0 %v7749
        %8295 = vmatprep.subr.bf16.mxu0 %v7756
        %8296 = vmatpush1.bf16.msra.mxu0 %v7755
        %8297 = vmatprep.subr.bf16.mxu0 %v7762
        %8298 = vmatpush1.bf16.msra.mxu0 %v7761
        %8299 = vmatprep.subr.bf16.mxu0 %v7768
        %8300 = vmatpush1.bf16.msra.mxu0 %v7767
        %8301 = vmatprep.subr.bf16.mxu0 %v7774
        %8302 = vmatpush1.bf16.msra.mxu0 %v7773
        %8303 = vmatprep.subr.bf16.mxu0 %v7780
        %8304 = vmatpush1.bf16.msra.mxu0 %v7779
        %8305 = vmatprep.subr.bf16.mxu0 %v7786
        %8306 = vmatpush1.bf16.msra.mxu0 %v7785
        %8307 = vmatprep.subr.bf16.mxu0 %v7792
        %8308 = vmatpush1.bf16.msra.mxu0 %v7791
        %8309 = vmatprep.subr.bf16.mxu0 %v7798
        %8310 = vmatpush1.bf16.msra.mxu0 %v7797
        %8311 = vmatprep.subr.bf16.mxu0 %v7804
        %8312 = vmatpush1.bf16.msra.mxu0 %v7803
        %8313 = vmatprep.subr.bf16.mxu0 %v7810
        %8314 = vmatpush1.bf16.msra.mxu0 %v7809
        %8315 = vmatprep.subr.bf16.mxu0 %v7816
        %8316 = vmatpush1.bf16.msra.mxu0 %v7815
        %8317 = vmatprep.subr.bf16.mxu0 %v7822
        %8318 = vmatpush1.bf16.msra.mxu0 %v7821
        %8319 = vmatprep.subr.bf16.mxu0 %v7828
        %8320 = vmatpush1.bf16.msra.mxu0 %v7827
        %8321 = vmatprep.subr.bf16.mxu0 %v7834
        %8322 = vmatpush1.bf16.msra.mxu0 %v7833
        %8323 = vmatprep.mubr.bf16.mxu0 %v3508
        %8324 = vmatmul.mubr.bf16.gmra.mrb[0].mxu0 %v3504
        %v8325 = vpop.f32.mrb[0].mxu0
        %v8326 = vadd.f32 0.0, %v8325
        %v8327 = vpop.f32.mrb[0].mxu0
        %v8328 = vadd.f32 0.0, %v8327
        %v8329 = vpop.f32.mrb[0].mxu0
        %v8330 = vadd.f32 0.0, %v8329
        %v8331 = vpop.f32.mrb[0].mxu0
        %v8332 = vadd.f32 0.0, %v8331
        %8333 = vmatprep.mubr.bf16.mxu0 %v3524
        %8334 = vmatmul.mubr.bf16.gmra.mrb[0].mxu0 %v3520
        %v8335 = vpop.f32.mrb[0].mxu0
        %v8336 = vadd.f32 0.0, %v8335
        %v8337 = vpop.f32.mrb[0].mxu0
        %v8338 = vadd.f32 0.0, %v8337
        %v8339 = vpop.f32.mrb[0].mxu0
        %v8340 = vadd.f32 0.0, %v8339
        %v8341 = vpop.f32.mrb[0].mxu0
        %v8342 = vadd.f32 0.0, %v8341
        %8343 = vmatprep.mubr.bf16.mxu0 %v3540
        %8344 = vmatmul.mubr.bf16.gmra.mrb[0].mxu0 %v3536
        %v8345 = vpop.f32.mrb[0].mxu0
        %v8346 = vadd.f32 0.0, %v8345
        %v8347 = vpop.f32.mrb[0].mxu0
        %v8348 = vadd.f32 0.0, %v8347
        %v8349 = vpop.f32.mrb[0].mxu0
        %v8350 = vadd.f32 0.0, %v8349
        %v8351 = vpop.f32.mrb[0].mxu0
        %v8352 = vadd.f32 0.0, %v8351
        %8353 = vmatprep.mubr.bf16.mxu0 %v3556
        %8354 = vmatmul.mubr.bf16.gmra.mrb[0].mxu0 %v3552
        %v8355 = vpop.f32.mrb[0].mxu0
        %v8356 = vadd.f32 0.0, %v8355
        %v8357 = vpop.f32.mrb[0].mxu0
        %v8358 = vadd.f32 0.0, %v8357
        %v8359 = vpop.f32.mrb[0].mxu0
        %v8360 = vadd.f32 0.0, %v8359
        %v8361 = vpop.f32.mrb[0].mxu0
        %v8362 = vadd.f32 0.0, %v8361
        %8363 = vmatprep.mubr.bf16.mxu0 %v3572
        %8364 = vmatmul.mubr.bf16.gmra.mrb[0].mxu0 %v3568
        %v8365 = vpop.f32.mrb[0].mxu0
        %v8366 = vadd.f32 0.0, %v8365
        %v8367 = vpop.f32.mrb[0].mxu0
        %v8368 = vadd.f32 0.0, %v8367
        %v8369 = vpop.f32.mrb[0].mxu0
        %v8370 = vadd.f32 0.0, %v8369
        %v8371 = vpop.f32.mrb[0].mxu0
        %v8372 = vadd.f32 0.0, %v8371
        %8373 = vdwg.mxu0
        %8374 = vmatprep.subr.bf16.mxu0 %v7840
        %8375 = vmatpush1.bf16.msra.mxu0 %v7839
        %8376 = vmatprep.subr.bf16.mxu0 %v7846
        %8377 = vmatpush1.bf16.msra.mxu0 %v7845
        %8378 = vmatprep.subr.bf16.mxu0 %v7852
        %8379 = vmatpush1.bf16.msra.mxu0 %v7851
        %8380 = vmatprep.subr.bf16.mxu0 %v7858
        %8381 = vmatpush1.bf16.msra.mxu0 %v7857
        %8382 = vmatprep.subr.bf16.mxu0 %v7864
        %8383 = vmatpush1.bf16.msra.mxu0 %v7863
        %8384 = vmatprep.subr.bf16.mxu0 %v7870
        %8385 = vmatpush1.bf16.msra.mxu0 %v7869
        %8386 = vmatprep.subr.bf16.mxu0 %v7876
        %8387 = vmatpush1.bf16.msra.mxu0 %v7875
        %8388 = vmatprep.subr.bf16.mxu0 %v7882
        %8389 = vmatpush1.bf16.msra.mxu0 %v7881
        %8390 = vmatprep.subr.bf16.mxu0 %v7888
        %8391 = vmatpush1.bf16.msra.mxu0 %v7887
        %8392 = vmatprep.subr.bf16.mxu0 %v7894
        %8393 = vmatpush1.bf16.msra.mxu0 %v7893
        %8394 = vmatprep.subr.bf16.mxu0 %v7900
        %8395 = vmatpush1.bf16.msra.mxu0 %v7899
        %8396 = vmatprep.subr.bf16.mxu0 %v7906
        %8397 = vmatpush1.bf16.msra.mxu0 %v7905
        %8398 = vmatprep.subr.bf16.mxu0 %v7912
        %8399 = vmatpush1.bf16.msra.mxu0 %v7911
        %8400 = vmatprep.subr.bf16.mxu0 %v7918
        %8401 = vmatpush1.bf16.msra.mxu0 %v7917
        %8402 = vmatprep.subr.bf16.mxu0 %v7924
        %8403 = vmatpush1.bf16.msra.mxu0 %v7923
        %8404 = vmatprep.subr.bf16.mxu0 %v7930
        %8405 = vmatpush1.bf16.msra.mxu0 %v7929
        %8406 = vmatprep.mubr.bf16.mxu0 %v3516
        %8407 = vmatmul.mubr.bf16.gmra.mrb[0].mxu0 %v3512
        %v8408 = vpop.f32.mrb[0].mxu0
        %v8409 = vadd.f32 %v8326, %v8408
        %v8410 = vpop.f32.mrb[0].mxu0
        %v8411 = vadd.f32 %v8328, %v8410
        %v8412 = vpop.f32.mrb[0].mxu0
        %v8413 = vadd.f32 %v8330, %v8412
        %v8414 = vpop.f32.mrb[0].mxu0
        %v8415 = vadd.f32 %v8332, %v8414
        %8416 = vmatprep.mubr.bf16.mxu0 %v3532
        %8417 = vmatmul.mubr.bf16.gmra.mrb[0].mxu0 %v3528
        %v8418 = vpop.f32.mrb[0].mxu0
        %v8419 = vadd.f32 %v8336, %v8418
        %v8420 = vpop.f32.mrb[0].mxu0
        %v8421 = vadd.f32 %v8338, %v8420
        %v8422 = vpop.f32.mrb[0].mxu0
        %v8423 = vadd.f32 %v8340, %v8422
        %v8424 = vpop.f32.mrb[0].mxu0
        %v8425 = vadd.f32 %v8342, %v8424
        %8426 = vmatprep.mubr.bf16.mxu0 %v3548
        %8427 = vmatmul.mubr.bf16.gmra.mrb[0].mxu0 %v3544
        %v8428 = vpop.f32.mrb[0].mxu0
        %v8429 = vadd.f32 %v8346, %v8428
        %v8430 = vpop.f32.mrb[0].mxu0
        %v8431 = vadd.f32 %v8348, %v8430
        %v8432 = vpop.f32.mrb[0].mxu0
        %v8433 = vadd.f32 %v8350, %v8432
        %v8434 = vpop.f32.mrb[0].mxu0
        %v8435 = vadd.f32 %v8352, %v8434
        %8436 = vmatprep.mubr.bf16.mxu0 %v3564
        %8437 = vmatmul.mubr.bf16.gmra.mrb[0].mxu0 %v3560
        %v8438 = vpop.f32.mrb[0].mxu0
        %v8439 = vadd.f32 %v8356, %v8438
        %v8440 = vpop.f32.mrb[0].mxu0
        %v8441 = vadd.f32 %v8358, %v8440
        %v8442 = vpop.f32.mrb[0].mxu0
        %v8443 = vadd.f32 %v8360, %v8442
        %v8444 = vpop.f32.mrb[0].mxu0
        %v8445 = vadd.f32 %v8362, %v8444
        %8446 = vmatprep.mubr.bf16.mxu0 %v3580
        %8447 = vmatmul.mubr.bf16.gmra.mrb[0].mxu0 %v3576
        %v8448 = vpop.f32.mrb[0].mxu0
        %v8449 = vadd.f32 %v8366, %v8448
        %v8450 = vpop.f32.mrb[0].mxu0
        %v8451 = vadd.f32 %v8368, %v8450
        %v8452 = vpop.f32.mrb[0].mxu0
        %v8453 = vadd.f32 %v8370, %v8452
        %v8454 = vpop.f32.mrb[0].mxu0
        %v8455 = vadd.f32 %v8372, %v8454
        %8456 = vdwg.mxu0
        %8457 = vmatprep.subr.bf16.mxu0 %v7746
        %8458 = vmatpush1.bf16.msra.mxu0 %v7745
        %8459 = vmatprep.subr.bf16.mxu0 %v7752
        %8460 = vmatpush1.bf16.msra.mxu0 %v7751
        %8461 = vmatprep.subr.bf16.mxu0 %v7758
        %8462 = vmatpush1.bf16.msra.mxu0 %v7757
        %8463 = vmatprep.subr.bf16.mxu0 %v7764
        %8464 = vmatpush1.bf16.msra.mxu0 %v7763
        %8465 = vmatprep.subr.bf16.mxu0 %v7770
        %8466 = vmatpush1.bf16.msra.mxu0 %v7769
        %8467 = vmatprep.subr.bf16.mxu0 %v7776
        %8468 = vmatpush1.bf16.msra.mxu0 %v7775
        %8469 = vmatprep.subr.bf16.mxu0 %v7782
        %8470 = vmatpush1.bf16.msra.mxu0 %v7781
        %8471 = vmatprep.subr.bf16.mxu0 %v7788
        %8472 = vmatpush1.bf16.msra.mxu0 %v7787
        %8473 = vmatprep.subr.bf16.mxu0 %v7794
        %8474 = vmatpush1.bf16.msra.mxu0 %v7793
        %8475 = vmatprep.subr.bf16.mxu0 %v7800
        %8476 = vmatpush1.bf16.msra.mxu0 %v7799
        %8477 = vmatprep.subr.bf16.mxu0 %v7806
        %8478 = vmatpush1.bf16.msra.mxu0 %v7805
        %8479 = vmatprep.subr.bf16.mxu0 %v7812
        %8480 = vmatpush1.bf16.msra.mxu0 %v7811
        %8481 = vmatprep.subr.bf16.mxu0 %v7818
        %8482 = vmatpush1.bf16.msra.mxu0 %v7817
        %8483 = vmatprep.subr.bf16.mxu0 %v7824
        %8484 = vmatpush1.bf16.msra.mxu0 %v7823
        %8485 = vmatprep.subr.bf16.mxu0 %v7830
        %8486 = vmatpush1.bf16.msra.mxu0 %v7829
        %8487 = vmatprep.subr.bf16.mxu0 %v7836
        %8488 = vmatpush1.bf16.msra.mxu0 %v7835
        %8489 = vmatprep.mubr.bf16.mxu0 %v3508
        %8490 = vmatmul.mubr.bf16.gmra.mrb[0].mxu0 %v3504
        %v8491 = vpop.f32.mrb[0].mxu0
        %v8492 = vadd.f32 0.0, %v8491
        %v8493 = vpop.f32.mrb[0].mxu0
        %v8494 = vadd.f32 0.0, %v8493
        %v8495 = vpop.f32.mrb[0].mxu0
        %v8496 = vadd.f32 0.0, %v8495
        %v8497 = vpop.f32.mrb[0].mxu0
        %v8498 = vadd.f32 0.0, %v8497
        %8499 = vmatprep.mubr.bf16.mxu0 %v3524
        %8500 = vmatmul.mubr.bf16.gmra.mrb[0].mxu0 %v3520
        %v8501 = vpop.f32.mrb[0].mxu0
        %v8502 = vadd.f32 0.0, %v8501
        %v8503 = vpop.f32.mrb[0].mxu0
        %v8504 = vadd.f32 0.0, %v8503
        %v8505 = vpop.f32.mrb[0].mxu0
        %v8506 = vadd.f32 0.0, %v8505
        %v8507 = vpop.f32.mrb[0].mxu0
        %v8508 = vadd.f32 0.0, %v8507
        %8509 = vmatprep.mubr.bf16.mxu0 %v3540
        %8510 = vmatmul.mubr.bf16.gmra.mrb[0].mxu0 %v3536
        %v8511 = vpop.f32.mrb[0].mxu0
        %v8512 = vadd.f32 0.0, %v8511
        %v8513 = vpop.f32.mrb[0].mxu0
        %v8514 = vadd.f32 0.0, %v8513
        %v8515 = vpop.f32.mrb[0].mxu0
        %v8516 = vadd.f32 0.0, %v8515
        %v8517 = vpop.f32.mrb[0].mxu0
        %v8518 = vadd.f32 0.0, %v8517
        %8519 = vmatprep.mubr.bf16.mxu0 %v3556
        %8520 = vmatmul.mubr.bf16.gmra.mrb[0].mxu0 %v3552
        %v8521 = vpop.f32.mrb[0].mxu0
        %v8522 = vadd.f32 0.0, %v8521
        %v8523 = vpop.f32.mrb[0].mxu0
        %v8524 = vadd.f32 0.0, %v8523
        %v8525 = vpop.f32.mrb[0].mxu0
        %v8526 = vadd.f32 0.0, %v8525
        %v8527 = vpop.f32.mrb[0].mxu0
        %v8528 = vadd.f32 0.0, %v8527
        %8529 = vmatprep.mubr.bf16.mxu0 %v3572
        %8530 = vmatmul.mubr.bf16.gmra.mrb[0].mxu0 %v3568
        %v8531 = vpop.f32.mrb[0].mxu0
        %v8532 = vadd.f32 0.0, %v8531
        %v8533 = vpop.f32.mrb[0].mxu0
        %v8534 = vadd.f32 0.0, %v8533
        %v8535 = vpop.f32.mrb[0].mxu0
        %v8536 = vadd.f32 0.0, %v8535
        %v8537 = vpop.f32.mrb[0].mxu0
        %v8538 = vadd.f32 0.0, %v8537
        %8539 = vdwg.mxu0
        %8540 = vmatprep.subr.bf16.mxu0 %v7842
        %8541 = vmatpush1.bf16.msra.mxu0 %v7841
        %8542 = vmatprep.subr.bf16.mxu0 %v7848
        %8543 = vmatpush1.bf16.msra.mxu0 %v7847
        %8544 = vmatprep.subr.bf16.mxu0 %v7854
        %8545 = vmatpush1.bf16.msra.mxu0 %v7853
        %8546 = vmatprep.subr.bf16.mxu0 %v7860
        %8547 = vmatpush1.bf16.msra.mxu0 %v7859
        %8548 = vmatprep.subr.bf16.mxu0 %v7866
        %8549 = vmatpush1.bf16.msra.mxu0 %v7865
        %8550 = vmatprep.subr.bf16.mxu0 %v7872
        %8551 = vmatpush1.bf16.msra.mxu0 %v7871
        %8552 = vmatprep.subr.bf16.mxu0 %v7878
        %8553 = vmatpush1.bf16.msra.mxu0 %v7877
        %8554 = vmatprep.subr.bf16.mxu0 %v7884
        %8555 = vmatpush1.bf16.msra.mxu0 %v7883
        %8556 = vmatprep.subr.bf16.mxu0 %v7890
        %8557 = vmatpush1.bf16.msra.mxu0 %v7889
        %8558 = vmatprep.subr.bf16.mxu0 %v7896
        %8559 = vmatpush1.bf16.msra.mxu0 %v7895
        %8560 = vmatprep.subr.bf16.mxu0 %v7902
        %8561 = vmatpush1.bf16.msra.mxu0 %v7901
        %8562 = vmatprep.subr.bf16.mxu0 %v7908
        %8563 = vmatpush1.bf16.msra.mxu0 %v7907
        %8564 = vmatprep.subr.bf16.mxu0 %v7914
        %8565 = vmatpush1.bf16.msra.mxu0 %v7913
        %8566 = vmatprep.subr.bf16.mxu0 %v7920
        %8567 = vmatpush1.bf16.msra.mxu0 %v7919
        %8568 = vmatprep.subr.bf16.mxu0 %v7926
        %8569 = vmatpush1.bf16.msra.mxu0 %v7925
        %8570 = vmatprep.subr.bf16.mxu0 %v7932
        %8571 = vmatpush1.bf16.msra.mxu0 %v7931
        %8572 = vmatprep.mubr.bf16.mxu0 %v3516
        %8573 = vmatmul.mubr.bf16.gmra.mrb[0].mxu0 %v3512
        %v8574 = vpop.f32.mrb[0].mxu0
        %v8575 = vadd.f32 %v8492, %v8574
        %v8576 = vpop.f32.mrb[0].mxu0
        %v8577 = vadd.f32 %v8494, %v8576
        %v8578 = vpop.f32.mrb[0].mxu0
        %v8579 = vadd.f32 %v8496, %v8578
        %v8580 = vpop.f32.mrb[0].mxu0
        %v8581 = vadd.f32 %v8498, %v8580
        %8582 = vmatprep.mubr.bf16.mxu0 %v3532
        %8583 = vmatmul.mubr.bf16.gmra.mrb[0].mxu0 %v3528
        %v8584 = vpop.f32.mrb[0].mxu0
        %v8585 = vadd.f32 %v8502, %v8584
        %v8586 = vpop.f32.mrb[0].mxu0
        %v8587 = vadd.f32 %v8504, %v8586
        %v8588 = vpop.f32.mrb[0].mxu0
        %v8589 = vadd.f32 %v8506, %v8588
        %v8590 = vpop.f32.mrb[0].mxu0
        %v8591 = vadd.f32 %v8508, %v8590
        %8592 = vmatprep.mubr.bf16.mxu0 %v3548
        %8593 = vmatmul.mubr.bf16.gmra.mrb[0].mxu0 %v3544
        %v8594 = vpop.f32.mrb[0].mxu0
        %v8595 = vadd.f32 %v8512, %v8594
        %v8596 = vpop.f32.mrb[0].mxu0
        %v8597 = vadd.f32 %v8514, %v8596
        %v8598 = vpop.f32.mrb[0].mxu0
        %v8599 = vadd.f32 %v8516, %v8598
        %v8600 = vpop.f32.mrb[0].mxu0
        %v8601 = vadd.f32 %v8518, %v8600
        %8602 = vmatprep.mubr.bf16.mxu0 %v3564
        %8603 = vmatmul.mubr.bf16.gmra.mrb[0].mxu0 %v3560
        %v8604 = vpop.f32.mrb[0].mxu0
        %v8605 = vadd.f32 %v8522, %v8604
        %v8606 = vpop.f32.mrb[0].mxu0
        %v8607 = vadd.f32 %v8524, %v8606
        %v8608 = vpop.f32.mrb[0].mxu0
        %v8609 = vadd.f32 %v8526, %v8608
        %v8610 = vpop.f32.mrb[0].mxu0
        %v8611 = vadd.f32 %v8528, %v8610
        %8612 = vmatprep.mubr.bf16.mxu0 %v3580
        %8613 = vmatmul.mubr.bf16.gmra.mrb[0].mxu0 %v3576
        %v8614 = vpop.f32.mrb[0].mxu0
        %v8615 = vadd.f32 %v8532, %v8614
        %v8616 = vpop.f32.mrb[0].mxu0
        %v8617 = vadd.f32 %v8534, %v8616
        %v8618 = vpop.f32.mrb[0].mxu0
        %v8619 = vadd.f32 %v8536, %v8618
        %v8620 = vpop.f32.mrb[0].mxu0
        %v8621 = vadd.f32 %v8538, %v8620
        %8622 = vdwg.mxu0
        %v8623 = vadd.f32 %v6592, %v8243
        %v8624 = vadd.f32 %v6594, %v8245
        %v8625 = vadd.f32 %v6758, %v8409
        %v8626 = vadd.f32 %v6760, %v8411
        %v8627 = vadd.f32 %v6924, %v8575
        %v8628 = vadd.f32 %v6926, %v8577
        %v8629 = vadd.f32 %v6596, %v8247
        %v8630 = vadd.f32 %v6598, %v8249
        %v8631 = vadd.f32 %v6762, %v8413
        %v8632 = vadd.f32 %v6764, %v8415
        %v8633 = vadd.f32 %v6928, %v8579
        %v8634 = vadd.f32 %v6930, %v8581
        %v8635 = vadd.f32 %v6602, %v8253
        %v8636 = vadd.f32 %v6604, %v8255
        %v8637 = vadd.f32 %v6768, %v8419
        %v8638 = vadd.f32 %v6770, %v8421
        %v8639 = vadd.f32 %v6934, %v8585
        %v8640 = vadd.f32 %v6936, %v8587
        %v8641 = vadd.f32 %v6606, %v8257
        %v8642 = vadd.f32 %v6608, %v8259
        %v8643 = vadd.f32 %v6772, %v8423
        %v8644 = vadd.f32 %v6774, %v8425
        %v8645 = vadd.f32 %v6938, %v8589
        %v8646 = vadd.f32 %v6940, %v8591
        %v8647 = vadd.f32 %v6612, %v8263
        %v8648 = vadd.f32 %v6614, %v8265
        %v8649 = vadd.f32 %v6778, %v8429
        %v8650 = vadd.f32 %v6780, %v8431
        %v8651 = vadd.f32 %v6944, %v8595
        %v8652 = vadd.f32 %v6946, %v8597
        %v8653 = vadd.f32 %v6616, %v8267
        %v8654 = vadd.f32 %v6618, %v8269
        %v8655 = vadd.f32 %v6782, %v8433
        %v8656 = vadd.f32 %v6784, %v8435
        %v8657 = vadd.f32 %v6948, %v8599
        %v8658 = vadd.f32 %v6950, %v8601
        %v8659 = vadd.f32 %v6622, %v8273
        %v8660 = vadd.f32 %v6624, %v8275
        %v8661 = vadd.f32 %v6788, %v8439
        %v8662 = vadd.f32 %v6790, %v8441
        %v8663 = vadd.f32 %v6954, %v8605
        %v8664 = vadd.f32 %v6956, %v8607
        %v8665 = vadd.f32 %v6626, %v8277
        %v8666 = vadd.f32 %v6628, %v8279
        %v8667 = vadd.f32 %v6792, %v8443
        %v8668 = vadd.f32 %v6794, %v8445
        %v8669 = vadd.f32 %v6958, %v8609
        %v8670 = vadd.f32 %v6960, %v8611
        %v8671 = vadd.f32 %v6632, %v8283
        %v8672 = vadd.f32 %v6634, %v8285
        %v8673 = vadd.f32 %v6798, %v8449
        %v8674 = vadd.f32 %v6800, %v8451
        %v8675 = vadd.f32 %v6964, %v8615
        %v8676 = vadd.f32 %v6966, %v8617
        %v8677 = vadd.f32 %v6636, %v8287
        %v8678 = vadd.f32 %v6638, %v8289
        %v8679 = vadd.f32 %v6802, %v8453
        %v8680 = vadd.f32 %v6804, %v8455
        %v8681 = vadd.f32 %v6968, %v8619
        %v8682 = vadd.f32 %v6970, %v8621
        %v8683 = vld [vmem:[#allocation8] sm:$0x7]
        %v8684 = vmax.f32 %v8623, %v8626
        %v8685 = vmax.f32 %v8624, %v8627
        %v8686 = vmax.f32 %v8625, %v8628
        %v8687 = vmax.f32 %v8629, %v8632
        %v8688 = vmax.f32 %v8630, %v8633
        %v8689 = vmax.f32 %v8631, %v8634
        %v8690 = vmax.f32 %v8684, %v8687
        %v8691 = vmax.f32 %v8685, %v8688
        %v8692 = vmax.f32 %v8686, %v8689
        %v8694 = vlaneseq
        %v8695 = vshrl.u32 %v8694, 7
        %v8696 = vsub.s32 0, %v8695
        %v8697 = vrot.slane %v8683, %v8696
        %v8698 = vlaneseq
        %v8699 = vshrl.u32 %v8698, 7
        %v8700 = vsub.s32 1, %v8699
        %v8701 = vrot.slane %v8683, %v8700
        %v8702 = vlaneseq
        %v8703 = vshrl.u32 %v8702, 7
        %v8704 = vsub.s32 2, %v8703
        %v8705 = vrot.slane %v8683, %v8704
        %v8709 = vadd.f32 %v8690, %v8697
        %v8710 = vadd.f32 %v8691, %v8701
        %v8711 = vadd.f32 %v8692, %v8705
        %v8712 = vmax.f32 %v8709, 0.0
        %v8713 = vmax.f32 %v8710, 0.0
        %v8714 = vmax.f32 %v8711, 0.0
        %v8715 = vpack.c.bf16 %v8712, %v8712
        %v8716 = vpack.c.bf16 %v8713, %v8713
        %v8717 = vpack.c.bf16 %v8714, %v8714
        %v8718 = vmax.f32 %v8635, %v8638
        %v8719 = vmax.f32 %v8636, %v8639
        %v8720 = vmax.f32 %v8637, %v8640
        %v8721 = vmax.f32 %v8641, %v8644
        %v8722 = vmax.f32 %v8642, %v8645
        %v8723 = vmax.f32 %v8643, %v8646
        %v8724 = vmax.f32 %v8718, %v8721
        %v8725 = vmax.f32 %v8719, %v8722
        %v8726 = vmax.f32 %v8720, %v8723
        %v8727 = vadd.f32 %v8724, %v8697
        %v8728 = vadd.f32 %v8725, %v8701
        %v8729 = vadd.f32 %v8726, %v8705
        %v8730 = vmax.f32 %v8727, 0.0
        %v8731 = vmax.f32 %v8728, 0.0
        %v8732 = vmax.f32 %v8729, 0.0
        %v8733 = vpack.c.bf16 %v8730, %v8730
        %v8734 = vpack.c.bf16 %v8731, %v8731
        %v8735 = vpack.c.bf16 %v8732, %v8732
        %v8736 = vmax.f32 %v8647, %v8650
        %v8737 = vmax.f32 %v8648, %v8651
        %v8738 = vmax.f32 %v8649, %v8652
        %v8739 = vmax.f32 %v8653, %v8656
        %v8740 = vmax.f32 %v8654, %v8657
        %v8741 = vmax.f32 %v8655, %v8658
        %v8742 = vmax.f32 %v8736, %v8739
        %v8743 = vmax.f32 %v8737, %v8740
        %v8744 = vmax.f32 %v8738, %v8741
        %v8745 = vadd.f32 %v8742, %v8697
        %v8746 = vadd.f32 %v8743, %v8701
        %v8747 = vadd.f32 %v8744, %v8705
        %v8748 = vmax.f32 %v8745, 0.0
        %v8749 = vmax.f32 %v8746, 0.0
        %v8750 = vmax.f32 %v8747, 0.0
        %v8751 = vpack.c.bf16 %v8748, %v8748
        %v8752 = vpack.c.bf16 %v8749, %v8749
        %v8753 = vpack.c.bf16 %v8750, %v8750
        %v8754 = vmax.f32 %v8659, %v8662
        %v8755 = vmax.f32 %v8660, %v8663
        %v8756 = vmax.f32 %v8661, %v8664
        %v8757 = vmax.f32 %v8665, %v8668
        %v8758 = vmax.f32 %v8666, %v8669
        %v8759 = vmax.f32 %v8667, %v8670
        %v8760 = vmax.f32 %v8754, %v8757
        %v8761 = vmax.f32 %v8755, %v8758
        %v8762 = vmax.f32 %v8756, %v8759
        %v8763 = vadd.f32 %v8760, %v8697
        %v8764 = vadd.f32 %v8761, %v8701
        %v8765 = vadd.f32 %v8762, %v8705
        %v8766 = vmax.f32 %v8763, 0.0
        %v8767 = vmax.f32 %v8764, 0.0
        %v8768 = vmax.f32 %v8765, 0.0
        %v8769 = vpack.c.bf16 %v8766, %v8766
        %v8770 = vpack.c.bf16 %v8767, %v8767
        %v8771 = vpack.c.bf16 %v8768, %v8768
        %v8772 = vmax.f32 %v8671, %v8674
        %v8773 = vmax.f32 %v8672, %v8675
        %v8774 = vmax.f32 %v8673, %v8676
        %v8775 = vmax.f32 %v8677, %v8680
        %v8776 = vmax.f32 %v8678, %v8681
        %v8777 = vmax.f32 %v8679, %v8682
        %v8778 = vmax.f32 %v8772, %v8775
        %v8779 = vmax.f32 %v8773, %v8776
        %v8780 = vmax.f32 %v8774, %v8777
        %v8781 = vadd.f32 %v8778, %v8697
        %v8782 = vadd.f32 %v8779, %v8701
        %v8783 = vadd.f32 %v8780, %v8705
        %v8784 = vmax.f32 %v8781, 0.0
        %v8785 = vmax.f32 %v8782, 0.0
        %v8786 = vmax.f32 %v8783, 0.0
        %v8787 = vpack.c.bf16 %v8784, %v8784
        %v8788 = vpack.c.bf16 %v8785, %v8785
        %v8789 = vpack.c.bf16 %v8786, %v8786
        %v8793 = vrot.slane %v8733, 4
        %v8794 = vrot.slane %v8734, 4
        %v8795 = vrot.slane %v8735, 4
        %v8799 = vrot.slane %v8769, 4
        %v8800 = vrot.slane %v8770, 4
        %v8801 = vrot.slane %v8771, 4
        %v8804 = vsel %vm3485, %v8715, %v8793
        %v8808 = vsel %vm3485, %v8716, %v8794
        %v8812 = vsel %vm3485, %v8717, %v8795
        %v8816 = vsel %vm3485, %v8751, %v8799
        %v8820 = vsel %vm3485, %v8752, %v8800
        %v8824 = vsel %vm3485, %v8753, %v8801
        %v8826 = vld [vmem:[%s5] sm:$0xff]
        %v8827 = vld [vmem:[%s5 + $0x8] sm:$0xff]
        %v8828 = vld [vmem:[%s5 + $0x10] sm:$0xff]
        %v8829 = vld [vmem:[%s5 + $0x18] sm:$0xff]
        %v8830 = vld [vmem:[%s5 + $0x20] sm:$0xff]
        %v8831 = vld [vmem:[%s5 + $0x28] sm:$0xff]
        %v8832 = vld [vmem:[%s5 + $0x30] sm:$0xff]
        %v8833 = vld [vmem:[%s5 + $0x38] sm:$0xff]
        %v8834 = vld [vmem:[%s5 + $0x40] sm:$0xff]
        %v8835 = vld [vmem:[%s5 + $0x48] sm:$0xff]
        %v8836 = vld [vmem:[%s5 + $0x50] sm:$0xff]
        %v8837 = vld [vmem:[%s5 + $0x58] sm:$0xff]
        %v8838 = vld [vmem:[%s5 + $0x60] sm:$0xff]
        %v8839 = vld [vmem:[%s5 + $0x68] sm:$0xff]
        %v8840 = vld [vmem:[%s5 + $0x70] sm:$0xff]
        %v8841 = vld [vmem:[%s5 + $0x78] sm:$0xff]
        %v8842 = vld [vmem:[%s5 + $0x80] sm:$0xff]
        %v8843 = vld [vmem:[%s5 + $0x88] sm:$0xff]
        %v8844 = vld [vmem:[%s5 + $0x90] sm:$0xff]
        %v8845 = vld [vmem:[%s5 + $0x98] sm:$0xff]
        %v8846 = vld [vmem:[%s5 + $0xa0] sm:$0xff]
        %v8847 = vld [vmem:[%s5 + $0xa8] sm:$0xff]
        %v8848 = vld [vmem:[%s5 + $0xb0] sm:$0xff]
        %v8849 = vld [vmem:[%s5 + $0xb8] sm:$0xff]
        %v8850 = vld [vmem:[%s5 + $0xc0] sm:$0xff]
        %v8851 = vld [vmem:[%s5 + $0xc8] sm:$0xff]
        %v8852 = vld [vmem:[%s5 + $0xd0] sm:$0xff]
        %v8853 = vld [vmem:[%s5 + $0xd8] sm:$0xff]
        %v8854 = vld [vmem:[%s5 + $0xe0] sm:$0xff]
        %v8855 = vld [vmem:[%s5 + $0xe8] sm:$0xff]
        %v8856 = vld [vmem:[%s5 + $0xf0] sm:$0xff]
        %v8857 = vld [vmem:[%s5 + $0xf8] sm:$0xff]
        %v8858 = vld [vmem:[%s5 + $0x100] sm:$0xff]
        %v8859 = vld [vmem:[%s5 + $0x108] sm:$0xff]
        %v8860 = vld [vmem:[%s5 + $0x110] sm:$0xff]
        %v8861 = vld [vmem:[%s5 + $0x118] sm:$0xff]
        %v8862 = vld [vmem:[%s5 + $0x120] sm:$0xff]
        %v8863 = vld [vmem:[%s5 + $0x128] sm:$0xff]
        %v8864 = vld [vmem:[%s5 + $0x130] sm:$0xff]
        %v8865 = vld [vmem:[%s5 + $0x138] sm:$0xff]
        %v8866 = vld [vmem:[%s5 + $0x140] sm:$0xff]
        %v8867 = vld [vmem:[%s5 + $0x148] sm:$0xff]
        %v8868 = vld [vmem:[%s5 + $0x150] sm:$0xff]
        %v8869 = vld [vmem:[%s5 + $0x158] sm:$0xff]
        %v8870 = vld [vmem:[%s5 + $0x160] sm:$0xff]
        %v8871 = vld [vmem:[%s5 + $0x168] sm:$0xff]
        %v8872 = vld [vmem:[%s5 + $0x170] sm:$0xff]
        %v8873 = vld [vmem:[%s5 + $0x178] sm:$0xff]
        %s8874 = scalar_lea.vmem %s5, 384
        %v8875 = vld [vmem:[%s8874] sm:$0xff]
        %v8876 = vld [vmem:[%s8874 + $0x8] sm:$0xff]
        %v8877 = vld [vmem:[%s8874 + $0x10] sm:$0xff]
        %v8878 = vld [vmem:[%s8874 + $0x18] sm:$0xff]
        %v8879 = vld [vmem:[%s8874 + $0x20] sm:$0xff]
        %v8880 = vld [vmem:[%s8874 + $0x28] sm:$0xff]
        %v8881 = vld [vmem:[%s8874 + $0x30] sm:$0xff]
        %v8882 = vld [vmem:[%s8874 + $0x38] sm:$0xff]
        %v8883 = vld [vmem:[%s8874 + $0x40] sm:$0xff]
        %v8884 = vld [vmem:[%s8874 + $0x48] sm:$0xff]
        %v8885 = vld [vmem:[%s8874 + $0x50] sm:$0xff]
        %v8886 = vld [vmem:[%s8874 + $0x58] sm:$0xff]
        %v8887 = vld [vmem:[%s8874 + $0x60] sm:$0xff]
        %v8888 = vld [vmem:[%s8874 + $0x68] sm:$0xff]
        %v8889 = vld [vmem:[%s8874 + $0x70] sm:$0xff]
        %v8890 = vld [vmem:[%s8874 + $0x78] sm:$0xff]
        %v8891 = vld [vmem:[%s8874 + $0x80] sm:$0xff]
        %v8892 = vld [vmem:[%s8874 + $0x88] sm:$0xff]
        %v8893 = vld [vmem:[%s8874 + $0x90] sm:$0xff]
        %v8894 = vld [vmem:[%s8874 + $0x98] sm:$0xff]
        %v8895 = vld [vmem:[%s8874 + $0xa0] sm:$0xff]
        %v8896 = vld [vmem:[%s8874 + $0xa8] sm:$0xff]
        %v8897 = vld [vmem:[%s8874 + $0xb0] sm:$0xff]
        %v8898 = vld [vmem:[%s8874 + $0xb8] sm:$0xff]
        %v8899 = vld [vmem:[%s8874 + $0xc0] sm:$0xff]
        %v8900 = vld [vmem:[%s8874 + $0xc8] sm:$0xff]
        %v8901 = vld [vmem:[%s8874 + $0xd0] sm:$0xff]
        %v8902 = vld [vmem:[%s8874 + $0xd8] sm:$0xff]
        %v8903 = vld [vmem:[%s8874 + $0xe0] sm:$0xff]
        %v8904 = vld [vmem:[%s8874 + $0xe8] sm:$0xff]
        %v8905 = vld [vmem:[%s8874 + $0xf0] sm:$0xff]
        %v8906 = vld [vmem:[%s8874 + $0xf8] sm:$0xff]
        %v8907 = vld [vmem:[%s8874 + $0x100] sm:$0xff]
        %v8908 = vld [vmem:[%s8874 + $0x108] sm:$0xff]
        %v8909 = vld [vmem:[%s8874 + $0x110] sm:$0xff]
        %v8910 = vld [vmem:[%s8874 + $0x118] sm:$0xff]
        %v8911 = vld [vmem:[%s8874 + $0x120] sm:$0xff]
        %v8912 = vld [vmem:[%s8874 + $0x128] sm:$0xff]
        %v8913 = vld [vmem:[%s8874 + $0x130] sm:$0xff]
        %v8914 = vld [vmem:[%s8874 + $0x138] sm:$0xff]
        %v8915 = vld [vmem:[%s8874 + $0x140] sm:$0xff]
        %v8916 = vld [vmem:[%s8874 + $0x148] sm:$0xff]
        %v8917 = vld [vmem:[%s8874 + $0x150] sm:$0xff]
        %v8918 = vld [vmem:[%s8874 + $0x158] sm:$0xff]
        %v8919 = vld [vmem:[%s8874 + $0x160] sm:$0xff]
        %v8920 = vld [vmem:[%s8874 + $0x168] sm:$0xff]
        %v8921 = vld [vmem:[%s8874 + $0x170] sm:$0xff]
        %v8922 = vld [vmem:[%s8874 + $0x178] sm:$0xff]
        %v8929 = vrot.slane %v8804, 4
        %v8930 = vrot.slane %v8816, 4
        %v8931 = vsel %vm3991, %v8929, %v8930
        %v8932 = vrot.slane %v8808, 4
        %v8933 = vrot.slane %v8820, 4
        %v8934 = vsel %vm3991, %v8932, %v8933
        %v8935 = vrot.slane %v8812, 4
        %v8936 = vrot.slane %v8824, 4
        %v8937 = vsel %vm3991, %v8935, %v8936
        %v8992 = vunpack.c.l.b16 %v8875
        %v8993 = vunpack.c.h.b16 %v8875
        %v8994 = vunpack.c.l.b16 %v8876
        %v8995 = vunpack.c.h.b16 %v8876
        %v8996 = vunpack.c.l.b16 %v8877
        %v8997 = vunpack.c.h.b16 %v8877
        %v8998 = vunpack.c.l.b16 %v8878
        %v8999 = vunpack.c.h.b16 %v8878
        %v9000 = vunpack.c.l.b16 %v8879
        %v9001 = vunpack.c.h.b16 %v8879
        %v9002 = vunpack.c.l.b16 %v8880
        %v9003 = vunpack.c.h.b16 %v8880
        %v9004 = vunpack.c.l.b16 %v8881
        %v9005 = vunpack.c.h.b16 %v8881
        %v9006 = vunpack.c.l.b16 %v8882
        %v9007 = vunpack.c.h.b16 %v8882
        %v9008 = vunpack.c.l.b16 %v8883
        %v9009 = vunpack.c.h.b16 %v8883
        %v9010 = vunpack.c.l.b16 %v8884
        %v9011 = vunpack.c.h.b16 %v8884
        %v9012 = vunpack.c.l.b16 %v8885
        %v9013 = vunpack.c.h.b16 %v8885
        %v9014 = vunpack.c.l.b16 %v8886
        %v9015 = vunpack.c.h.b16 %v8886
        %v9016 = vunpack.c.l.b16 %v8887
        %v9017 = vunpack.c.h.b16 %v8887
        %v9018 = vunpack.c.l.b16 %v8888
        %v9019 = vunpack.c.h.b16 %v8888
        %v9020 = vunpack.c.l.b16 %v8889
        %v9021 = vunpack.c.h.b16 %v8889
        %v9022 = vunpack.c.l.b16 %v8890
        %v9023 = vunpack.c.h.b16 %v8890
        %v9024 = vunpack.c.l.b16 %v8891
        %v9025 = vunpack.c.h.b16 %v8891
        %v9026 = vunpack.c.l.b16 %v8892
        %v9027 = vunpack.c.h.b16 %v8892
        %v9028 = vunpack.c.l.b16 %v8893
        %v9029 = vunpack.c.h.b16 %v8893
        %v9030 = vunpack.c.l.b16 %v8894
        %v9031 = vunpack.c.h.b16 %v8894
        %v9032 = vunpack.c.l.b16 %v8895
        %v9033 = vunpack.c.h.b16 %v8895
        %v9034 = vunpack.c.l.b16 %v8896
        %v9035 = vunpack.c.h.b16 %v8896
        %v9036 = vunpack.c.l.b16 %v8897
        %v9037 = vunpack.c.h.b16 %v8897
        %v9038 = vunpack.c.l.b16 %v8898
        %v9039 = vunpack.c.h.b16 %v8898
        %v9040 = vunpack.c.l.b16 %v8899
        %v9041 = vunpack.c.h.b16 %v8899
        %v9042 = vunpack.c.l.b16 %v8900
        %v9043 = vunpack.c.h.b16 %v8900
        %v9044 = vunpack.c.l.b16 %v8901
        %v9045 = vunpack.c.h.b16 %v8901
        %v9046 = vunpack.c.l.b16 %v8902
        %v9047 = vunpack.c.h.b16 %v8902
        %v9048 = vunpack.c.l.b16 %v8903
        %v9049 = vunpack.c.h.b16 %v8903
        %v9050 = vunpack.c.l.b16 %v8904
        %v9051 = vunpack.c.h.b16 %v8904
        %v9052 = vunpack.c.l.b16 %v8905
        %v9053 = vunpack.c.h.b16 %v8905
        %v9054 = vunpack.c.l.b16 %v8906
        %v9055 = vunpack.c.h.b16 %v8906
        %v9056 = vunpack.c.l.b16 %v8907
        %v9057 = vunpack.c.h.b16 %v8907
        %v9058 = vunpack.c.l.b16 %v8908
        %v9059 = vunpack.c.h.b16 %v8908
        %v9060 = vunpack.c.l.b16 %v8909
        %v9061 = vunpack.c.h.b16 %v8909
        %v9062 = vunpack.c.l.b16 %v8910
        %v9063 = vunpack.c.h.b16 %v8910
        %v9064 = vunpack.c.l.b16 %v8911
        %v9065 = vunpack.c.h.b16 %v8911
        %v9066 = vunpack.c.l.b16 %v8912
        %v9067 = vunpack.c.h.b16 %v8912
        %v9068 = vunpack.c.l.b16 %v8913
        %v9069 = vunpack.c.h.b16 %v8913
        %v9070 = vunpack.c.l.b16 %v8914
        %v9071 = vunpack.c.h.b16 %v8914
        %v9072 = vunpack.c.l.b16 %v8915
        %v9073 = vunpack.c.h.b16 %v8915
        %v9074 = vunpack.c.l.b16 %v8916
        %v9075 = vunpack.c.h.b16 %v8916
        %v9076 = vunpack.c.l.b16 %v8917
        %v9077 = vunpack.c.h.b16 %v8917
        %v9078 = vunpack.c.l.b16 %v8918
        %v9079 = vunpack.c.h.b16 %v8918
        %v9080 = vunpack.c.l.b16 %v8919
        %v9081 = vunpack.c.h.b16 %v8919
        %v9082 = vunpack.c.l.b16 %v8920
        %v9083 = vunpack.c.h.b16 %v8920
        %v9084 = vunpack.c.l.b16 %v8921
        %v9085 = vunpack.c.h.b16 %v8921
        %v9086 = vunpack.c.l.b16 %v8922
        %v9087 = vunpack.c.h.b16 %v8922
        %v9088 = vpack.c.b16 %v8994, %v8992
        %v9089 = vpack.c.b16 %v8995, %v8993
        %v9090 = vpack.c.b16 %v8998, %v8996
        %v9091 = vpack.c.b16 %v8999, %v8997
        %v9092 = vpack.c.b16 %v9002, %v9000
        %v9093 = vpack.c.b16 %v9003, %v9001
        %v9094 = vpack.c.b16 %v9006, %v9004
        %v9095 = vpack.c.b16 %v9007, %v9005
        %v9096 = vpack.c.b16 %v9010, %v9008
        %v9097 = vpack.c.b16 %v9011, %v9009
        %v9098 = vpack.c.b16 %v9014, %v9012
        %v9099 = vpack.c.b16 %v9015, %v9013
        %v9100 = vpack.c.b16 %v9018, %v9016
        %v9101 = vpack.c.b16 %v9019, %v9017
        %v9102 = vpack.c.b16 %v9022, %v9020
        %v9103 = vpack.c.b16 %v9023, %v9021
        %v9104 = vpack.c.b16 %v9026, %v9024
        %v9105 = vpack.c.b16 %v9027, %v9025
        %v9106 = vpack.c.b16 %v9030, %v9028
        %v9107 = vpack.c.b16 %v9031, %v9029
        %v9108 = vpack.c.b16 %v9034, %v9032
        %v9109 = vpack.c.b16 %v9035, %v9033
        %v9110 = vpack.c.b16 %v9038, %v9036
        %v9111 = vpack.c.b16 %v9039, %v9037
        %v9112 = vpack.c.b16 %v9042, %v9040
        %v9113 = vpack.c.b16 %v9043, %v9041
        %v9114 = vpack.c.b16 %v9046, %v9044
        %v9115 = vpack.c.b16 %v9047, %v9045
        %v9116 = vpack.c.b16 %v9050, %v9048
        %v9117 = vpack.c.b16 %v9051, %v9049
        %v9118 = vpack.c.b16 %v9054, %v9052
        %v9119 = vpack.c.b16 %v9055, %v9053
        %v9120 = vpack.c.b16 %v9058, %v9056
        %v9121 = vpack.c.b16 %v9059, %v9057
        %v9122 = vpack.c.b16 %v9062, %v9060
        %v9123 = vpack.c.b16 %v9063, %v9061
        %v9124 = vpack.c.b16 %v9066, %v9064
        %v9125 = vpack.c.b16 %v9067, %v9065
        %v9126 = vpack.c.b16 %v9070, %v9068
        %v9127 = vpack.c.b16 %v9071, %v9069
        %v9128 = vpack.c.b16 %v9074, %v9072
        %v9129 = vpack.c.b16 %v9075, %v9073
        %v9130 = vpack.c.b16 %v9078, %v9076
        %v9131 = vpack.c.b16 %v9079, %v9077
        %v9132 = vpack.c.b16 %v9082, %v9080
        %v9133 = vpack.c.b16 %v9083, %v9081
        %v9134 = vpack.c.b16 %v9086, %v9084
        %v9135 = vpack.c.b16 %v9087, %v9085
        %9184 = vmatprep.subr.bf16.mxu0 %v9089
        %9185 = vmatpush1.bf16.msra.mxu0 %v9088
        %9186 = vmatprep.subr.bf16.mxu0 %v9091
        %9187 = vmatpush1.bf16.msra.mxu0 %v9090
        %9188 = vmatprep.subr.bf16.mxu0 %v9093
        %9189 = vmatpush1.bf16.msra.mxu0 %v9092
        %9190 = vmatprep.subr.bf16.mxu0 %v9095
        %9191 = vmatpush1.bf16.msra.mxu0 %v9094
        %9192 = vmatprep.subr.bf16.mxu0 %v9097
        %9193 = vmatpush1.bf16.msra.mxu0 %v9096
        %9194 = vmatprep.subr.bf16.mxu0 %v9099
        %9195 = vmatpush1.bf16.msra.mxu0 %v9098
        %9196 = vmatprep.subr.bf16.mxu0 %v9101
        %9197 = vmatpush1.bf16.msra.mxu0 %v9100
        %9198 = vmatprep.subr.bf16.mxu0 %v9103
        %9199 = vmatpush1.bf16.msra.mxu0 %v9102
        %9200 = vmatprep.subr.bf16.mxu0 %v9105
        %9201 = vmatpush1.bf16.msra.mxu0 %v9104
        %9202 = vmatprep.subr.bf16.mxu0 %v9107
        %9203 = vmatpush1.bf16.msra.mxu0 %v9106
        %9204 = vmatprep.subr.bf16.mxu0 %v9109
        %9205 = vmatpush1.bf16.msra.mxu0 %v9108
        %9206 = vmatprep.subr.bf16.mxu0 %v9111
        %9207 = vmatpush1.bf16.msra.mxu0 %v9110
        %9208 = vmatprep.subr.bf16.mxu0 %v9113
        %9209 = vmatpush1.bf16.msra.mxu0 %v9112
        %9210 = vmatprep.subr.bf16.mxu0 %v9115
        %9211 = vmatpush1.bf16.msra.mxu0 %v9114
        %9212 = vmatprep.subr.bf16.mxu0 %v9117
        %9213 = vmatpush1.bf16.msra.mxu0 %v9116
        %9214 = vmatprep.subr.bf16.mxu0 %v9119
        %9215 = vmatpush1.bf16.msra.mxu0 %v9118
        %9216 = vmatprep.mubr.bf16.mxu0 %v8934
        %9217 = vmatmul.mubr.bf16.gmra.mrb[0].mxu0 %v8931
        %v9218 = vpop.f32.mrb[0].mxu0
        %v9219 = vadd.f32 0.0, %v9218
        %v9220 = vpop.f32.mrb[0].mxu0
        %v9221 = vadd.f32 0.0, %v9220
        %v9222 = vpop.f32.mrb[0].mxu0
        %v9223 = vadd.f32 0.0, %v9222
        %v9224 = vpop.f32.mrb[0].mxu0
        %v9225 = vadd.f32 0.0, %v9224
        %9226 = vmatprep.mubr.bf16.mxu0 %v8933
        %9227 = vmatmul.mubr.bf16.gmra.mrb[0].mxu0 %v8930
        %v9228 = vpop.f32.mrb[0].mxu0
        %v9229 = vadd.f32 0.0, %v9228
        %v9230 = vpop.f32.mrb[0].mxu0
        %v9231 = vadd.f32 0.0, %v9230
        %v9232 = vpop.f32.mrb[0].mxu0
        %v9233 = vpop.f32.mrb[0].mxu0
        %9234 = vdwg.mxu0
        %9235 = vmatprep.subr.bf16.mxu0 %v9121
        %9236 = vmatpush1.bf16.msra.mxu0 %v9120
        %9237 = vmatprep.subr.bf16.mxu0 %v9123
        %9238 = vmatpush1.bf16.msra.mxu0 %v9122
        %9239 = vmatprep.subr.bf16.mxu0 %v9125
        %9240 = vmatpush1.bf16.msra.mxu0 %v9124
        %9241 = vmatprep.subr.bf16.mxu0 %v9127
        %9242 = vmatpush1.bf16.msra.mxu0 %v9126
        %9243 = vmatprep.subr.bf16.mxu0 %v9129
        %9244 = vmatpush1.bf16.msra.mxu0 %v9128
        %9245 = vmatprep.subr.bf16.mxu0 %v9131
        %9246 = vmatpush1.bf16.msra.mxu0 %v9130
        %9247 = vmatprep.subr.bf16.mxu0 %v9133
        %9248 = vmatpush1.bf16.msra.mxu0 %v9132
        %9249 = vmatprep.subr.bf16.mxu0 %v9135
        %9250 = vmatpush1.bf16.msra.mxu0 %v9134
        %9251 = vmatprep.subr.bf16.mxu0 0
        %9252 = vmatpush1.bf16.msra.mxu0 0
        %9253 = vmatprep.subr.bf16.mxu0 0
        %9254 = vmatpush1.bf16.msra.mxu0 0
        %9255 = vmatprep.subr.bf16.mxu0 0
        %9256 = vmatpush1.bf16.msra.mxu0 0
        %9257 = vmatprep.subr.bf16.mxu0 0
        %9258 = vmatpush1.bf16.msra.mxu0 0
        %9259 = vmatprep.subr.bf16.mxu0 0
        %9260 = vmatpush1.bf16.msra.mxu0 0
        %9261 = vmatprep.subr.bf16.mxu0 0
        %9262 = vmatpush1.bf16.msra.mxu0 0
        %9263 = vmatprep.subr.bf16.mxu0 0
        %9264 = vmatpush1.bf16.msra.mxu0 0
        %9265 = vmatprep.subr.bf16.mxu0 0
        %9266 = vmatpush1.bf16.msra.mxu0 0
        %9267 = vmatprep.mubr.bf16.mxu0 0
        %9268 = vmatmul.mubr.bf16.gmra.mrb[0].mxu0 %v8937
        %v9269 = vpop.f32.mrb[0].mxu0
        %v9270 = vadd.f32 %v9219, %v9269
        %v9271 = vpop.f32.mrb[0].mxu0
        %v9272 = vadd.f32 %v9221, %v9271
        %v9273 = vpop.f32.mrb[0].mxu0
        %v9274 = vadd.f32 %v9223, %v9273
        %v9275 = vpop.f32.mrb[0].mxu0
        %v9276 = vadd.f32 %v9225, %v9275
        %9277 = vmatprep.mubr.bf16.mxu0 0
        %9278 = vmatmul.mubr.bf16.gmra.mrb[0].mxu0 %v8936
        %v9279 = vpop.f32.mrb[0].mxu0
        %v9280 = vadd.f32 %v9229, %v9279
        %v9281 = vpop.f32.mrb[0].mxu0
        %v9282 = vadd.f32 %v9231, %v9281
        %v9283 = vpop.f32.mrb[0].mxu0
        %v9284 = vpop.f32.mrb[0].mxu0
        %9285 = vdwg.mxu0
        %v9334 = vunpack.c.l.b16 %v8826
        %v9335 = vunpack.c.h.b16 %v8826
        %v9336 = vunpack.c.l.b16 %v8827
        %v9337 = vunpack.c.h.b16 %v8827
        %v9338 = vunpack.c.l.b16 %v8828
        %v9339 = vunpack.c.h.b16 %v8828
        %v9340 = vunpack.c.l.b16 %v8829
        %v9341 = vunpack.c.h.b16 %v8829
        %v9342 = vunpack.c.l.b16 %v8830
        %v9343 = vunpack.c.h.b16 %v8830
        %v9344 = vunpack.c.l.b16 %v8831
        %v9345 = vunpack.c.h.b16 %v8831
        %v9346 = vunpack.c.l.b16 %v8832
        %v9347 = vunpack.c.h.b16 %v8832
        %v9348 = vunpack.c.l.b16 %v8833
        %v9349 = vunpack.c.h.b16 %v8833
        %v9350 = vunpack.c.l.b16 %v8834
        %v9351 = vunpack.c.h.b16 %v8834
        %v9352 = vunpack.c.l.b16 %v8835
        %v9353 = vunpack.c.h.b16 %v8835
        %v9354 = vunpack.c.l.b16 %v8836
        %v9355 = vunpack.c.h.b16 %v8836
        %v9356 = vunpack.c.l.b16 %v8837
        %v9357 = vunpack.c.h.b16 %v8837
        %v9358 = vunpack.c.l.b16 %v8838
        %v9359 = vunpack.c.h.b16 %v8838
        %v9360 = vunpack.c.l.b16 %v8839
        %v9361 = vunpack.c.h.b16 %v8839
        %v9362 = vunpack.c.l.b16 %v8840
        %v9363 = vunpack.c.h.b16 %v8840
        %v9364 = vunpack.c.l.b16 %v8841
        %v9365 = vunpack.c.h.b16 %v8841
        %v9366 = vunpack.c.l.b16 %v8842
        %v9367 = vunpack.c.h.b16 %v8842
        %v9368 = vunpack.c.l.b16 %v8843
        %v9369 = vunpack.c.h.b16 %v8843
        %v9370 = vunpack.c.l.b16 %v8844
        %v9371 = vunpack.c.h.b16 %v8844
        %v9372 = vunpack.c.l.b16 %v8845
        %v9373 = vunpack.c.h.b16 %v8845
        %v9374 = vunpack.c.l.b16 %v8846
        %v9375 = vunpack.c.h.b16 %v8846
        %v9376 = vunpack.c.l.b16 %v8847
        %v9377 = vunpack.c.h.b16 %v8847
        %v9378 = vunpack.c.l.b16 %v8848
        %v9379 = vunpack.c.h.b16 %v8848
        %v9380 = vunpack.c.l.b16 %v8849
        %v9381 = vunpack.c.h.b16 %v8849
        %v9382 = vunpack.c.l.b16 %v8850
        %v9383 = vunpack.c.h.b16 %v8850
        %v9384 = vunpack.c.l.b16 %v8851
        %v9385 = vunpack.c.h.b16 %v8851
        %v9386 = vunpack.c.l.b16 %v8852
        %v9387 = vunpack.c.h.b16 %v8852
        %v9388 = vunpack.c.l.b16 %v8853
        %v9389 = vunpack.c.h.b16 %v8853
        %v9390 = vunpack.c.l.b16 %v8854
        %v9391 = vunpack.c.h.b16 %v8854
        %v9392 = vunpack.c.l.b16 %v8855
        %v9393 = vunpack.c.h.b16 %v8855
        %v9394 = vunpack.c.l.b16 %v8856
        %v9395 = vunpack.c.h.b16 %v8856
        %v9396 = vunpack.c.l.b16 %v8857
        %v9397 = vunpack.c.h.b16 %v8857
        %v9398 = vunpack.c.l.b16 %v8858
        %v9399 = vunpack.c.h.b16 %v8858
        %v9400 = vunpack.c.l.b16 %v8859
        %v9401 = vunpack.c.h.b16 %v8859
        %v9402 = vunpack.c.l.b16 %v8860
        %v9403 = vunpack.c.h.b16 %v8860
        %v9404 = vunpack.c.l.b16 %v8861
        %v9405 = vunpack.c.h.b16 %v8861
        %v9406 = vunpack.c.l.b16 %v8862
        %v9407 = vunpack.c.h.b16 %v8862
        %v9408 = vunpack.c.l.b16 %v8863
        %v9409 = vunpack.c.h.b16 %v8863
        %v9410 = vunpack.c.l.b16 %v8864
        %v9411 = vunpack.c.h.b16 %v8864
        %v9412 = vunpack.c.l.b16 %v8865
        %v9413 = vunpack.c.h.b16 %v8865
        %v9414 = vunpack.c.l.b16 %v8866
        %v9415 = vunpack.c.h.b16 %v8866
        %v9416 = vunpack.c.l.b16 %v8867
        %v9417 = vunpack.c.h.b16 %v8867
        %v9418 = vunpack.c.l.b16 %v8868
        %v9419 = vunpack.c.h.b16 %v8868
        %v9420 = vunpack.c.l.b16 %v8869
        %v9421 = vunpack.c.h.b16 %v8869
        %v9422 = vunpack.c.l.b16 %v8870
        %v9423 = vunpack.c.h.b16 %v8870
        %v9424 = vunpack.c.l.b16 %v8871
        %v9425 = vunpack.c.h.b16 %v8871
        %v9426 = vunpack.c.l.b16 %v8872
        %v9427 = vunpack.c.h.b16 %v8872
        %v9428 = vunpack.c.l.b16 %v8873
        %v9429 = vunpack.c.h.b16 %v8873
        %v9430 = vpack.c.b16 %v9336, %v9334
        %v9431 = vpack.c.b16 %v9337, %v9335
        %v9432 = vpack.c.b16 %v9340, %v9338
        %v9433 = vpack.c.b16 %v9341, %v9339
        %v9434 = vpack.c.b16 %v9344, %v9342
        %v9435 = vpack.c.b16 %v9345, %v9343
        %v9436 = vpack.c.b16 %v9348, %v9346
        %v9437 = vpack.c.b16 %v9349, %v9347
        %v9438 = vpack.c.b16 %v9352, %v9350
        %v9439 = vpack.c.b16 %v9353, %v9351
        %v9440 = vpack.c.b16 %v9356, %v9354
        %v9441 = vpack.c.b16 %v9357, %v9355
        %v9442 = vpack.c.b16 %v9360, %v9358
        %v9443 = vpack.c.b16 %v9361, %v9359
        %v9444 = vpack.c.b16 %v9364, %v9362
        %v9445 = vpack.c.b16 %v9365, %v9363
        %v9446 = vpack.c.b16 %v9368, %v9366
        %v9447 = vpack.c.b16 %v9369, %v9367
        %v9448 = vpack.c.b16 %v9372, %v9370
        %v9449 = vpack.c.b16 %v9373, %v9371
        %v9450 = vpack.c.b16 %v9376, %v9374
        %v9451 = vpack.c.b16 %v9377, %v9375
        %v9452 = vpack.c.b16 %v9380, %v9378
        %v9453 = vpack.c.b16 %v9381, %v9379
        %v9454 = vpack.c.b16 %v9384, %v9382
        %v9455 = vpack.c.b16 %v9385, %v9383
        %v9456 = vpack.c.b16 %v9388, %v9386
        %v9457 = vpack.c.b16 %v9389, %v9387
        %v9458 = vpack.c.b16 %v9392, %v9390
        %v9459 = vpack.c.b16 %v9393, %v9391
        %v9460 = vpack.c.b16 %v9396, %v9394
        %v9461 = vpack.c.b16 %v9397, %v9395
        %v9462 = vpack.c.b16 %v9400, %v9398
        %v9463 = vpack.c.b16 %v9401, %v9399
        %v9464 = vpack.c.b16 %v9404, %v9402
        %v9465 = vpack.c.b16 %v9405, %v9403
        %v9466 = vpack.c.b16 %v9408, %v9406
        %v9467 = vpack.c.b16 %v9409, %v9407
        %v9468 = vpack.c.b16 %v9412, %v9410
        %v9469 = vpack.c.b16 %v9413, %v9411
        %v9470 = vpack.c.b16 %v9416, %v9414
        %v9471 = vpack.c.b16 %v9417, %v9415
        %v9472 = vpack.c.b16 %v9420, %v9418
        %v9473 = vpack.c.b16 %v9421, %v9419
        %v9474 = vpack.c.b16 %v9424, %v9422
        %v9475 = vpack.c.b16 %v9425, %v9423
        %v9476 = vpack.c.b16 %v9428, %v9426
        %v9477 = vpack.c.b16 %v9429, %v9427
        %9526 = vmatprep.subr.bf16.mxu0 %v9431
        %9527 = vmatpush1.bf16.msra.mxu0 %v9430
        %9528 = vmatprep.subr.bf16.mxu0 %v9433
        %9529 = vmatpush1.bf16.msra.mxu0 %v9432
        %9530 = vmatprep.subr.bf16.mxu0 %v9435
        %9531 = vmatpush1.bf16.msra.mxu0 %v9434
        %9532 = vmatprep.subr.bf16.mxu0 %v9437
        %9533 = vmatpush1.bf16.msra.mxu0 %v9436
        %9534 = vmatprep.subr.bf16.mxu0 %v9439
        %9535 = vmatpush1.bf16.msra.mxu0 %v9438
        %9536 = vmatprep.subr.bf16.mxu0 %v9441
        %9537 = vmatpush1.bf16.msra.mxu0 %v9440
        %9538 = vmatprep.subr.bf16.mxu0 %v9443
        %9539 = vmatpush1.bf16.msra.mxu0 %v9442
        %9540 = vmatprep.subr.bf16.mxu0 %v9445
        %9541 = vmatpush1.bf16.msra.mxu0 %v9444
        %9542 = vmatprep.subr.bf16.mxu0 %v9447
        %9543 = vmatpush1.bf16.msra.mxu0 %v9446
        %9544 = vmatprep.subr.bf16.mxu0 %v9449
        %9545 = vmatpush1.bf16.msra.mxu0 %v9448
        %9546 = vmatprep.subr.bf16.mxu0 %v9451
        %9547 = vmatpush1.bf16.msra.mxu0 %v9450
        %9548 = vmatprep.subr.bf16.mxu0 %v9453
        %9549 = vmatpush1.bf16.msra.mxu0 %v9452
        %9550 = vmatprep.subr.bf16.mxu0 %v9455
        %9551 = vmatpush1.bf16.msra.mxu0 %v9454
        %9552 = vmatprep.subr.bf16.mxu0 %v9457
        %9553 = vmatpush1.bf16.msra.mxu0 %v9456
        %9554 = vmatprep.subr.bf16.mxu0 %v9459
        %9555 = vmatpush1.bf16.msra.mxu0 %v9458
        %9556 = vmatprep.subr.bf16.mxu0 %v9461
        %9557 = vmatpush1.bf16.msra.mxu0 %v9460
        %9558 = vmatprep.mubr.bf16.mxu0 %v8808
        %9559 = vmatmul.mubr.bf16.gmra.mrb[0].mxu0 %v8804
        %v9560 = vpop.f32.mrb[0].mxu0
        %v9561 = vadd.f32 %v9270, %v9560
        %v9562 = vpop.f32.mrb[0].mxu0
        %v9563 = vadd.f32 %v9272, %v9562
        %v9564 = vpop.f32.mrb[0].mxu0
        %v9565 = vadd.f32 %v9274, %v9564
        %v9566 = vpop.f32.mrb[0].mxu0
        %v9567 = vadd.f32 %v9276, %v9566
        %9568 = vmatprep.mubr.bf16.mxu0 %v8820
        %9569 = vmatmul.mubr.bf16.gmra.mrb[0].mxu0 %v8816
        %v9570 = vpop.f32.mrb[0].mxu0
        %v9571 = vadd.f32 %v9280, %v9570
        %v9572 = vpop.f32.mrb[0].mxu0
        %v9573 = vadd.f32 %v9282, %v9572
        %v9574 = vpop.f32.mrb[0].mxu0
        %v9575 = vpop.f32.mrb[0].mxu0
        %9576 = vdwg.mxu0
        %9577 = vmatprep.subr.bf16.mxu0 %v9463
        %9578 = vmatpush1.bf16.msra.mxu0 %v9462
        %9579 = vmatprep.subr.bf16.mxu0 %v9465
        %9580 = vmatpush1.bf16.msra.mxu0 %v9464
        %9581 = vmatprep.subr.bf16.mxu0 %v9467
        %9582 = vmatpush1.bf16.msra.mxu0 %v9466
        %9583 = vmatprep.subr.bf16.mxu0 %v9469
        %9584 = vmatpush1.bf16.msra.mxu0 %v9468
        %9585 = vmatprep.subr.bf16.mxu0 %v9471
        %9586 = vmatpush1.bf16.msra.mxu0 %v9470
        %9587 = vmatprep.subr.bf16.mxu0 %v9473
        %9588 = vmatpush1.bf16.msra.mxu0 %v9472
        %9589 = vmatprep.subr.bf16.mxu0 %v9475
        %9590 = vmatpush1.bf16.msra.mxu0 %v9474
        %9591 = vmatprep.subr.bf16.mxu0 %v9477
        %9592 = vmatpush1.bf16.msra.mxu0 %v9476
        %9593 = vmatprep.subr.bf16.mxu0 0
        %9594 = vmatpush1.bf16.msra.mxu0 0
        %9595 = vmatprep.subr.bf16.mxu0 0
        %9596 = vmatpush1.bf16.msra.mxu0 0
        %9597 = vmatprep.subr.bf16.mxu0 0
        %9598 = vmatpush1.bf16.msra.mxu0 0
        %9599 = vmatprep.subr.bf16.mxu0 0
        %9600 = vmatpush1.bf16.msra.mxu0 0
        %9601 = vmatprep.subr.bf16.mxu0 0
        %9602 = vmatpush1.bf16.msra.mxu0 0
        %9603 = vmatprep.subr.bf16.mxu0 0
        %9604 = vmatpush1.bf16.msra.mxu0 0
        %9605 = vmatprep.subr.bf16.mxu0 0
        %9606 = vmatpush1.bf16.msra.mxu0 0
        %9607 = vmatprep.subr.bf16.mxu0 0
        %9608 = vmatpush1.bf16.msra.mxu0 0
        %9609 = vmatprep.mubr.bf16.mxu0 0
        %9610 = vmatmul.mubr.bf16.gmra.mrb[0].mxu0 %v8812
        %v9611 = vpop.f32.mrb[0].mxu0
        %v9612 = vadd.f32 %v9561, %v9611
        %v9613 = vpop.f32.mrb[0].mxu0
        %v9614 = vadd.f32 %v9563, %v9613
        %v9615 = vpop.f32.mrb[0].mxu0
        %v9616 = vadd.f32 %v9565, %v9615
        %v9617 = vpop.f32.mrb[0].mxu0
        %v9618 = vadd.f32 %v9567, %v9617
        %9619 = vmatprep.mubr.bf16.mxu0 0
        %9620 = vmatmul.mubr.bf16.gmra.mrb[0].mxu0 %v8824
        %v9621 = vpop.f32.mrb[0].mxu0
        %v9622 = vadd.f32 %v9571, %v9621
        %v9623 = vpop.f32.mrb[0].mxu0
        %v9624 = vadd.f32 %v9573, %v9623
        %v9625 = vpop.f32.mrb[0].mxu0
        %v9626 = vpop.f32.mrb[0].mxu0
        %9627 = vdwg.mxu0
        %s9628 = scalar_lea.vmem %s5, 768
        %v9629 = vld [vmem:[%s9628] sm:$0xff]
        %v9630 = vld [vmem:[%s9628 + $0x8] sm:$0xff]
        %v9631 = vld [vmem:[%s9628 + $0x10] sm:$0xff]
        %v9632 = vld [vmem:[%s9628 + $0x18] sm:$0xff]
        %v9633 = vld [vmem:[%s9628 + $0x20] sm:$0xff]
        %v9634 = vld [vmem:[%s9628 + $0x28] sm:$0xff]
        %v9635 = vld [vmem:[%s9628 + $0x30] sm:$0xff]
        %v9636 = vld [vmem:[%s9628 + $0x38] sm:$0xff]
        %v9637 = vld [vmem:[%s9628 + $0x40] sm:$0xff]
        %v9638 = vld [vmem:[%s9628 + $0x48] sm:$0xff]
        %v9639 = vld [vmem:[%s9628 + $0x50] sm:$0xff]
        %v9640 = vld [vmem:[%s9628 + $0x58] sm:$0xff]
        %v9641 = vld [vmem:[%s9628 + $0x60] sm:$0xff]
        %v9642 = vld [vmem:[%s9628 + $0x68] sm:$0xff]
        %v9643 = vld [vmem:[%s9628 + $0x70] sm:$0xff]
        %v9644 = vld [vmem:[%s9628 + $0x78] sm:$0xff]
        %v9645 = vld [vmem:[%s9628 + $0x80] sm:$0xff]
        %v9646 = vld [vmem:[%s9628 + $0x88] sm:$0xff]
        %v9647 = vld [vmem:[%s9628 + $0x90] sm:$0xff]
        %v9648 = vld [vmem:[%s9628 + $0x98] sm:$0xff]
        %v9649 = vld [vmem:[%s9628 + $0xa0] sm:$0xff]
        %v9650 = vld [vmem:[%s9628 + $0xa8] sm:$0xff]
        %v9651 = vld [vmem:[%s9628 + $0xb0] sm:$0xff]
        %v9652 = vld [vmem:[%s9628 + $0xb8] sm:$0xff]
        %v9653 = vld [vmem:[%s9628 + $0xc0] sm:$0xff]
        %v9654 = vld [vmem:[%s9628 + $0xc8] sm:$0xff]
        %v9655 = vld [vmem:[%s9628 + $0xd0] sm:$0xff]
        %v9656 = vld [vmem:[%s9628 + $0xd8] sm:$0xff]
        %v9657 = vld [vmem:[%s9628 + $0xe0] sm:$0xff]
        %v9658 = vld [vmem:[%s9628 + $0xe8] sm:$0xff]
        %v9659 = vld [vmem:[%s9628 + $0xf0] sm:$0xff]
        %v9660 = vld [vmem:[%s9628 + $0xf8] sm:$0xff]
        %v9661 = vld [vmem:[%s9628 + $0x100] sm:$0xff]
        %v9662 = vld [vmem:[%s9628 + $0x108] sm:$0xff]
        %v9663 = vld [vmem:[%s9628 + $0x110] sm:$0xff]
        %v9664 = vld [vmem:[%s9628 + $0x118] sm:$0xff]
        %v9665 = vld [vmem:[%s9628 + $0x120] sm:$0xff]
        %v9666 = vld [vmem:[%s9628 + $0x128] sm:$0xff]
        %v9667 = vld [vmem:[%s9628 + $0x130] sm:$0xff]
        %v9668 = vld [vmem:[%s9628 + $0x138] sm:$0xff]
        %v9669 = vld [vmem:[%s9628 + $0x140] sm:$0xff]
        %v9670 = vld [vmem:[%s9628 + $0x148] sm:$0xff]
        %v9671 = vld [vmem:[%s9628 + $0x150] sm:$0xff]
        %v9672 = vld [vmem:[%s9628 + $0x158] sm:$0xff]
        %v9673 = vld [vmem:[%s9628 + $0x160] sm:$0xff]
        %v9674 = vld [vmem:[%s9628 + $0x168] sm:$0xff]
        %v9675 = vld [vmem:[%s9628 + $0x170] sm:$0xff]
        %v9676 = vld [vmem:[%s9628 + $0x178] sm:$0xff]
        %v9725 = vunpack.c.l.b16 %v9629
        %v9726 = vunpack.c.h.b16 %v9629
        %v9727 = vunpack.c.l.b16 %v9630
        %v9728 = vunpack.c.h.b16 %v9630
        %v9729 = vunpack.c.l.b16 %v9631
        %v9730 = vunpack.c.h.b16 %v9631
        %v9731 = vunpack.c.l.b16 %v9632
        %v9732 = vunpack.c.h.b16 %v9632
        %v9733 = vunpack.c.l.b16 %v9633
        %v9734 = vunpack.c.h.b16 %v9633
        %v9735 = vunpack.c.l.b16 %v9634
        %v9736 = vunpack.c.h.b16 %v9634
        %v9737 = vunpack.c.l.b16 %v9635
        %v9738 = vunpack.c.h.b16 %v9635
        %v9739 = vunpack.c.l.b16 %v9636
        %v9740 = vunpack.c.h.b16 %v9636
        %v9741 = vunpack.c.l.b16 %v9637
        %v9742 = vunpack.c.h.b16 %v9637
        %v9743 = vunpack.c.l.b16 %v9638
        %v9744 = vunpack.c.h.b16 %v9638
        %v9745 = vunpack.c.l.b16 %v9639
        %v9746 = vunpack.c.h.b16 %v9639
        %v9747 = vunpack.c.l.b16 %v9640
        %v9748 = vunpack.c.h.b16 %v9640
        %v9749 = vunpack.c.l.b16 %v9641
        %v9750 = vunpack.c.h.b16 %v9641
        %v9751 = vunpack.c.l.b16 %v9642
        %v9752 = vunpack.c.h.b16 %v9642
        %v9753 = vunpack.c.l.b16 %v9643
        %v9754 = vunpack.c.h.b16 %v9643
        %v9755 = vunpack.c.l.b16 %v9644
        %v9756 = vunpack.c.h.b16 %v9644
        %v9757 = vunpack.c.l.b16 %v9645
        %v9758 = vunpack.c.h.b16 %v9645
        %v9759 = vunpack.c.l.b16 %v9646
        %v9760 = vunpack.c.h.b16 %v9646
        %v9761 = vunpack.c.l.b16 %v9647
        %v9762 = vunpack.c.h.b16 %v9647
        %v9763 = vunpack.c.l.b16 %v9648
        %v9764 = vunpack.c.h.b16 %v9648
        %v9765 = vunpack.c.l.b16 %v9649
        %v9766 = vunpack.c.h.b16 %v9649
        %v9767 = vunpack.c.l.b16 %v9650
        %v9768 = vunpack.c.h.b16 %v9650
        %v9769 = vunpack.c.l.b16 %v9651
        %v9770 = vunpack.c.h.b16 %v9651
        %v9771 = vunpack.c.l.b16 %v9652
        %v9772 = vunpack.c.h.b16 %v9652
        %v9773 = vunpack.c.l.b16 %v9653
        %v9774 = vunpack.c.h.b16 %v9653
        %v9775 = vunpack.c.l.b16 %v9654
        %v9776 = vunpack.c.h.b16 %v9654
        %v9777 = vunpack.c.l.b16 %v9655
        %v9778 = vunpack.c.h.b16 %v9655
        %v9779 = vunpack.c.l.b16 %v9656
        %v9780 = vunpack.c.h.b16 %v9656
        %v9781 = vunpack.c.l.b16 %v9657
        %v9782 = vunpack.c.h.b16 %v9657
        %v9783 = vunpack.c.l.b16 %v9658
        %v9784 = vunpack.c.h.b16 %v9658
        %v9785 = vunpack.c.l.b16 %v9659
        %v9786 = vunpack.c.h.b16 %v9659
        %v9787 = vunpack.c.l.b16 %v9660
        %v9788 = vunpack.c.h.b16 %v9660
        %v9789 = vunpack.c.l.b16 %v9661
        %v9790 = vunpack.c.h.b16 %v9661
        %v9791 = vunpack.c.l.b16 %v9662
        %v9792 = vunpack.c.h.b16 %v9662
        %v9793 = vunpack.c.l.b16 %v9663
        %v9794 = vunpack.c.h.b16 %v9663
        %v9795 = vunpack.c.l.b16 %v9664
        %v9796 = vunpack.c.h.b16 %v9664
        %v9797 = vunpack.c.l.b16 %v9665
        %v9798 = vunpack.c.h.b16 %v9665
        %v9799 = vunpack.c.l.b16 %v9666
        %v9800 = vunpack.c.h.b16 %v9666
        %v9801 = vunpack.c.l.b16 %v9667
        %v9802 = vunpack.c.h.b16 %v9667
        %v9803 = vunpack.c.l.b16 %v9668
        %v9804 = vunpack.c.h.b16 %v9668
        %v9805 = vunpack.c.l.b16 %v9669
        %v9806 = vunpack.c.h.b16 %v9669
        %v9807 = vunpack.c.l.b16 %v9670
        %v9808 = vunpack.c.h.b16 %v9670
        %v9809 = vunpack.c.l.b16 %v9671
        %v9810 = vunpack.c.h.b16 %v9671
        %v9811 = vunpack.c.l.b16 %v9672
        %v9812 = vunpack.c.h.b16 %v9672
        %v9813 = vunpack.c.l.b16 %v9673
        %v9814 = vunpack.c.h.b16 %v9673
        %v9815 = vunpack.c.l.b16 %v9674
        %v9816 = vunpack.c.h.b16 %v9674
        %v9817 = vunpack.c.l.b16 %v9675
        %v9818 = vunpack.c.h.b16 %v9675
        %v9819 = vunpack.c.l.b16 %v9676
        %v9820 = vunpack.c.h.b16 %v9676
        %v9821 = vpack.c.b16 %v9727, %v9725
        %v9822 = vpack.c.b16 %v9728, %v9726
        %v9823 = vpack.c.b16 %v9731, %v9729
        %v9824 = vpack.c.b16 %v9732, %v9730
        %v9825 = vpack.c.b16 %v9735, %v9733
        %v9826 = vpack.c.b16 %v9736, %v9734
        %v9827 = vpack.c.b16 %v9739, %v9737
        %v9828 = vpack.c.b16 %v9740, %v9738
        %v9829 = vpack.c.b16 %v9743, %v9741
        %v9830 = vpack.c.b16 %v9744, %v9742
        %v9831 = vpack.c.b16 %v9747, %v9745
        %v9832 = vpack.c.b16 %v9748, %v9746
        %v9833 = vpack.c.b16 %v9751, %v9749
        %v9834 = vpack.c.b16 %v9752, %v9750
        %v9835 = vpack.c.b16 %v9755, %v9753
        %v9836 = vpack.c.b16 %v9756, %v9754
        %v9837 = vpack.c.b16 %v9759, %v9757
        %v9838 = vpack.c.b16 %v9760, %v9758
        %v9839 = vpack.c.b16 %v9763, %v9761
        %v9840 = vpack.c.b16 %v9764, %v9762
        %v9841 = vpack.c.b16 %v9767, %v9765
        %v9842 = vpack.c.b16 %v9768, %v9766
        %v9843 = vpack.c.b16 %v9771, %v9769
        %v9844 = vpack.c.b16 %v9772, %v9770
        %v9845 = vpack.c.b16 %v9775, %v9773
        %v9846 = vpack.c.b16 %v9776, %v9774
        %v9847 = vpack.c.b16 %v9779, %v9777
        %v9848 = vpack.c.b16 %v9780, %v9778
        %v9849 = vpack.c.b16 %v9783, %v9781
        %v9850 = vpack.c.b16 %v9784, %v9782
        %v9851 = vpack.c.b16 %v9787, %v9785
        %v9852 = vpack.c.b16 %v9788, %v9786
        %v9853 = vpack.c.b16 %v9791, %v9789
        %v9854 = vpack.c.b16 %v9792, %v9790
        %v9855 = vpack.c.b16 %v9795, %v9793
        %v9856 = vpack.c.b16 %v9796, %v9794
        %v9857 = vpack.c.b16 %v9799, %v9797
        %v9858 = vpack.c.b16 %v9800, %v9798
        %v9859 = vpack.c.b16 %v9803, %v9801
        %v9860 = vpack.c.b16 %v9804, %v9802
        %v9861 = vpack.c.b16 %v9807, %v9805
        %v9862 = vpack.c.b16 %v9808, %v9806
        %v9863 = vpack.c.b16 %v9811, %v9809
        %v9864 = vpack.c.b16 %v9812, %v9810
        %v9865 = vpack.c.b16 %v9815, %v9813
        %v9866 = vpack.c.b16 %v9816, %v9814
        %v9867 = vpack.c.b16 %v9819, %v9817
        %v9868 = vpack.c.b16 %v9820, %v9818
        %9917 = vmatprep.subr.bf16.mxu0 %v9822
        %9918 = vmatpush1.bf16.msra.mxu0 %v9821
        %9919 = vmatprep.subr.bf16.mxu0 %v9824
        %9920 = vmatpush1.bf16.msra.mxu0 %v9823
        %9921 = vmatprep.subr.bf16.mxu0 %v9826
        %9922 = vmatpush1.bf16.msra.mxu0 %v9825
        %9923 = vmatprep.subr.bf16.mxu0 %v9828
        %9924 = vmatpush1.bf16.msra.mxu0 %v9827
        %9925 = vmatprep.subr.bf16.mxu0 %v9830
        %9926 = vmatpush1.bf16.msra.mxu0 %v9829
        %9927 = vmatprep.subr.bf16.mxu0 %v9832
        %9928 = vmatpush1.bf16.msra.mxu0 %v9831
        %9929 = vmatprep.subr.bf16.mxu0 %v9834
        %9930 = vmatpush1.bf16.msra.mxu0 %v9833
        %9931 = vmatprep.subr.bf16.mxu0 %v9836
        %9932 = vmatpush1.bf16.msra.mxu0 %v9835
        %9933 = vmatprep.subr.bf16.mxu0 %v9838
        %9934 = vmatpush1.bf16.msra.mxu0 %v9837
        %9935 = vmatprep.subr.bf16.mxu0 %v9840
        %9936 = vmatpush1.bf16.msra.mxu0 %v9839
        %9937 = vmatprep.subr.bf16.mxu0 %v9842
        %9938 = vmatpush1.bf16.msra.mxu0 %v9841
        %9939 = vmatprep.subr.bf16.mxu0 %v9844
        %9940 = vmatpush1.bf16.msra.mxu0 %v9843
        %9941 = vmatprep.subr.bf16.mxu0 %v9846
        %9942 = vmatpush1.bf16.msra.mxu0 %v9845
        %9943 = vmatprep.subr.bf16.mxu0 %v9848
        %9944 = vmatpush1.bf16.msra.mxu0 %v9847
        %9945 = vmatprep.subr.bf16.mxu0 %v9850
        %9946 = vmatpush1.bf16.msra.mxu0 %v9849
        %9947 = vmatprep.subr.bf16.mxu0 %v9852
        %9948 = vmatpush1.bf16.msra.mxu0 %v9851
        %9949 = vmatprep.mubr.bf16.mxu0 %v8820
        %9950 = vmatmul.mubr.bf16.gmra.mrb[0].mxu0 %v8816
        %v9951 = vpop.f32.mrb[0].mxu0
        %v9952 = vadd.f32 0.0, %v9951
        %v9953 = vpop.f32.mrb[0].mxu0
        %v9954 = vadd.f32 0.0, %v9953
        %v9955 = vpop.f32.mrb[0].mxu0
        %v9956 = vadd.f32 0.0, %v9955
        %v9957 = vpop.f32.mrb[0].mxu0
        %v9958 = vadd.f32 0.0, %v9957
        %9959 = vmatprep.mubr.bf16.mxu0 %v8788
        %9960 = vmatmul.mubr.bf16.gmra.mrb[0].mxu0 %v8787
        %v9961 = vpop.f32.mrb[0].mxu0
        %v9962 = vadd.f32 0.0, %v9961
        %v9963 = vpop.f32.mrb[0].mxu0
        %v9964 = vadd.f32 0.0, %v9963
        %v9965 = vpop.f32.mrb[0].mxu0
        %v9966 = vpop.f32.mrb[0].mxu0
        %9967 = vdwg.mxu0
        %9968 = vmatprep.subr.bf16.mxu0 %v9854
        %9969 = vmatpush1.bf16.msra.mxu0 %v9853
        %9970 = vmatprep.subr.bf16.mxu0 %v9856
        %9971 = vmatpush1.bf16.msra.mxu0 %v9855
        %9972 = vmatprep.subr.bf16.mxu0 %v9858
        %9973 = vmatpush1.bf16.msra.mxu0 %v9857
        %9974 = vmatprep.subr.bf16.mxu0 %v9860
        %9975 = vmatpush1.bf16.msra.mxu0 %v9859
        %9976 = vmatprep.subr.bf16.mxu0 %v9862
        %9977 = vmatpush1.bf16.msra.mxu0 %v9861
        %9978 = vmatprep.subr.bf16.mxu0 %v9864
        %9979 = vmatpush1.bf16.msra.mxu0 %v9863
        %9980 = vmatprep.subr.bf16.mxu0 %v9866
        %9981 = vmatpush1.bf16.msra.mxu0 %v9865
        %9982 = vmatprep.subr.bf16.mxu0 %v9868
        %9983 = vmatpush1.bf16.msra.mxu0 %v9867
        %9984 = vmatprep.subr.bf16.mxu0 0
        %9985 = vmatpush1.bf16.msra.mxu0 0
        %9986 = vmatprep.subr.bf16.mxu0 0
        %9987 = vmatpush1.bf16.msra.mxu0 0
        %9988 = vmatprep.subr.bf16.mxu0 0
        %9989 = vmatpush1.bf16.msra.mxu0 0
        %9990 = vmatprep.subr.bf16.mxu0 0
        %9991 = vmatpush1.bf16.msra.mxu0 0
        %9992 = vmatprep.subr.bf16.mxu0 0
        %9993 = vmatpush1.bf16.msra.mxu0 0
        %9994 = vmatprep.subr.bf16.mxu0 0
        %9995 = vmatpush1.bf16.msra.mxu0 0
        %9996 = vmatprep.subr.bf16.mxu0 0
        %9997 = vmatpush1.bf16.msra.mxu0 0
        %9998 = vmatprep.subr.bf16.mxu0 0
        %9999 = vmatpush1.bf16.msra.mxu0 0
        %10000 = vmatprep.mubr.bf16.mxu0 0
        %10001 = vmatmul.mubr.bf16.gmra.mrb[0].mxu0 %v8824
        %v10002 = vpop.f32.mrb[0].mxu0
        %v10003 = vadd.f32 %v9952, %v10002
        %v10004 = vpop.f32.mrb[0].mxu0
        %v10005 = vadd.f32 %v9954, %v10004
        %v10006 = vpop.f32.mrb[0].mxu0
        %v10007 = vadd.f32 %v9956, %v10006
        %v10008 = vpop.f32.mrb[0].mxu0
        %v10009 = vadd.f32 %v9958, %v10008
        %10010 = vmatprep.mubr.bf16.mxu0 0
        %10011 = vmatmul.mubr.bf16.gmra.mrb[0].mxu0 %v8789
        %v10012 = vpop.f32.mrb[0].mxu0
        %v10013 = vadd.f32 %v9962, %v10012
        %v10014 = vpop.f32.mrb[0].mxu0
        %v10015 = vadd.f32 %v9964, %v10014
        %v10016 = vpop.f32.mrb[0].mxu0
        %v10017 = vpop.f32.mrb[0].mxu0
        %10018 = vdwg.mxu0
        %v10019 = vadd.f32 %v9612, %v10003
        %v10020 = vadd.f32 %v9614, %v10005
        %v10021 = vadd.f32 %v9616, %v10007
        %v10022 = vadd.f32 %v9618, %v10009
        %v10023 = vadd.f32 %v9622, %v10013
        %v10024 = vadd.f32 %v9624, %v10015
        %v10025 = vld [vmem:[#allocation10] sm:$0x3]
        %v10027 = vlaneseq
        %v10028 = vshrl.u32 %v10027, 7
        %v10029 = vsub.s32 0, %v10028
        %v10030 = vrot.slane %v10025, %v10029
        %v10031 = vlaneseq
        %v10032 = vshrl.u32 %v10031, 7
        %v10033 = vsub.s32 1, %v10032
        %v10034 = vrot.slane %v10025, %v10033
        %v10037 = vadd.f32 %v10019, %v10030
        %v10038 = vadd.f32 %v10020, %v10034
        %v10039 = vadd.f32 %v10021, %v10030
        %v10040 = vadd.f32 %v10022, %v10034
        %v10041 = vadd.f32 %v10023, %v10030
        %v10042 = vadd.f32 %v10024, %v10034
        %v10043 = vmax.f32 %v10037, 0.0
        %v10044 = vmax.f32 %v10038, 0.0
        %v10045 = vmax.f32 %v10039, 0.0
        %v10046 = vmax.f32 %v10040, 0.0
        %v10047 = vmax.f32 %v10041, 0.0
        %v10048 = vmax.f32 %v10042, 0.0
        %v10049 = vpack.c.bf16 %v10045, %v10043
        %v10050 = vpack.c.bf16 %v10046, %v10044
        %v10051 = vpack.c.bf16 %v10047, %v10047
        %v10052 = vpack.c.bf16 %v10048, %v10048
        %v10053 = vld [vmem:[#allocation11] sm:$0xf]
        %v10054 = vld [vmem:[#allocation11 + $0x4] sm:$0xf]
        %v10055 = vld [vmem:[#allocation11 + $0x8] sm:$0xf]
        %v10056 = vld [vmem:[#allocation11 + $0xc] sm:$0xf]
        %v10057 = vld [vmem:[#allocation11 + $0x10] sm:$0xf]
        %v10058 = vld [vmem:[#allocation11 + $0x14] sm:$0xf]
        %v10059 = vld [vmem:[#allocation11 + $0x18] sm:$0xf]
        %v10060 = vld [vmem:[#allocation11 + $0x1c] sm:$0xf]
        %v10061 = vld [vmem:[#allocation11 + $0x20] sm:$0xf]
        %v10062 = vld [vmem:[#allocation11 + $0x24] sm:$0xf]
        %v10063 = vld [vmem:[#allocation11 + $0x28] sm:$0xf]
        %v10064 = vld [vmem:[#allocation11 + $0x2c] sm:$0xf]
        %v10065 = vld [vmem:[#allocation11 + $0x30] sm:$0xf]
        %v10066 = vld [vmem:[#allocation11 + $0x34] sm:$0xf]
        %v10067 = vld [vmem:[#allocation11 + $0x38] sm:$0xf]
        %v10068 = vld [vmem:[#allocation11 + $0x3c] sm:$0xf]
        %v10069 = vld [vmem:[#allocation11 + $0x40] sm:$0xf]
        %v10070 = vld [vmem:[#allocation11 + $0x44] sm:$0xf]
        %v10071 = vld [vmem:[#allocation11 + $0x48] sm:$0xf]
        %v10072 = vld [vmem:[#allocation11 + $0x4c] sm:$0xf]
        %v10073 = vld [vmem:[#allocation11 + $0x50] sm:$0xf]
        %v10074 = vld [vmem:[#allocation11 + $0x54] sm:$0xf]
        %v10075 = vld [vmem:[#allocation11 + $0x58] sm:$0xf]
        %v10076 = vld [vmem:[#allocation11 + $0x5c] sm:$0xf]
        %v10077 = vld [vmem:[#allocation11 + $0x60] sm:$0xf]
        %v10078 = vld [vmem:[#allocation11 + $0x64] sm:$0xf]
        %v10079 = vld [vmem:[#allocation11 + $0x68] sm:$0xf]
        %v10080 = vld [vmem:[#allocation11 + $0x6c] sm:$0xf]
        %v10081 = vld [vmem:[#allocation11 + $0x70] sm:$0xf]
        %v10082 = vld [vmem:[#allocation11 + $0x74] sm:$0xf]
        %v10083 = vld [vmem:[#allocation11 + $0x78] sm:$0xf]
        %v10084 = vld [vmem:[#allocation11 + $0x7c] sm:$0xf]
        %v10085 = vld [vmem:[#allocation11 + $0x80] sm:$0xf]
        %v10086 = vld [vmem:[#allocation11 + $0x84] sm:$0xf]
        %v10087 = vld [vmem:[#allocation11 + $0x88] sm:$0xf]
        %v10088 = vld [vmem:[#allocation11 + $0x8c] sm:$0xf]
        %v10089 = vld [vmem:[#allocation11 + $0x90] sm:$0xf]
        %v10090 = vld [vmem:[#allocation11 + $0x94] sm:$0xf]
        %v10091 = vld [vmem:[#allocation11 + $0x98] sm:$0xf]
        %v10092 = vld [vmem:[#allocation11 + $0x9c] sm:$0xf]
        %v10093 = vld [vmem:[#allocation11 + $0xa0] sm:$0xf]
        %v10094 = vld [vmem:[#allocation11 + $0xa4] sm:$0xf]
        %v10095 = vld [vmem:[#allocation11 + $0xa8] sm:$0xf]
        %v10096 = vld [vmem:[#allocation11 + $0xac] sm:$0xf]
        %v10097 = vld [vmem:[#allocation11 + $0xb0] sm:$0xf]
        %v10098 = vld [vmem:[#allocation11 + $0xb4] sm:$0xf]
        %v10099 = vld [vmem:[#allocation11 + $0xb8] sm:$0xf]
        %v10100 = vld [vmem:[#allocation11 + $0xbc] sm:$0xf]
        %v10103 = vrot.slane %v10049, 4
        %v10104 = vrot.slane %v10050, 4
        %v10130 = vunpack.c.l.b16 %v10077
        %v10131 = vunpack.c.l.b16 %v10078
        %v10132 = vunpack.c.l.b16 %v10079
        %v10133 = vunpack.c.l.b16 %v10080
        %v10134 = vunpack.c.l.b16 %v10081
        %v10135 = vunpack.c.l.b16 %v10082
        %v10136 = vunpack.c.l.b16 %v10083
        %v10137 = vunpack.c.l.b16 %v10084
        %v10138 = vunpack.c.l.b16 %v10085
        %v10139 = vunpack.c.l.b16 %v10086
        %v10140 = vunpack.c.l.b16 %v10087
        %v10141 = vunpack.c.l.b16 %v10088
        %v10142 = vunpack.c.l.b16 %v10089
        %v10143 = vunpack.c.l.b16 %v10090
        %v10144 = vunpack.c.l.b16 %v10091
        %v10145 = vunpack.c.l.b16 %v10092
        %v10146 = vunpack.c.l.b16 %v10093
        %v10147 = vunpack.c.l.b16 %v10094
        %v10148 = vunpack.c.l.b16 %v10095
        %v10149 = vunpack.c.l.b16 %v10096
        %v10150 = vunpack.c.l.b16 %v10097
        %v10151 = vunpack.c.l.b16 %v10098
        %v10152 = vunpack.c.l.b16 %v10099
        %v10153 = vunpack.c.l.b16 %v10100
        %v10154 = vpack.c.b16 %v10131, %v10130
        %v10155 = vpack.c.b16 %v10133, %v10132
        %v10156 = vpack.c.b16 %v10135, %v10134
        %v10157 = vpack.c.b16 %v10137, %v10136
        %v10158 = vpack.c.b16 %v10139, %v10138
        %v10159 = vpack.c.b16 %v10141, %v10140
        %v10160 = vpack.c.b16 %v10143, %v10142
        %v10161 = vpack.c.b16 %v10145, %v10144
        %v10162 = vpack.c.b16 %v10147, %v10146
        %v10163 = vpack.c.b16 %v10149, %v10148
        %v10164 = vpack.c.b16 %v10151, %v10150
        %v10165 = vpack.c.b16 %v10153, %v10152
        %vm10178 = vcmask 523264
        %v10180 = vsel %vm10178, %v10104, 0
        %10182 = vmatprep.subr.bf16.mxu0 0
        %10183 = vmatpush1.bf16.msra.mxu0 %v10154
        %10184 = vmatprep.subr.bf16.mxu0 0
        %10185 = vmatpush1.bf16.msra.mxu0 %v10155
        %10186 = vmatprep.subr.bf16.mxu0 0
        %10187 = vmatpush1.bf16.msra.mxu0 %v10156
        %10188 = vmatprep.subr.bf16.mxu0 0
        %10189 = vmatpush1.bf16.msra.mxu0 %v10157
        %10190 = vmatprep.subr.bf16.mxu0 0
        %10191 = vmatpush1.bf16.msra.mxu0 %v10158
        %10192 = vmatprep.subr.bf16.mxu0 0
        %10193 = vmatpush1.bf16.msra.mxu0 %v10159
        %10194 = vmatprep.subr.bf16.mxu0 0
        %10195 = vmatpush1.bf16.msra.mxu0 %v10160
        %10196 = vmatprep.subr.bf16.mxu0 0
        %10197 = vmatpush1.bf16.msra.mxu0 %v10161
        %10198 = vmatprep.subr.bf16.mxu0 0
        %10199 = vmatpush1.bf16.msra.mxu0 %v10162
        %10200 = vmatprep.subr.bf16.mxu0 0
        %10201 = vmatpush1.bf16.msra.mxu0 %v10163
        %10202 = vmatprep.subr.bf16.mxu0 0
        %10203 = vmatpush1.bf16.msra.mxu0 %v10164
        %10204 = vmatprep.subr.bf16.mxu0 0
        %10205 = vmatpush1.bf16.msra.mxu0 %v10165
        %10206 = vmatprep.subr.bf16.mxu0 0
        %10207 = vmatpush1.bf16.msra.mxu0 0
        %10208 = vmatprep.subr.bf16.mxu0 0
        %10209 = vmatpush1.bf16.msra.mxu0 0
        %10210 = vmatprep.subr.bf16.mxu0 0
        %10211 = vmatpush1.bf16.msra.mxu0 0
        %10212 = vmatprep.subr.bf16.mxu0 0
        %10213 = vmatpush1.bf16.msra.mxu0 0
        %10214 = vmatprep.mubr.bf16.mxu0 %v10180
        %10215 = vmatmul.mubr.bf16.gmra.mrb[0].mxu0 %v10103
        %v10216 = vpop.f32.mrb[0].mxu0
        %v10217 = vadd.f32 0.0, %v10216
        %v10218 = vpop.f32.mrb[0].mxu0
        %v10219 = vpop.f32.mrb[0].mxu0
        %v10220 = vpop.f32.mrb[0].mxu0
        %10221 = vdwg.mxu0
        %v10246 = vunpack.c.l.b16 %v10053
        %v10247 = vunpack.c.l.b16 %v10054
        %v10248 = vunpack.c.l.b16 %v10055
        %v10249 = vunpack.c.l.b16 %v10056
        %v10250 = vunpack.c.l.b16 %v10057
        %v10251 = vunpack.c.l.b16 %v10058
        %v10252 = vunpack.c.l.b16 %v10059
        %v10253 = vunpack.c.l.b16 %v10060
        %v10254 = vunpack.c.l.b16 %v10061
        %v10255 = vunpack.c.l.b16 %v10062
        %v10256 = vunpack.c.l.b16 %v10063
        %v10257 = vunpack.c.l.b16 %v10064
        %v10258 = vunpack.c.l.b16 %v10065
        %v10259 = vunpack.c.l.b16 %v10066
        %v10260 = vunpack.c.l.b16 %v10067
        %v10261 = vunpack.c.l.b16 %v10068
        %v10262 = vunpack.c.l.b16 %v10069
        %v10263 = vunpack.c.l.b16 %v10070
        %v10264 = vunpack.c.l.b16 %v10071
        %v10265 = vunpack.c.l.b16 %v10072
        %v10266 = vunpack.c.l.b16 %v10073
        %v10267 = vunpack.c.l.b16 %v10074
        %v10268 = vunpack.c.l.b16 %v10075
        %v10269 = vunpack.c.l.b16 %v10076
        %v10270 = vpack.c.b16 %v10247, %v10246
        %v10271 = vpack.c.b16 %v10249, %v10248
        %v10272 = vpack.c.b16 %v10251, %v10250
        %v10273 = vpack.c.b16 %v10253, %v10252
        %v10274 = vpack.c.b16 %v10255, %v10254
        %v10275 = vpack.c.b16 %v10257, %v10256
        %v10276 = vpack.c.b16 %v10259, %v10258
        %v10277 = vpack.c.b16 %v10261, %v10260
        %v10278 = vpack.c.b16 %v10263, %v10262
        %v10279 = vpack.c.b16 %v10265, %v10264
        %v10280 = vpack.c.b16 %v10267, %v10266
        %v10281 = vpack.c.b16 %v10269, %v10268
        %v10295 = vsel %vm10178, %v10050, 0
        %10297 = vmatprep.subr.bf16.mxu0 0
        %10298 = vmatpush1.bf16.msra.mxu0 %v10270
        %10299 = vmatprep.subr.bf16.mxu0 0
        %10300 = vmatpush1.bf16.msra.mxu0 %v10271
        %10301 = vmatprep.subr.bf16.mxu0 0
        %10302 = vmatpush1.bf16.msra.mxu0 %v10272
        %10303 = vmatprep.subr.bf16.mxu0 0
        %10304 = vmatpush1.bf16.msra.mxu0 %v10273
        %10305 = vmatprep.subr.bf16.mxu0 0
        %10306 = vmatpush1.bf16.msra.mxu0 %v10274
        %10307 = vmatprep.subr.bf16.mxu0 0
        %10308 = vmatpush1.bf16.msra.mxu0 %v10275
        %10309 = vmatprep.subr.bf16.mxu0 0
        %10310 = vmatpush1.bf16.msra.mxu0 %v10276
        %10311 = vmatprep.subr.bf16.mxu0 0
        %10312 = vmatpush1.bf16.msra.mxu0 %v10277
        %10313 = vmatprep.subr.bf16.mxu0 0
        %10314 = vmatpush1.bf16.msra.mxu0 %v10278
        %10315 = vmatprep.subr.bf16.mxu0 0
        %10316 = vmatpush1.bf16.msra.mxu0 %v10279
        %10317 = vmatprep.subr.bf16.mxu0 0
        %10318 = vmatpush1.bf16.msra.mxu0 %v10280
        %10319 = vmatprep.subr.bf16.mxu0 0
        %10320 = vmatpush1.bf16.msra.mxu0 %v10281
        %10321 = vmatprep.subr.bf16.mxu0 0
        %10322 = vmatpush1.bf16.msra.mxu0 0
        %10323 = vmatprep.subr.bf16.mxu0 0
        %10324 = vmatpush1.bf16.msra.mxu0 0
        %10325 = vmatprep.subr.bf16.mxu0 0
        %10326 = vmatpush1.bf16.msra.mxu0 0
        %10327 = vmatprep.subr.bf16.mxu0 0
        %10328 = vmatpush1.bf16.msra.mxu0 0
        %10329 = vmatprep.mubr.bf16.mxu0 %v10295
        %10330 = vmatmul.mubr.bf16.gmra.mrb[0].mxu0 %v10049
        %v10331 = vpop.f32.mrb[0].mxu0
        %v10332 = vadd.f32 %v10217, %v10331
        %v10333 = vpop.f32.mrb[0].mxu0
        %v10334 = vpop.f32.mrb[0].mxu0
        %v10335 = vpop.f32.mrb[0].mxu0
        %10336 = vdwg.mxu0
        %v10337 = vld [vmem:[#allocation11 + $0xc0] sm:$0xf]
        %v10338 = vld [vmem:[#allocation11 + $0xc4] sm:$0xf]
        %v10339 = vld [vmem:[#allocation11 + $0xc8] sm:$0xf]
        %v10340 = vld [vmem:[#allocation11 + $0xcc] sm:$0xf]
        %v10341 = vld [vmem:[#allocation11 + $0xd0] sm:$0xf]
        %v10342 = vld [vmem:[#allocation11 + $0xd4] sm:$0xf]
        %v10343 = vld [vmem:[#allocation11 + $0xd8] sm:$0xf]
        %v10344 = vld [vmem:[#allocation11 + $0xdc] sm:$0xf]
        %v10345 = vld [vmem:[#allocation11 + $0xe0] sm:$0xf]
        %v10346 = vld [vmem:[#allocation11 + $0xe4] sm:$0xf]
        %v10347 = vld [vmem:[#allocation11 + $0xe8] sm:$0xf]
        %v10348 = vld [vmem:[#allocation11 + $0xec] sm:$0xf]
        %v10349 = vld [vmem:[#allocation11 + $0xf0] sm:$0xf]
        %v10350 = vld [vmem:[#allocation11 + $0xf4] sm:$0xf]
        %v10351 = vld [vmem:[#allocation11 + $0xf8] sm:$0xf]
        %v10352 = vld [vmem:[#allocation11 + $0xfc] sm:$0xf]
        %v10353 = vld [vmem:[#allocation11 + $0x100] sm:$0xf]
        %v10354 = vld [vmem:[#allocation11 + $0x104] sm:$0xf]
        %v10355 = vld [vmem:[#allocation11 + $0x108] sm:$0xf]
        %v10356 = vld [vmem:[#allocation11 + $0x10c] sm:$0xf]
        %v10357 = vld [vmem:[#allocation11 + $0x110] sm:$0xf]
        %v10358 = vld [vmem:[#allocation11 + $0x114] sm:$0xf]
        %v10359 = vld [vmem:[#allocation11 + $0x118] sm:$0xf]
        %v10360 = vld [vmem:[#allocation11 + $0x11c] sm:$0xf]
        %v10385 = vunpack.c.l.b16 %v10337
        %v10386 = vunpack.c.l.b16 %v10338
        %v10387 = vunpack.c.l.b16 %v10339
        %v10388 = vunpack.c.l.b16 %v10340
        %v10389 = vunpack.c.l.b16 %v10341
        %v10390 = vunpack.c.l.b16 %v10342
        %v10391 = vunpack.c.l.b16 %v10343
        %v10392 = vunpack.c.l.b16 %v10344
        %v10393 = vunpack.c.l.b16 %v10345
        %v10394 = vunpack.c.l.b16 %v10346
        %v10395 = vunpack.c.l.b16 %v10347
        %v10396 = vunpack.c.l.b16 %v10348
        %v10397 = vunpack.c.l.b16 %v10349
        %v10398 = vunpack.c.l.b16 %v10350
        %v10399 = vunpack.c.l.b16 %v10351
        %v10400 = vunpack.c.l.b16 %v10352
        %v10401 = vunpack.c.l.b16 %v10353
        %v10402 = vunpack.c.l.b16 %v10354
        %v10403 = vunpack.c.l.b16 %v10355
        %v10404 = vunpack.c.l.b16 %v10356
        %v10405 = vunpack.c.l.b16 %v10357
        %v10406 = vunpack.c.l.b16 %v10358
        %v10407 = vunpack.c.l.b16 %v10359
        %v10408 = vunpack.c.l.b16 %v10360
        %v10409 = vpack.c.b16 %v10386, %v10385
        %v10410 = vpack.c.b16 %v10388, %v10387
        %v10411 = vpack.c.b16 %v10390, %v10389
        %v10412 = vpack.c.b16 %v10392, %v10391
        %v10413 = vpack.c.b16 %v10394, %v10393
        %v10414 = vpack.c.b16 %v10396, %v10395
        %v10415 = vpack.c.b16 %v10398, %v10397
        %v10416 = vpack.c.b16 %v10400, %v10399
        %v10417 = vpack.c.b16 %v10402, %v10401
        %v10418 = vpack.c.b16 %v10404, %v10403
        %v10419 = vpack.c.b16 %v10406, %v10405
        %v10420 = vpack.c.b16 %v10408, %v10407
        %v10434 = vsel %vm10178, %v10052, 0
        %10436 = vmatprep.subr.bf16.mxu0 0
        %10437 = vmatpush1.bf16.msra.mxu0 %v10409
        %10438 = vmatprep.subr.bf16.mxu0 0
        %10439 = vmatpush1.bf16.msra.mxu0 %v10410
        %10440 = vmatprep.subr.bf16.mxu0 0
        %10441 = vmatpush1.bf16.msra.mxu0 %v10411
        %10442 = vmatprep.subr.bf16.mxu0 0
        %10443 = vmatpush1.bf16.msra.mxu0 %v10412
        %10444 = vmatprep.subr.bf16.mxu0 0
        %10445 = vmatpush1.bf16.msra.mxu0 %v10413
        %10446 = vmatprep.subr.bf16.mxu0 0
        %10447 = vmatpush1.bf16.msra.mxu0 %v10414
        %10448 = vmatprep.subr.bf16.mxu0 0
        %10449 = vmatpush1.bf16.msra.mxu0 %v10415
        %10450 = vmatprep.subr.bf16.mxu0 0
        %10451 = vmatpush1.bf16.msra.mxu0 %v10416
        %10452 = vmatprep.subr.bf16.mxu0 0
        %10453 = vmatpush1.bf16.msra.mxu0 %v10417
        %10454 = vmatprep.subr.bf16.mxu0 0
        %10455 = vmatpush1.bf16.msra.mxu0 %v10418
        %10456 = vmatprep.subr.bf16.mxu0 0
        %10457 = vmatpush1.bf16.msra.mxu0 %v10419
        %10458 = vmatprep.subr.bf16.mxu0 0
        %10459 = vmatpush1.bf16.msra.mxu0 %v10420
        %10460 = vmatprep.subr.bf16.mxu0 0
        %10461 = vmatpush1.bf16.msra.mxu0 0
        %10462 = vmatprep.subr.bf16.mxu0 0
        %10463 = vmatpush1.bf16.msra.mxu0 0
        %10464 = vmatprep.subr.bf16.mxu0 0
        %10465 = vmatpush1.bf16.msra.mxu0 0
        %10466 = vmatprep.subr.bf16.mxu0 0
        %10467 = vmatpush1.bf16.msra.mxu0 0
        %10468 = vmatprep.mubr.bf16.mxu0 %v10434
        %10469 = vmatmul.mubr.bf16.gmra.mrb[0].mxu0 %v10051
        %v10470 = vpop.f32.mrb[0].mxu0
        %v10471 = vadd.f32 0.0, %v10470
        %v10472 = vpop.f32.mrb[0].mxu0
        %v10473 = vpop.f32.mrb[0].mxu0
        %v10474 = vpop.f32.mrb[0].mxu0
        %10475 = vdwg.mxu0
        %v10476 = vadd.f32 %v10332, %v10471
        %v10477 = vld [vmem:[#allocation13] sm:$0x1]
        %v10479 = vlaneseq
        %v10480 = vshrl.u32 %v10479, 7
        %v10481 = vsub.s32 0, %v10480
        %v10482 = vrot.slane %v10477, %v10481
        %v10484 = vadd.f32 %v10476, %v10482
        %v10485 = vmax.f32 %v10484, 0.0
        %v10486 = vpack.c.bf16 %v10485, %v10485
        %v10487 = vld [vmem:[%s9] sm:$0xf]
        %v10488 = vld [vmem:[%s9 + $0x4] sm:$0xf]
        %v10489 = vld [vmem:[%s9 + $0x8] sm:$0xf]
        %v10490 = vld [vmem:[%s9 + $0xc] sm:$0xf]
        %v10491 = vld [vmem:[%s9 + $0x10] sm:$0xf]
        %v10492 = vld [vmem:[%s9 + $0x14] sm:$0xf]
        %v10493 = vld [vmem:[%s9 + $0x18] sm:$0xf]
        %v10494 = vld [vmem:[%s9 + $0x1c] sm:$0xf]
        %v10495 = vld [vmem:[%s9 + $0x20] sm:$0xf]
        %v10496 = vld [vmem:[%s9 + $0x24] sm:$0xf]
        %v10497 = vld [vmem:[%s9 + $0x28] sm:$0xf]
        %v10498 = vld [vmem:[%s9 + $0x2c] sm:$0xf]
        %v10499 = vld [vmem:[%s9 + $0x30] sm:$0xf]
        %v10500 = vld [vmem:[%s9 + $0x34] sm:$0xf]
        %v10501 = vld [vmem:[%s9 + $0x38] sm:$0xf]
        %v10502 = vld [vmem:[%s9 + $0x3c] sm:$0xf]
        %v10503 = vld [vmem:[#allocation14] sm:$0x1]
        %v10505 = vlaneseq
        %v10506 = vshrl.u32 %v10505, 7
        %v10507 = vsub.s32 0, %v10506
        %v10508 = vrot.slane %v10503, %v10507
        %v10526 = vunpack.c.l.b16 %v10487
        %v10527 = vunpack.c.l.b16 %v10488
        %v10528 = vunpack.c.l.b16 %v10489
        %v10529 = vunpack.c.l.b16 %v10490
        %v10530 = vunpack.c.l.b16 %v10491
        %v10531 = vunpack.c.l.b16 %v10492
        %v10532 = vunpack.c.l.b16 %v10493
        %v10533 = vunpack.c.l.b16 %v10494
        %v10534 = vunpack.c.l.b16 %v10495
        %v10535 = vunpack.c.l.b16 %v10496
        %v10536 = vunpack.c.l.b16 %v10497
        %v10537 = vunpack.c.l.b16 %v10498
        %v10538 = vunpack.c.l.b16 %v10499
        %v10539 = vunpack.c.l.b16 %v10500
        %v10540 = vunpack.c.l.b16 %v10501
        %v10541 = vunpack.c.l.b16 %v10502
        %v10542 = vpack.c.b16 %v10527, %v10526
        %v10543 = vpack.c.b16 %v10529, %v10528
        %v10544 = vpack.c.b16 %v10531, %v10530
        %v10545 = vpack.c.b16 %v10533, %v10532
        %v10546 = vpack.c.b16 %v10535, %v10534
        %v10547 = vpack.c.b16 %v10537, %v10536
        %v10548 = vpack.c.b16 %v10539, %v10538
        %v10549 = vpack.c.b16 %v10541, %v10540
        %10558 = vmatprep.subr.bf16.mxu0 0
        %10559 = vmatpush1.bf16.msra.mxu0 %v10542
        %10560 = vmatprep.subr.bf16.mxu0 0
        %10561 = vmatpush1.bf16.msra.mxu0 %v10543
        %10562 = vmatprep.subr.bf16.mxu0 0
        %10563 = vmatpush1.bf16.msra.mxu0 %v10544
        %10564 = vmatprep.subr.bf16.mxu0 0
        %10565 = vmatpush1.bf16.msra.mxu0 %v10545
        %10566 = vmatprep.subr.bf16.mxu0 0
        %10567 = vmatpush1.bf16.msra.mxu0 %v10546
        %10568 = vmatprep.subr.bf16.mxu0 0
        %10569 = vmatpush1.bf16.msra.mxu0 %v10547
        %10570 = vmatprep.subr.bf16.mxu0 0
        %10571 = vmatpush1.bf16.msra.mxu0 %v10548
        %10572 = vmatprep.subr.bf16.mxu0 0
        %10573 = vmatpush1.bf16.msra.mxu0 %v10549
        %10574 = vmatprep.subr.bf16.mxu0 0
        %10575 = vmatpush1.bf16.msra.mxu0 0
        %10576 = vmatprep.subr.bf16.mxu0 0
        %10577 = vmatpush1.bf16.msra.mxu0 0
        %10578 = vmatprep.subr.bf16.mxu0 0
        %10579 = vmatpush1.bf16.msra.mxu0 0
        %10580 = vmatprep.subr.bf16.mxu0 0
        %10581 = vmatpush1.bf16.msra.mxu0 0
        %10582 = vmatprep.subr.bf16.mxu0 0
        %10583 = vmatpush1.bf16.msra.mxu0 0
        %10584 = vmatprep.subr.bf16.mxu0 0
        %10585 = vmatpush1.bf16.msra.mxu0 0
        %10586 = vmatprep.subr.bf16.mxu0 0
        %10587 = vmatpush1.bf16.msra.mxu0 0
        %10588 = vmatprep.subr.bf16.mxu0 0
        %10589 = vmatpush1.bf16.msra.mxu0 0
        %10590 = vmatprep.mubr.bf16.mxu0 0
        %10591 = vmatmul.mubr.bf16.gmra.mrb[0].mxu0 %v10486
        %v10592 = vpop.f32.mrb[0].mxu0
        %v10593 = vadd.f32 %v10508, %v10592
        %v10594 = vpop.f32.mrb[0].mxu0
        %v10595 = vpop.f32.mrb[0].mxu0
        %v10596 = vpop.f32.mrb[0].mxu0
        %10597 = vdwg.mxu0
        %vm10598 = vcmask 80896
        %v10599 = vsel %vm10598, %v10593, -inf
        %10600 = vmax.xlane.f32.xlu0 %v10599
        %v10601 = vpop.xlane.xlu0 %10600
        %v10602 = vsub.f32 %v10593, %v10601
        %v10603 = vmul.f32 %v10602, 1.442695
        %v10604 = vpow.pop %v10603
        %v10605 = vsel %vm10598, %v10604, 0.0
        %10606 = vadd.xlane.f32.xlu0 %v10605
        %v10607 = vpop.xlane.xlu0 %10606
        %v10608 = vrcp.pop %v10607
        %v10609 = vmul.f32 %v10604, %v10608
        %10610 = vst.msk [vmem:[%s487] sm:$0xff] %vm10598, %v10609
        %s10611 = sand.u32 %s274, 1
        %s10612 = scalar_lea.sflag [#allocation4], %s10611
        %s10613 = sand.u32 %s274, 1
        %s10614 = smul.addr %s10613, 8
        %s10615 = scalar_lea.vmem [#allocation16], %s10614
        // Predicated region
        $region97: #{net_forward.1} parent=63 // pred_check
          %p10616 = pneg %p284
        $region98: #{net_forward.1} parent=63 // pred_check_branch
          %10618 = sbr.rel (%p10616) target = $region100
        $region99: #{net_forward.1} parent=63 // pred_region
          %s10620 = ssub.s32 128, 128
          %10621 = vsyncadd %s10612, %s10620
          %s10622 = smul.addr %s30, 128
          %s10623 = scalar_lea.hbm %s11, %s10622
          %s10625 = sshll.u32 %s10615, 4
          %s10626 = int_to_ptr.vmem [resolvable:$true] %s10625
          %10628 = dma.vmem_to_hbm [thread:$0]  %s10626, 128, %s10623, %s10612
        $region100: #{net_forward.1} parent=63 // pred_fallthru
          _
      $region64: #{net_forward.1} parent=5 // pred_fallthru
        _
      %p10629 = scmp.le.s32.totalorder 2, %s25
      // Predicated region
      $region101: #{net_forward.1} parent=5 // pred_check
        %p10630 = pneg %p10629
      $region102: #{net_forward.1} parent=5 // pred_check_branch
        %10632 = sbr.rel (%p10630) target = $region104
      $region103: #{net_forward.1} parent=5 // pred_region
        %s10633 = ssub.s32 %s25, 2
        // Predicated region
        $region105: #{net_forward.1} parent=103 // pred_check
          %p10634 = pneg %p290
        $region106: #{net_forward.1} parent=103 // pred_check_branch
          %10636 = sbr.rel (%p10634) target = $region108
        $region107: #{net_forward.1} parent=103 // pred_region
          %s10637 = sand.u32 %s275, 1
          %s10638 = scalar_lea.sflag [#allocation4], %s10637
          %s10639 = sand.u32 %s275, 1
          %s10640 = smul.addr %s10639, 8
          %s10641 = scalar_lea.vmem [#allocation16], %s10640
          %10642 = dma.done %s10638, 128
        $region108: #{net_forward.1} parent=103 // pred_fallthru
          _
      $region104: #{net_forward.1} parent=5 // pred_fallthru
        _
    $region6: #{net_forward.1} parent=1 // loop_footer
      %s29 = sadd.s32 1, %s25
    $region7: #{net_forward.1} parent=1 // loop_footer_branch
      %24 = sbr.rel target = $region3
    $region8: #{net_forward.1} parent=1 // loop_exit
      _
    %10643 = vsyncpa [#allocation3], 1
    %s10644 = scalar_lea.sflag [#allocation3], 1
    %10645 = vsyncpa %s10644, 1
    %10646 = vsyncpa [#allocation6], 1
    %10647 = vsyncpa [#allocation9], 1
    %10648 = vsyncpa [#allocation12], 1
    %10649 = vsyncpa [#allocation15], 1
    %10650 = vsyncpa [#allocation4], 1
    %s10651 = scalar_lea.sflag [#allocation4], 1
    %10652 = vsyncpa %s10651, 1

</llo_original>
